<compile_context>
chip_gen: v7x
topology: tpu7x:2x2x1
jax: 0.10.0
libtpu: 0.0.40
codegen_flags: <defaults>
</compile_context>

<pallas_src>
import functools

import jax
import jax.numpy as jnp
from jax.experimental import pallas as pl
from jax.experimental.pallas import tpu as pltpu

_LANE = 128  # TPU lane width


def _round_up(n, m):
    return ((n + m - 1) // m) * m


# -----------------------------------------------------------------------------
# Fused decoder kernel: every conv layer = one MXU dot over a tap-packed patch.
# -----------------------------------------------------------------------------
def _make_decoder_kernel(H, W, cfgs):
    """Builds the fused kernel body.

    Ref order: x, content, skip, (w_i, b_i) per fused op, out, scratch.
      x       : (H*W, C_x)            bf16
      content : (H*W, C_content)      bf16
      skip    : (H*W, C_skip)         bf16
      w_i     : (K_pad_i, 128)        bf16   tap-major packed conv weight
      b_i     : (1, 128)              f32
      out     : (H*W, 128)            bf16
      scratch : (H*W + 2*margin, Cs)  bf16   zero-margined shift buffer
    """
    M = H * W
    margin = _round_up(W + 1, 8)
    n_ops = len(cfgs)

    def kernel(*refs):
        x_ref, content_ref, skip_ref = refs[0], refs[1], refs[2]
        wb = refs[3:3 + 2 * n_ops]
        out_ref = refs[3 + 2 * n_ops]
        scr_ref = refs[3 + 2 * n_ops + 1]

        # Zero the staging scratch once per grid step: its top/bottom margins
        # provide the conv zero padding in the H direction for free.
        scr_ref[...] = jnp.zeros(scr_ref.shape, scr_ref.dtype)

        # W-boundary masks over the flattened spatial index (built once).
        col = jax.lax.broadcasted_iota(jnp.int32, (M, 1), 0) % W
        not_first_col = col > 0
        not_last_col = col < (W - 1)

        h = x_ref[...]                                     # current activation
        for li, cfg in enumerate(cfgs):
            w_ref, b_ref = wb[2 * li], wb[2 * li + 1]

            # Channel-concat of the external feature (content for layer 0,
            # skip_feat for the skip layer) is fused here - never hits HBM.
            if cfg["extra"] == "content":
                a = jnp.concatenate([h, content_ref[...]], axis=-1)
            elif cfg["extra"] == "skip":
                a = jnp.concatenate([skip_ref[...], h], axis=-1)
            else:
                a = h
            cin = a.shape[-1]
            k_pad = w_ref.shape[0]

            if cfg["ksize"] == 3:
                # Stage the activation into the zero-margined scratch; each
                # tap is then a plain shifted VMEM load (H padding is free,
                # only the W boundary needs a mask).
                scr_ref[margin:margin + M, :cin] = a
                taps = []
                for dy in (-1, 0, 1):
                    for dx in (-1, 0, 1):
                        ofs = margin + dy * W + dx
                        t = scr_ref[ofs:ofs + M, :cin]
                        if dx == -1:
                            t = jnp.where(not_first_col, t, jnp.zeros_like(t))
                        elif dx == 1:
                            t = jnp.where(not_last_col, t, jnp.zeros_like(t))
                        taps.append(t)
            else:                                           # 1x1 conv (skip)
                taps = [a]

            # Lane-pack taps x real channels into one contracting axis
            # (K-packing); zero-pad up to the packed weight's leading dim.
            k_real = cin * len(taps)
            if k_pad > k_real:
                taps.append(jnp.zeros((M, k_pad - k_real), a.dtype))
            patch = jnp.concatenate(taps, axis=-1)          # (M, k_pad) bf16

            acc = jnp.dot(patch, w_ref[...],                # single MXU dot
                          preferred_element_type=jnp.float32)
            acc = acc + b_ref[...]                          # bias in f32
            if cfg["act"] == "relu":
                acc = jnp.maximum(acc, 0.0)
            elif cfg["act"] == "sigmoid":                   # Decoder's out()
                acc = jnp.clip(acc, -60.0, 60.0)
                acc = pl.reciprocal(1.0 + jnp.exp(-acc), approx=True)

            if li == n_ops - 1:
                out_ref[...] = acc.astype(out_ref.dtype)    # lane-dense bf16
            else:
                h = acc[:, :cfg["cout"]].astype(jnp.bfloat16)

    return kernel, margin


# -----------------------------------------------------------------------------
# Wrapper: one-time NCHW <-> flattened-NHWC layout change, single pallas_call.
# -----------------------------------------------------------------------------
def decoder_forward(params, x_nchw, skip_feat, content_feats):
    """Fused Pallas forward matching Decoder.forward (NCHW in / NCHW out)."""
    B, _, H, W = x_nchw.shape
    M = H * W
    assert M % 8 == 0, "flattened spatial size must be a multiple of 8"

    def to_flat(t):   # one-time NCHW -> (B, H*W, C) bf16 at the API boundary
        return (jnp.transpose(t, (0, 2, 3, 1))
                .reshape(B, M, t.shape[1]).astype(jnp.bfloat16))

    x = to_flat(x_nchw)
    content = to_flat(content_feats)
    skip = to_flat(skip_feat)

    cfgs = params["cfgs"]
    kernel, margin = _make_decoder_kernel(H, W, cfgs)
    c_scr = max(cfg["cin"] for cfg in cfgs if cfg["ksize"] == 3)

    operands = [x, content, skip]
    in_specs = [
        pl.BlockSpec((None, M, x.shape[-1]), lambda b: (b, 0, 0)),
        pl.BlockSpec((None, M, content.shape[-1]), lambda b: (b, 0, 0)),
        pl.BlockSpec((None, M, skip.shape[-1]), lambda b: (b, 0, 0)),
    ]
    for w, bias in params["packed"]:
        operands += [w, bias]
        in_specs += [pl.BlockSpec(w.shape, lambda b: (0, 0)),
                     pl.BlockSpec(bias.shape, lambda b: (0, 0))]

    # TODO(synk): at real lffont resolutions (e.g. 128x128) this whole-image
    #             block must be re-tiled spatially with a halo so per-step
    #             VMEM stays well under v7x's 64 MiB; 16x16 fits everywhere.
    out = pl.pallas_call(
        kernel,
        out_shape=jax.ShapeDtypeStruct((B, M, _LANE), jnp.bfloat16),
        grid=(B,),
        in_specs=in_specs,
        out_specs=pl.BlockSpec((None, M, _LANE), lambda b: (b, 0, 0)),
        scratch_shapes=[pltpu.VMEM((M + 2 * margin, c_scr), jnp.bfloat16)],
        compiler_params=pltpu.CompilerParams(
            dimension_semantics=("parallel",),      # batch -> v7x megacore
            vmem_limit_bytes=32 * 1024 * 1024),
    )(*operands)

    c_out = params["out_channels"]
    out = out[:, :, :c_out].reshape(B, H, W, c_out)
    return jnp.transpose(out, (0, 3, 1, 2)).astype(jnp.float32)


# -----------------------------------------------------------------------------
# Parameter construction: raw weights + precomputed packed/padded kernel params
# -----------------------------------------------------------------------------
def _pack_conv(w_list, bias):
    """Pack per-input conv weights into a (K_pad, 128) bf16 matrix.

    Rows are tap-major: for each tap t, the rows are the input channels of
    every input tensor in w_list order - matching the in-kernel patch layout.
    """
    taps = w_list[0].shape[0]
    cout = w_list[0].shape[-1]
    rows = []
    for t in range(taps):
        for w in w_list:
            rows.append(w[t])                               # (cin_i, cout)
    packed = jnp.concatenate(rows, axis=0)                  # (K, cout)
    k = packed.shape[0]
    k_pad = _round_up(k, _LANE)
    packed = jnp.pad(packed, ((0, k_pad - k), (0, _LANE - cout)))
    b = jnp.pad(bias, (0, _LANE - cout)).reshape(1, -1)
    return packed.astype(jnp.bfloat16), b.astype(jnp.float32)


def init_decoder_params(key, c_x=4, c_content=4, c_skip=8,
                        widths=(16, 16, 3), skip_idx=1):
    def conv_w(k, taps, cin, cout):
        return jax.random.normal(k, (taps, cin, cout), jnp.float32) * 0.1

    # raw (unpacked) parameters - kept only for the pure-jnp reference
    raw_layers = []
    key, k1, k2, k3 = jax.random.split(key, 4)
    raw_layers.append(dict(
        ksize=3, act="relu",
        w=[conv_w(k1, 9, c_x, widths[0]),
           conv_w(k2, 9, c_content, widths[0])],
        b=jax.random.normal(k3, (widths[0],), jnp.float32) * 0.1))
    c_prev = widths[0]
    for li, cout in enumerate(widths[1:], start=1):
        key, k1, k2 = jax.random.split(key, 3)
        act = "relu" if li < len(widths) - 1 else "sigmoid"  # out() fused
        raw_layers.append(dict(
            ksize=3, act=act, w=[conv_w(k1, 9, c_prev, cout)],
            b=jax.random.normal(k2, (cout,), jnp.float32) * 0.1))
        c_prev = cout

    c_at_skip = widths[skip_idx - 1] if skip_idx > 0 else c_x
    key, k1, k2, k3 = jax.random.split(key, 4)
    raw_skip = dict(
        ksize=1, act="none",
        w=[conv_w(k1, 1, c_skip, c_at_skip),
           conv_w(k2, 1, c_at_skip, c_at_skip)],
        b=jax.random.normal(k3, (c_at_skip,), jnp.float32) * 0.1)

    # Fused-op program in Decoder.forward order; packed bf16 weights / f32
    # biases are precomputed HERE (not per forward call).
    cfgs, packed = [], []

    def add_op(raw, extra):
        cfgs.append(dict(ksize=raw["ksize"], act=raw["act"], extra=extra,
                         cin=sum(w.shape[1] for w in raw["w"]),
                         cout=raw["w"][0].shape[-1]))
        packed.append(_pack_conv(raw["w"], raw["b"]))

    for i, layer in enumerate(raw_layers):
        if i == skip_idx:
            add_op(raw_skip, extra="skip")
        add_op(layer, extra="content" if i == 0 else None)

    return dict(raw_layers=raw_layers, raw_skip=raw_skip, skip_idx=skip_idx,
                cfgs=cfgs, packed=packed, out_channels=widths[-1])


# -----------------------------------------------------------------------------
# Pure-jnp f32 reference for correctness checking
# -----------------------------------------------------------------------------
def _reference(params, x_nchw, skip_nchw, content_nchw):
    def conv(xs, ws, b, ksize, act):
        B, H, W, _ = xs[0].shape
        p = (ksize - 1) // 2
        cout = ws[0].shape[-1]
        acc = jnp.zeros((B, H, W, cout), jnp.float32) + b
        for x, w in zip(xs, ws):
            xp = jnp.pad(x, ((0, 0), (p, p), (p, p), (0, 0)))
            for t in range(ksize * ksize):
                dy, dx = t // ksize, t % ksize
                acc = acc + jnp.einsum("bhwc,cd->bhwd",
                                       xp[:, dy:dy + H, dx:dx + W, :], w[t])
        if act == "relu":
            acc = jnp.maximum(acc, 0.0)
        elif act == "sigmoid":
            acc = jax.nn.sigmoid(acc)
        return acc

    x = jnp.transpose(x_nchw, (0, 2, 3, 1)).astype(jnp.float32)
    skip = jnp.transpose(skip_nchw, (0, 2, 3, 1)).astype(jnp.float32)
    content = jnp.transpose(content_nchw, (0, 2, 3, 1)).astype(jnp.float32)
    layers, sl = params["raw_layers"], params["raw_skip"]
    for i, layer in enumerate(layers):
        if i == params["skip_idx"]:
            x = conv([skip, x], sl["w"], sl["b"], sl["ksize"], sl["act"])
        if i == 0:
            x = conv([x, content], layer["w"], layer["b"],
                     layer["ksize"], layer["act"])
        else:
            x = conv([x], layer["w"], layer["b"],
                     layer["ksize"], layer["act"])
    return jnp.transpose(x, (0, 3, 1, 2))


# -----------------------------------------------------------------------------
if __name__ == "__main__":
    key = jax.random.PRNGKey(0)
    key, kx, ks, kc = jax.random.split(key, 4)

    B, C, H, W = 2, 4, 16, 16
    C_CONTENT, C_SKIP = 4, 8

    params = init_decoder_params(key, c_x=C, c_content=C_CONTENT,
                                 c_skip=C_SKIP, widths=(16, 16, 3), skip_idx=1)
    x = jax.random.normal(kx, (B, C, H, W), jnp.float32)
    skip_feat = jax.random.normal(ks, (B, C_SKIP, H, W), jnp.float32)
    content_feats = jax.random.normal(kc, (B, C_CONTENT, H, W), jnp.float32)

    fwd = jax.jit(functools.partial(decoder_forward, params))
    out = jax.block_until_ready(fwd(x, skip_feat, content_feats))

    ref = _reference(params, x, skip_feat, content_feats)
    assert out.shape == (B, 3, H, W), out.shape
    max_err = float(jnp.max(jnp.abs(out - ref)))
    assert max_err < 3e-2, f"max abs error vs f32 reference: {max_err}"

    print("KERNEL_OK")
</pallas_src>

<mosaic_0001>
module attributes {stable_mosaic.version = 11 : i64} {
  func.func @kernel(%arg0: i32, %arg1: memref<1x256x4xbf16, #tpu.memory_space<vmem>>, %arg2: memref<1x256x4xbf16, #tpu.memory_space<vmem>>, %arg3: memref<1x256x8xbf16, #tpu.memory_space<vmem>>, %arg4: memref<128x128xbf16, #tpu.memory_space<vmem>>, %arg5: memref<1x128xf32, #tpu.memory_space<vmem>>, %arg6: memref<128x128xbf16, #tpu.memory_space<vmem>>, %arg7: memref<1x128xf32, #tpu.memory_space<vmem>>, %arg8: memref<256x128xbf16, #tpu.memory_space<vmem>>, %arg9: memref<1x128xf32, #tpu.memory_space<vmem>>, %arg10: memref<256x128xbf16, #tpu.memory_space<vmem>>, %arg11: memref<1x128xf32, #tpu.memory_space<vmem>>, %arg12: memref<1x256x128xbf16, #tpu.memory_space<vmem>>, %arg13: memref<304x16xbf16, #tpu.memory_space<vmem>>) attributes {dimension_semantics = [#tpu.dimension_semantics<parallel>], iteration_bounds = array<i64: 2>, scalar_prefetch = 0 : i64, scratch_operands = 1 : i64, tpu.core_type = #tpu.core_type<tc>, window_params = [{transform_indices = @transform_0, window_bounds = array<i64: 1, 256, 4>}, {transform_indices = @transform_1, window_bounds = array<i64: 1, 256, 4>}, {transform_indices = @transform_2, window_bounds = array<i64: 1, 256, 8>}, {pipeline_mode = #tpu.pipeline_mode<synchronous>, transform_indices = @transform_3, window_bounds = array<i64: 128, 128>}, {pipeline_mode = #tpu.pipeline_mode<synchronous>, transform_indices = @transform_4, window_bounds = array<i64: 1, 128>}, {pipeline_mode = #tpu.pipeline_mode<synchronous>, transform_indices = @transform_5, window_bounds = array<i64: 128, 128>}, {pipeline_mode = #tpu.pipeline_mode<synchronous>, transform_indices = @transform_6, window_bounds = array<i64: 1, 128>}, {pipeline_mode = #tpu.pipeline_mode<synchronous>, transform_indices = @transform_7, window_bounds = array<i64: 256, 128>}, {pipeline_mode = #tpu.pipeline_mode<synchronous>, transform_indices = @transform_8, window_bounds = array<i64: 1, 128>}, {pipeline_mode = #tpu.pipeline_mode<synchronous>, transform_indices = @transform_9, window_bounds = array<i64: 256, 128>}, {pipeline_mode = #tpu.pipeline_mode<synchronous>, transform_indices = @transform_10, window_bounds = array<i64: 1, 128>}, {transform_indices = @transform_11, window_bounds = array<i64: 1, 256, 128>}]} {
    %cst = arith.constant 0.000000e+00 : bf16
    %0 = vector.broadcast %cst : bf16 to vector<304x16xbf16>
    %c0 = arith.constant 0 : index
    %c0_0 = arith.constant 0 : index
    %1 = vector.load %arg13[%c0, %c0_0] : memref<304x16xbf16, #tpu.memory_space<vmem>>, vector<304x16xbf16>
    tpu.vector_store %arg13[%c0, %c0_0], %0 {strides = array<i32>} : memref<304x16xbf16, #tpu.memory_space<vmem>>, vector<304x16xbf16>,
    %2 = tpu.iota {dimensions = array<i32: 0>} : vector<256x1xi32>
    %c16_i32 = arith.constant 16 : i32
    %c0_i32 = arith.constant 0 : i32
    %3 = arith.cmpi eq, %c16_i32, %c0_i32 : i32
    %c1_i32 = arith.constant 1 : i32
    %4 = arith.select %3, %c1_i32, %c16_i32 : i32
    %5 = vector.broadcast %4 : i32 to vector<256x1xi32>
    %6 = arith.remsi %2, %5 : vector<256x1xi32>
    %c0_i32_1 = arith.constant 0 : i32
    %7 = vector.broadcast %c0_i32_1 : i32 to vector<256x1xi32>
    %8 = arith.cmpi ne, %6, %7 : vector<256x1xi32>
    %c0_i32_2 = arith.constant 0 : i32
    %9 = vector.broadcast %c0_i32_2 : i32 to vector<256x1xi32>
    %10 = arith.cmpi slt, %6, %9 : vector<256x1xi32>
    %c0_i32_3 = arith.constant 0 : i32
    %11 = arith.cmpi slt, %4, %c0_i32_3 : i32
    %12 = vector.broadcast %11 : i1 to vector<256x1xi1>
    %13 = vector.broadcast %12 : vector<256x1xi1> to vector<256x1xi1>
    %14 = arith.xori %10, %13 : vector<256x1xi1>
    %15 = arith.andi %14, %8 : vector<256x1xi1>
    %16 = vector.broadcast %4 : i32 to vector<256x1xi32>
    %17 = arith.addi %6, %16 : vector<256x1xi32>
    %18 = arith.select %15, %17, %6 : vector<256x1xi1>, vector<256x1xi32>
    %c0_i32_4 = arith.constant 0 : i32
    %19 = vector.broadcast %c0_i32_4 : i32 to vector<256x1xi32>
    %20 = arith.cmpi sgt, %18, %19 : vector<256x1xi32>
    %c15_i32 = arith.constant 15 : i32
    %21 = vector.broadcast %c15_i32 : i32 to vector<256x1xi32>
    %22 = arith.cmpi slt, %18, %21 : vector<256x1xi32>
    %c0_5 = arith.constant 0 : index
    %c0_6 = arith.constant 0 : index
    %c0_7 = arith.constant 0 : index
    %23 = vector.load %arg1[%c0_5, %c0_6, %c0_7] : memref<1x256x4xbf16, #tpu.memory_space<vmem>>, vector<1x256x4xbf16>
    %24 = vector.shape_cast %23 : vector<1x256x4xbf16> to vector<256x4xbf16>
    %c0_8 = arith.constant 0 : index
    %c0_9 = arith.constant 0 : index
    %c0_10 = arith.constant 0 : index
    %25 = vector.load %arg2[%c0_8, %c0_9, %c0_10] : memref<1x256x4xbf16, #tpu.memory_space<vmem>>, vector<1x256x4xbf16>
    %26 = vector.shape_cast %25 : vector<1x256x4xbf16> to vector<256x4xbf16>
    %27 = tpu.concatenate %24, %26 in 1 : vector<256x4xbf16>, vector<256x4xbf16> -> vector<256x8xbf16>
    %c24 = arith.constant 24 : index
    %c0_11 = arith.constant 0 : index
    %28 = vector.load %arg13[%c24, %c0_11] : memref<304x16xbf16, #tpu.memory_space<vmem>>, vector<256x8xbf16>
    tpu.vector_store %arg13[%c24, %c0_11], %27 {strides = array<i32>} : memref<304x16xbf16, #tpu.memory_space<vmem>>, vector<256x8xbf16>,
    %c7 = arith.constant 7 : index
    %c0_12 = arith.constant 0 : index
    %29 = vector.load %arg13[%c7, %c0_12] : memref<304x16xbf16, #tpu.memory_space<vmem>>, vector<256x8xbf16>
    %cst_13 = arith.constant 0.000000e+00 : bf16
    %30 = vector.broadcast %cst_13 : bf16 to vector<256x8xbf16>
    %31 = vector.shape_cast %20 : vector<256x1xi1> to vector<256x1xi1>
    %32 = vector.broadcast %31 : vector<256x1xi1> to vector<256x8xi1>
    %33 = arith.select %32, %29, %30 : vector<256x8xi1>, vector<256x8xbf16>
    %c8 = arith.constant 8 : index
    %c0_14 = arith.constant 0 : index
    %34 = vector.load %arg13[%c8, %c0_14] : memref<304x16xbf16, #tpu.memory_space<vmem>>, vector<256x8xbf16>
    %c9 = arith.constant 9 : index
    %c0_15 = arith.constant 0 : index
    %35 = vector.load %arg13[%c9, %c0_15] : memref<304x16xbf16, #tpu.memory_space<vmem>>, vector<256x8xbf16>
    %cst_16 = arith.constant 0.000000e+00 : bf16
    %36 = vector.broadcast %cst_16 : bf16 to vector<256x8xbf16>
    %37 = vector.shape_cast %22 : vector<256x1xi1> to vector<256x1xi1>
    %38 = vector.broadcast %37 : vector<256x1xi1> to vector<256x8xi1>
    %39 = arith.select %38, %35, %36 : vector<256x8xi1>, vector<256x8xbf16>
    %c23 = arith.constant 23 : index
    %c0_17 = arith.constant 0 : index
    %40 = vector.load %arg13[%c23, %c0_17] : memref<304x16xbf16, #tpu.memory_space<vmem>>, vector<256x8xbf16>
    %cst_18 = arith.constant 0.000000e+00 : bf16
    %41 = vector.broadcast %cst_18 : bf16 to vector<256x8xbf16>
    %42 = vector.shape_cast %20 : vector<256x1xi1> to vector<256x1xi1>
    %43 = vector.broadcast %42 : vector<256x1xi1> to vector<256x8xi1>
    %44 = arith.select %43, %40, %41 : vector<256x8xi1>, vector<256x8xbf16>
    %c24_19 = arith.constant 24 : index
    %c0_20 = arith.constant 0 : index
    %45 = vector.load %arg13[%c24_19, %c0_20] : memref<304x16xbf16, #tpu.memory_space<vmem>>, vector<256x8xbf16>
    %c25 = arith.constant 25 : index
    %c0_21 = arith.constant 0 : index
    %46 = vector.load %arg13[%c25, %c0_21] : memref<304x16xbf16, #tpu.memory_space<vmem>>, vector<256x8xbf16>
    %cst_22 = arith.constant 0.000000e+00 : bf16
    %47 = vector.broadcast %cst_22 : bf16 to vector<256x8xbf16>
    %48 = vector.shape_cast %22 : vector<256x1xi1> to vector<256x1xi1>
    %49 = vector.broadcast %48 : vector<256x1xi1> to vector<256x8xi1>
    %50 = arith.select %49, %46, %47 : vector<256x8xi1>, vector<256x8xbf16>
    %c39 = arith.constant 39 : index
    %c0_23 = arith.constant 0 : index
    %51 = vector.load %arg13[%c39, %c0_23] : memref<304x16xbf16, #tpu.memory_space<vmem>>, vector<256x8xbf16>
    %cst_24 = arith.constant 0.000000e+00 : bf16
    %52 = vector.broadcast %cst_24 : bf16 to vector<256x8xbf16>
    %53 = vector.shape_cast %20 : vector<256x1xi1> to vector<256x1xi1>
    %54 = vector.broadcast %53 : vector<256x1xi1> to vector<256x8xi1>
    %55 = arith.select %54, %51, %52 : vector<256x8xi1>, vector<256x8xbf16>
    %c40 = arith.constant 40 : index
    %c0_25 = arith.constant 0 : index
    %56 = vector.load %arg13[%c40, %c0_25] : memref<304x16xbf16, #tpu.memory_space<vmem>>, vector<256x8xbf16>
    %c41 = arith.constant 41 : index
    %c0_26 = arith.constant 0 : index
    %57 = vector.load %arg13[%c41, %c0_26] : memref<304x16xbf16, #tpu.memory_space<vmem>>, vector<256x8xbf16>
    %cst_27 = arith.constant 0.000000e+00 : bf16
    %58 = vector.broadcast %cst_27 : bf16 to vector<256x8xbf16>
    %59 = vector.shape_cast %22 : vector<256x1xi1> to vector<256x1xi1>
    %60 = vector.broadcast %59 : vector<256x1xi1> to vector<256x8xi1>
    %61 = arith.select %60, %57, %58 : vector<256x8xi1>, vector<256x8xbf16>
    %cst_28 = arith.constant 0.000000e+00 : bf16
    %62 = vector.broadcast %cst_28 : bf16 to vector<256x56xbf16>
    %63 = tpu.concatenate %33, %34, %39, %44, %45, %50, %55, %56, %61, %62 in 1 : vector<256x8xbf16>, vector<256x8xbf16>, vector<256x8xbf16>, vector<256x8xbf16>, vector<256x8xbf16>, vector<256x8xbf16>, vector<256x8xbf16>, vector<256x8xbf16>, vector<256x8xbf16>, vector<256x56xbf16> -> vector<256x128xbf16>
    %c0_29 = arith.constant 0 : index
    %c0_30 = arith.constant 0 : index
    %64 = vector.load %arg4[%c0_29, %c0_30] : memref<128x128xbf16, #tpu.memory_space<vmem>>, vector<128x128xbf16>
    %cst_31 = arith.constant dense<0.000000e+00> : vector<256x128xf32>
    %65 = tpu.matmul %63, %64, %cst_31 {dimension_numbers = #tpu.dot_dimension_numbers<[1], [0], [0], [1], [0, 0, 1, 1], [], []>} : vector<256x128xbf16>, vector<128x128xbf16>, vector<256x128xf32> -> vector<256x128xf32>
    %c0_32 = arith.constant 0 : index
    %c0_33 = arith.constant 0 : index
    %66 = vector.load %arg5[%c0_32, %c0_33] : memref<1x128xf32, #tpu.memory_space<vmem>>, vector<1x128xf32>
    %67 = vector.broadcast %66 : vector<1x128xf32> to vector<256x128xf32>
    %68 = arith.addf %65, %67 : vector<256x128xf32>
    %cst_34 = arith.constant 0.000000e+00 : f32
    %69 = vector.broadcast %cst_34 : f32 to vector<256x128xf32>
    %70 = arith.maximumf %68, %69 : vector<256x128xf32>
    %71 = vector.extract_strided_slice %70 {offsets = [0, 0], sizes = [256, 16], strides = [1, 1]} : vector<256x128xf32> to vector<256x16xf32>
    %72 = arith.truncf %71 : vector<256x16xf32> to vector<256x16xbf16>
    %c0_35 = arith.constant 0 : index
    %c0_36 = arith.constant 0 : index
    %c0_37 = arith.constant 0 : index
    %73 = vector.load %arg3[%c0_35, %c0_36, %c0_37] : memref<1x256x8xbf16, #tpu.memory_space<vmem>>, vector<1x256x8xbf16>
    %74 = vector.shape_cast %73 : vector<1x256x8xbf16> to vector<256x8xbf16>
    %75 = tpu.concatenate %74, %72 in 1 : vector<256x8xbf16>, vector<256x16xbf16> -> vector<256x24xbf16>
    %cst_38 = arith.constant 0.000000e+00 : bf16
    %76 = vector.broadcast %cst_38 : bf16 to vector<256x104xbf16>
    %77 = tpu.concatenate %75, %76 in 1 : vector<256x24xbf16>, vector<256x104xbf16> -> vector<256x128xbf16>
    %c0_39 = arith.constant 0 : index
    %c0_40 = arith.constant 0 : index
    %78 = vector.load %arg6[%c0_39, %c0_40] : memref<128x128xbf16, #tpu.memory_space<vmem>>, vector<128x128xbf16>
    %cst_41 = arith.constant dense<0.000000e+00> : vector<256x128xf32>
    %79 = tpu.matmul %77, %78, %cst_41 {dimension_numbers = #tpu.dot_dimension_numbers<[1], [0], [0], [1], [0, 0, 1, 1], [], []>} : vector<256x128xbf16>, vector<128x128xbf16>, vector<256x128xf32> -> vector<256x128xf32>
    %c0_42 = arith.constant 0 : index
    %c0_43 = arith.constant 0 : index
    %80 = vector.load %arg7[%c0_42, %c0_43] : memref<1x128xf32, #tpu.memory_space<vmem>>, vector<1x128xf32>
    %81 = vector.broadcast %80 : vector<1x128xf32> to vector<256x128xf32>
    %82 = arith.addf %79, %81 : vector<256x128xf32>
    %83 = vector.extract_strided_slice %82 {offsets = [0, 0], sizes = [256, 16], strides = [1, 1]} : vector<256x128xf32> to vector<256x16xf32>
    %84 = arith.truncf %83 : vector<256x16xf32> to vector<256x16xbf16>
    %c24_44 = arith.constant 24 : index
    %c0_45 = arith.constant 0 : index
    %85 = vector.load %arg13[%c24_44, %c0_45] : memref<304x16xbf16, #tpu.memory_space<vmem>>, vector<256x16xbf16>
    tpu.vector_store %arg13[%c24_44, %c0_45], %84 {strides = array<i32>} : memref<304x16xbf16, #tpu.memory_space<vmem>>, vector<256x16xbf16>,
    %c7_46 = arith.constant 7 : index
    %c0_47 = arith.constant 0 : index
    %86 = vector.load %arg13[%c7_46, %c0_47] : memref<304x16xbf16, #tpu.memory_space<vmem>>, vector<256x16xbf16>
    %cst_48 = arith.constant 0.000000e+00 : bf16
    %87 = vector.broadcast %cst_48 : bf16 to vector<256x16xbf16>
    %88 = vector.shape_cast %20 : vector<256x1xi1> to vector<256x1xi1>
    %89 = vector.broadcast %88 : vector<256x1xi1> to vector<256x16xi1>
    %90 = arith.select %89, %86, %87 : vector<256x16xi1>, vector<256x16xbf16>
    %c8_49 = arith.constant 8 : index
    %c0_50 = arith.constant 0 : index
    %91 = vector.load %arg13[%c8_49, %c0_50] : memref<304x16xbf16, #tpu.memory_space<vmem>>, vector<256x16xbf16>
    %c9_51 = arith.constant 9 : index
    %c0_52 = arith.constant 0 : index
    %92 = vector.load %arg13[%c9_51, %c0_52] : memref<304x16xbf16, #tpu.memory_space<vmem>>, vector<256x16xbf16>
    %cst_53 = arith.constant 0.000000e+00 : bf16
    %93 = vector.broadcast %cst_53 : bf16 to vector<256x16xbf16>
    %94 = vector.shape_cast %22 : vector<256x1xi1> to vector<256x1xi1>
    %95 = vector.broadcast %94 : vector<256x1xi1> to vector<256x16xi1>
    %96 = arith.select %95, %92, %93 : vector<256x16xi1>, vector<256x16xbf16>
    %c23_54 = arith.constant 23 : index
    %c0_55 = arith.constant 0 : index
    %97 = vector.load %arg13[%c23_54, %c0_55] : memref<304x16xbf16, #tpu.memory_space<vmem>>, vector<256x16xbf16>
    %cst_56 = arith.constant 0.000000e+00 : bf16
    %98 = vector.broadcast %cst_56 : bf16 to vector<256x16xbf16>
    %99 = vector.shape_cast %20 : vector<256x1xi1> to vector<256x1xi1>
    %100 = vector.broadcast %99 : vector<256x1xi1> to vector<256x16xi1>
    %101 = arith.select %100, %97, %98 : vector<256x16xi1>, vector<256x16xbf16>
    %c24_57 = arith.constant 24 : index
    %c0_58 = arith.constant 0 : index
    %102 = vector.load %arg13[%c24_57, %c0_58] : memref<304x16xbf16, #tpu.memory_space<vmem>>, vector<256x16xbf16>
    %c25_59 = arith.constant 25 : index
    %c0_60 = arith.constant 0 : index
    %103 = vector.load %arg13[%c25_59, %c0_60] : memref<304x16xbf16, #tpu.memory_space<vmem>>, vector<256x16xbf16>
    %cst_61 = arith.constant 0.000000e+00 : bf16
    %104 = vector.broadcast %cst_61 : bf16 to vector<256x16xbf16>
    %105 = vector.shape_cast %22 : vector<256x1xi1> to vector<256x1xi1>
    %106 = vector.broadcast %105 : vector<256x1xi1> to vector<256x16xi1>
    %107 = arith.select %106, %103, %104 : vector<256x16xi1>, vector<256x16xbf16>
    %c39_62 = arith.constant 39 : index
    %c0_63 = arith.constant 0 : index
    %108 = vector.load %arg13[%c39_62, %c0_63] : memref<304x16xbf16, #tpu.memory_space<vmem>>, vector<256x16xbf16>
    %cst_64 = arith.constant 0.000000e+00 : bf16
    %109 = vector.broadcast %cst_64 : bf16 to vector<256x16xbf16>
    %110 = vector.shape_cast %20 : vector<256x1xi1> to vector<256x1xi1>
    %111 = vector.broadcast %110 : vector<256x1xi1> to vector<256x16xi1>
    %112 = arith.select %111, %108, %109 : vector<256x16xi1>, vector<256x16xbf16>
    %c40_65 = arith.constant 40 : index
    %c0_66 = arith.constant 0 : index
    %113 = vector.load %arg13[%c40_65, %c0_66] : memref<304x16xbf16, #tpu.memory_space<vmem>>, vector<256x16xbf16>
    %c41_67 = arith.constant 41 : index
    %c0_68 = arith.constant 0 : index
    %114 = vector.load %arg13[%c41_67, %c0_68] : memref<304x16xbf16, #tpu.memory_space<vmem>>, vector<256x16xbf16>
    %cst_69 = arith.constant 0.000000e+00 : bf16
    %115 = vector.broadcast %cst_69 : bf16 to vector<256x16xbf16>
    %116 = vector.shape_cast %22 : vector<256x1xi1> to vector<256x1xi1>
    %117 = vector.broadcast %116 : vector<256x1xi1> to vector<256x16xi1>
    %118 = arith.select %117, %114, %115 : vector<256x16xi1>, vector<256x16xbf16>
    %cst_70 = arith.constant 0.000000e+00 : bf16
    %119 = vector.broadcast %cst_70 : bf16 to vector<256x112xbf16>
    %120 = tpu.concatenate %90, %91, %96, %101, %102, %107, %112, %113, %118, %119 in 1 : vector<256x16xbf16>, vector<256x16xbf16>, vector<256x16xbf16>, vector<256x16xbf16>, vector<256x16xbf16>, vector<256x16xbf16>, vector<256x16xbf16>, vector<256x16xbf16>, vector<256x16xbf16>, vector<256x112xbf16> -> vector<256x256xbf16>
    %c0_71 = arith.constant 0 : index
    %c0_72 = arith.constant 0 : index
    %121 = vector.load %arg8[%c0_71, %c0_72] : memref<256x128xbf16, #tpu.memory_space<vmem>>, vector<256x128xbf16>
    %cst_73 = arith.constant dense<0.000000e+00> : vector<256x128xf32>
    %122 = tpu.matmul %120, %121, %cst_73 {dimension_numbers = #tpu.dot_dimension_numbers<[1], [0], [0], [1], [0, 0, 1, 1], [], []>} : vector<256x256xbf16>, vector<256x128xbf16>, vector<256x128xf32> -> vector<256x128xf32>
    %c0_74 = arith.constant 0 : index
    %c0_75 = arith.constant 0 : index
    %123 = vector.load %arg9[%c0_74, %c0_75] : memref<1x128xf32, #tpu.memory_space<vmem>>, vector<1x128xf32>
    %124 = vector.broadcast %123 : vector<1x128xf32> to vector<256x128xf32>
    %125 = arith.addf %122, %124 : vector<256x128xf32>
    %cst_76 = arith.constant 0.000000e+00 : f32
    %126 = vector.broadcast %cst_76 : f32 to vector<256x128xf32>
    %127 = arith.maximumf %125, %126 : vector<256x128xf32>
    %128 = vector.extract_strided_slice %127 {offsets = [0, 0], sizes = [256, 16], strides = [1, 1]} : vector<256x128xf32> to vector<256x16xf32>
    %129 = arith.truncf %128 : vector<256x16xf32> to vector<256x16xbf16>
    %c24_77 = arith.constant 24 : index
    %c0_78 = arith.constant 0 : index
    %130 = vector.load %arg13[%c24_77, %c0_78] : memref<304x16xbf16, #tpu.memory_space<vmem>>, vector<256x16xbf16>
    tpu.vector_store %arg13[%c24_77, %c0_78], %129 {strides = array<i32>} : memref<304x16xbf16, #tpu.memory_space<vmem>>, vector<256x16xbf16>,
    %c7_79 = arith.constant 7 : index
    %c0_80 = arith.constant 0 : index
    %131 = vector.load %arg13[%c7_79, %c0_80] : memref<304x16xbf16, #tpu.memory_space<vmem>>, vector<256x16xbf16>
    %cst_81 = arith.constant 0.000000e+00 : bf16
    %132 = vector.broadcast %cst_81 : bf16 to vector<256x16xbf16>
    %133 = vector.shape_cast %20 : vector<256x1xi1> to vector<256x1xi1>
    %134 = vector.broadcast %133 : vector<256x1xi1> to vector<256x16xi1>
    %135 = arith.select %134, %131, %132 : vector<256x16xi1>, vector<256x16xbf16>
    %c8_82 = arith.constant 8 : index
    %c0_83 = arith.constant 0 : index
    %136 = vector.load %arg13[%c8_82, %c0_83] : memref<304x16xbf16, #tpu.memory_space<vmem>>, vector<256x16xbf16>
    %c9_84 = arith.constant 9 : index
    %c0_85 = arith.constant 0 : index
    %137 = vector.load %arg13[%c9_84, %c0_85] : memref<304x16xbf16, #tpu.memory_space<vmem>>, vector<256x16xbf16>
    %cst_86 = arith.constant 0.000000e+00 : bf16
    %138 = vector.broadcast %cst_86 : bf16 to vector<256x16xbf16>
    %139 = vector.shape_cast %22 : vector<256x1xi1> to vector<256x1xi1>
    %140 = vector.broadcast %139 : vector<256x1xi1> to vector<256x16xi1>
    %141 = arith.select %140, %137, %138 : vector<256x16xi1>, vector<256x16xbf16>
    %c23_87 = arith.constant 23 : index
    %c0_88 = arith.constant 0 : index
    %142 = vector.load %arg13[%c23_87, %c0_88] : memref<304x16xbf16, #tpu.memory_space<vmem>>, vector<256x16xbf16>
    %cst_89 = arith.constant 0.000000e+00 : bf16
    %143 = vector.broadcast %cst_89 : bf16 to vector<256x16xbf16>
    %144 = vector.shape_cast %20 : vector<256x1xi1> to vector<256x1xi1>
    %145 = vector.broadcast %144 : vector<256x1xi1> to vector<256x16xi1>
    %146 = arith.select %145, %142, %143 : vector<256x16xi1>, vector<256x16xbf16>
    %c24_90 = arith.constant 24 : index
    %c0_91 = arith.constant 0 : index
    %147 = vector.load %arg13[%c24_90, %c0_91] : memref<304x16xbf16, #tpu.memory_space<vmem>>, vector<256x16xbf16>
    %c25_92 = arith.constant 25 : index
    %c0_93 = arith.constant 0 : index
    %148 = vector.load %arg13[%c25_92, %c0_93] : memref<304x16xbf16, #tpu.memory_space<vmem>>, vector<256x16xbf16>
    %cst_94 = arith.constant 0.000000e+00 : bf16
    %149 = vector.broadcast %cst_94 : bf16 to vector<256x16xbf16>
    %150 = vector.shape_cast %22 : vector<256x1xi1> to vector<256x1xi1>
    %151 = vector.broadcast %150 : vector<256x1xi1> to vector<256x16xi1>
    %152 = arith.select %151, %148, %149 : vector<256x16xi1>, vector<256x16xbf16>
    %c39_95 = arith.constant 39 : index
    %c0_96 = arith.constant 0 : index
    %153 = vector.load %arg13[%c39_95, %c0_96] : memref<304x16xbf16, #tpu.memory_space<vmem>>, vector<256x16xbf16>
    %cst_97 = arith.constant 0.000000e+00 : bf16
    %154 = vector.broadcast %cst_97 : bf16 to vector<256x16xbf16>
    %155 = vector.shape_cast %20 : vector<256x1xi1> to vector<256x1xi1>
    %156 = vector.broadcast %155 : vector<256x1xi1> to vector<256x16xi1>
    %157 = arith.select %156, %153, %154 : vector<256x16xi1>, vector<256x16xbf16>
    %c40_98 = arith.constant 40 : index
    %c0_99 = arith.constant 0 : index
    %158 = vector.load %arg13[%c40_98, %c0_99] : memref<304x16xbf16, #tpu.memory_space<vmem>>, vector<256x16xbf16>
    %c41_100 = arith.constant 41 : index
    %c0_101 = arith.constant 0 : index
    %159 = vector.load %arg13[%c41_100, %c0_101] : memref<304x16xbf16, #tpu.memory_space<vmem>>, vector<256x16xbf16>
    %cst_102 = arith.constant 0.000000e+00 : bf16
    %160 = vector.broadcast %cst_102 : bf16 to vector<256x16xbf16>
    %161 = vector.shape_cast %22 : vector<256x1xi1> to vector<256x1xi1>
    %162 = vector.broadcast %161 : vector<256x1xi1> to vector<256x16xi1>
    %163 = arith.select %162, %159, %160 : vector<256x16xi1>, vector<256x16xbf16>
    %cst_103 = arith.constant 0.000000e+00 : bf16
    %164 = vector.broadcast %cst_103 : bf16 to vector<256x112xbf16>
    %165 = tpu.concatenate %135, %136, %141, %146, %147, %152, %157, %158, %163, %164 in 1 : vector<256x16xbf16>, vector<256x16xbf16>, vector<256x16xbf16>, vector<256x16xbf16>, vector<256x16xbf16>, vector<256x16xbf16>, vector<256x16xbf16>, vector<256x16xbf16>, vector<256x16xbf16>, vector<256x112xbf16> -> vector<256x256xbf16>
    %c0_104 = arith.constant 0 : index
    %c0_105 = arith.constant 0 : index
    %166 = vector.load %arg10[%c0_104, %c0_105] : memref<256x128xbf16, #tpu.memory_space<vmem>>, vector<256x128xbf16>
    %cst_106 = arith.constant dense<0.000000e+00> : vector<256x128xf32>
    %167 = tpu.matmul %165, %166, %cst_106 {dimension_numbers = #tpu.dot_dimension_numbers<[1], [0], [0], [1], [0, 0, 1, 1], [], []>} : vector<256x256xbf16>, vector<256x128xbf16>, vector<256x128xf32> -> vector<256x128xf32>
    %c0_107 = arith.constant 0 : index
    %c0_108 = arith.constant 0 : index
    %168 = vector.load %arg11[%c0_107, %c0_108] : memref<1x128xf32, #tpu.memory_space<vmem>>, vector<1x128xf32>
    %169 = vector.broadcast %168 : vector<1x128xf32> to vector<256x128xf32>
    %170 = arith.addf %167, %169 : vector<256x128xf32>
    %cst_109 = arith.constant -6.000000e+01 : f32
    %cst_110 = arith.constant 6.000000e+01 : f32
    %171 = vector.broadcast %cst_109 : f32 to vector<256x128xf32>
    %172 = arith.maximumf %171, %170 : vector<256x128xf32>
    %173 = vector.broadcast %cst_110 : f32 to vector<256x128xf32>
    %174 = arith.minimumf %173, %172 : vector<256x128xf32>
    %cst_111 = arith.constant 0.000000e+00 : f32
    %175 = vector.broadcast %cst_111 : f32 to vector<256x128xf32>
    %176 = arith.subf %175, %174 : vector<256x128xf32>
    %177 = math.exp %176 : vector<256x128xf32>
    %cst_112 = arith.constant 1.000000e+00 : f32
    %178 = vector.broadcast %cst_112 : f32 to vector<256x128xf32>
    %179 = arith.addf %178, %177 : vector<256x128xf32>
    %180 = tpu.reciprocal %179 {approx = true} : vector<256x128xf32> -> vector<256x128xf32>
    %181 = arith.truncf %180 : vector<256x128xf32> to vector<256x128xbf16>
    %c0_113 = arith.constant 0 : index
    %c0_114 = arith.constant 0 : index
    %c0_115 = arith.constant 0 : index
    %182 = vector.load %arg12[%c0_113, %c0_114, %c0_115] : memref<1x256x128xbf16, #tpu.memory_space<vmem>>, vector<1x256x128xbf16>
    %183 = vector.shape_cast %182 : vector<1x256x128xbf16> to vector<256x128xbf16>
    %184 = vector.shape_cast %181 : vector<256x128xbf16> to vector<1x256x128xbf16>
    tpu.vector_store %arg12[%c0_113, %c0_114, %c0_115], %184 {strides = array<i32>} : memref<1x256x128xbf16, #tpu.memory_space<vmem>>, vector<1x256x128xbf16>,
    return
  }
  func.func @transform_0(%arg0: i32) -> (i32, i32, i32) {
    %c0_i32 = arith.constant 0 : i32
    %c0_i32_0 = arith.constant 0 : i32
    %c0_i32_1 = arith.constant 0 : i32
    return %arg0, %c0_i32, %c0_i32_0 : i32, i32, i32
  }
  func.func @transform_1(%arg0: i32) -> (i32, i32, i32) {
    %c0_i32 = arith.constant 0 : i32
    %c0_i32_0 = arith.constant 0 : i32
    %c0_i32_1 = arith.constant 0 : i32
    return %arg0, %c0_i32, %c0_i32_0 : i32, i32, i32
  }
  func.func @transform_2(%arg0: i32) -> (i32, i32, i32) {
    %c0_i32 = arith.constant 0 : i32
    %c0_i32_0 = arith.constant 0 : i32
    %c0_i32_1 = arith.constant 0 : i32
    return %arg0, %c0_i32, %c0_i32_0 : i32, i32, i32
  }
  func.func @transform_3(%arg0: i32) -> (i32, i32) {
    %c0_i32 = arith.constant 0 : i32
    %c0_i32_0 = arith.constant 0 : i32
    %c0_i32_1 = arith.constant 0 : i32
    return %c0_i32, %c0_i32_0 : i32, i32
  }
  func.func @transform_4(%arg0: i32) -> (i32, i32) {
    %c0_i32 = arith.constant 0 : i32
    %c0_i32_0 = arith.constant 0 : i32
    %c0_i32_1 = arith.constant 0 : i32
    return %c0_i32, %c0_i32_0 : i32, i32
  }
  func.func @transform_5(%arg0: i32) -> (i32, i32) {
    %c0_i32 = arith.constant 0 : i32
    %c0_i32_0 = arith.constant 0 : i32
    %c0_i32_1 = arith.constant 0 : i32
    return %c0_i32, %c0_i32_0 : i32, i32
  }
  func.func @transform_6(%arg0: i32) -> (i32, i32) {
    %c0_i32 = arith.constant 0 : i32
    %c0_i32_0 = arith.constant 0 : i32
    %c0_i32_1 = arith.constant 0 : i32
    return %c0_i32, %c0_i32_0 : i32, i32
  }
  func.func @transform_7(%arg0: i32) -> (i32, i32) {
    %c0_i32 = arith.constant 0 : i32
    %c0_i32_0 = arith.constant 0 : i32
    %c0_i32_1 = arith.constant 0 : i32
    return %c0_i32, %c0_i32_0 : i32, i32
  }
  func.func @transform_8(%arg0: i32) -> (i32, i32) {
    %c0_i32 = arith.constant 0 : i32
    %c0_i32_0 = arith.constant 0 : i32
    %c0_i32_1 = arith.constant 0 : i32
    return %c0_i32, %c0_i32_0 : i32, i32
  }
  func.func @transform_9(%arg0: i32) -> (i32, i32) {
    %c0_i32 = arith.constant 0 : i32
    %c0_i32_0 = arith.constant 0 : i32
    %c0_i32_1 = arith.constant 0 : i32
    return %c0_i32, %c0_i32_0 : i32, i32
  }
  func.func @transform_10(%arg0: i32) -> (i32, i32) {
    %c0_i32 = arith.constant 0 : i32
    %c0_i32_0 = arith.constant 0 : i32
    %c0_i32_1 = arith.constant 0 : i32
    return %c0_i32, %c0_i32_0 : i32, i32
  }
  func.func @transform_11(%arg0: i32) -> (i32, i32, i32) {
    %c0_i32 = arith.constant 0 : i32
    %c0_i32_0 = arith.constant 0 : i32
    %c0_i32_1 = arith.constant 0 : i32
    return %arg0, %c0_i32, %c0_i32_0 : i32, i32, i32
  }
}

</mosaic_0001>

<llo_original>
// kernel: decoder_forward.1
$region0: #{decoder_forward.1}
  #allocation0 [shape = 'u32[]', space=smem, size = 0x4, offset = 0x4, fixed_abs, tag = 'smem constant byte address 0x4 - core index']
  #allocation1 [shape = 'u32[144,128]{1,0:T(1,128)}', space=vmem, size = 0x12000, scoped, tag = 'internal scratch']
  #allocation2 [shape = 'bf16[304,16]{1,0:T(16,128)(2,1)}', space=vmem, size = 0x13000, scoped, tag = 'scratch operand']
  %s0 = inlined_call_operand.vmem [shape: bf16[2,256,4], index: 0, kind: input, shape index: {}]
  %s1 = inlined_call_operand.vmem [shape: bf16[2,256,4], index: 1, kind: input, shape index: {}]
  %s2 = inlined_call_operand.vmem [shape: bf16[2,256,8], index: 2, kind: input, shape index: {}]
  %s3 = inlined_call_operand.vmem [shape: bf16[128,128], index: 3, kind: input, shape index: {}]
  %s4 = inlined_call_operand.vmem [shape: f32[1,128], index: 4, kind: input, shape index: {}]
  %s5 = inlined_call_operand.vmem [shape: bf16[128,128], index: 5, kind: input, shape index: {}]
  %s6 = inlined_call_operand.vmem [shape: f32[1,128], index: 6, kind: input, shape index: {}]
  %s7 = inlined_call_operand.vmem [shape: bf16[256,128], index: 7, kind: input, shape index: {}]
  %s8 = inlined_call_operand.vmem [shape: f32[1,128], index: 8, kind: input, shape index: {}]
  %s9 = inlined_call_operand.vmem [shape: bf16[256,128], index: 9, kind: input, shape index: {}]
  %s10 = inlined_call_operand.vmem [shape: f32[1,128], index: 10, kind: input, shape index: {}]
  %s11 = inlined_call_operand.vmem [shape: bf16[2,256,128], index: 11, kind: output, shape index: {}]
  %s12 = sld [smem:[#allocation0]]
  $region77: #{decoder_forward.1} parent=0
    _
  %s14 = ssub.s32 1, %s12
  %s15 = scalar_select 0, %s14, %s12
  loop: start=0, step=1, limit=4
  $region2: #{decoder_forward.1} parent=0 // loop_pre_header
    _
  $region3: #{decoder_forward.1} parent=0 // loop_header
    %s17 = sphi 0, %s21
    %p18 = scmp.ge.s32.totalorder %s17, 4
    %s27 = sphi 0, %s29
    %s30 = sphi 0, %s27
    %s31 = sphi 0, %s30
    %s47 = sphi 0, %s31
    %s53 = sphi 0, %s55
    %s56 = sphi 0, %s53
    %s57 = sphi 0, %s56
    %s73 = sphi 0, %s57
    %s79 = sphi 0, %s81
    %s82 = sphi 0, %s79
    %s83 = sphi 0, %s82
    %s99 = sphi 0, %s83
    %s103 = sphi 0, %s103
    %s105 = sphi 0, %s103
    %s106 = sphi 0, %s105
    %s120 = sphi 0, %s106
    %s124 = sphi 0, %s124
    %s126 = sphi 0, %s124
    %s127 = sphi 0, %s126
    %s141 = sphi 0, %s127
    %s145 = sphi 0, %s145
    %s147 = sphi 0, %s145
    %s148 = sphi 0, %s147
    %s162 = sphi 0, %s148
    %s166 = sphi 0, %s166
    %s168 = sphi 0, %s166
    %s169 = sphi 0, %s168
    %s183 = sphi 0, %s169
    %s187 = sphi 0, %s187
    %s189 = sphi 0, %s187
    %s190 = sphi 0, %s189
    %s204 = sphi 0, %s190
    %s208 = sphi 0, %s208
    %s210 = sphi 0, %s208
    %s211 = sphi 0, %s210
    %s225 = sphi 0, %s211
    %s229 = sphi 0, %s229
    %s231 = sphi 0, %s229
    %s232 = sphi 0, %s231
    %s246 = sphi 0, %s232
    %s250 = sphi 0, %s250
    %s252 = sphi 0, %s250
    %s253 = sphi 0, %s252
    %s267 = sphi 0, %s253
    %s273 = sphi 0, %s275
    %s276 = sphi 0, %s273
    %s277 = sphi 0, %s276
    %s293 = sphi 0, %s277
  $region4: #{decoder_forward.1} parent=0 // loop_header_branch
    %20 = sbr.rel (%p18) target = $region8
  $region5: #{decoder_forward.1} parent=0 // loop_body
    %s22 = ssub.s32 %s17, 1
    %s23 = ssub.s32 %s17, 2
    %s24 = sadd.s32 %s17, 1
    %s25 = ssub.s32 %s17, %s24
    %p26 = scmp.eq.s32.totalorder %s25, 0
    %s28 = sadd.s32 %s27, 1
    %s29 = scalar_select %p26, %s27, %s28
    %p32 = pneg %p26
    %p33 = scmp.eq.s32.totalorder %s17, 1
    %p34 = por %p32, %p33
    %p35 = scmp.ne.s32.totalorder %s27, %s30
    %p36 = scmp.eq.s32.totalorder %s17, 0
    %p37 = por %p35, %p36
    %p38 = scmp.ne.s32.totalorder %s27, %s30
    %p39 = scmp.eq.s32.totalorder %s22, 1
    %p40 = por %p38, %p39
    %p41 = scmp.ne.s32.totalorder %s30, %s31
    %p42 = scmp.eq.s32.totalorder %s22, 0
    %p43 = por %p41, %p42
    %p44 = scmp.ne.s32.totalorder %s30, %s31
    %p45 = scmp.eq.s32.totalorder %s23, 1
    %p46 = por %p44, %p45
    %p48 = scmp.ne.s32.totalorder %s31, %s47
    %p49 = scmp.eq.s32.totalorder %s23, 0
    %p50 = por %p48, %p49
    %s51 = ssub.s32 %s17, %s24
    %p52 = scmp.eq.s32.totalorder %s51, 0
    %s54 = sadd.s32 %s53, 1
    %s55 = scalar_select %p52, %s53, %s54
    %p58 = pneg %p52
    %p59 = scmp.eq.s32.totalorder %s17, 1
    %p60 = por %p58, %p59
    %p61 = scmp.ne.s32.totalorder %s53, %s56
    %p62 = scmp.eq.s32.totalorder %s17, 0
    %p63 = por %p61, %p62
    %p64 = scmp.ne.s32.totalorder %s53, %s56
    %p65 = scmp.eq.s32.totalorder %s22, 1
    %p66 = por %p64, %p65
    %p67 = scmp.ne.s32.totalorder %s56, %s57
    %p68 = scmp.eq.s32.totalorder %s22, 0
    %p69 = por %p67, %p68
    %p70 = scmp.ne.s32.totalorder %s56, %s57
    %p71 = scmp.eq.s32.totalorder %s23, 1
    %p72 = por %p70, %p71
    %p74 = scmp.ne.s32.totalorder %s57, %s73
    %p75 = scmp.eq.s32.totalorder %s23, 0
    %p76 = por %p74, %p75
    %s77 = ssub.s32 %s17, %s24
    %p78 = scmp.eq.s32.totalorder %s77, 0
    %s80 = sadd.s32 %s79, 1
    %s81 = scalar_select %p78, %s79, %s80
    %p84 = pneg %p78
    %p85 = scmp.eq.s32.totalorder %s17, 1
    %p86 = por %p84, %p85
    %p87 = scmp.ne.s32.totalorder %s79, %s82
    %p88 = scmp.eq.s32.totalorder %s17, 0
    %p89 = por %p87, %p88
    %p90 = scmp.ne.s32.totalorder %s79, %s82
    %p91 = scmp.eq.s32.totalorder %s22, 1
    %p92 = por %p90, %p91
    %p93 = scmp.ne.s32.totalorder %s82, %s83
    %p94 = scmp.eq.s32.totalorder %s22, 0
    %p95 = por %p93, %p94
    %p96 = scmp.ne.s32.totalorder %s82, %s83
    %p97 = scmp.eq.s32.totalorder %s23, 1
    %p98 = por %p96, %p97
    %p100 = scmp.ne.s32.totalorder %s83, %s99
    %p101 = scmp.eq.s32.totalorder %s23, 0
    %p102 = por %p100, %p101
    %s104 = sadd.s32 %s103, 1
    %p107 = scmp.eq.s32.totalorder %s17, 1
    %p108 = scmp.ne.s32.totalorder %s103, %s105
    %p109 = scmp.eq.s32.totalorder %s17, 0
    %p110 = por %p108, %p109
    %p111 = scmp.ne.s32.totalorder %s103, %s105
    %p112 = scmp.eq.s32.totalorder %s22, 1
    %p113 = por %p111, %p112
    %p114 = scmp.ne.s32.totalorder %s105, %s106
    %p115 = scmp.eq.s32.totalorder %s22, 0
    %p116 = por %p114, %p115
    %p117 = scmp.ne.s32.totalorder %s105, %s106
    %p118 = scmp.eq.s32.totalorder %s23, 1
    %p119 = por %p117, %p118
    %p121 = scmp.ne.s32.totalorder %s106, %s120
    %p122 = scmp.eq.s32.totalorder %s23, 0
    %p123 = por %p121, %p122
    %s125 = sadd.s32 %s124, 1
    %p128 = scmp.eq.s32.totalorder %s17, 1
    %p129 = scmp.ne.s32.totalorder %s124, %s126
    %p130 = scmp.eq.s32.totalorder %s17, 0
    %p131 = por %p129, %p130
    %p132 = scmp.ne.s32.totalorder %s124, %s126
    %p133 = scmp.eq.s32.totalorder %s22, 1
    %p134 = por %p132, %p133
    %p135 = scmp.ne.s32.totalorder %s126, %s127
    %p136 = scmp.eq.s32.totalorder %s22, 0
    %p137 = por %p135, %p136
    %p138 = scmp.ne.s32.totalorder %s126, %s127
    %p139 = scmp.eq.s32.totalorder %s23, 1
    %p140 = por %p138, %p139
    %p142 = scmp.ne.s32.totalorder %s127, %s141
    %p143 = scmp.eq.s32.totalorder %s23, 0
    %p144 = por %p142, %p143
    %s146 = sadd.s32 %s145, 1
    %p149 = scmp.eq.s32.totalorder %s17, 1
    %p150 = scmp.ne.s32.totalorder %s145, %s147
    %p151 = scmp.eq.s32.totalorder %s17, 0
    %p152 = por %p150, %p151
    %p153 = scmp.ne.s32.totalorder %s145, %s147
    %p154 = scmp.eq.s32.totalorder %s22, 1
    %p155 = por %p153, %p154
    %p156 = scmp.ne.s32.totalorder %s147, %s148
    %p157 = scmp.eq.s32.totalorder %s22, 0
    %p158 = por %p156, %p157
    %p159 = scmp.ne.s32.totalorder %s147, %s148
    %p160 = scmp.eq.s32.totalorder %s23, 1
    %p161 = por %p159, %p160
    %p163 = scmp.ne.s32.totalorder %s148, %s162
    %p164 = scmp.eq.s32.totalorder %s23, 0
    %p165 = por %p163, %p164
    %s167 = sadd.s32 %s166, 1
    %p170 = scmp.eq.s32.totalorder %s17, 1
    %p171 = scmp.ne.s32.totalorder %s166, %s168
    %p172 = scmp.eq.s32.totalorder %s17, 0
    %p173 = por %p171, %p172
    %p174 = scmp.ne.s32.totalorder %s166, %s168
    %p175 = scmp.eq.s32.totalorder %s22, 1
    %p176 = por %p174, %p175
    %p177 = scmp.ne.s32.totalorder %s168, %s169
    %p178 = scmp.eq.s32.totalorder %s22, 0
    %p179 = por %p177, %p178
    %p180 = scmp.ne.s32.totalorder %s168, %s169
    %p181 = scmp.eq.s32.totalorder %s23, 1
    %p182 = por %p180, %p181
    %p184 = scmp.ne.s32.totalorder %s169, %s183
    %p185 = scmp.eq.s32.totalorder %s23, 0
    %p186 = por %p184, %p185
    %s188 = sadd.s32 %s187, 1
    %p191 = scmp.eq.s32.totalorder %s17, 1
    %p192 = scmp.ne.s32.totalorder %s187, %s189
    %p193 = scmp.eq.s32.totalorder %s17, 0
    %p194 = por %p192, %p193
    %p195 = scmp.ne.s32.totalorder %s187, %s189
    %p196 = scmp.eq.s32.totalorder %s22, 1
    %p197 = por %p195, %p196
    %p198 = scmp.ne.s32.totalorder %s189, %s190
    %p199 = scmp.eq.s32.totalorder %s22, 0
    %p200 = por %p198, %p199
    %p201 = scmp.ne.s32.totalorder %s189, %s190
    %p202 = scmp.eq.s32.totalorder %s23, 1
    %p203 = por %p201, %p202
    %p205 = scmp.ne.s32.totalorder %s190, %s204
    %p206 = scmp.eq.s32.totalorder %s23, 0
    %p207 = por %p205, %p206
    %s209 = sadd.s32 %s208, 1
    %p212 = scmp.eq.s32.totalorder %s17, 1
    %p213 = scmp.ne.s32.totalorder %s208, %s210
    %p214 = scmp.eq.s32.totalorder %s17, 0
    %p215 = por %p213, %p214
    %p216 = scmp.ne.s32.totalorder %s208, %s210
    %p217 = scmp.eq.s32.totalorder %s22, 1
    %p218 = por %p216, %p217
    %p219 = scmp.ne.s32.totalorder %s210, %s211
    %p220 = scmp.eq.s32.totalorder %s22, 0
    %p221 = por %p219, %p220
    %p222 = scmp.ne.s32.totalorder %s210, %s211
    %p223 = scmp.eq.s32.totalorder %s23, 1
    %p224 = por %p222, %p223
    %p226 = scmp.ne.s32.totalorder %s211, %s225
    %p227 = scmp.eq.s32.totalorder %s23, 0
    %p228 = por %p226, %p227
    %s230 = sadd.s32 %s229, 1
    %p233 = scmp.eq.s32.totalorder %s17, 1
    %p234 = scmp.ne.s32.totalorder %s229, %s231
    %p235 = scmp.eq.s32.totalorder %s17, 0
    %p236 = por %p234, %p235
    %p237 = scmp.ne.s32.totalorder %s229, %s231
    %p238 = scmp.eq.s32.totalorder %s22, 1
    %p239 = por %p237, %p238
    %p240 = scmp.ne.s32.totalorder %s231, %s232
    %p241 = scmp.eq.s32.totalorder %s22, 0
    %p242 = por %p240, %p241
    %p243 = scmp.ne.s32.totalorder %s231, %s232
    %p244 = scmp.eq.s32.totalorder %s23, 1
    %p245 = por %p243, %p244
    %p247 = scmp.ne.s32.totalorder %s232, %s246
    %p248 = scmp.eq.s32.totalorder %s23, 0
    %p249 = por %p247, %p248
    %s251 = sadd.s32 %s250, 1
    %p254 = scmp.eq.s32.totalorder %s17, 1
    %p255 = scmp.ne.s32.totalorder %s250, %s252
    %p256 = scmp.eq.s32.totalorder %s17, 0
    %p257 = por %p255, %p256
    %p258 = scmp.ne.s32.totalorder %s250, %s252
    %p259 = scmp.eq.s32.totalorder %s22, 1
    %p260 = por %p258, %p259
    %p261 = scmp.ne.s32.totalorder %s252, %s253
    %p262 = scmp.eq.s32.totalorder %s22, 0
    %p263 = por %p261, %p262
    %p264 = scmp.ne.s32.totalorder %s252, %s253
    %p265 = scmp.eq.s32.totalorder %s23, 1
    %p266 = por %p264, %p265
    %p268 = scmp.ne.s32.totalorder %s253, %s267
    %p269 = scmp.eq.s32.totalorder %s23, 0
    %p270 = por %p268, %p269
    %s271 = ssub.s32 %s17, %s24
    %p272 = scmp.eq.s32.totalorder %s271, 0
    %s274 = sadd.s32 %s273, 1
    %s275 = scalar_select %p272, %s273, %s274
    %p278 = pneg %p272
    %p279 = scmp.eq.s32.totalorder %s17, 1
    %p280 = por %p278, %p279
    %p281 = scmp.ne.s32.totalorder %s273, %s276
    %p282 = scmp.eq.s32.totalorder %s17, 0
    %p283 = por %p281, %p282
    %p284 = scmp.ne.s32.totalorder %s273, %s276
    %p285 = scmp.eq.s32.totalorder %s22, 1
    %p286 = por %p284, %p285
    %p287 = scmp.ne.s32.totalorder %s276, %s277
    %p288 = scmp.eq.s32.totalorder %s22, 0
    %p289 = por %p287, %p288
    %p290 = scmp.ne.s32.totalorder %s276, %s277
    %p291 = scmp.eq.s32.totalorder %s23, 1
    %p292 = por %p290, %p291
    %p294 = scmp.ne.s32.totalorder %s277, %s293
    %p295 = scmp.eq.s32.totalorder %s23, 0
    %p296 = por %p294, %p295
    %p297 = scmp.le.s32.totalorder 1, %s17
    %p298 = scmp.lt.s32.totalorder %s17, 3
    %p299 = pnand %p297, %p298
    %p300 = pneg %p299
    // Predicated region
    $region9: #{decoder_forward.1} parent=5 // pred_check
      _
    $region10: #{decoder_forward.1} parent=5 // pred_check_branch
      %302 = sbr.rel (%p299) target = $region12
    $region11: #{decoder_forward.1} parent=5 // pred_region
      %s303 = ssub.s32 %s17, 1
      // Predicated region
      $region13: #{decoder_forward.1} parent=11 // pred_check
        %p304 = pneg %p116
      $region14: #{decoder_forward.1} parent=11 // pred_check_branch
        %306 = sbr.rel (%p304) target = $region16
      $region15: #{decoder_forward.1} parent=11 // pred_region
        _
      $region16: #{decoder_forward.1} parent=11 // pred_fallthru
        _
      // Predicated region
      $region17: #{decoder_forward.1} parent=11 // pred_check
        %p307 = pneg %p137
      $region18: #{decoder_forward.1} parent=11 // pred_check_branch
        %309 = sbr.rel (%p307) target = $region20
      $region19: #{decoder_forward.1} parent=11 // pred_region
        _
      $region20: #{decoder_forward.1} parent=11 // pred_fallthru
        _
      // Predicated region
      $region21: #{decoder_forward.1} parent=11 // pred_check
        %p310 = pneg %p158
      $region22: #{decoder_forward.1} parent=11 // pred_check_branch
        %312 = sbr.rel (%p310) target = $region24
      $region23: #{decoder_forward.1} parent=11 // pred_region
        _
      $region24: #{decoder_forward.1} parent=11 // pred_fallthru
        _
      // Predicated region
      $region25: #{decoder_forward.1} parent=11 // pred_check
        %p313 = pneg %p179
      $region26: #{decoder_forward.1} parent=11 // pred_check_branch
        %315 = sbr.rel (%p313) target = $region28
      $region27: #{decoder_forward.1} parent=11 // pred_region
        _
      $region28: #{decoder_forward.1} parent=11 // pred_fallthru
        _
      // Predicated region
      $region29: #{decoder_forward.1} parent=11 // pred_check
        %p316 = pneg %p200
      $region30: #{decoder_forward.1} parent=11 // pred_check_branch
        %318 = sbr.rel (%p316) target = $region32
      $region31: #{decoder_forward.1} parent=11 // pred_region
        _
      $region32: #{decoder_forward.1} parent=11 // pred_fallthru
        _
      // Predicated region
      $region33: #{decoder_forward.1} parent=11 // pred_check
        %p319 = pneg %p221
      $region34: #{decoder_forward.1} parent=11 // pred_check_branch
        %321 = sbr.rel (%p319) target = $region36
      $region35: #{decoder_forward.1} parent=11 // pred_region
        _
      $region36: #{decoder_forward.1} parent=11 // pred_fallthru
        _
      // Predicated region
      $region37: #{decoder_forward.1} parent=11 // pred_check
        %p322 = pneg %p242
      $region38: #{decoder_forward.1} parent=11 // pred_check_branch
        %324 = sbr.rel (%p322) target = $region40
      $region39: #{decoder_forward.1} parent=11 // pred_region
        _
      $region40: #{decoder_forward.1} parent=11 // pred_fallthru
        _
      // Predicated region
      $region41: #{decoder_forward.1} parent=11 // pred_check
        %p325 = pneg %p263
      $region42: #{decoder_forward.1} parent=11 // pred_check_branch
        %327 = sbr.rel (%p325) target = $region44
      $region43: #{decoder_forward.1} parent=11 // pred_region
        _
      $region44: #{decoder_forward.1} parent=11 // pred_fallthru
        _
    $region12: #{decoder_forward.1} parent=5 // pred_fallthru
      _
    %p328 = scmp.lt.s32.totalorder %s17, 2
    // Predicated region
    $region45: #{decoder_forward.1} parent=5 // pred_check
      %p329 = pneg %p328
    $region46: #{decoder_forward.1} parent=5 // pred_check_branch
      %331 = sbr.rel (%p329) target = $region48
    $region47: #{decoder_forward.1} parent=5 // pred_region
      // Predicated region
      $region49: #{decoder_forward.1} parent=47 // pred_check
        %p332 = pneg %p37
      $region50: #{decoder_forward.1} parent=47 // pred_check_branch
        %334 = sbr.rel (%p332) target = $region52
      $region51: #{decoder_forward.1} parent=47 // pred_region
        %p335 = scmp.lt.s32.totalorder %s17, 1
        %s336 = scalar_select %p335, %s17, 1
        %s337 = smul.addr %s336, 32
        %s338 = smul.addr %s337, 4
        %s339 = scalar_lea.vmem %s0, %s338
      $region52: #{decoder_forward.1} parent=47 // pred_fallthru
        _
      // Predicated region
      $region53: #{decoder_forward.1} parent=47 // pred_check
        %p340 = pneg %p63
      $region54: #{decoder_forward.1} parent=47 // pred_check_branch
        %342 = sbr.rel (%p340) target = $region56
      $region55: #{decoder_forward.1} parent=47 // pred_region
        %p343 = scmp.lt.s32.totalorder %s17, 1
        %s344 = scalar_select %p343, %s17, 1
        %s345 = smul.addr %s344, 32
        %s346 = smul.addr %s345, 4
        %s347 = scalar_lea.vmem %s1, %s346
      $region56: #{decoder_forward.1} parent=47 // pred_fallthru
        _
      // Predicated region
      $region57: #{decoder_forward.1} parent=47 // pred_check
        %p348 = pneg %p89
      $region58: #{decoder_forward.1} parent=47 // pred_check_branch
        %350 = sbr.rel (%p348) target = $region60
      $region59: #{decoder_forward.1} parent=47 // pred_region
        %p351 = scmp.lt.s32.totalorder %s17, 1
        %s352 = scalar_select %p351, %s17, 1
        %s353 = smul.addr %s352, 32
        %s354 = smul.addr %s353, 4
        %s355 = scalar_lea.vmem %s2, %s354
      $region60: #{decoder_forward.1} parent=47 // pred_fallthru
        _
    $region48: #{decoder_forward.1} parent=5 // pred_fallthru
      _
    %p356 = scmp.le.s32.totalorder 1, %s17
    %p357 = scmp.lt.s32.totalorder %s17, 3
    %p358 = pnand %p356, %p357
    %p359 = pneg %p358
    // Predicated region
    $region61: #{decoder_forward.1} parent=5 // pred_check
      _
    $region62: #{decoder_forward.1} parent=5 // pred_check_branch
      %361 = sbr.rel (%p358) target = $region64
    $region63: #{decoder_forward.1} parent=5 // pred_region
      %s362 = ssub.s32 %s17, 1
      %p363 = scmp.lt.s32.totalorder %s22, 1
      %s364 = scalar_select %p363, %s22, 1
      %s365 = smul.addr %s364, 32
      %s366 = smul.addr %s365, 4
      %s367 = scalar_lea.vmem %s0, %s366
      %p368 = pneg %p43
      %p369 = pneg %p40
      %p370 = scmp.lt.s32.totalorder %s22, 1
      %s371 = scalar_select %p370, %s22, 1
      %s372 = smul.addr %s371, 32
      %s373 = smul.addr %s372, 4
      %s374 = scalar_lea.vmem %s1, %s373
      %p375 = pneg %p69
      %p376 = pneg %p66
      %p377 = scmp.lt.s32.totalorder %s22, 1
      %s378 = scalar_select %p377, %s22, 1
      %s379 = smul.addr %s378, 32
      %s380 = smul.addr %s379, 4
      %s381 = scalar_lea.vmem %s2, %s380
      %p382 = pneg %p95
      %p383 = pneg %p92
      %p384 = pneg %p116
      %p385 = pneg %p113
      %p386 = pneg %p137
      %p387 = pneg %p134
      %p388 = pneg %p158
      %p389 = pneg %p155
      %p390 = pneg %p179
      %p391 = pneg %p176
      %p392 = pneg %p200
      %p393 = pneg %p197
      %p394 = pneg %p221
      %p395 = pneg %p218
      %p396 = pneg %p242
      %p397 = pneg %p239
      %p398 = pneg %p263
      %p399 = pneg %p260
      %p400 = pneg %p289
      %p401 = pneg %p286
      %p402 = scmp.lt.s32.totalorder %s22, 1
      %s403 = scalar_select %p402, %s22, 1
      %s404 = smul.addr %s403, 32
      %s405 = smul.addr %s404, 4
      %s406 = scalar_lea.vmem %s11, %s405
      %p407 = scmp.lt.s32.totalorder %s22, 1
      %s408 = scalar_select %p407, %s22, 1
      %s409 = smul.addr %s408, 32
      %s410 = smul.addr %s409, 4
      %s411 = scalar_lea.vmem %s0, %s410
      %p412 = scmp.lt.s32.totalorder %s22, 1
      %s413 = scalar_select %p412, %s22, 1
      %s414 = smul.addr %s413, 32
      %s415 = smul.addr %s414, 4
      %s416 = scalar_lea.vmem %s1, %s415
      %p417 = scmp.lt.s32.totalorder %s22, 1
      %s418 = scalar_select %p417, %s22, 1
      %s419 = smul.addr %s418, 32
      %s420 = smul.addr %s419, 4
      %s421 = scalar_lea.vmem %s2, %s420
      %p422 = scmp.lt.s32.totalorder %s22, 1
      %s423 = scalar_select %p422, %s22, 1
      %s424 = smul.addr %s423, 32
      %s425 = smul.addr %s424, 4
      %s426 = scalar_lea.vmem %s11, %s425
      %vm430 = vcmask 130048
      %431 = vst.msk [vmem:[#allocation2] sm:$0xff] %vm430, 0
      %432 = vst.msk [vmem:[#allocation2 + $0x8] sm:$0xff] %vm430, 0
      %433 = vst.msk [vmem:[#allocation2 + $0x10] sm:$0xff] %vm430, 0
      %434 = vst.msk [vmem:[#allocation2 + $0x18] sm:$0xff] %vm430, 0
      %435 = vst.msk [vmem:[#allocation2 + $0x20] sm:$0xff] %vm430, 0
      %436 = vst.msk [vmem:[#allocation2 + $0x28] sm:$0xff] %vm430, 0
      %437 = vst.msk [vmem:[#allocation2 + $0x30] sm:$0xff] %vm430, 0
      %438 = vst.msk [vmem:[#allocation2 + $0x38] sm:$0xff] %vm430, 0
      %439 = vst.msk [vmem:[#allocation2 + $0x40] sm:$0xff] %vm430, 0
      %440 = vst.msk [vmem:[#allocation2 + $0x48] sm:$0xff] %vm430, 0
      %441 = vst.msk [vmem:[#allocation2 + $0x50] sm:$0xff] %vm430, 0
      %442 = vst.msk [vmem:[#allocation2 + $0x58] sm:$0xff] %vm430, 0
      %443 = vst.msk [vmem:[#allocation2 + $0x60] sm:$0xff] %vm430, 0
      %444 = vst.msk [vmem:[#allocation2 + $0x68] sm:$0xff] %vm430, 0
      %445 = vst.msk [vmem:[#allocation2 + $0x70] sm:$0xff] %vm430, 0
      %446 = vst.msk [vmem:[#allocation2 + $0x78] sm:$0xff] %vm430, 0
      %447 = vst.msk [vmem:[#allocation2 + $0x80] sm:$0xff] %vm430, 0
      %448 = vst.msk [vmem:[#allocation2 + $0x88] sm:$0xff] %vm430, 0
      %449 = vst.msk [vmem:[#allocation2 + $0x90] sm:$0xff] %vm430, 0
      %v450 = vlaneseq
      %v451 = vshrl.u32 %v450, 7
      %v452 = vadd.s32 %v451, 8
      %v453 = vadd.s32 %v451, 16
      %v454 = vadd.s32 %v451, 24
      %v455 = vadd.s32 %v451, 32
      %v456 = vadd.s32 %v451, 40
      %v457 = vadd.s32 %v451, 48
      %v458 = vadd.s32 %v451, 56
      %v459 = vadd.s32 %v451, 64
      %v460 = vadd.s32 %v451, 72
      %v461 = vadd.s32 %v451, 80
      %v462 = vadd.s32 %v451, 88
      %v463 = vadd.s32 %v451, 96
      %v464 = vadd.s32 %v451, 104
      %v465 = vadd.s32 %v451, 112
      %v466 = vadd.s32 %v451, 120
      %v467 = vadd.s32 %v451, 128
      %v468 = vadd.s32 %v451, 136
      %v469 = vadd.s32 %v451, 144
      %v470 = vadd.s32 %v451, 152
      %v471 = vadd.s32 %v451, 160
      %v472 = vadd.s32 %v451, 168
      %v473 = vadd.s32 %v451, 176
      %v474 = vadd.s32 %v451, 184
      %v475 = vadd.s32 %v451, 192
      %v476 = vadd.s32 %v451, 200
      %v477 = vadd.s32 %v451, 208
      %v478 = vadd.s32 %v451, 216
      %v479 = vadd.s32 %v451, 224
      %v480 = vadd.s32 %v451, 232
      %v481 = vadd.s32 %v451, 240
      %v482 = vadd.s32 %v451, 248
      %vm483 = vcmp.lt.s32.totalorder %v451, 0
      %v484 = vsub.s32 0, %v451
      %v485 = vsel %vm483, %v484, %v451
      %v486 = vshrl.u32 %v485, 4
      %v487 = vand.u32 %v485, 15
      %v488 = vsub.s32 0, %v487
      %v489 = vsel %vm483, %v488, %v487
      %vm490 = vcmp.lt.s32.totalorder %v452, 0
      %v491 = vsub.s32 0, %v452
      %v492 = vsel %vm490, %v491, %v452
      %v493 = vshrl.u32 %v492, 4
      %v494 = vand.u32 %v492, 15
      %v495 = vsub.s32 0, %v494
      %v496 = vsel %vm490, %v495, %v494
      %vm497 = vcmp.lt.s32.totalorder %v453, 0
      %v498 = vsub.s32 0, %v453
      %v499 = vsel %vm497, %v498, %v453
      %v500 = vshrl.u32 %v499, 4
      %v501 = vand.u32 %v499, 15
      %v502 = vsub.s32 0, %v501
      %v503 = vsel %vm497, %v502, %v501
      %vm504 = vcmp.lt.s32.totalorder %v454, 0
      %v505 = vsub.s32 0, %v454
      %v506 = vsel %vm504, %v505, %v454
      %v507 = vshrl.u32 %v506, 4
      %v508 = vand.u32 %v506, 15
      %v509 = vsub.s32 0, %v508
      %v510 = vsel %vm504, %v509, %v508
      %vm511 = vcmp.lt.s32.totalorder %v455, 0
      %v512 = vsub.s32 0, %v455
      %v513 = vsel %vm511, %v512, %v455
      %v514 = vshrl.u32 %v513, 4
      %v515 = vand.u32 %v513, 15
      %v516 = vsub.s32 0, %v515
      %v517 = vsel %vm511, %v516, %v515
      %vm518 = vcmp.lt.s32.totalorder %v456, 0
      %v519 = vsub.s32 0, %v456
      %v520 = vsel %vm518, %v519, %v456
      %v521 = vshrl.u32 %v520, 4
      %v522 = vand.u32 %v520, 15
      %v523 = vsub.s32 0, %v522
      %v524 = vsel %vm518, %v523, %v522
      %vm525 = vcmp.lt.s32.totalorder %v457, 0
      %v526 = vsub.s32 0, %v457
      %v527 = vsel %vm525, %v526, %v457
      %v528 = vshrl.u32 %v527, 4
      %v529 = vand.u32 %v527, 15
      %v530 = vsub.s32 0, %v529
      %v531 = vsel %vm525, %v530, %v529
      %vm532 = vcmp.lt.s32.totalorder %v458, 0
      %v533 = vsub.s32 0, %v458
      %v534 = vsel %vm532, %v533, %v458
      %v535 = vshrl.u32 %v534, 4
      %v536 = vand.u32 %v534, 15
      %v537 = vsub.s32 0, %v536
      %v538 = vsel %vm532, %v537, %v536
      %vm539 = vcmp.lt.s32.totalorder %v459, 0
      %v540 = vsub.s32 0, %v459
      %v541 = vsel %vm539, %v540, %v459
      %v542 = vshrl.u32 %v541, 4
      %v543 = vand.u32 %v541, 15
      %v544 = vsub.s32 0, %v543
      %v545 = vsel %vm539, %v544, %v543
      %vm546 = vcmp.lt.s32.totalorder %v460, 0
      %v547 = vsub.s32 0, %v460
      %v548 = vsel %vm546, %v547, %v460
      %v549 = vshrl.u32 %v548, 4
      %v550 = vand.u32 %v548, 15
      %v551 = vsub.s32 0, %v550
      %v552 = vsel %vm546, %v551, %v550
      %vm553 = vcmp.lt.s32.totalorder %v461, 0
      %v554 = vsub.s32 0, %v461
      %v555 = vsel %vm553, %v554, %v461
      %v556 = vshrl.u32 %v555, 4
      %v557 = vand.u32 %v555, 15
      %v558 = vsub.s32 0, %v557
      %v559 = vsel %vm553, %v558, %v557
      %vm560 = vcmp.lt.s32.totalorder %v462, 0
      %v561 = vsub.s32 0, %v462
      %v562 = vsel %vm560, %v561, %v462
      %v563 = vshrl.u32 %v562, 4
      %v564 = vand.u32 %v562, 15
      %v565 = vsub.s32 0, %v564
      %v566 = vsel %vm560, %v565, %v564
      %vm567 = vcmp.lt.s32.totalorder %v463, 0
      %v568 = vsub.s32 0, %v463
      %v569 = vsel %vm567, %v568, %v463
      %v570 = vshrl.u32 %v569, 4
      %v571 = vand.u32 %v569, 15
      %v572 = vsub.s32 0, %v571
      %v573 = vsel %vm567, %v572, %v571
      %vm574 = vcmp.lt.s32.totalorder %v464, 0
      %v575 = vsub.s32 0, %v464
      %v576 = vsel %vm574, %v575, %v464
      %v577 = vshrl.u32 %v576, 4
      %v578 = vand.u32 %v576, 15
      %v579 = vsub.s32 0, %v578
      %v580 = vsel %vm574, %v579, %v578
      %vm581 = vcmp.lt.s32.totalorder %v465, 0
      %v582 = vsub.s32 0, %v465
      %v583 = vsel %vm581, %v582, %v465
      %v584 = vshrl.u32 %v583, 4
      %v585 = vand.u32 %v583, 15
      %v586 = vsub.s32 0, %v585
      %v587 = vsel %vm581, %v586, %v585
      %vm588 = vcmp.lt.s32.totalorder %v466, 0
      %v589 = vsub.s32 0, %v466
      %v590 = vsel %vm588, %v589, %v466
      %v591 = vshrl.u32 %v590, 4
      %v592 = vand.u32 %v590, 15
      %v593 = vsub.s32 0, %v592
      %v594 = vsel %vm588, %v593, %v592
      %vm595 = vcmp.lt.s32.totalorder %v467, 0
      %v596 = vsub.s32 0, %v467
      %v597 = vsel %vm595, %v596, %v467
      %v598 = vshrl.u32 %v597, 4
      %v599 = vand.u32 %v597, 15
      %v600 = vsub.s32 0, %v599
      %v601 = vsel %vm595, %v600, %v599
      %vm602 = vcmp.lt.s32.totalorder %v468, 0
      %v603 = vsub.s32 0, %v468
      %v604 = vsel %vm602, %v603, %v468
      %v605 = vshrl.u32 %v604, 4
      %v606 = vand.u32 %v604, 15
      %v607 = vsub.s32 0, %v606
      %v608 = vsel %vm602, %v607, %v606
      %vm609 = vcmp.lt.s32.totalorder %v469, 0
      %v610 = vsub.s32 0, %v469
      %v611 = vsel %vm609, %v610, %v469
      %v612 = vshrl.u32 %v611, 4
      %v613 = vand.u32 %v611, 15
      %v614 = vsub.s32 0, %v613
      %v615 = vsel %vm609, %v614, %v613
      %vm616 = vcmp.lt.s32.totalorder %v470, 0
      %v617 = vsub.s32 0, %v470
      %v618 = vsel %vm616, %v617, %v470
      %v619 = vshrl.u32 %v618, 4
      %v620 = vand.u32 %v618, 15
      %v621 = vsub.s32 0, %v620
      %v622 = vsel %vm616, %v621, %v620
      %vm623 = vcmp.lt.s32.totalorder %v471, 0
      %v624 = vsub.s32 0, %v471
      %v625 = vsel %vm623, %v624, %v471
      %v626 = vshrl.u32 %v625, 4
      %v627 = vand.u32 %v625, 15
      %v628 = vsub.s32 0, %v627
      %v629 = vsel %vm623, %v628, %v627
      %vm630 = vcmp.lt.s32.totalorder %v472, 0
      %v631 = vsub.s32 0, %v472
      %v632 = vsel %vm630, %v631, %v472
      %v633 = vshrl.u32 %v632, 4
      %v634 = vand.u32 %v632, 15
      %v635 = vsub.s32 0, %v634
      %v636 = vsel %vm630, %v635, %v634
      %vm637 = vcmp.lt.s32.totalorder %v473, 0
      %v638 = vsub.s32 0, %v473
      %v639 = vsel %vm637, %v638, %v473
      %v640 = vshrl.u32 %v639, 4
      %v641 = vand.u32 %v639, 15
      %v642 = vsub.s32 0, %v641
      %v643 = vsel %vm637, %v642, %v641
      %vm644 = vcmp.lt.s32.totalorder %v474, 0
      %v645 = vsub.s32 0, %v474
      %v646 = vsel %vm644, %v645, %v474
      %v647 = vshrl.u32 %v646, 4
      %v648 = vand.u32 %v646, 15
      %v649 = vsub.s32 0, %v648
      %v650 = vsel %vm644, %v649, %v648
      %vm651 = vcmp.lt.s32.totalorder %v475, 0
      %v652 = vsub.s32 0, %v475
      %v653 = vsel %vm651, %v652, %v475
      %v654 = vshrl.u32 %v653, 4
      %v655 = vand.u32 %v653, 15
      %v656 = vsub.s32 0, %v655
      %v657 = vsel %vm651, %v656, %v655
      %vm658 = vcmp.lt.s32.totalorder %v476, 0
      %v659 = vsub.s32 0, %v476
      %v660 = vsel %vm658, %v659, %v476
      %v661 = vshrl.u32 %v660, 4
      %v662 = vand.u32 %v660, 15
      %v663 = vsub.s32 0, %v662
      %v664 = vsel %vm658, %v663, %v662
      %vm665 = vcmp.lt.s32.totalorder %v477, 0
      %v666 = vsub.s32 0, %v477
      %v667 = vsel %vm665, %v666, %v477
      %v668 = vshrl.u32 %v667, 4
      %v669 = vand.u32 %v667, 15
      %v670 = vsub.s32 0, %v669
      %v671 = vsel %vm665, %v670, %v669
      %vm672 = vcmp.lt.s32.totalorder %v478, 0
      %v673 = vsub.s32 0, %v478
      %v674 = vsel %vm672, %v673, %v478
      %v675 = vshrl.u32 %v674, 4
      %v676 = vand.u32 %v674, 15
      %v677 = vsub.s32 0, %v676
      %v678 = vsel %vm672, %v677, %v676
      %vm679 = vcmp.lt.s32.totalorder %v479, 0
      %v680 = vsub.s32 0, %v479
      %v681 = vsel %vm679, %v680, %v479
      %v682 = vshrl.u32 %v681, 4
      %v683 = vand.u32 %v681, 15
      %v684 = vsub.s32 0, %v683
      %v685 = vsel %vm679, %v684, %v683
      %vm686 = vcmp.lt.s32.totalorder %v480, 0
      %v687 = vsub.s32 0, %v480
      %v688 = vsel %vm686, %v687, %v480
      %v689 = vshrl.u32 %v688, 4
      %v690 = vand.u32 %v688, 15
      %v691 = vsub.s32 0, %v690
      %v692 = vsel %vm686, %v691, %v690
      %vm693 = vcmp.lt.s32.totalorder %v481, 0
      %v694 = vsub.s32 0, %v481
      %v695 = vsel %vm693, %v694, %v481
      %v696 = vshrl.u32 %v695, 4
      %v697 = vand.u32 %v695, 15
      %v698 = vsub.s32 0, %v697
      %v699 = vsel %vm693, %v698, %v697
      %vm700 = vcmp.lt.s32.totalorder %v482, 0
      %v701 = vsub.s32 0, %v482
      %v702 = vsel %vm700, %v701, %v482
      %v703 = vshrl.u32 %v702, 4
      %v704 = vand.u32 %v702, 15
      %v705 = vsub.s32 0, %v704
      %v706 = vsel %vm700, %v705, %v704
      %vm707 = vcmp.ne.s32.totalorder %v489, 0
      %vm708 = vcmp.ne.s32.totalorder %v496, 0
      %vm709 = vcmp.ne.s32.totalorder %v503, 0
      %vm710 = vcmp.ne.s32.totalorder %v510, 0
      %vm711 = vcmp.ne.s32.totalorder %v517, 0
      %vm712 = vcmp.ne.s32.totalorder %v524, 0
      %vm713 = vcmp.ne.s32.totalorder %v531, 0
      %vm714 = vcmp.ne.s32.totalorder %v538, 0
      %vm715 = vcmp.ne.s32.totalorder %v545, 0
      %vm716 = vcmp.ne.s32.totalorder %v552, 0
      %vm717 = vcmp.ne.s32.totalorder %v559, 0
      %vm718 = vcmp.ne.s32.totalorder %v566, 0
      %vm719 = vcmp.ne.s32.totalorder %v573, 0
      %vm720 = vcmp.ne.s32.totalorder %v580, 0
      %vm721 = vcmp.ne.s32.totalorder %v587, 0
      %vm722 = vcmp.ne.s32.totalorder %v594, 0
      %vm723 = vcmp.ne.s32.totalorder %v601, 0
      %vm724 = vcmp.ne.s32.totalorder %v608, 0
      %vm725 = vcmp.ne.s32.totalorder %v615, 0
      %vm726 = vcmp.ne.s32.totalorder %v622, 0
      %vm727 = vcmp.ne.s32.totalorder %v629, 0
      %vm728 = vcmp.ne.s32.totalorder %v636, 0
      %vm729 = vcmp.ne.s32.totalorder %v643, 0
      %vm730 = vcmp.ne.s32.totalorder %v650, 0
      %vm731 = vcmp.ne.s32.totalorder %v657, 0
      %vm732 = vcmp.ne.s32.totalorder %v664, 0
      %vm733 = vcmp.ne.s32.totalorder %v671, 0
      %vm734 = vcmp.ne.s32.totalorder %v678, 0
      %vm735 = vcmp.ne.s32.totalorder %v685, 0
      %vm736 = vcmp.ne.s32.totalorder %v692, 0
      %vm737 = vcmp.ne.s32.totalorder %v699, 0
      %vm738 = vcmp.ne.s32.totalorder %v706, 0
      %vm739 = vcmp.lt.s32.totalorder %v489, 0
      %vm740 = vcmp.lt.s32.totalorder %v496, 0
      %vm741 = vcmp.lt.s32.totalorder %v503, 0
      %vm742 = vcmp.lt.s32.totalorder %v510, 0
      %vm743 = vcmp.lt.s32.totalorder %v517, 0
      %vm744 = vcmp.lt.s32.totalorder %v524, 0
      %vm745 = vcmp.lt.s32.totalorder %v531, 0
      %vm746 = vcmp.lt.s32.totalorder %v538, 0
      %vm747 = vcmp.lt.s32.totalorder %v545, 0
      %vm748 = vcmp.lt.s32.totalorder %v552, 0
      %vm749 = vcmp.lt.s32.totalorder %v559, 0
      %vm750 = vcmp.lt.s32.totalorder %v566, 0
      %vm751 = vcmp.lt.s32.totalorder %v573, 0
      %vm752 = vcmp.lt.s32.totalorder %v580, 0
      %vm753 = vcmp.lt.s32.totalorder %v587, 0
      %vm754 = vcmp.lt.s32.totalorder %v594, 0
      %vm755 = vcmp.lt.s32.totalorder %v601, 0
      %vm756 = vcmp.lt.s32.totalorder %v608, 0
      %vm757 = vcmp.lt.s32.totalorder %v615, 0
      %vm758 = vcmp.lt.s32.totalorder %v622, 0
      %vm759 = vcmp.lt.s32.totalorder %v629, 0
      %vm760 = vcmp.lt.s32.totalorder %v636, 0
      %vm761 = vcmp.lt.s32.totalorder %v643, 0
      %vm762 = vcmp.lt.s32.totalorder %v650, 0
      %vm763 = vcmp.lt.s32.totalorder %v657, 0
      %vm764 = vcmp.lt.s32.totalorder %v664, 0
      %vm765 = vcmp.lt.s32.totalorder %v671, 0
      %vm766 = vcmp.lt.s32.totalorder %v678, 0
      %vm767 = vcmp.lt.s32.totalorder %v685, 0
      %vm768 = vcmp.lt.s32.totalorder %v692, 0
      %vm769 = vcmp.lt.s32.totalorder %v699, 0
      %vm770 = vcmp.lt.s32.totalorder %v706, 0
      %vm771 = vmand %vm739, %vm707
      %vm772 = vmand %vm740, %vm708
      %vm773 = vmand %vm741, %vm709
      %vm774 = vmand %vm742, %vm710
      %vm775 = vmand %vm743, %vm711
      %vm776 = vmand %vm744, %vm712
      %vm777 = vmand %vm745, %vm713
      %vm778 = vmand %vm746, %vm714
      %vm779 = vmand %vm747, %vm715
      %vm780 = vmand %vm748, %vm716
      %vm781 = vmand %vm749, %vm717
      %vm782 = vmand %vm750, %vm718
      %vm783 = vmand %vm751, %vm719
      %vm784 = vmand %vm752, %vm720
      %vm785 = vmand %vm753, %vm721
      %vm786 = vmand %vm754, %vm722
      %vm787 = vmand %vm755, %vm723
      %vm788 = vmand %vm756, %vm724
      %vm789 = vmand %vm757, %vm725
      %vm790 = vmand %vm758, %vm726
      %vm791 = vmand %vm759, %vm727
      %vm792 = vmand %vm760, %vm728
      %vm793 = vmand %vm761, %vm729
      %vm794 = vmand %vm762, %vm730
      %vm795 = vmand %vm763, %vm731
      %vm796 = vmand %vm764, %vm732
      %vm797 = vmand %vm765, %vm733
      %vm798 = vmand %vm766, %vm734
      %vm799 = vmand %vm767, %vm735
      %vm800 = vmand %vm768, %vm736
      %vm801 = vmand %vm769, %vm737
      %vm802 = vmand %vm770, %vm738
      %v803 = vadd.s32 %v489, 16
      %v804 = vadd.s32 %v496, 16
      %v805 = vadd.s32 %v503, 16
      %v806 = vadd.s32 %v510, 16
      %v807 = vadd.s32 %v517, 16
      %v808 = vadd.s32 %v524, 16
      %v809 = vadd.s32 %v531, 16
      %v810 = vadd.s32 %v538, 16
      %v811 = vadd.s32 %v545, 16
      %v812 = vadd.s32 %v552, 16
      %v813 = vadd.s32 %v559, 16
      %v814 = vadd.s32 %v566, 16
      %v815 = vadd.s32 %v573, 16
      %v816 = vadd.s32 %v580, 16
      %v817 = vadd.s32 %v587, 16
      %v818 = vadd.s32 %v594, 16
      %v819 = vadd.s32 %v601, 16
      %v820 = vadd.s32 %v608, 16
      %v821 = vadd.s32 %v615, 16
      %v822 = vadd.s32 %v622, 16
      %v823 = vadd.s32 %v629, 16
      %v824 = vadd.s32 %v636, 16
      %v825 = vadd.s32 %v643, 16
      %v826 = vadd.s32 %v650, 16
      %v827 = vadd.s32 %v657, 16
      %v828 = vadd.s32 %v664, 16
      %v829 = vadd.s32 %v671, 16
      %v830 = vadd.s32 %v678, 16
      %v831 = vadd.s32 %v685, 16
      %v832 = vadd.s32 %v692, 16
      %v833 = vadd.s32 %v699, 16
      %v834 = vadd.s32 %v706, 16
      %v835 = vsel %vm771, %v803, %v489
      %v836 = vsel %vm772, %v804, %v496
      %v837 = vsel %vm773, %v805, %v503
      %v838 = vsel %vm774, %v806, %v510
      %v839 = vsel %vm775, %v807, %v517
      %v840 = vsel %vm776, %v808, %v524
      %v841 = vsel %vm777, %v809, %v531
      %v842 = vsel %vm778, %v810, %v538
      %v843 = vsel %vm779, %v811, %v545
      %v844 = vsel %vm780, %v812, %v552
      %v845 = vsel %vm781, %v813, %v559
      %v846 = vsel %vm782, %v814, %v566
      %v847 = vsel %vm783, %v815, %v573
      %v848 = vsel %vm784, %v816, %v580
      %v849 = vsel %vm785, %v817, %v587
      %v850 = vsel %vm786, %v818, %v594
      %v851 = vsel %vm787, %v819, %v601
      %v852 = vsel %vm788, %v820, %v608
      %v853 = vsel %vm789, %v821, %v615
      %v854 = vsel %vm790, %v822, %v622
      %v855 = vsel %vm791, %v823, %v629
      %v856 = vsel %vm792, %v824, %v636
      %v857 = vsel %vm793, %v825, %v643
      %v858 = vsel %vm794, %v826, %v650
      %v859 = vsel %vm795, %v827, %v657
      %v860 = vsel %vm796, %v828, %v664
      %v861 = vsel %vm797, %v829, %v671
      %v862 = vsel %vm798, %v830, %v678
      %v863 = vsel %vm799, %v831, %v685
      %v864 = vsel %vm800, %v832, %v692
      %v865 = vsel %vm801, %v833, %v699
      %v866 = vsel %vm802, %v834, %v706
      %vm867 = vcmp.gt.s32.totalorder %v835, 0
      %vm868 = vcmp.gt.s32.totalorder %v836, 0
      %vm869 = vcmp.gt.s32.totalorder %v837, 0
      %vm870 = vcmp.gt.s32.totalorder %v838, 0
      %vm871 = vcmp.gt.s32.totalorder %v839, 0
      %vm872 = vcmp.gt.s32.totalorder %v840, 0
      %vm873 = vcmp.gt.s32.totalorder %v841, 0
      %vm874 = vcmp.gt.s32.totalorder %v842, 0
      %vm875 = vcmp.gt.s32.totalorder %v843, 0
      %vm876 = vcmp.gt.s32.totalorder %v844, 0
      %vm877 = vcmp.gt.s32.totalorder %v845, 0
      %vm878 = vcmp.gt.s32.totalorder %v846, 0
      %vm879 = vcmp.gt.s32.totalorder %v847, 0
      %vm880 = vcmp.gt.s32.totalorder %v848, 0
      %vm881 = vcmp.gt.s32.totalorder %v849, 0
      %vm882 = vcmp.gt.s32.totalorder %v850, 0
      %vm883 = vcmp.gt.s32.totalorder %v851, 0
      %vm884 = vcmp.gt.s32.totalorder %v852, 0
      %vm885 = vcmp.gt.s32.totalorder %v853, 0
      %vm886 = vcmp.gt.s32.totalorder %v854, 0
      %vm887 = vcmp.gt.s32.totalorder %v855, 0
      %vm888 = vcmp.gt.s32.totalorder %v856, 0
      %vm889 = vcmp.gt.s32.totalorder %v857, 0
      %vm890 = vcmp.gt.s32.totalorder %v858, 0
      %vm891 = vcmp.gt.s32.totalorder %v859, 0
      %vm892 = vcmp.gt.s32.totalorder %v860, 0
      %vm893 = vcmp.gt.s32.totalorder %v861, 0
      %vm894 = vcmp.gt.s32.totalorder %v862, 0
      %vm895 = vcmp.gt.s32.totalorder %v863, 0
      %vm896 = vcmp.gt.s32.totalorder %v864, 0
      %vm897 = vcmp.gt.s32.totalorder %v865, 0
      %vm898 = vcmp.gt.s32.totalorder %v866, 0
      %vm899 = vcmp.lt.s32.totalorder %v835, 15
      %vm900 = vcmp.lt.s32.totalorder %v836, 15
      %vm901 = vcmp.lt.s32.totalorder %v837, 15
      %vm902 = vcmp.lt.s32.totalorder %v838, 15
      %vm903 = vcmp.lt.s32.totalorder %v839, 15
      %vm904 = vcmp.lt.s32.totalorder %v840, 15
      %vm905 = vcmp.lt.s32.totalorder %v841, 15
      %vm906 = vcmp.lt.s32.totalorder %v842, 15
      %vm907 = vcmp.lt.s32.totalorder %v843, 15
      %vm908 = vcmp.lt.s32.totalorder %v844, 15
      %vm909 = vcmp.lt.s32.totalorder %v845, 15
      %vm910 = vcmp.lt.s32.totalorder %v846, 15
      %vm911 = vcmp.lt.s32.totalorder %v847, 15
      %vm912 = vcmp.lt.s32.totalorder %v848, 15
      %vm913 = vcmp.lt.s32.totalorder %v849, 15
      %vm914 = vcmp.lt.s32.totalorder %v850, 15
      %vm915 = vcmp.lt.s32.totalorder %v851, 15
      %vm916 = vcmp.lt.s32.totalorder %v852, 15
      %vm917 = vcmp.lt.s32.totalorder %v853, 15
      %vm918 = vcmp.lt.s32.totalorder %v854, 15
      %vm919 = vcmp.lt.s32.totalorder %v855, 15
      %vm920 = vcmp.lt.s32.totalorder %v856, 15
      %vm921 = vcmp.lt.s32.totalorder %v857, 15
      %vm922 = vcmp.lt.s32.totalorder %v858, 15
      %vm923 = vcmp.lt.s32.totalorder %v859, 15
      %vm924 = vcmp.lt.s32.totalorder %v860, 15
      %vm925 = vcmp.lt.s32.totalorder %v861, 15
      %vm926 = vcmp.lt.s32.totalorder %v862, 15
      %vm927 = vcmp.lt.s32.totalorder %v863, 15
      %vm928 = vcmp.lt.s32.totalorder %v864, 15
      %vm929 = vcmp.lt.s32.totalorder %v865, 15
      %vm930 = vcmp.lt.s32.totalorder %v866, 15
      %v931 = vld [vmem:[%s411] sm:$0xf]
      %v932 = vld [vmem:[%s411 + $0x4] sm:$0xf]
      %v933 = vld [vmem:[%s411 + $0x8] sm:$0xf]
      %v934 = vld [vmem:[%s411 + $0xc] sm:$0xf]
      %v935 = vld [vmem:[%s411 + $0x10] sm:$0xf]
      %v936 = vld [vmem:[%s411 + $0x14] sm:$0xf]
      %v937 = vld [vmem:[%s411 + $0x18] sm:$0xf]
      %v938 = vld [vmem:[%s411 + $0x1c] sm:$0xf]
      %v939 = vld [vmem:[%s411 + $0x20] sm:$0xf]
      %v940 = vld [vmem:[%s411 + $0x24] sm:$0xf]
      %v941 = vld [vmem:[%s411 + $0x28] sm:$0xf]
      %v942 = vld [vmem:[%s411 + $0x2c] sm:$0xf]
      %v943 = vld [vmem:[%s411 + $0x30] sm:$0xf]
      %v944 = vld [vmem:[%s411 + $0x34] sm:$0xf]
      %v945 = vld [vmem:[%s411 + $0x38] sm:$0xf]
      %v946 = vld [vmem:[%s411 + $0x3c] sm:$0xf]
      %v947 = vld [vmem:[%s411 + $0x40] sm:$0xf]
      %v948 = vld [vmem:[%s411 + $0x44] sm:$0xf]
      %v949 = vld [vmem:[%s411 + $0x48] sm:$0xf]
      %v950 = vld [vmem:[%s411 + $0x4c] sm:$0xf]
      %v951 = vld [vmem:[%s411 + $0x50] sm:$0xf]
      %v952 = vld [vmem:[%s411 + $0x54] sm:$0xf]
      %v953 = vld [vmem:[%s411 + $0x58] sm:$0xf]
      %v954 = vld [vmem:[%s411 + $0x5c] sm:$0xf]
      %v955 = vld [vmem:[%s411 + $0x60] sm:$0xf]
      %v956 = vld [vmem:[%s411 + $0x64] sm:$0xf]
      %v957 = vld [vmem:[%s411 + $0x68] sm:$0xf]
      %v958 = vld [vmem:[%s411 + $0x6c] sm:$0xf]
      %v959 = vld [vmem:[%s411 + $0x70] sm:$0xf]
      %v960 = vld [vmem:[%s411 + $0x74] sm:$0xf]
      %v961 = vld [vmem:[%s411 + $0x78] sm:$0xf]
      %v962 = vld [vmem:[%s411 + $0x7c] sm:$0xf]
      %v963 = vld [vmem:[%s416] sm:$0xf]
      %v964 = vld [vmem:[%s416 + $0x4] sm:$0xf]
      %v965 = vld [vmem:[%s416 + $0x8] sm:$0xf]
      %v966 = vld [vmem:[%s416 + $0xc] sm:$0xf]
      %v967 = vld [vmem:[%s416 + $0x10] sm:$0xf]
      %v968 = vld [vmem:[%s416 + $0x14] sm:$0xf]
      %v969 = vld [vmem:[%s416 + $0x18] sm:$0xf]
      %v970 = vld [vmem:[%s416 + $0x1c] sm:$0xf]
      %v971 = vld [vmem:[%s416 + $0x20] sm:$0xf]
      %v972 = vld [vmem:[%s416 + $0x24] sm:$0xf]
      %v973 = vld [vmem:[%s416 + $0x28] sm:$0xf]
      %v974 = vld [vmem:[%s416 + $0x2c] sm:$0xf]
      %v975 = vld [vmem:[%s416 + $0x30] sm:$0xf]
      %v976 = vld [vmem:[%s416 + $0x34] sm:$0xf]
      %v977 = vld [vmem:[%s416 + $0x38] sm:$0xf]
      %v978 = vld [vmem:[%s416 + $0x3c] sm:$0xf]
      %v979 = vld [vmem:[%s416 + $0x40] sm:$0xf]
      %v980 = vld [vmem:[%s416 + $0x44] sm:$0xf]
      %v981 = vld [vmem:[%s416 + $0x48] sm:$0xf]
      %v982 = vld [vmem:[%s416 + $0x4c] sm:$0xf]
      %v983 = vld [vmem:[%s416 + $0x50] sm:$0xf]
      %v984 = vld [vmem:[%s416 + $0x54] sm:$0xf]
      %v985 = vld [vmem:[%s416 + $0x58] sm:$0xf]
      %v986 = vld [vmem:[%s416 + $0x5c] sm:$0xf]
      %v987 = vld [vmem:[%s416 + $0x60] sm:$0xf]
      %v988 = vld [vmem:[%s416 + $0x64] sm:$0xf]
      %v989 = vld [vmem:[%s416 + $0x68] sm:$0xf]
      %v990 = vld [vmem:[%s416 + $0x6c] sm:$0xf]
      %v991 = vld [vmem:[%s416 + $0x70] sm:$0xf]
      %v992 = vld [vmem:[%s416 + $0x74] sm:$0xf]
      %v993 = vld [vmem:[%s416 + $0x78] sm:$0xf]
      %v994 = vld [vmem:[%s416 + $0x7c] sm:$0xf]
      %v1027 = vunpack.c.l.b16 %v931
      %v1028 = vunpack.c.l.b16 %v932
      %v1029 = vunpack.c.l.b16 %v933
      %v1030 = vunpack.c.l.b16 %v934
      %v1031 = vunpack.c.l.b16 %v935
      %v1032 = vunpack.c.l.b16 %v936
      %v1033 = vunpack.c.l.b16 %v937
      %v1034 = vunpack.c.l.b16 %v938
      %v1035 = vunpack.c.l.b16 %v939
      %v1036 = vunpack.c.l.b16 %v940
      %v1037 = vunpack.c.l.b16 %v941
      %v1038 = vunpack.c.l.b16 %v942
      %v1039 = vunpack.c.l.b16 %v943
      %v1040 = vunpack.c.l.b16 %v944
      %v1041 = vunpack.c.l.b16 %v945
      %v1042 = vunpack.c.l.b16 %v946
      %v1043 = vunpack.c.l.b16 %v947
      %v1044 = vunpack.c.l.b16 %v948
      %v1045 = vunpack.c.l.b16 %v949
      %v1046 = vunpack.c.l.b16 %v950
      %v1047 = vunpack.c.l.b16 %v951
      %v1048 = vunpack.c.l.b16 %v952
      %v1049 = vunpack.c.l.b16 %v953
      %v1050 = vunpack.c.l.b16 %v954
      %v1051 = vunpack.c.l.b16 %v955
      %v1052 = vunpack.c.l.b16 %v956
      %v1053 = vunpack.c.l.b16 %v957
      %v1054 = vunpack.c.l.b16 %v958
      %v1055 = vunpack.c.l.b16 %v959
      %v1056 = vunpack.c.l.b16 %v960
      %v1057 = vunpack.c.l.b16 %v961
      %v1058 = vunpack.c.l.b16 %v962
      %v1059 = vpack.c.b16 %v1028, %v1027
      %v1060 = vpack.c.b16 %v1030, %v1029
      %v1061 = vpack.c.b16 %v1032, %v1031
      %v1062 = vpack.c.b16 %v1034, %v1033
      %v1063 = vpack.c.b16 %v1036, %v1035
      %v1064 = vpack.c.b16 %v1038, %v1037
      %v1065 = vpack.c.b16 %v1040, %v1039
      %v1066 = vpack.c.b16 %v1042, %v1041
      %v1067 = vpack.c.b16 %v1044, %v1043
      %v1068 = vpack.c.b16 %v1046, %v1045
      %v1069 = vpack.c.b16 %v1048, %v1047
      %v1070 = vpack.c.b16 %v1050, %v1049
      %v1071 = vpack.c.b16 %v1052, %v1051
      %v1072 = vpack.c.b16 %v1054, %v1053
      %v1073 = vpack.c.b16 %v1056, %v1055
      %v1074 = vpack.c.b16 %v1058, %v1057
      %v1107 = vunpack.c.l.b16 %v963
      %v1108 = vunpack.c.l.b16 %v964
      %v1109 = vunpack.c.l.b16 %v965
      %v1110 = vunpack.c.l.b16 %v966
      %v1111 = vunpack.c.l.b16 %v967
      %v1112 = vunpack.c.l.b16 %v968
      %v1113 = vunpack.c.l.b16 %v969
      %v1114 = vunpack.c.l.b16 %v970
      %v1115 = vunpack.c.l.b16 %v971
      %v1116 = vunpack.c.l.b16 %v972
      %v1117 = vunpack.c.l.b16 %v973
      %v1118 = vunpack.c.l.b16 %v974
      %v1119 = vunpack.c.l.b16 %v975
      %v1120 = vunpack.c.l.b16 %v976
      %v1121 = vunpack.c.l.b16 %v977
      %v1122 = vunpack.c.l.b16 %v978
      %v1123 = vunpack.c.l.b16 %v979
      %v1124 = vunpack.c.l.b16 %v980
      %v1125 = vunpack.c.l.b16 %v981
      %v1126 = vunpack.c.l.b16 %v982
      %v1127 = vunpack.c.l.b16 %v983
      %v1128 = vunpack.c.l.b16 %v984
      %v1129 = vunpack.c.l.b16 %v985
      %v1130 = vunpack.c.l.b16 %v986
      %v1131 = vunpack.c.l.b16 %v987
      %v1132 = vunpack.c.l.b16 %v988
      %v1133 = vunpack.c.l.b16 %v989
      %v1134 = vunpack.c.l.b16 %v990
      %v1135 = vunpack.c.l.b16 %v991
      %v1136 = vunpack.c.l.b16 %v992
      %v1137 = vunpack.c.l.b16 %v993
      %v1138 = vunpack.c.l.b16 %v994
      %v1139 = vpack.c.b16 %v1108, %v1107
      %v1140 = vpack.c.b16 %v1110, %v1109
      %v1141 = vpack.c.b16 %v1112, %v1111
      %v1142 = vpack.c.b16 %v1114, %v1113
      %v1143 = vpack.c.b16 %v1116, %v1115
      %v1144 = vpack.c.b16 %v1118, %v1117
      %v1145 = vpack.c.b16 %v1120, %v1119
      %v1146 = vpack.c.b16 %v1122, %v1121
      %v1147 = vpack.c.b16 %v1124, %v1123
      %v1148 = vpack.c.b16 %v1126, %v1125
      %v1149 = vpack.c.b16 %v1128, %v1127
      %v1150 = vpack.c.b16 %v1130, %v1129
      %v1151 = vpack.c.b16 %v1132, %v1131
      %v1152 = vpack.c.b16 %v1134, %v1133
      %v1153 = vpack.c.b16 %v1136, %v1135
      %v1154 = vpack.c.b16 %v1138, %v1137
      %1155 = vrot.lane.b32.xlu0 %v1139, 4
      %v1156 = vpop.permute.xlu0 %1155
      %1157 = vrot.lane.b32.xlu0 %v1140, 4
      %v1158 = vpop.permute.xlu0 %1157
      %1159 = vrot.lane.b32.xlu0 %v1141, 4
      %v1160 = vpop.permute.xlu0 %1159
      %1161 = vrot.lane.b32.xlu0 %v1142, 4
      %v1162 = vpop.permute.xlu0 %1161
      %1163 = vrot.lane.b32.xlu0 %v1143, 4
      %v1164 = vpop.permute.xlu0 %1163
      %1165 = vrot.lane.b32.xlu0 %v1144, 4
      %v1166 = vpop.permute.xlu0 %1165
      %1167 = vrot.lane.b32.xlu0 %v1145, 4
      %v1168 = vpop.permute.xlu0 %1167
      %1169 = vrot.lane.b32.xlu0 %v1146, 4
      %v1170 = vpop.permute.xlu0 %1169
      %1171 = vrot.lane.b32.xlu0 %v1147, 4
      %v1172 = vpop.permute.xlu0 %1171
      %1173 = vrot.lane.b32.xlu0 %v1148, 4
      %v1174 = vpop.permute.xlu0 %1173
      %1175 = vrot.lane.b32.xlu0 %v1149, 4
      %v1176 = vpop.permute.xlu0 %1175
      %1177 = vrot.lane.b32.xlu0 %v1150, 4
      %v1178 = vpop.permute.xlu0 %1177
      %1179 = vrot.lane.b32.xlu0 %v1151, 4
      %v1180 = vpop.permute.xlu0 %1179
      %1181 = vrot.lane.b32.xlu0 %v1152, 4
      %v1182 = vpop.permute.xlu0 %1181
      %1183 = vrot.lane.b32.xlu0 %v1153, 4
      %v1184 = vpop.permute.xlu0 %1183
      %1185 = vrot.lane.b32.xlu0 %v1154, 4
      %v1186 = vpop.permute.xlu0 %1185
      %vm1187 = vcmask 31744
      %v1190 = vsel %vm1187, %v1059, %v1156
      %v1193 = vsel %vm1187, %v1060, %v1158
      %v1196 = vsel %vm1187, %v1061, %v1160
      %v1199 = vsel %vm1187, %v1062, %v1162
      %v1202 = vsel %vm1187, %v1063, %v1164
      %v1205 = vsel %vm1187, %v1064, %v1166
      %v1208 = vsel %vm1187, %v1065, %v1168
      %v1211 = vsel %vm1187, %v1066, %v1170
      %v1214 = vsel %vm1187, %v1067, %v1172
      %v1217 = vsel %vm1187, %v1068, %v1174
      %v1220 = vsel %vm1187, %v1069, %v1176
      %v1223 = vsel %vm1187, %v1070, %v1178
      %v1226 = vsel %vm1187, %v1071, %v1180
      %v1229 = vsel %vm1187, %v1072, %v1182
      %v1232 = vsel %vm1187, %v1073, %v1184
      %v1235 = vsel %vm1187, %v1074, %v1186
      %vm1252 = vcmask 1043456
      %v1253 = vrot.slane %v1190, 4
      %v1254 = vrot.slane %v1193, 4
      %v1255 = vsel %vm1252, %v1253, %v1254
      %v1256 = vrot.slane %v1196, 4
      %v1257 = vsel %vm1252, %v1254, %v1256
      %v1258 = vrot.slane %v1199, 4
      %v1259 = vsel %vm1252, %v1256, %v1258
      %v1260 = vrot.slane %v1202, 4
      %v1261 = vsel %vm1252, %v1258, %v1260
      %v1262 = vrot.slane %v1205, 4
      %v1263 = vsel %vm1252, %v1260, %v1262
      %v1264 = vrot.slane %v1208, 4
      %v1265 = vsel %vm1252, %v1262, %v1264
      %v1266 = vrot.slane %v1211, 4
      %v1267 = vsel %vm1252, %v1264, %v1266
      %v1268 = vrot.slane %v1214, 4
      %v1269 = vsel %vm1252, %v1266, %v1268
      %v1270 = vrot.slane %v1217, 4
      %v1271 = vsel %vm1252, %v1268, %v1270
      %v1272 = vrot.slane %v1220, 4
      %v1273 = vsel %vm1252, %v1270, %v1272
      %v1274 = vrot.slane %v1223, 4
      %v1275 = vsel %vm1252, %v1272, %v1274
      %v1276 = vrot.slane %v1226, 4
      %v1277 = vsel %vm1252, %v1274, %v1276
      %v1278 = vrot.slane %v1229, 4
      %v1279 = vsel %vm1252, %v1276, %v1278
      %v1280 = vrot.slane %v1232, 4
      %v1281 = vsel %vm1252, %v1278, %v1280
      %v1282 = vrot.slane %v1235, 4
      %v1283 = vsel %vm1252, %v1280, %v1282
      %vm1301 = vcmask 64516
      %1302 = vst.msk [vmem:[#allocation2 + $0x8] sm:$0xf0] %vm1301, %v1253
      %vm1303 = vcmask 64512
      %1304 = vst.msk [vmem:[#allocation2 + $0x10] sm:$0xff] %vm1303, %v1255
      %1305 = vst.msk [vmem:[#allocation2 + $0x18] sm:$0xff] %vm1303, %v1257
      %1306 = vst.msk [vmem:[#allocation2 + $0x20] sm:$0xff] %vm1303, %v1259
      %1307 = vst.msk [vmem:[#allocation2 + $0x28] sm:$0xff] %vm1303, %v1261
      %1308 = vst.msk [vmem:[#allocation2 + $0x30] sm:$0xff] %vm1303, %v1263
      %1309 = vst.msk [vmem:[#allocation2 + $0x38] sm:$0xff] %vm1303, %v1265
      %1310 = vst.msk [vmem:[#allocation2 + $0x40] sm:$0xff] %vm1303, %v1267
      %1311 = vst.msk [vmem:[#allocation2 + $0x48] sm:$0xff] %vm1303, %v1269
      %1312 = vst.msk [vmem:[#allocation2 + $0x50] sm:$0xff] %vm1303, %v1271
      %1313 = vst.msk [vmem:[#allocation2 + $0x58] sm:$0xff] %vm1303, %v1273
      %1314 = vst.msk [vmem:[#allocation2 + $0x60] sm:$0xff] %vm1303, %v1275
      %1315 = vst.msk [vmem:[#allocation2 + $0x68] sm:$0xff] %vm1303, %v1277
      %1316 = vst.msk [vmem:[#allocation2 + $0x70] sm:$0xff] %vm1303, %v1279
      %1317 = vst.msk [vmem:[#allocation2 + $0x78] sm:$0xff] %vm1303, %v1281
      %1318 = vst.msk [vmem:[#allocation2 + $0x80] sm:$0xff] %vm1303, %v1283
      %vm1319 = vcmask 60416
      %1320 = vst.msk [vmem:[#allocation2 + $0x88] sm:$0xf] %vm1319, %v1282
      %v1321 = vld [vmem:[#allocation2] sm:$0xf8]
      %v1322 = vld [vmem:[#allocation2 + $0x8] sm:$0xff]
      %v1323 = vld [vmem:[#allocation2 + $0x10] sm:$0xff]
      %v1324 = vld [vmem:[#allocation2 + $0x18] sm:$0xff]
      %v1325 = vld [vmem:[#allocation2 + $0x20] sm:$0xff]
      %v1326 = vld [vmem:[#allocation2 + $0x28] sm:$0xff]
      %v1327 = vld [vmem:[#allocation2 + $0x30] sm:$0xff]
      %v1328 = vld [vmem:[#allocation2 + $0x38] sm:$0xff]
      %v1329 = vld [vmem:[#allocation2 + $0x40] sm:$0xff]
      %v1330 = vld [vmem:[#allocation2 + $0x48] sm:$0xff]
      %v1331 = vld [vmem:[#allocation2 + $0x50] sm:$0xff]
      %v1332 = vld [vmem:[#allocation2 + $0x58] sm:$0xff]
      %v1333 = vld [vmem:[#allocation2 + $0x60] sm:$0xff]
      %v1334 = vld [vmem:[#allocation2 + $0x68] sm:$0xff]
      %v1335 = vld [vmem:[#allocation2 + $0x70] sm:$0xff]
      %v1336 = vld [vmem:[#allocation2 + $0x78] sm:$0xff]
      %v1337 = vld [vmem:[#allocation2 + $0x80] sm:$0xf]
      %v1338 = vsel %vm867, 1, 0
      %v1339 = vsel %vm868, 1, 0
      %v1340 = vsel %vm869, 1, 0
      %v1341 = vsel %vm870, 1, 0
      %v1342 = vsel %vm871, 1, 0
      %v1343 = vsel %vm872, 1, 0
      %v1344 = vsel %vm873, 1, 0
      %v1345 = vsel %vm874, 1, 0
      %v1346 = vsel %vm875, 1, 0
      %v1347 = vsel %vm876, 1, 0
      %v1348 = vsel %vm877, 1, 0
      %v1349 = vsel %vm878, 1, 0
      %v1350 = vsel %vm879, 1, 0
      %v1351 = vsel %vm880, 1, 0
      %v1352 = vsel %vm881, 1, 0
      %v1353 = vsel %vm882, 1, 0
      %v1354 = vsel %vm883, 1, 0
      %v1355 = vsel %vm884, 1, 0
      %v1356 = vsel %vm885, 1, 0
      %v1357 = vsel %vm886, 1, 0
      %v1358 = vsel %vm887, 1, 0
      %v1359 = vsel %vm888, 1, 0
      %v1360 = vsel %vm889, 1, 0
      %v1361 = vsel %vm890, 1, 0
      %v1362 = vsel %vm891, 1, 0
      %v1363 = vsel %vm892, 1, 0
      %v1364 = vsel %vm893, 1, 0
      %v1365 = vsel %vm894, 1, 0
      %v1366 = vsel %vm895, 1, 0
      %v1367 = vsel %vm896, 1, 0
      %v1368 = vsel %vm897, 1, 0
      %v1369 = vsel %vm898, 1, 0
      %vm1370 = vcmp.eq.s32.totalorder %v1338, 1
      %vm1371 = vcmp.eq.s32.totalorder %v1339, 1
      %vm1372 = vcmp.eq.s32.totalorder %v1340, 1
      %vm1373 = vcmp.eq.s32.totalorder %v1341, 1
      %vm1374 = vcmp.eq.s32.totalorder %v1342, 1
      %vm1375 = vcmp.eq.s32.totalorder %v1343, 1
      %vm1376 = vcmp.eq.s32.totalorder %v1344, 1
      %vm1377 = vcmp.eq.s32.totalorder %v1345, 1
      %vm1378 = vcmp.eq.s32.totalorder %v1346, 1
      %vm1379 = vcmp.eq.s32.totalorder %v1347, 1
      %vm1380 = vcmp.eq.s32.totalorder %v1348, 1
      %vm1381 = vcmp.eq.s32.totalorder %v1349, 1
      %vm1382 = vcmp.eq.s32.totalorder %v1350, 1
      %vm1383 = vcmp.eq.s32.totalorder %v1351, 1
      %vm1384 = vcmp.eq.s32.totalorder %v1352, 1
      %vm1385 = vcmp.eq.s32.totalorder %v1353, 1
      %vm1386 = vcmp.eq.s32.totalorder %v1354, 1
      %vm1387 = vcmp.eq.s32.totalorder %v1355, 1
      %vm1388 = vcmp.eq.s32.totalorder %v1356, 1
      %vm1389 = vcmp.eq.s32.totalorder %v1357, 1
      %vm1390 = vcmp.eq.s32.totalorder %v1358, 1
      %vm1391 = vcmp.eq.s32.totalorder %v1359, 1
      %vm1392 = vcmp.eq.s32.totalorder %v1360, 1
      %vm1393 = vcmp.eq.s32.totalorder %v1361, 1
      %vm1394 = vcmp.eq.s32.totalorder %v1362, 1
      %vm1395 = vcmp.eq.s32.totalorder %v1363, 1
      %vm1396 = vcmp.eq.s32.totalorder %v1364, 1
      %vm1397 = vcmp.eq.s32.totalorder %v1365, 1
      %vm1398 = vcmp.eq.s32.totalorder %v1366, 1
      %vm1399 = vcmp.eq.s32.totalorder %v1367, 1
      %vm1400 = vcmp.eq.s32.totalorder %v1368, 1
      %vm1401 = vcmp.eq.s32.totalorder %v1369, 1
      %vm1402 = vmpackc.low %vm1370, %vm1370
      %vm1403 = vmpackc.low %vm1371, %vm1371
      %vm1404 = vmpackc.low %vm1372, %vm1372
      %vm1405 = vmpackc.low %vm1373, %vm1373
      %vm1406 = vmpackc.low %vm1374, %vm1374
      %vm1407 = vmpackc.low %vm1375, %vm1375
      %vm1408 = vmpackc.low %vm1376, %vm1376
      %vm1409 = vmpackc.low %vm1377, %vm1377
      %vm1410 = vmpackc.low %vm1378, %vm1378
      %vm1411 = vmpackc.low %vm1379, %vm1379
      %vm1412 = vmpackc.low %vm1380, %vm1380
      %vm1413 = vmpackc.low %vm1381, %vm1381
      %vm1414 = vmpackc.low %vm1382, %vm1382
      %vm1415 = vmpackc.low %vm1383, %vm1383
      %vm1416 = vmpackc.low %vm1384, %vm1384
      %vm1417 = vmpackc.low %vm1385, %vm1385
      %vm1418 = vmpackc.low %vm1386, %vm1386
      %vm1419 = vmpackc.low %vm1387, %vm1387
      %vm1420 = vmpackc.low %vm1388, %vm1388
      %vm1421 = vmpackc.low %vm1389, %vm1389
      %vm1422 = vmpackc.low %vm1390, %vm1390
      %vm1423 = vmpackc.low %vm1391, %vm1391
      %vm1424 = vmpackc.low %vm1392, %vm1392
      %vm1425 = vmpackc.low %vm1393, %vm1393
      %vm1426 = vmpackc.low %vm1394, %vm1394
      %vm1427 = vmpackc.low %vm1395, %vm1395
      %vm1428 = vmpackc.low %vm1396, %vm1396
      %vm1429 = vmpackc.low %vm1397, %vm1397
      %vm1430 = vmpackc.low %vm1398, %vm1398
      %vm1431 = vmpackc.low %vm1399, %vm1399
      %vm1432 = vmpackc.low %vm1400, %vm1400
      %vm1433 = vmpackc.low %vm1401, %vm1401
      %v1434 = vsel %vm1402, 65537, 0
      %v1435 = vsel %vm1403, 65537, 0
      %v1436 = vsel %vm1404, 65537, 0
      %v1437 = vsel %vm1405, 65537, 0
      %v1438 = vsel %vm1406, 65537, 0
      %v1439 = vsel %vm1407, 65537, 0
      %v1440 = vsel %vm1408, 65537, 0
      %v1441 = vsel %vm1409, 65537, 0
      %v1442 = vsel %vm1410, 65537, 0
      %v1443 = vsel %vm1411, 65537, 0
      %v1444 = vsel %vm1412, 65537, 0
      %v1445 = vsel %vm1413, 65537, 0
      %v1446 = vsel %vm1414, 65537, 0
      %v1447 = vsel %vm1415, 65537, 0
      %v1448 = vsel %vm1416, 65537, 0
      %v1449 = vsel %vm1417, 65537, 0
      %v1450 = vsel %vm1418, 65537, 0
      %v1451 = vsel %vm1419, 65537, 0
      %v1452 = vsel %vm1420, 65537, 0
      %v1453 = vsel %vm1421, 65537, 0
      %v1454 = vsel %vm1422, 65537, 0
      %v1455 = vsel %vm1423, 65537, 0
      %v1456 = vsel %vm1424, 65537, 0
      %v1457 = vsel %vm1425, 65537, 0
      %v1458 = vsel %vm1426, 65537, 0
      %v1459 = vsel %vm1427, 65537, 0
      %v1460 = vsel %vm1428, 65537, 0
      %v1461 = vsel %vm1429, 65537, 0
      %v1462 = vsel %vm1430, 65537, 0
      %v1463 = vsel %vm1431, 65537, 0
      %v1464 = vsel %vm1432, 65537, 0
      %v1465 = vsel %vm1433, 65537, 0
      %v1466 = vunpack.c.l.b16 %v1434
      %v1467 = vunpack.c.l.b16 %v1435
      %v1468 = vunpack.c.l.b16 %v1436
      %v1469 = vunpack.c.l.b16 %v1437
      %v1470 = vunpack.c.l.b16 %v1438
      %v1471 = vunpack.c.l.b16 %v1439
      %v1472 = vunpack.c.l.b16 %v1440
      %v1473 = vunpack.c.l.b16 %v1441
      %v1474 = vunpack.c.l.b16 %v1442
      %v1475 = vunpack.c.l.b16 %v1443
      %v1476 = vunpack.c.l.b16 %v1444
      %v1477 = vunpack.c.l.b16 %v1445
      %v1478 = vunpack.c.l.b16 %v1446
      %v1479 = vunpack.c.l.b16 %v1447
      %v1480 = vunpack.c.l.b16 %v1448
      %v1481 = vunpack.c.l.b16 %v1449
      %v1482 = vunpack.c.l.b16 %v1450
      %v1483 = vunpack.c.l.b16 %v1451
      %v1484 = vunpack.c.l.b16 %v1452
      %v1485 = vunpack.c.l.b16 %v1453
      %v1486 = vunpack.c.l.b16 %v1454
      %v1487 = vunpack.c.l.b16 %v1455
      %v1488 = vunpack.c.l.b16 %v1456
      %v1489 = vunpack.c.l.b16 %v1457
      %v1490 = vunpack.c.l.b16 %v1458
      %v1491 = vunpack.c.l.b16 %v1459
      %v1492 = vunpack.c.l.b16 %v1460
      %v1493 = vunpack.c.l.b16 %v1461
      %v1494 = vunpack.c.l.b16 %v1462
      %v1495 = vunpack.c.l.b16 %v1463
      %v1496 = vunpack.c.l.b16 %v1464
      %v1497 = vunpack.c.l.b16 %v1465
      %v1498 = vpack.c.b16 %v1467, %v1466
      %v1499 = vpack.c.b16 %v1469, %v1468
      %v1500 = vpack.c.b16 %v1471, %v1470
      %v1501 = vpack.c.b16 %v1473, %v1472
      %v1502 = vpack.c.b16 %v1475, %v1474
      %v1503 = vpack.c.b16 %v1477, %v1476
      %v1504 = vpack.c.b16 %v1479, %v1478
      %v1505 = vpack.c.b16 %v1481, %v1480
      %v1506 = vpack.c.b16 %v1483, %v1482
      %v1507 = vpack.c.b16 %v1485, %v1484
      %v1508 = vpack.c.b16 %v1487, %v1486
      %v1509 = vpack.c.b16 %v1489, %v1488
      %v1510 = vpack.c.b16 %v1491, %v1490
      %v1511 = vpack.c.b16 %v1493, %v1492
      %v1512 = vpack.c.b16 %v1495, %v1494
      %v1513 = vpack.c.b16 %v1497, %v1496
      %vm1514 = vsmask.f32 3328
      %v1516 = vshrl.u32 %v1498, 16
      %v1518 = vrot.slane %v1516, 4
      %v1519 = vshll.u32 %v1498, 16
      %v1521 = vrot.slane %v1519, 5
      %v1522 = vor.u32 %v1518, %v1521
      %v1524 = vshrl.u32 %v1499, 16
      %v1526 = vrot.slane %v1524, 4
      %v1527 = vshll.u32 %v1499, 16
      %v1529 = vrot.slane %v1527, 5
      %v1530 = vor.u32 %v1526, %v1529
      %v1531 = vsel %vm1514, %v1522, %v1530
      %v1533 = vshrl.u32 %v1500, 16
      %v1535 = vrot.slane %v1533, 4
      %v1536 = vshll.u32 %v1500, 16
      %v1538 = vrot.slane %v1536, 5
      %v1539 = vor.u32 %v1535, %v1538
      %v1540 = vsel %vm1514, %v1530, %v1539
      %v1542 = vshrl.u32 %v1501, 16
      %v1544 = vrot.slane %v1542, 4
      %v1545 = vshll.u32 %v1501, 16
      %v1547 = vrot.slane %v1545, 5
      %v1548 = vor.u32 %v1544, %v1547
      %v1549 = vsel %vm1514, %v1539, %v1548
      %v1551 = vshrl.u32 %v1502, 16
      %v1553 = vrot.slane %v1551, 4
      %v1554 = vshll.u32 %v1502, 16
      %v1556 = vrot.slane %v1554, 5
      %v1557 = vor.u32 %v1553, %v1556
      %v1558 = vsel %vm1514, %v1548, %v1557
      %v1560 = vshrl.u32 %v1503, 16
      %v1562 = vrot.slane %v1560, 4
      %v1563 = vshll.u32 %v1503, 16
      %v1565 = vrot.slane %v1563, 5
      %v1566 = vor.u32 %v1562, %v1565
      %v1567 = vsel %vm1514, %v1557, %v1566
      %v1569 = vshrl.u32 %v1504, 16
      %v1571 = vrot.slane %v1569, 4
      %v1572 = vshll.u32 %v1504, 16
      %v1574 = vrot.slane %v1572, 5
      %v1575 = vor.u32 %v1571, %v1574
      %v1576 = vsel %vm1514, %v1566, %v1575
      %v1578 = vshrl.u32 %v1505, 16
      %v1580 = vrot.slane %v1578, 4
      %v1581 = vshll.u32 %v1505, 16
      %v1583 = vrot.slane %v1581, 5
      %v1584 = vor.u32 %v1580, %v1583
      %v1585 = vsel %vm1514, %v1575, %v1584
      %v1587 = vshrl.u32 %v1506, 16
      %v1589 = vrot.slane %v1587, 4
      %v1590 = vshll.u32 %v1506, 16
      %v1592 = vrot.slane %v1590, 5
      %v1593 = vor.u32 %v1589, %v1592
      %v1594 = vsel %vm1514, %v1584, %v1593
      %v1596 = vshrl.u32 %v1507, 16
      %v1598 = vrot.slane %v1596, 4
      %v1599 = vshll.u32 %v1507, 16
      %v1601 = vrot.slane %v1599, 5
      %v1602 = vor.u32 %v1598, %v1601
      %v1603 = vsel %vm1514, %v1593, %v1602
      %v1605 = vshrl.u32 %v1508, 16
      %v1607 = vrot.slane %v1605, 4
      %v1608 = vshll.u32 %v1508, 16
      %v1610 = vrot.slane %v1608, 5
      %v1611 = vor.u32 %v1607, %v1610
      %v1612 = vsel %vm1514, %v1602, %v1611
      %v1614 = vshrl.u32 %v1509, 16
      %v1616 = vrot.slane %v1614, 4
      %v1617 = vshll.u32 %v1509, 16
      %v1619 = vrot.slane %v1617, 5
      %v1620 = vor.u32 %v1616, %v1619
      %v1621 = vsel %vm1514, %v1611, %v1620
      %v1623 = vshrl.u32 %v1510, 16
      %v1625 = vrot.slane %v1623, 4
      %v1626 = vshll.u32 %v1510, 16
      %v1628 = vrot.slane %v1626, 5
      %v1629 = vor.u32 %v1625, %v1628
      %v1630 = vsel %vm1514, %v1620, %v1629
      %v1632 = vshrl.u32 %v1511, 16
      %v1634 = vrot.slane %v1632, 4
      %v1635 = vshll.u32 %v1511, 16
      %v1637 = vrot.slane %v1635, 5
      %v1638 = vor.u32 %v1634, %v1637
      %v1639 = vsel %vm1514, %v1629, %v1638
      %v1641 = vshrl.u32 %v1512, 16
      %v1643 = vrot.slane %v1641, 4
      %v1644 = vshll.u32 %v1512, 16
      %v1646 = vrot.slane %v1644, 5
      %v1647 = vor.u32 %v1643, %v1646
      %v1648 = vsel %vm1514, %v1638, %v1647
      %v1650 = vshrl.u32 %v1513, 16
      %v1652 = vrot.slane %v1650, 4
      %v1653 = vshll.u32 %v1513, 16
      %v1655 = vrot.slane %v1653, 5
      %v1656 = vor.u32 %v1652, %v1655
      %v1657 = vsel %vm1514, %v1647, %v1656
      %vm1658 = vcmp.ne.s16.totalorder %v1522, 0
      %vm1659 = vcmp.ne.s16.totalorder %v1531, 0
      %vm1660 = vcmp.ne.s16.totalorder %v1540, 0
      %vm1661 = vcmp.ne.s16.totalorder %v1549, 0
      %vm1662 = vcmp.ne.s16.totalorder %v1558, 0
      %vm1663 = vcmp.ne.s16.totalorder %v1567, 0
      %vm1664 = vcmp.ne.s16.totalorder %v1576, 0
      %vm1665 = vcmp.ne.s16.totalorder %v1585, 0
      %vm1666 = vcmp.ne.s16.totalorder %v1594, 0
      %vm1667 = vcmp.ne.s16.totalorder %v1603, 0
      %vm1668 = vcmp.ne.s16.totalorder %v1612, 0
      %vm1669 = vcmp.ne.s16.totalorder %v1621, 0
      %vm1670 = vcmp.ne.s16.totalorder %v1630, 0
      %vm1671 = vcmp.ne.s16.totalorder %v1639, 0
      %vm1672 = vcmp.ne.s16.totalorder %v1648, 0
      %vm1673 = vcmp.ne.s16.totalorder %v1657, 0
      %vm1674 = vcmp.ne.s16.totalorder %v1656, 0
      %v1675 = vsel %vm1658, %v1321, 0
      %v1676 = vsel %vm1659, %v1322, 0
      %v1677 = vsel %vm1660, %v1323, 0
      %v1678 = vsel %vm1661, %v1324, 0
      %v1679 = vsel %vm1662, %v1325, 0
      %v1680 = vsel %vm1663, %v1326, 0
      %v1681 = vsel %vm1664, %v1327, 0
      %v1682 = vsel %vm1665, %v1328, 0
      %v1683 = vsel %vm1666, %v1329, 0
      %v1684 = vsel %vm1667, %v1330, 0
      %v1685 = vsel %vm1668, %v1331, 0
      %v1686 = vsel %vm1669, %v1332, 0
      %v1687 = vsel %vm1670, %v1333, 0
      %v1688 = vsel %vm1671, %v1334, 0
      %v1689 = vsel %vm1672, %v1335, 0
      %v1690 = vsel %vm1673, %v1336, 0
      %v1691 = vsel %vm1674, %v1337, 0
      %v1692 = vld [vmem:[#allocation2] sm:$0xf0]
      %v1693 = vld [vmem:[#allocation2 + $0x80] sm:$0x1f]
      %v1694 = vsel %vm899, 1, 0
      %v1695 = vsel %vm900, 1, 0
      %v1696 = vsel %vm901, 1, 0
      %v1697 = vsel %vm902, 1, 0
      %v1698 = vsel %vm903, 1, 0
      %v1699 = vsel %vm904, 1, 0
      %v1700 = vsel %vm905, 1, 0
      %v1701 = vsel %vm906, 1, 0
      %v1702 = vsel %vm907, 1, 0
      %v1703 = vsel %vm908, 1, 0
      %v1704 = vsel %vm909, 1, 0
      %v1705 = vsel %vm910, 1, 0
      %v1706 = vsel %vm911, 1, 0
      %v1707 = vsel %vm912, 1, 0
      %v1708 = vsel %vm913, 1, 0
      %v1709 = vsel %vm914, 1, 0
      %v1710 = vsel %vm915, 1, 0
      %v1711 = vsel %vm916, 1, 0
      %v1712 = vsel %vm917, 1, 0
      %v1713 = vsel %vm918, 1, 0
      %v1714 = vsel %vm919, 1, 0
      %v1715 = vsel %vm920, 1, 0
      %v1716 = vsel %vm921, 1, 0
      %v1717 = vsel %vm922, 1, 0
      %v1718 = vsel %vm923, 1, 0
      %v1719 = vsel %vm924, 1, 0
      %v1720 = vsel %vm925, 1, 0
      %v1721 = vsel %vm926, 1, 0
      %v1722 = vsel %vm927, 1, 0
      %v1723 = vsel %vm928, 1, 0
      %v1724 = vsel %vm929, 1, 0
      %v1725 = vsel %vm930, 1, 0
      %vm1726 = vcmp.eq.s32.totalorder %v1694, 1
      %vm1727 = vcmp.eq.s32.totalorder %v1695, 1
      %vm1728 = vcmp.eq.s32.totalorder %v1696, 1
      %vm1729 = vcmp.eq.s32.totalorder %v1697, 1
      %vm1730 = vcmp.eq.s32.totalorder %v1698, 1
      %vm1731 = vcmp.eq.s32.totalorder %v1699, 1
      %vm1732 = vcmp.eq.s32.totalorder %v1700, 1
      %vm1733 = vcmp.eq.s32.totalorder %v1701, 1
      %vm1734 = vcmp.eq.s32.totalorder %v1702, 1
      %vm1735 = vcmp.eq.s32.totalorder %v1703, 1
      %vm1736 = vcmp.eq.s32.totalorder %v1704, 1
      %vm1737 = vcmp.eq.s32.totalorder %v1705, 1
      %vm1738 = vcmp.eq.s32.totalorder %v1706, 1
      %vm1739 = vcmp.eq.s32.totalorder %v1707, 1
      %vm1740 = vcmp.eq.s32.totalorder %v1708, 1
      %vm1741 = vcmp.eq.s32.totalorder %v1709, 1
      %vm1742 = vcmp.eq.s32.totalorder %v1710, 1
      %vm1743 = vcmp.eq.s32.totalorder %v1711, 1
      %vm1744 = vcmp.eq.s32.totalorder %v1712, 1
      %vm1745 = vcmp.eq.s32.totalorder %v1713, 1
      %vm1746 = vcmp.eq.s32.totalorder %v1714, 1
      %vm1747 = vcmp.eq.s32.totalorder %v1715, 1
      %vm1748 = vcmp.eq.s32.totalorder %v1716, 1
      %vm1749 = vcmp.eq.s32.totalorder %v1717, 1
      %vm1750 = vcmp.eq.s32.totalorder %v1718, 1
      %vm1751 = vcmp.eq.s32.totalorder %v1719, 1
      %vm1752 = vcmp.eq.s32.totalorder %v1720, 1
      %vm1753 = vcmp.eq.s32.totalorder %v1721, 1
      %vm1754 = vcmp.eq.s32.totalorder %v1722, 1
      %vm1755 = vcmp.eq.s32.totalorder %v1723, 1
      %vm1756 = vcmp.eq.s32.totalorder %v1724, 1
      %vm1757 = vcmp.eq.s32.totalorder %v1725, 1
      %vm1758 = vmpackc.low %vm1726, %vm1726
      %vm1759 = vmpackc.low %vm1727, %vm1727
      %vm1760 = vmpackc.low %vm1728, %vm1728
      %vm1761 = vmpackc.low %vm1729, %vm1729
      %vm1762 = vmpackc.low %vm1730, %vm1730
      %vm1763 = vmpackc.low %vm1731, %vm1731
      %vm1764 = vmpackc.low %vm1732, %vm1732
      %vm1765 = vmpackc.low %vm1733, %vm1733
      %vm1766 = vmpackc.low %vm1734, %vm1734
      %vm1767 = vmpackc.low %vm1735, %vm1735
      %vm1768 = vmpackc.low %vm1736, %vm1736
      %vm1769 = vmpackc.low %vm1737, %vm1737
      %vm1770 = vmpackc.low %vm1738, %vm1738
      %vm1771 = vmpackc.low %vm1739, %vm1739
      %vm1772 = vmpackc.low %vm1740, %vm1740
      %vm1773 = vmpackc.low %vm1741, %vm1741
      %vm1774 = vmpackc.low %vm1742, %vm1742
      %vm1775 = vmpackc.low %vm1743, %vm1743
      %vm1776 = vmpackc.low %vm1744, %vm1744
      %vm1777 = vmpackc.low %vm1745, %vm1745
      %vm1778 = vmpackc.low %vm1746, %vm1746
      %vm1779 = vmpackc.low %vm1747, %vm1747
      %vm1780 = vmpackc.low %vm1748, %vm1748
      %vm1781 = vmpackc.low %vm1749, %vm1749
      %vm1782 = vmpackc.low %vm1750, %vm1750
      %vm1783 = vmpackc.low %vm1751, %vm1751
      %vm1784 = vmpackc.low %vm1752, %vm1752
      %vm1785 = vmpackc.low %vm1753, %vm1753
      %vm1786 = vmpackc.low %vm1754, %vm1754
      %vm1787 = vmpackc.low %vm1755, %vm1755
      %vm1788 = vmpackc.low %vm1756, %vm1756
      %vm1789 = vmpackc.low %vm1757, %vm1757
      %v1790 = vsel %vm1758, 65537, 0
      %v1791 = vsel %vm1759, 65537, 0
      %v1792 = vsel %vm1760, 65537, 0
      %v1793 = vsel %vm1761, 65537, 0
      %v1794 = vsel %vm1762, 65537, 0
      %v1795 = vsel %vm1763, 65537, 0
      %v1796 = vsel %vm1764, 65537, 0
      %v1797 = vsel %vm1765, 65537, 0
      %v1798 = vsel %vm1766, 65537, 0
      %v1799 = vsel %vm1767, 65537, 0
      %v1800 = vsel %vm1768, 65537, 0
      %v1801 = vsel %vm1769, 65537, 0
      %v1802 = vsel %vm1770, 65537, 0
      %v1803 = vsel %vm1771, 65537, 0
      %v1804 = vsel %vm1772, 65537, 0
      %v1805 = vsel %vm1773, 65537, 0
      %v1806 = vsel %vm1774, 65537, 0
      %v1807 = vsel %vm1775, 65537, 0
      %v1808 = vsel %vm1776, 65537, 0
      %v1809 = vsel %vm1777, 65537, 0
      %v1810 = vsel %vm1778, 65537, 0
      %v1811 = vsel %vm1779, 65537, 0
      %v1812 = vsel %vm1780, 65537, 0
      %v1813 = vsel %vm1781, 65537, 0
      %v1814 = vsel %vm1782, 65537, 0
      %v1815 = vsel %vm1783, 65537, 0
      %v1816 = vsel %vm1784, 65537, 0
      %v1817 = vsel %vm1785, 65537, 0
      %v1818 = vsel %vm1786, 65537, 0
      %v1819 = vsel %vm1787, 65537, 0
      %v1820 = vsel %vm1788, 65537, 0
      %v1821 = vsel %vm1789, 65537, 0
      %v1822 = vunpack.c.l.b16 %v1790
      %v1823 = vunpack.c.l.b16 %v1791
      %v1824 = vunpack.c.l.b16 %v1792
      %v1825 = vunpack.c.l.b16 %v1793
      %v1826 = vunpack.c.l.b16 %v1794
      %v1827 = vunpack.c.l.b16 %v1795
      %v1828 = vunpack.c.l.b16 %v1796
      %v1829 = vunpack.c.l.b16 %v1797
      %v1830 = vunpack.c.l.b16 %v1798
      %v1831 = vunpack.c.l.b16 %v1799
      %v1832 = vunpack.c.l.b16 %v1800
      %v1833 = vunpack.c.l.b16 %v1801
      %v1834 = vunpack.c.l.b16 %v1802
      %v1835 = vunpack.c.l.b16 %v1803
      %v1836 = vunpack.c.l.b16 %v1804
      %v1837 = vunpack.c.l.b16 %v1805
      %v1838 = vunpack.c.l.b16 %v1806
      %v1839 = vunpack.c.l.b16 %v1807
      %v1840 = vunpack.c.l.b16 %v1808
      %v1841 = vunpack.c.l.b16 %v1809
      %v1842 = vunpack.c.l.b16 %v1810
      %v1843 = vunpack.c.l.b16 %v1811
      %v1844 = vunpack.c.l.b16 %v1812
      %v1845 = vunpack.c.l.b16 %v1813
      %v1846 = vunpack.c.l.b16 %v1814
      %v1847 = vunpack.c.l.b16 %v1815
      %v1848 = vunpack.c.l.b16 %v1816
      %v1849 = vunpack.c.l.b16 %v1817
      %v1850 = vunpack.c.l.b16 %v1818
      %v1851 = vunpack.c.l.b16 %v1819
      %v1852 = vunpack.c.l.b16 %v1820
      %v1853 = vunpack.c.l.b16 %v1821
      %v1854 = vpack.c.b16 %v1823, %v1822
      %v1855 = vpack.c.b16 %v1825, %v1824
      %v1856 = vpack.c.b16 %v1827, %v1826
      %v1857 = vpack.c.b16 %v1829, %v1828
      %v1858 = vpack.c.b16 %v1831, %v1830
      %v1859 = vpack.c.b16 %v1833, %v1832
      %v1860 = vpack.c.b16 %v1835, %v1834
      %v1861 = vpack.c.b16 %v1837, %v1836
      %v1862 = vpack.c.b16 %v1839, %v1838
      %v1863 = vpack.c.b16 %v1841, %v1840
      %v1864 = vpack.c.b16 %v1843, %v1842
      %v1865 = vpack.c.b16 %v1845, %v1844
      %v1866 = vpack.c.b16 %v1847, %v1846
      %v1867 = vpack.c.b16 %v1849, %v1848
      %v1868 = vpack.c.b16 %v1851, %v1850
      %v1869 = vpack.c.b16 %v1853, %v1852
      %vm1870 = vsmask.f32 4352
      %v1872 = vshrl.u32 %v1854, 16
      %v1874 = vrot.slane %v1872, 3
      %v1875 = vshll.u32 %v1854, 16
      %v1877 = vrot.slane %v1875, 4
      %v1878 = vor.u32 %v1874, %v1877
      %v1880 = vshrl.u32 %v1855, 16
      %v1882 = vrot.slane %v1880, 3
      %v1883 = vshll.u32 %v1855, 16
      %v1885 = vrot.slane %v1883, 4
      %v1886 = vor.u32 %v1882, %v1885
      %v1887 = vsel %vm1870, %v1878, %v1886
      %v1889 = vshrl.u32 %v1856, 16
      %v1891 = vrot.slane %v1889, 3
      %v1892 = vshll.u32 %v1856, 16
      %v1894 = vrot.slane %v1892, 4
      %v1895 = vor.u32 %v1891, %v1894
      %v1896 = vsel %vm1870, %v1886, %v1895
      %v1898 = vshrl.u32 %v1857, 16
      %v1900 = vrot.slane %v1898, 3
      %v1901 = vshll.u32 %v1857, 16
      %v1903 = vrot.slane %v1901, 4
      %v1904 = vor.u32 %v1900, %v1903
      %v1905 = vsel %vm1870, %v1895, %v1904
      %v1907 = vshrl.u32 %v1858, 16
      %v1909 = vrot.slane %v1907, 3
      %v1910 = vshll.u32 %v1858, 16
      %v1912 = vrot.slane %v1910, 4
      %v1913 = vor.u32 %v1909, %v1912
      %v1914 = vsel %vm1870, %v1904, %v1913
      %v1916 = vshrl.u32 %v1859, 16
      %v1918 = vrot.slane %v1916, 3
      %v1919 = vshll.u32 %v1859, 16
      %v1921 = vrot.slane %v1919, 4
      %v1922 = vor.u32 %v1918, %v1921
      %v1923 = vsel %vm1870, %v1913, %v1922
      %v1925 = vshrl.u32 %v1860, 16
      %v1927 = vrot.slane %v1925, 3
      %v1928 = vshll.u32 %v1860, 16
      %v1930 = vrot.slane %v1928, 4
      %v1931 = vor.u32 %v1927, %v1930
      %v1932 = vsel %vm1870, %v1922, %v1931
      %v1934 = vshrl.u32 %v1861, 16
      %v1936 = vrot.slane %v1934, 3
      %v1937 = vshll.u32 %v1861, 16
      %v1939 = vrot.slane %v1937, 4
      %v1940 = vor.u32 %v1936, %v1939
      %v1941 = vsel %vm1870, %v1931, %v1940
      %v1943 = vshrl.u32 %v1862, 16
      %v1945 = vrot.slane %v1943, 3
      %v1946 = vshll.u32 %v1862, 16
      %v1948 = vrot.slane %v1946, 4
      %v1949 = vor.u32 %v1945, %v1948
      %v1950 = vsel %vm1870, %v1940, %v1949
      %v1952 = vshrl.u32 %v1863, 16
      %v1954 = vrot.slane %v1952, 3
      %v1955 = vshll.u32 %v1863, 16
      %v1957 = vrot.slane %v1955, 4
      %v1958 = vor.u32 %v1954, %v1957
      %v1959 = vsel %vm1870, %v1949, %v1958
      %v1961 = vshrl.u32 %v1864, 16
      %v1963 = vrot.slane %v1961, 3
      %v1964 = vshll.u32 %v1864, 16
      %v1966 = vrot.slane %v1964, 4
      %v1967 = vor.u32 %v1963, %v1966
      %v1968 = vsel %vm1870, %v1958, %v1967
      %v1970 = vshrl.u32 %v1865, 16
      %v1972 = vrot.slane %v1970, 3
      %v1973 = vshll.u32 %v1865, 16
      %v1975 = vrot.slane %v1973, 4
      %v1976 = vor.u32 %v1972, %v1975
      %v1977 = vsel %vm1870, %v1967, %v1976
      %v1979 = vshrl.u32 %v1866, 16
      %v1981 = vrot.slane %v1979, 3
      %v1982 = vshll.u32 %v1866, 16
      %v1984 = vrot.slane %v1982, 4
      %v1985 = vor.u32 %v1981, %v1984
      %v1986 = vsel %vm1870, %v1976, %v1985
      %v1988 = vshrl.u32 %v1867, 16
      %v1990 = vrot.slane %v1988, 3
      %v1991 = vshll.u32 %v1867, 16
      %v1993 = vrot.slane %v1991, 4
      %v1994 = vor.u32 %v1990, %v1993
      %v1995 = vsel %vm1870, %v1985, %v1994
      %v1997 = vshrl.u32 %v1868, 16
      %v1999 = vrot.slane %v1997, 3
      %v2000 = vshll.u32 %v1868, 16
      %v2002 = vrot.slane %v2000, 4
      %v2003 = vor.u32 %v1999, %v2002
      %v2004 = vsel %vm1870, %v1994, %v2003
      %v2006 = vshrl.u32 %v1869, 16
      %v2008 = vrot.slane %v2006, 3
      %v2009 = vshll.u32 %v1869, 16
      %v2011 = vrot.slane %v2009, 4
      %v2012 = vor.u32 %v2008, %v2011
      %v2013 = vsel %vm1870, %v2003, %v2012
      %vm2014 = vcmp.ne.s16.totalorder %v1878, 0
      %vm2015 = vcmp.ne.s16.totalorder %v1887, 0
      %vm2016 = vcmp.ne.s16.totalorder %v1896, 0
      %vm2017 = vcmp.ne.s16.totalorder %v1905, 0
      %vm2018 = vcmp.ne.s16.totalorder %v1914, 0
      %vm2019 = vcmp.ne.s16.totalorder %v1923, 0
      %vm2020 = vcmp.ne.s16.totalorder %v1932, 0
      %vm2021 = vcmp.ne.s16.totalorder %v1941, 0
      %vm2022 = vcmp.ne.s16.totalorder %v1950, 0
      %vm2023 = vcmp.ne.s16.totalorder %v1959, 0
      %vm2024 = vcmp.ne.s16.totalorder %v1968, 0
      %vm2025 = vcmp.ne.s16.totalorder %v1977, 0
      %vm2026 = vcmp.ne.s16.totalorder %v1986, 0
      %vm2027 = vcmp.ne.s16.totalorder %v1995, 0
      %vm2028 = vcmp.ne.s16.totalorder %v2004, 0
      %vm2029 = vcmp.ne.s16.totalorder %v2013, 0
      %vm2030 = vcmp.ne.s16.totalorder %v2012, 0
      %v2031 = vsel %vm2014, %v1692, 0
      %v2032 = vsel %vm2015, %v1322, 0
      %v2033 = vsel %vm2016, %v1323, 0
      %v2034 = vsel %vm2017, %v1324, 0
      %v2035 = vsel %vm2018, %v1325, 0
      %v2036 = vsel %vm2019, %v1326, 0
      %v2037 = vsel %vm2020, %v1327, 0
      %v2038 = vsel %vm2021, %v1328, 0
      %v2039 = vsel %vm2022, %v1329, 0
      %v2040 = vsel %vm2023, %v1330, 0
      %v2041 = vsel %vm2024, %v1331, 0
      %v2042 = vsel %vm2025, %v1332, 0
      %v2043 = vsel %vm2026, %v1333, 0
      %v2044 = vsel %vm2027, %v1334, 0
      %v2045 = vsel %vm2028, %v1335, 0
      %v2046 = vsel %vm2029, %v1336, 0
      %v2047 = vsel %vm2030, %v1693, 0
      %v2048 = vld [vmem:[#allocation2 + $0x8] sm:$0xf8]
      %v2049 = vld [vmem:[#allocation2 + $0x80] sm:$0xff]
      %v2050 = vld [vmem:[#allocation2 + $0x88] sm:$0xf]
      %v2051 = vsel %vm1658, %v2048, 0
      %v2052 = vsel %vm1659, %v1323, 0
      %v2053 = vsel %vm1660, %v1324, 0
      %v2054 = vsel %vm1661, %v1325, 0
      %v2055 = vsel %vm1662, %v1326, 0
      %v2056 = vsel %vm1663, %v1327, 0
      %v2057 = vsel %vm1664, %v1328, 0
      %v2058 = vsel %vm1665, %v1329, 0
      %v2059 = vsel %vm1666, %v1330, 0
      %v2060 = vsel %vm1667, %v1331, 0
      %v2061 = vsel %vm1668, %v1332, 0
      %v2062 = vsel %vm1669, %v1333, 0
      %v2063 = vsel %vm1670, %v1334, 0
      %v2064 = vsel %vm1671, %v1335, 0
      %v2065 = vsel %vm1672, %v1336, 0
      %v2066 = vsel %vm1673, %v2049, 0
      %v2067 = vsel %vm1674, %v2050, 0
      %v2068 = vld [vmem:[#allocation2 + $0x8] sm:$0xf0]
      %v2069 = vld [vmem:[#allocation2 + $0x88] sm:$0x1f]
      %v2070 = vsel %vm2014, %v2068, 0
      %v2071 = vsel %vm2015, %v1323, 0
      %v2072 = vsel %vm2016, %v1324, 0
      %v2073 = vsel %vm2017, %v1325, 0
      %v2074 = vsel %vm2018, %v1326, 0
      %v2075 = vsel %vm2019, %v1327, 0
      %v2076 = vsel %vm2020, %v1328, 0
      %v2077 = vsel %vm2021, %v1329, 0
      %v2078 = vsel %vm2022, %v1330, 0
      %v2079 = vsel %vm2023, %v1331, 0
      %v2080 = vsel %vm2024, %v1332, 0
      %v2081 = vsel %vm2025, %v1333, 0
      %v2082 = vsel %vm2026, %v1334, 0
      %v2083 = vsel %vm2027, %v1335, 0
      %v2084 = vsel %vm2028, %v1336, 0
      %v2085 = vsel %vm2029, %v2049, 0
      %v2086 = vsel %vm2030, %v2069, 0
      %v2087 = vld [vmem:[#allocation2 + $0x10] sm:$0xf8]
      %v2088 = vld [vmem:[#allocation2 + $0x88] sm:$0xff]
      %v2089 = vld [vmem:[#allocation2 + $0x90] sm:$0xf]
      %v2090 = vsel %vm1658, %v2087, 0
      %v2091 = vsel %vm1659, %v1324, 0
      %v2092 = vsel %vm1660, %v1325, 0
      %v2093 = vsel %vm1661, %v1326, 0
      %v2094 = vsel %vm1662, %v1327, 0
      %v2095 = vsel %vm1663, %v1328, 0
      %v2096 = vsel %vm1664, %v1329, 0
      %v2097 = vsel %vm1665, %v1330, 0
      %v2098 = vsel %vm1666, %v1331, 0
      %v2099 = vsel %vm1667, %v1332, 0
      %v2100 = vsel %vm1668, %v1333, 0
      %v2101 = vsel %vm1669, %v1334, 0
      %v2102 = vsel %vm1670, %v1335, 0
      %v2103 = vsel %vm1671, %v1336, 0
      %v2104 = vsel %vm1672, %v2049, 0
      %v2105 = vsel %vm1673, %v2088, 0
      %v2106 = vsel %vm1674, %v2089, 0
      %v2107 = vld [vmem:[#allocation2 + $0x10] sm:$0xf0]
      %v2108 = vld [vmem:[#allocation2 + $0x90] sm:$0x1f]
      %v2109 = vsel %vm2014, %v2107, 0
      %v2110 = vsel %vm2015, %v1324, 0
      %v2111 = vsel %vm2016, %v1325, 0
      %v2112 = vsel %vm2017, %v1326, 0
      %v2113 = vsel %vm2018, %v1327, 0
      %v2114 = vsel %vm2019, %v1328, 0
      %v2115 = vsel %vm2020, %v1329, 0
      %v2116 = vsel %vm2021, %v1330, 0
      %v2117 = vsel %vm2022, %v1331, 0
      %v2118 = vsel %vm2023, %v1332, 0
      %v2119 = vsel %vm2024, %v1333, 0
      %v2120 = vsel %vm2025, %v1334, 0
      %v2121 = vsel %vm2026, %v1335, 0
      %v2122 = vsel %vm2027, %v1336, 0
      %v2123 = vsel %vm2028, %v2049, 0
      %v2124 = vsel %vm2029, %v2088, 0
      %v2125 = vsel %vm2030, %v2108, 0
      %vm2126 = vsmask.f32 7424
      %v2128 = vshrl.u32 %v1692, 16
      %v2130 = vshll.u32 %v1692, 16
      %v2132 = vrot.slane %v2130, 1
      %v2133 = vor.u32 %v2128, %v2132
      %v2135 = vshll.u32 %v1322, 16
      %v2137 = vrot.slane %v2135, 1
      %v2138 = vsel %vm2126, %v2133, %v2137
      %v2139 = vshrl.u32 %v1322, 16
      %v2141 = vor.u32 %v2139, %v2137
      %v2143 = vshll.u32 %v1323, 16
      %v2145 = vrot.slane %v2143, 1
      %v2146 = vsel %vm2126, %v2141, %v2145
      %v2147 = vshrl.u32 %v1323, 16
      %v2149 = vor.u32 %v2147, %v2145
      %v2151 = vshll.u32 %v1324, 16
      %v2153 = vrot.slane %v2151, 1
      %v2154 = vsel %vm2126, %v2149, %v2153
      %v2155 = vshrl.u32 %v1324, 16
      %v2157 = vor.u32 %v2155, %v2153
      %v2159 = vshll.u32 %v1325, 16
      %v2161 = vrot.slane %v2159, 1
      %v2162 = vsel %vm2126, %v2157, %v2161
      %v2163 = vshrl.u32 %v1325, 16
      %v2165 = vor.u32 %v2163, %v2161
      %v2167 = vshll.u32 %v1326, 16
      %v2169 = vrot.slane %v2167, 1
      %v2170 = vsel %vm2126, %v2165, %v2169
      %v2171 = vshrl.u32 %v1326, 16
      %v2173 = vor.u32 %v2171, %v2169
      %v2175 = vshll.u32 %v1327, 16
      %v2177 = vrot.slane %v2175, 1
      %v2178 = vsel %vm2126, %v2173, %v2177
      %v2179 = vshrl.u32 %v1327, 16
      %v2181 = vor.u32 %v2179, %v2177
      %v2183 = vshll.u32 %v1328, 16
      %v2185 = vrot.slane %v2183, 1
      %v2186 = vsel %vm2126, %v2181, %v2185
      %v2187 = vshrl.u32 %v1328, 16
      %v2189 = vor.u32 %v2187, %v2185
      %v2191 = vshll.u32 %v1329, 16
      %v2193 = vrot.slane %v2191, 1
      %v2194 = vsel %vm2126, %v2189, %v2193
      %v2195 = vshrl.u32 %v1329, 16
      %v2197 = vor.u32 %v2195, %v2193
      %v2199 = vshll.u32 %v1330, 16
      %v2201 = vrot.slane %v2199, 1
      %v2202 = vsel %vm2126, %v2197, %v2201
      %v2203 = vshrl.u32 %v1330, 16
      %v2205 = vor.u32 %v2203, %v2201
      %v2207 = vshll.u32 %v1331, 16
      %v2209 = vrot.slane %v2207, 1
      %v2210 = vsel %vm2126, %v2205, %v2209
      %v2211 = vshrl.u32 %v1331, 16
      %v2213 = vor.u32 %v2211, %v2209
      %v2215 = vshll.u32 %v1332, 16
      %v2217 = vrot.slane %v2215, 1
      %v2218 = vsel %vm2126, %v2213, %v2217
      %v2219 = vshrl.u32 %v1332, 16
      %v2221 = vor.u32 %v2219, %v2217
      %v2223 = vshll.u32 %v1333, 16
      %v2225 = vrot.slane %v2223, 1
      %v2226 = vsel %vm2126, %v2221, %v2225
      %v2227 = vshrl.u32 %v1333, 16
      %v2229 = vor.u32 %v2227, %v2225
      %v2231 = vshll.u32 %v1334, 16
      %v2233 = vrot.slane %v2231, 1
      %v2234 = vsel %vm2126, %v2229, %v2233
      %v2235 = vshrl.u32 %v1334, 16
      %v2237 = vor.u32 %v2235, %v2233
      %v2239 = vshll.u32 %v1335, 16
      %v2241 = vrot.slane %v2239, 1
      %v2242 = vsel %vm2126, %v2237, %v2241
      %v2243 = vshrl.u32 %v1335, 16
      %v2245 = vor.u32 %v2243, %v2241
      %v2247 = vshll.u32 %v1336, 16
      %v2249 = vrot.slane %v2247, 1
      %v2250 = vsel %vm2126, %v2245, %v2249
      %v2251 = vshrl.u32 %v1336, 16
      %v2253 = vor.u32 %v2251, %v2249
      %v2255 = vshll.u32 %v1337, 16
      %v2257 = vrot.slane %v2255, 1
      %v2258 = vsel %vm2126, %v2253, %v2257
      %v2259 = vshrl.u32 %v1337, 16
      %v2261 = vor.u32 %v2259, %v2257
      %2262 = vrot.lane.b32.xlu0 %v2138, 8
      %v2263 = vpop.permute.xlu0 %2262
      %2264 = vrot.lane.b32.xlu0 %v2146, 8
      %v2265 = vpop.permute.xlu0 %2264
      %2266 = vrot.lane.b32.xlu0 %v2154, 8
      %v2267 = vpop.permute.xlu0 %2266
      %2268 = vrot.lane.b32.xlu0 %v2162, 8
      %v2269 = vpop.permute.xlu0 %2268
      %2270 = vrot.lane.b32.xlu0 %v2170, 8
      %v2271 = vpop.permute.xlu0 %2270
      %2272 = vrot.lane.b32.xlu0 %v2178, 8
      %v2273 = vpop.permute.xlu0 %2272
      %2274 = vrot.lane.b32.xlu0 %v2186, 8
      %v2275 = vpop.permute.xlu0 %2274
      %2276 = vrot.lane.b32.xlu0 %v2194, 8
      %v2277 = vpop.permute.xlu0 %2276
      %2278 = vrot.lane.b32.xlu0 %v2202, 8
      %v2279 = vpop.permute.xlu0 %2278
      %2280 = vrot.lane.b32.xlu0 %v2210, 8
      %v2281 = vpop.permute.xlu0 %2280
      %2282 = vrot.lane.b32.xlu0 %v2218, 8
      %v2283 = vpop.permute.xlu0 %2282
      %2284 = vrot.lane.b32.xlu0 %v2226, 8
      %v2285 = vpop.permute.xlu0 %2284
      %2286 = vrot.lane.b32.xlu0 %v2234, 8
      %v2287 = vpop.permute.xlu0 %2286
      %2288 = vrot.lane.b32.xlu0 %v2242, 8
      %v2289 = vpop.permute.xlu0 %2288
      %2290 = vrot.lane.b32.xlu0 %v2250, 8
      %v2291 = vpop.permute.xlu0 %2290
      %2292 = vrot.lane.b32.xlu0 %v2258, 8
      %v2293 = vpop.permute.xlu0 %2292
      %2294 = vrot.lane.b32.xlu0 %v2261, 8
      %v2295 = vpop.permute.xlu0 %2294
      %vm2313 = vcmask 1046528
      %v2314 = vrot.slane %v2031, 1
      %v2315 = vrot.slane %v2032, 1
      %v2316 = vsel %vm2313, %v2314, %v2315
      %v2317 = vrot.slane %v2033, 1
      %v2318 = vsel %vm2313, %v2315, %v2317
      %v2319 = vrot.slane %v2034, 1
      %v2320 = vsel %vm2313, %v2317, %v2319
      %v2321 = vrot.slane %v2035, 1
      %v2322 = vsel %vm2313, %v2319, %v2321
      %v2323 = vrot.slane %v2036, 1
      %v2324 = vsel %vm2313, %v2321, %v2323
      %v2325 = vrot.slane %v2037, 1
      %v2326 = vsel %vm2313, %v2323, %v2325
      %v2327 = vrot.slane %v2038, 1
      %v2328 = vsel %vm2313, %v2325, %v2327
      %v2329 = vrot.slane %v2039, 1
      %v2330 = vsel %vm2313, %v2327, %v2329
      %v2331 = vrot.slane %v2040, 1
      %v2332 = vsel %vm2313, %v2329, %v2331
      %v2333 = vrot.slane %v2041, 1
      %v2334 = vsel %vm2313, %v2331, %v2333
      %v2335 = vrot.slane %v2042, 1
      %v2336 = vsel %vm2313, %v2333, %v2335
      %v2337 = vrot.slane %v2043, 1
      %v2338 = vsel %vm2313, %v2335, %v2337
      %v2339 = vrot.slane %v2044, 1
      %v2340 = vsel %vm2313, %v2337, %v2339
      %v2341 = vrot.slane %v2045, 1
      %v2342 = vsel %vm2313, %v2339, %v2341
      %v2343 = vrot.slane %v2046, 1
      %v2344 = vsel %vm2313, %v2341, %v2343
      %v2345 = vrot.slane %v2047, 1
      %v2346 = vsel %vm2313, %v2343, %v2345
      %2347 = vrot.lane.b32.xlu0 %v2316, 16
      %v2348 = vpop.permute.xlu0 %2347
      %2349 = vrot.lane.b32.xlu0 %v2318, 16
      %v2350 = vpop.permute.xlu0 %2349
      %2351 = vrot.lane.b32.xlu0 %v2320, 16
      %v2352 = vpop.permute.xlu0 %2351
      %2353 = vrot.lane.b32.xlu0 %v2322, 16
      %v2354 = vpop.permute.xlu0 %2353
      %2355 = vrot.lane.b32.xlu0 %v2324, 16
      %v2356 = vpop.permute.xlu0 %2355
      %2357 = vrot.lane.b32.xlu0 %v2326, 16
      %v2358 = vpop.permute.xlu0 %2357
      %2359 = vrot.lane.b32.xlu0 %v2328, 16
      %v2360 = vpop.permute.xlu0 %2359
      %2361 = vrot.lane.b32.xlu0 %v2330, 16
      %v2362 = vpop.permute.xlu0 %2361
      %2363 = vrot.lane.b32.xlu0 %v2332, 16
      %v2364 = vpop.permute.xlu0 %2363
      %2365 = vrot.lane.b32.xlu0 %v2334, 16
      %v2366 = vpop.permute.xlu0 %2365
      %2367 = vrot.lane.b32.xlu0 %v2336, 16
      %v2368 = vpop.permute.xlu0 %2367
      %2369 = vrot.lane.b32.xlu0 %v2338, 16
      %v2370 = vpop.permute.xlu0 %2369
      %2371 = vrot.lane.b32.xlu0 %v2340, 16
      %v2372 = vpop.permute.xlu0 %2371
      %2373 = vrot.lane.b32.xlu0 %v2342, 16
      %v2374 = vpop.permute.xlu0 %2373
      %2375 = vrot.lane.b32.xlu0 %v2344, 16
      %v2376 = vpop.permute.xlu0 %2375
      %2377 = vrot.lane.b32.xlu0 %v2346, 16
      %v2378 = vpop.permute.xlu0 %2377
      %2379 = vrot.lane.b32.xlu0 %v2345, 16
      %v2380 = vpop.permute.xlu0 %2379
      %2398 = vrot.lane.b32.xlu0 %v2051, 24
      %v2399 = vpop.permute.xlu0 %2398
      %2400 = vrot.lane.b32.xlu0 %v2052, 24
      %v2401 = vpop.permute.xlu0 %2400
      %2402 = vrot.lane.b32.xlu0 %v2053, 24
      %v2403 = vpop.permute.xlu0 %2402
      %2404 = vrot.lane.b32.xlu0 %v2054, 24
      %v2405 = vpop.permute.xlu0 %2404
      %2406 = vrot.lane.b32.xlu0 %v2055, 24
      %v2407 = vpop.permute.xlu0 %2406
      %2408 = vrot.lane.b32.xlu0 %v2056, 24
      %v2409 = vpop.permute.xlu0 %2408
      %2410 = vrot.lane.b32.xlu0 %v2057, 24
      %v2411 = vpop.permute.xlu0 %2410
      %2412 = vrot.lane.b32.xlu0 %v2058, 24
      %v2413 = vpop.permute.xlu0 %2412
      %2414 = vrot.lane.b32.xlu0 %v2059, 24
      %v2415 = vpop.permute.xlu0 %2414
      %2416 = vrot.lane.b32.xlu0 %v2060, 24
      %v2417 = vpop.permute.xlu0 %2416
      %2418 = vrot.lane.b32.xlu0 %v2061, 24
      %v2419 = vpop.permute.xlu0 %2418
      %2420 = vrot.lane.b32.xlu0 %v2062, 24
      %v2421 = vpop.permute.xlu0 %2420
      %2422 = vrot.lane.b32.xlu0 %v2063, 24
      %v2423 = vpop.permute.xlu0 %2422
      %2424 = vrot.lane.b32.xlu0 %v2064, 24
      %v2425 = vpop.permute.xlu0 %2424
      %2426 = vrot.lane.b32.xlu0 %v2065, 24
      %v2427 = vpop.permute.xlu0 %2426
      %2428 = vrot.lane.b32.xlu0 %v2066, 24
      %v2429 = vpop.permute.xlu0 %2428
      %2430 = vrot.lane.b32.xlu0 %v2067, 24
      %v2431 = vpop.permute.xlu0 %2430
      %v2433 = vshrl.u32 %v2068, 16
      %v2435 = vshll.u32 %v2068, 16
      %v2437 = vrot.slane %v2435, 1
      %v2438 = vor.u32 %v2433, %v2437
      %v2439 = vsel %vm2126, %v2438, %v2145
      %v2441 = vshll.u32 %v2049, 16
      %v2443 = vrot.slane %v2441, 1
      %v2444 = vsel %vm2126, %v2253, %v2443
      %v2445 = vshrl.u32 %v2049, 16
      %v2447 = vor.u32 %v2445, %v2443
      %v2449 = vshll.u32 %v2050, 16
      %v2451 = vrot.slane %v2449, 1
      %v2452 = vsel %vm2126, %v2447, %v2451
      %v2453 = vshrl.u32 %v2050, 16
      %v2455 = vor.u32 %v2453, %v2451
      %2456 = vrot.lane.b32.xlu0 %v2439, 32
      %v2457 = vpop.permute.xlu0 %2456
      %2458 = vrot.lane.b32.xlu0 %v2154, 32
      %v2459 = vpop.permute.xlu0 %2458
      %2460 = vrot.lane.b32.xlu0 %v2162, 32
      %v2461 = vpop.permute.xlu0 %2460
      %2462 = vrot.lane.b32.xlu0 %v2170, 32
      %v2463 = vpop.permute.xlu0 %2462
      %2464 = vrot.lane.b32.xlu0 %v2178, 32
      %v2465 = vpop.permute.xlu0 %2464
      %2466 = vrot.lane.b32.xlu0 %v2186, 32
      %v2467 = vpop.permute.xlu0 %2466
      %2468 = vrot.lane.b32.xlu0 %v2194, 32
      %v2469 = vpop.permute.xlu0 %2468
      %2470 = vrot.lane.b32.xlu0 %v2202, 32
      %v2471 = vpop.permute.xlu0 %2470
      %2472 = vrot.lane.b32.xlu0 %v2210, 32
      %v2473 = vpop.permute.xlu0 %2472
      %2474 = vrot.lane.b32.xlu0 %v2218, 32
      %v2475 = vpop.permute.xlu0 %2474
      %2476 = vrot.lane.b32.xlu0 %v2226, 32
      %v2477 = vpop.permute.xlu0 %2476
      %2478 = vrot.lane.b32.xlu0 %v2234, 32
      %v2479 = vpop.permute.xlu0 %2478
      %2480 = vrot.lane.b32.xlu0 %v2242, 32
      %v2481 = vpop.permute.xlu0 %2480
      %2482 = vrot.lane.b32.xlu0 %v2250, 32
      %v2483 = vpop.permute.xlu0 %2482
      %2484 = vrot.lane.b32.xlu0 %v2444, 32
      %v2485 = vpop.permute.xlu0 %2484
      %2486 = vrot.lane.b32.xlu0 %v2452, 32
      %v2487 = vpop.permute.xlu0 %2486
      %2488 = vrot.lane.b32.xlu0 %v2455, 32
      %v2489 = vpop.permute.xlu0 %2488
      %v2507 = vrot.slane %v2070, 1
      %v2508 = vrot.slane %v2071, 1
      %v2509 = vsel %vm2313, %v2507, %v2508
      %v2510 = vrot.slane %v2072, 1
      %v2511 = vsel %vm2313, %v2508, %v2510
      %v2512 = vrot.slane %v2073, 1
      %v2513 = vsel %vm2313, %v2510, %v2512
      %v2514 = vrot.slane %v2074, 1
      %v2515 = vsel %vm2313, %v2512, %v2514
      %v2516 = vrot.slane %v2075, 1
      %v2517 = vsel %vm2313, %v2514, %v2516
      %v2518 = vrot.slane %v2076, 1
      %v2519 = vsel %vm2313, %v2516, %v2518
      %v2520 = vrot.slane %v2077, 1
      %v2521 = vsel %vm2313, %v2518, %v2520
      %v2522 = vrot.slane %v2078, 1
      %v2523 = vsel %vm2313, %v2520, %v2522
      %v2524 = vrot.slane %v2079, 1
      %v2525 = vsel %vm2313, %v2522, %v2524
      %v2526 = vrot.slane %v2080, 1
      %v2527 = vsel %vm2313, %v2524, %v2526
      %v2528 = vrot.slane %v2081, 1
      %v2529 = vsel %vm2313, %v2526, %v2528
      %v2530 = vrot.slane %v2082, 1
      %v2531 = vsel %vm2313, %v2528, %v2530
      %v2532 = vrot.slane %v2083, 1
      %v2533 = vsel %vm2313, %v2530, %v2532
      %v2534 = vrot.slane %v2084, 1
      %v2535 = vsel %vm2313, %v2532, %v2534
      %v2536 = vrot.slane %v2085, 1
      %v2537 = vsel %vm2313, %v2534, %v2536
      %v2538 = vrot.slane %v2086, 1
      %v2539 = vsel %vm2313, %v2536, %v2538
      %2540 = vrot.lane.b32.xlu0 %v2509, 40
      %v2541 = vpop.permute.xlu0 %2540
      %2542 = vrot.lane.b32.xlu0 %v2511, 40
      %v2543 = vpop.permute.xlu0 %2542
      %2544 = vrot.lane.b32.xlu0 %v2513, 40
      %v2545 = vpop.permute.xlu0 %2544
      %2546 = vrot.lane.b32.xlu0 %v2515, 40
      %v2547 = vpop.permute.xlu0 %2546
      %2548 = vrot.lane.b32.xlu0 %v2517, 40
      %v2549 = vpop.permute.xlu0 %2548
      %2550 = vrot.lane.b32.xlu0 %v2519, 40
      %v2551 = vpop.permute.xlu0 %2550
      %2552 = vrot.lane.b32.xlu0 %v2521, 40
      %v2553 = vpop.permute.xlu0 %2552
      %2554 = vrot.lane.b32.xlu0 %v2523, 40
      %v2555 = vpop.permute.xlu0 %2554
      %2556 = vrot.lane.b32.xlu0 %v2525, 40
      %v2557 = vpop.permute.xlu0 %2556
      %2558 = vrot.lane.b32.xlu0 %v2527, 40
      %v2559 = vpop.permute.xlu0 %2558
      %2560 = vrot.lane.b32.xlu0 %v2529, 40
      %v2561 = vpop.permute.xlu0 %2560
      %2562 = vrot.lane.b32.xlu0 %v2531, 40
      %v2563 = vpop.permute.xlu0 %2562
      %2564 = vrot.lane.b32.xlu0 %v2533, 40
      %v2565 = vpop.permute.xlu0 %2564
      %2566 = vrot.lane.b32.xlu0 %v2535, 40
      %v2567 = vpop.permute.xlu0 %2566
      %2568 = vrot.lane.b32.xlu0 %v2537, 40
      %v2569 = vpop.permute.xlu0 %2568
      %2570 = vrot.lane.b32.xlu0 %v2539, 40
      %v2571 = vpop.permute.xlu0 %2570
      %2572 = vrot.lane.b32.xlu0 %v2538, 40
      %v2573 = vpop.permute.xlu0 %2572
      %2591 = vrot.lane.b32.xlu0 %v2090, 48
      %v2592 = vpop.permute.xlu0 %2591
      %2593 = vrot.lane.b32.xlu0 %v2091, 48
      %v2594 = vpop.permute.xlu0 %2593
      %2595 = vrot.lane.b32.xlu0 %v2092, 48
      %v2596 = vpop.permute.xlu0 %2595
      %2597 = vrot.lane.b32.xlu0 %v2093, 48
      %v2598 = vpop.permute.xlu0 %2597
      %2599 = vrot.lane.b32.xlu0 %v2094, 48
      %v2600 = vpop.permute.xlu0 %2599
      %2601 = vrot.lane.b32.xlu0 %v2095, 48
      %v2602 = vpop.permute.xlu0 %2601
      %2603 = vrot.lane.b32.xlu0 %v2096, 48
      %v2604 = vpop.permute.xlu0 %2603
      %2605 = vrot.lane.b32.xlu0 %v2097, 48
      %v2606 = vpop.permute.xlu0 %2605
      %2607 = vrot.lane.b32.xlu0 %v2098, 48
      %v2608 = vpop.permute.xlu0 %2607
      %2609 = vrot.lane.b32.xlu0 %v2099, 48
      %v2610 = vpop.permute.xlu0 %2609
      %2611 = vrot.lane.b32.xlu0 %v2100, 48
      %v2612 = vpop.permute.xlu0 %2611
      %2613 = vrot.lane.b32.xlu0 %v2101, 48
      %v2614 = vpop.permute.xlu0 %2613
      %2615 = vrot.lane.b32.xlu0 %v2102, 48
      %v2616 = vpop.permute.xlu0 %2615
      %2617 = vrot.lane.b32.xlu0 %v2103, 48
      %v2618 = vpop.permute.xlu0 %2617
      %2619 = vrot.lane.b32.xlu0 %v2104, 48
      %v2620 = vpop.permute.xlu0 %2619
      %2621 = vrot.lane.b32.xlu0 %v2105, 48
      %v2622 = vpop.permute.xlu0 %2621
      %2623 = vrot.lane.b32.xlu0 %v2106, 48
      %v2624 = vpop.permute.xlu0 %2623
      %v2626 = vshrl.u32 %v2107, 16
      %v2628 = vshll.u32 %v2107, 16
      %v2630 = vrot.slane %v2628, 1
      %v2631 = vor.u32 %v2626, %v2630
      %v2632 = vsel %vm2126, %v2631, %v2153
      %v2634 = vshll.u32 %v2088, 16
      %v2636 = vrot.slane %v2634, 1
      %v2637 = vsel %vm2126, %v2447, %v2636
      %v2638 = vshrl.u32 %v2088, 16
      %v2640 = vor.u32 %v2638, %v2636
      %v2642 = vshll.u32 %v2089, 16
      %v2644 = vrot.slane %v2642, 1
      %v2645 = vsel %vm2126, %v2640, %v2644
      %v2646 = vshrl.u32 %v2089, 16
      %v2648 = vor.u32 %v2646, %v2644
      %2649 = vrot.lane.b32.xlu0 %v2632, 56
      %v2650 = vpop.permute.xlu0 %2649
      %2651 = vrot.lane.b32.xlu0 %v2162, 56
      %v2652 = vpop.permute.xlu0 %2651
      %2653 = vrot.lane.b32.xlu0 %v2170, 56
      %v2654 = vpop.permute.xlu0 %2653
      %2655 = vrot.lane.b32.xlu0 %v2178, 56
      %v2656 = vpop.permute.xlu0 %2655
      %2657 = vrot.lane.b32.xlu0 %v2186, 56
      %v2658 = vpop.permute.xlu0 %2657
      %2659 = vrot.lane.b32.xlu0 %v2194, 56
      %v2660 = vpop.permute.xlu0 %2659
      %2661 = vrot.lane.b32.xlu0 %v2202, 56
      %v2662 = vpop.permute.xlu0 %2661
      %2663 = vrot.lane.b32.xlu0 %v2210, 56
      %v2664 = vpop.permute.xlu0 %2663
      %2665 = vrot.lane.b32.xlu0 %v2218, 56
      %v2666 = vpop.permute.xlu0 %2665
      %2667 = vrot.lane.b32.xlu0 %v2226, 56
      %v2668 = vpop.permute.xlu0 %2667
      %2669 = vrot.lane.b32.xlu0 %v2234, 56
      %v2670 = vpop.permute.xlu0 %2669
      %2671 = vrot.lane.b32.xlu0 %v2242, 56
      %v2672 = vpop.permute.xlu0 %2671
      %2673 = vrot.lane.b32.xlu0 %v2250, 56
      %v2674 = vpop.permute.xlu0 %2673
      %2675 = vrot.lane.b32.xlu0 %v2444, 56
      %v2676 = vpop.permute.xlu0 %2675
      %2677 = vrot.lane.b32.xlu0 %v2637, 56
      %v2678 = vpop.permute.xlu0 %2677
      %2679 = vrot.lane.b32.xlu0 %v2645, 56
      %v2680 = vpop.permute.xlu0 %2679
      %2681 = vrot.lane.b32.xlu0 %v2648, 56
      %v2682 = vpop.permute.xlu0 %2681
      %v2700 = vrot.slane %v2109, 1
      %v2701 = vrot.slane %v2110, 1
      %v2702 = vsel %vm2313, %v2700, %v2701
      %v2703 = vrot.slane %v2111, 1
      %v2704 = vsel %vm2313, %v2701, %v2703
      %v2705 = vrot.slane %v2112, 1
      %v2706 = vsel %vm2313, %v2703, %v2705
      %v2707 = vrot.slane %v2113, 1
      %v2708 = vsel %vm2313, %v2705, %v2707
      %v2709 = vrot.slane %v2114, 1
      %v2710 = vsel %vm2313, %v2707, %v2709
      %v2711 = vrot.slane %v2115, 1
      %v2712 = vsel %vm2313, %v2709, %v2711
      %v2713 = vrot.slane %v2116, 1
      %v2714 = vsel %vm2313, %v2711, %v2713
      %v2715 = vrot.slane %v2117, 1
      %v2716 = vsel %vm2313, %v2713, %v2715
      %v2717 = vrot.slane %v2118, 1
      %v2718 = vsel %vm2313, %v2715, %v2717
      %v2719 = vrot.slane %v2119, 1
      %v2720 = vsel %vm2313, %v2717, %v2719
      %v2721 = vrot.slane %v2120, 1
      %v2722 = vsel %vm2313, %v2719, %v2721
      %v2723 = vrot.slane %v2121, 1
      %v2724 = vsel %vm2313, %v2721, %v2723
      %v2725 = vrot.slane %v2122, 1
      %v2726 = vsel %vm2313, %v2723, %v2725
      %v2727 = vrot.slane %v2123, 1
      %v2728 = vsel %vm2313, %v2725, %v2727
      %v2729 = vrot.slane %v2124, 1
      %v2730 = vsel %vm2313, %v2727, %v2729
      %v2731 = vrot.slane %v2125, 1
      %v2732 = vsel %vm2313, %v2729, %v2731
      %2733 = vrot.lane.b32.xlu0 %v2702, 64
      %v2734 = vpop.permute.xlu0 %2733
      %2735 = vrot.lane.b32.xlu0 %v2704, 64
      %v2736 = vpop.permute.xlu0 %2735
      %2737 = vrot.lane.b32.xlu0 %v2706, 64
      %v2738 = vpop.permute.xlu0 %2737
      %2739 = vrot.lane.b32.xlu0 %v2708, 64
      %v2740 = vpop.permute.xlu0 %2739
      %2741 = vrot.lane.b32.xlu0 %v2710, 64
      %v2742 = vpop.permute.xlu0 %2741
      %2743 = vrot.lane.b32.xlu0 %v2712, 64
      %v2744 = vpop.permute.xlu0 %2743
      %2745 = vrot.lane.b32.xlu0 %v2714, 64
      %v2746 = vpop.permute.xlu0 %2745
      %2747 = vrot.lane.b32.xlu0 %v2716, 64
      %v2748 = vpop.permute.xlu0 %2747
      %2749 = vrot.lane.b32.xlu0 %v2718, 64
      %v2750 = vpop.permute.xlu0 %2749
      %2751 = vrot.lane.b32.xlu0 %v2720, 64
      %v2752 = vpop.permute.xlu0 %2751
      %2753 = vrot.lane.b32.xlu0 %v2722, 64
      %v2754 = vpop.permute.xlu0 %2753
      %2755 = vrot.lane.b32.xlu0 %v2724, 64
      %v2756 = vpop.permute.xlu0 %2755
      %2757 = vrot.lane.b32.xlu0 %v2726, 64
      %v2758 = vpop.permute.xlu0 %2757
      %2759 = vrot.lane.b32.xlu0 %v2728, 64
      %v2760 = vpop.permute.xlu0 %2759
      %2761 = vrot.lane.b32.xlu0 %v2730, 64
      %v2762 = vpop.permute.xlu0 %2761
      %2763 = vrot.lane.b32.xlu0 %v2732, 64
      %v2764 = vpop.permute.xlu0 %2763
      %2765 = vrot.lane.b32.xlu0 %v2731, 64
      %v2766 = vpop.permute.xlu0 %2765
      %v2769 = vsel %vm1303, %v1675, %v2263
      %v2772 = vsel %vm1303, %v1676, %v2265
      %v2775 = vsel %vm1303, %v1677, %v2267
      %v2778 = vsel %vm1303, %v1678, %v2269
      %v2781 = vsel %vm1303, %v1679, %v2271
      %v2784 = vsel %vm1303, %v1680, %v2273
      %v2787 = vsel %vm1303, %v1681, %v2275
      %v2790 = vsel %vm1303, %v1682, %v2277
      %v2793 = vsel %vm1303, %v1683, %v2279
      %v2796 = vsel %vm1303, %v1684, %v2281
      %v2799 = vsel %vm1303, %v1685, %v2283
      %v2802 = vsel %vm1303, %v1686, %v2285
      %v2805 = vsel %vm1303, %v1687, %v2287
      %v2808 = vsel %vm1303, %v1688, %v2289
      %v2811 = vsel %vm1303, %v1689, %v2291
      %v2814 = vsel %vm1303, %v1690, %v2293
      %v2817 = vsel %vm1303, %v1691, %v2295
      %v2819 = vsel %vm430, %v2769, %v2348
      %v2821 = vsel %vm430, %v2772, %v2350
      %v2823 = vsel %vm430, %v2775, %v2352
      %v2825 = vsel %vm430, %v2778, %v2354
      %v2827 = vsel %vm430, %v2781, %v2356
      %v2829 = vsel %vm430, %v2784, %v2358
      %v2831 = vsel %vm430, %v2787, %v2360
      %v2833 = vsel %vm430, %v2790, %v2362
      %v2835 = vsel %vm430, %v2793, %v2364
      %v2837 = vsel %vm430, %v2796, %v2366
      %v2839 = vsel %vm430, %v2799, %v2368
      %v2841 = vsel %vm430, %v2802, %v2370
      %v2843 = vsel %vm430, %v2805, %v2372
      %v2845 = vsel %vm430, %v2808, %v2374
      %v2847 = vsel %vm430, %v2811, %v2376
      %v2849 = vsel %vm430, %v2814, %v2378
      %v2851 = vsel %vm430, %v2817, %v2380
      %vm2852 = vcmask 195584
      %v2854 = vsel %vm2852, %v2819, %v2399
      %v2856 = vsel %vm2852, %v2821, %v2401
      %v2858 = vsel %vm2852, %v2823, %v2403
      %v2860 = vsel %vm2852, %v2825, %v2405
      %v2862 = vsel %vm2852, %v2827, %v2407
      %v2864 = vsel %vm2852, %v2829, %v2409
      %v2866 = vsel %vm2852, %v2831, %v2411
      %v2868 = vsel %vm2852, %v2833, %v2413
      %v2870 = vsel %vm2852, %v2835, %v2415
      %v2872 = vsel %vm2852, %v2837, %v2417
      %v2874 = vsel %vm2852, %v2839, %v2419
      %v2876 = vsel %vm2852, %v2841, %v2421
      %v2878 = vsel %vm2852, %v2843, %v2423
      %v2880 = vsel %vm2852, %v2845, %v2425
      %v2882 = vsel %vm2852, %v2847, %v2427
      %v2884 = vsel %vm2852, %v2849, %v2429
      %v2886 = vsel %vm2852, %v2851, %v2431
      %vm2887 = vcmask 261120
      %v2889 = vsel %vm2887, %v2854, %v2457
      %v2891 = vsel %vm2887, %v2856, %v2459
      %v2893 = vsel %vm2887, %v2858, %v2461
      %v2895 = vsel %vm2887, %v2860, %v2463
      %v2897 = vsel %vm2887, %v2862, %v2465
      %v2899 = vsel %vm2887, %v2864, %v2467
      %v2901 = vsel %vm2887, %v2866, %v2469
      %v2903 = vsel %vm2887, %v2868, %v2471
      %v2905 = vsel %vm2887, %v2870, %v2473
      %v2907 = vsel %vm2887, %v2872, %v2475
      %v2909 = vsel %vm2887, %v2874, %v2477
      %v2911 = vsel %vm2887, %v2876, %v2479
      %v2913 = vsel %vm2887, %v2878, %v2481
      %v2915 = vsel %vm2887, %v2880, %v2483
      %v2917 = vsel %vm2887, %v2882, %v2485
      %v2919 = vsel %vm2887, %v2884, %v2487
      %v2921 = vsel %vm2887, %v2886, %v2489
      %vm2922 = vcmask 326656
      %v2924 = vsel %vm2922, %v2889, %v2541
      %v2926 = vsel %vm2922, %v2891, %v2543
      %v2928 = vsel %vm2922, %v2893, %v2545
      %v2930 = vsel %vm2922, %v2895, %v2547
      %v2932 = vsel %vm2922, %v2897, %v2549
      %v2934 = vsel %vm2922, %v2899, %v2551
      %v2936 = vsel %vm2922, %v2901, %v2553
      %v2938 = vsel %vm2922, %v2903, %v2555
      %v2940 = vsel %vm2922, %v2905, %v2557
      %v2942 = vsel %vm2922, %v2907, %v2559
      %v2944 = vsel %vm2922, %v2909, %v2561
      %v2946 = vsel %vm2922, %v2911, %v2563
      %v2948 = vsel %vm2922, %v2913, %v2565
      %v2950 = vsel %vm2922, %v2915, %v2567
      %v2952 = vsel %vm2922, %v2917, %v2569
      %v2954 = vsel %vm2922, %v2919, %v2571
      %v2956 = vsel %vm2922, %v2921, %v2573
      %vm2957 = vcmask 392192
      %v2959 = vsel %vm2957, %v2924, %v2592
      %v2961 = vsel %vm2957, %v2926, %v2594
      %v2963 = vsel %vm2957, %v2928, %v2596
      %v2965 = vsel %vm2957, %v2930, %v2598
      %v2967 = vsel %vm2957, %v2932, %v2600
      %v2969 = vsel %vm2957, %v2934, %v2602
      %v2971 = vsel %vm2957, %v2936, %v2604
      %v2973 = vsel %vm2957, %v2938, %v2606
      %v2975 = vsel %vm2957, %v2940, %v2608
      %v2977 = vsel %vm2957, %v2942, %v2610
      %v2979 = vsel %vm2957, %v2944, %v2612
      %v2981 = vsel %vm2957, %v2946, %v2614
      %v2983 = vsel %vm2957, %v2948, %v2616
      %v2985 = vsel %vm2957, %v2950, %v2618
      %v2987 = vsel %vm2957, %v2952, %v2620
      %v2989 = vsel %vm2957, %v2954, %v2622
      %v2991 = vsel %vm2957, %v2956, %v2624
      %vm2992 = vcmask 457728
      %v2994 = vsel %vm2992, %v2959, %v2650
      %v2996 = vsel %vm2992, %v2961, %v2652
      %v2998 = vsel %vm2992, %v2963, %v2654
      %v3000 = vsel %vm2992, %v2965, %v2656
      %v3002 = vsel %vm2992, %v2967, %v2658
      %v3004 = vsel %vm2992, %v2969, %v2660
      %v3006 = vsel %vm2992, %v2971, %v2662
      %v3008 = vsel %vm2992, %v2973, %v2664
      %v3010 = vsel %vm2992, %v2975, %v2666
      %v3012 = vsel %vm2992, %v2977, %v2668
      %v3014 = vsel %vm2992, %v2979, %v2670
      %v3016 = vsel %vm2992, %v2981, %v2672
      %v3018 = vsel %vm2992, %v2983, %v2674
      %v3020 = vsel %vm2992, %v2985, %v2676
      %v3022 = vsel %vm2992, %v2987, %v2678
      %v3024 = vsel %vm2992, %v2989, %v2680
      %v3026 = vsel %vm2992, %v2991, %v2682
      %vm3027 = vcmask 523264
      %v3029 = vsel %vm3027, %v2994, %v2734
      %v3031 = vsel %vm3027, %v2996, %v2736
      %v3033 = vsel %vm3027, %v2998, %v2738
      %v3035 = vsel %vm3027, %v3000, %v2740
      %v3037 = vsel %vm3027, %v3002, %v2742
      %v3039 = vsel %vm3027, %v3004, %v2744
      %v3041 = vsel %vm3027, %v3006, %v2746
      %v3043 = vsel %vm3027, %v3008, %v2748
      %v3045 = vsel %vm3027, %v3010, %v2750
      %v3047 = vsel %vm3027, %v3012, %v2752
      %v3049 = vsel %vm3027, %v3014, %v2754
      %v3051 = vsel %vm3027, %v3016, %v2756
      %v3053 = vsel %vm3027, %v3018, %v2758
      %v3055 = vsel %vm3027, %v3020, %v2760
      %v3057 = vsel %vm3027, %v3022, %v2762
      %v3059 = vsel %vm3027, %v3024, %v2764
      %v3061 = vsel %vm3027, %v3026, %v2766
      %vm3062 = vcmask 588800
      %v3064 = vsel %vm3062, %v3029, 0
      %v3065 = vsel %vm3062, %v3031, 0
      %v3066 = vsel %vm3062, %v3033, 0
      %v3067 = vsel %vm3062, %v3035, 0
      %v3068 = vsel %vm3062, %v3037, 0
      %v3069 = vsel %vm3062, %v3039, 0
      %v3070 = vsel %vm3062, %v3041, 0
      %v3071 = vsel %vm3062, %v3043, 0
      %v3072 = vsel %vm3062, %v3045, 0
      %v3073 = vsel %vm3062, %v3047, 0
      %v3074 = vsel %vm3062, %v3049, 0
      %v3075 = vsel %vm3062, %v3051, 0
      %v3076 = vsel %vm3062, %v3053, 0
      %v3077 = vsel %vm3062, %v3055, 0
      %v3078 = vsel %vm3062, %v3057, 0
      %v3079 = vsel %vm3062, %v3059, 0
      %v3080 = vsel %vm3062, %v3061, 0
      %v3081 = vld [vmem:[%s3] sm:$0xf]
      %v3082 = vld [vmem:[%s3 + $0x4] sm:$0xf]
      %v3083 = vld [vmem:[%s3 + $0x8] sm:$0xf]
      %v3084 = vld [vmem:[%s3 + $0xc] sm:$0xf]
      %v3085 = vld [vmem:[%s3 + $0x10] sm:$0xf]
      %v3086 = vld [vmem:[%s3 + $0x14] sm:$0xf]
      %v3087 = vld [vmem:[%s3 + $0x18] sm:$0xf]
      %v3088 = vld [vmem:[%s3 + $0x1c] sm:$0xf]
      %v3089 = vld [vmem:[%s3 + $0x20] sm:$0xf]
      %v3090 = vld [vmem:[%s3 + $0x24] sm:$0xf]
      %v3091 = vld [vmem:[%s3 + $0x28] sm:$0xf]
      %v3092 = vld [vmem:[%s3 + $0x2c] sm:$0xf]
      %v3093 = vld [vmem:[%s3 + $0x30] sm:$0xf]
      %v3094 = vld [vmem:[%s3 + $0x34] sm:$0xf]
      %v3095 = vld [vmem:[%s3 + $0x38] sm:$0xf]
      %v3096 = vld [vmem:[%s3 + $0x3c] sm:$0xf]
      %v3097 = vld [vmem:[%s4] sm:$0x1]
      %v3099 = vlaneseq
      %v3100 = vshrl.u32 %v3099, 7
      %v3101 = vsub.s32 0, %v3100
      %v3102 = vrot.slane %v3097, %v3101
      %v3104 = vshrl.u32 %v3064, 16
      %v3106 = vrot.slane %v3104, 3
      %v3107 = vshll.u32 %v3064, 16
      %v3109 = vrot.slane %v3107, 4
      %v3110 = vor.u32 %v3106, %v3109
      %v3111 = vshrl.u32 %v3065, 16
      %v3113 = vrot.slane %v3111, 3
      %v3114 = vshll.u32 %v3065, 16
      %v3116 = vrot.slane %v3114, 4
      %v3117 = vor.u32 %v3113, %v3116
      %v3118 = vsel %vm1870, %v3110, %v3117
      %v3119 = vshrl.u32 %v3066, 16
      %v3121 = vrot.slane %v3119, 3
      %v3122 = vshll.u32 %v3066, 16
      %v3124 = vrot.slane %v3122, 4
      %v3125 = vor.u32 %v3121, %v3124
      %v3126 = vsel %vm1870, %v3117, %v3125
      %v3127 = vshrl.u32 %v3067, 16
      %v3129 = vrot.slane %v3127, 3
      %v3130 = vshll.u32 %v3067, 16
      %v3132 = vrot.slane %v3130, 4
      %v3133 = vor.u32 %v3129, %v3132
      %v3134 = vsel %vm1870, %v3125, %v3133
      %v3135 = vshrl.u32 %v3068, 16
      %v3137 = vrot.slane %v3135, 3
      %v3138 = vshll.u32 %v3068, 16
      %v3140 = vrot.slane %v3138, 4
      %v3141 = vor.u32 %v3137, %v3140
      %v3142 = vsel %vm1870, %v3133, %v3141
      %v3143 = vshrl.u32 %v3069, 16
      %v3145 = vrot.slane %v3143, 3
      %v3146 = vshll.u32 %v3069, 16
      %v3148 = vrot.slane %v3146, 4
      %v3149 = vor.u32 %v3145, %v3148
      %v3150 = vsel %vm1870, %v3141, %v3149
      %v3151 = vshrl.u32 %v3070, 16
      %v3153 = vrot.slane %v3151, 3
      %v3154 = vshll.u32 %v3070, 16
      %v3156 = vrot.slane %v3154, 4
      %v3157 = vor.u32 %v3153, %v3156
      %v3158 = vsel %vm1870, %v3149, %v3157
      %v3159 = vshrl.u32 %v3071, 16
      %v3161 = vrot.slane %v3159, 3
      %v3162 = vshll.u32 %v3071, 16
      %v3164 = vrot.slane %v3162, 4
      %v3165 = vor.u32 %v3161, %v3164
      %v3166 = vsel %vm1870, %v3157, %v3165
      %v3167 = vshrl.u32 %v3072, 16
      %v3169 = vrot.slane %v3167, 3
      %v3170 = vshll.u32 %v3072, 16
      %v3172 = vrot.slane %v3170, 4
      %v3173 = vor.u32 %v3169, %v3172
      %v3174 = vsel %vm1870, %v3165, %v3173
      %v3175 = vshrl.u32 %v3073, 16
      %v3177 = vrot.slane %v3175, 3
      %v3178 = vshll.u32 %v3073, 16
      %v3180 = vrot.slane %v3178, 4
      %v3181 = vor.u32 %v3177, %v3180
      %v3182 = vsel %vm1870, %v3173, %v3181
      %v3183 = vshrl.u32 %v3074, 16
      %v3185 = vrot.slane %v3183, 3
      %v3186 = vshll.u32 %v3074, 16
      %v3188 = vrot.slane %v3186, 4
      %v3189 = vor.u32 %v3185, %v3188
      %v3190 = vsel %vm1870, %v3181, %v3189
      %v3191 = vshrl.u32 %v3075, 16
      %v3193 = vrot.slane %v3191, 3
      %v3194 = vshll.u32 %v3075, 16
      %v3196 = vrot.slane %v3194, 4
      %v3197 = vor.u32 %v3193, %v3196
      %v3198 = vsel %vm1870, %v3189, %v3197
      %v3199 = vshrl.u32 %v3076, 16
      %v3201 = vrot.slane %v3199, 3
      %v3202 = vshll.u32 %v3076, 16
      %v3204 = vrot.slane %v3202, 4
      %v3205 = vor.u32 %v3201, %v3204
      %v3206 = vsel %vm1870, %v3197, %v3205
      %v3207 = vshrl.u32 %v3077, 16
      %v3209 = vrot.slane %v3207, 3
      %v3210 = vshll.u32 %v3077, 16
      %v3212 = vrot.slane %v3210, 4
      %v3213 = vor.u32 %v3209, %v3212
      %v3214 = vsel %vm1870, %v3205, %v3213
      %v3215 = vshrl.u32 %v3078, 16
      %v3217 = vrot.slane %v3215, 3
      %v3218 = vshll.u32 %v3078, 16
      %v3220 = vrot.slane %v3218, 4
      %v3221 = vor.u32 %v3217, %v3220
      %v3222 = vsel %vm1870, %v3213, %v3221
      %v3223 = vshrl.u32 %v3079, 16
      %v3225 = vrot.slane %v3223, 3
      %v3226 = vshll.u32 %v3079, 16
      %v3228 = vrot.slane %v3226, 4
      %v3229 = vor.u32 %v3225, %v3228
      %v3230 = vsel %vm1870, %v3221, %v3229
      %v3231 = vshrl.u32 %v3080, 16
      %v3233 = vrot.slane %v3231, 3
      %v3234 = vshll.u32 %v3080, 16
      %v3236 = vrot.slane %v3234, 4
      %v3237 = vor.u32 %v3233, %v3236
      %v3238 = vsel %vm1870, %v3229, %v3237
      %v3271 = vunpack.c.l.b16 %v3081
      %v3272 = vunpack.c.l.b16 %v3082
      %v3273 = vunpack.c.l.b16 %v3083
      %v3274 = vunpack.c.l.b16 %v3084
      %v3275 = vunpack.c.l.b16 %v3085
      %v3276 = vunpack.c.l.b16 %v3086
      %v3277 = vunpack.c.l.b16 %v3087
      %v3278 = vunpack.c.l.b16 %v3088
      %v3279 = vunpack.c.l.b16 %v3089
      %v3280 = vunpack.c.l.b16 %v3090
      %v3281 = vunpack.c.l.b16 %v3091
      %v3282 = vunpack.c.l.b16 %v3092
      %v3283 = vunpack.c.l.b16 %v3093
      %v3284 = vunpack.c.l.b16 %v3094
      %v3285 = vunpack.c.l.b16 %v3095
      %v3286 = vunpack.c.l.b16 %v3096
      %v3287 = vpack.c.b16 %v3272, %v3271
      %v3288 = vpack.c.b16 %v3274, %v3273
      %v3289 = vpack.c.b16 %v3276, %v3275
      %v3290 = vpack.c.b16 %v3278, %v3277
      %v3291 = vpack.c.b16 %v3280, %v3279
      %v3292 = vpack.c.b16 %v3282, %v3281
      %v3293 = vpack.c.b16 %v3284, %v3283
      %v3294 = vpack.c.b16 %v3286, %v3285
      %3303 = vmatprep.subr.bf16.mxu0 0
      %3304 = vmatpush1.bf16.msra.mxu0 %v3287
      %3305 = vmatprep.subr.bf16.mxu0 0
      %3306 = vmatpush1.bf16.msra.mxu0 %v3288
      %3307 = vmatprep.subr.bf16.mxu0 0
      %3308 = vmatpush1.bf16.msra.mxu0 %v3289
      %3309 = vmatprep.subr.bf16.mxu0 0
      %3310 = vmatpush1.bf16.msra.mxu0 %v3290
      %3311 = vmatprep.subr.bf16.mxu0 0
      %3312 = vmatpush1.bf16.msra.mxu0 %v3291
      %3313 = vmatprep.subr.bf16.mxu0 0
      %3314 = vmatpush1.bf16.msra.mxu0 %v3292
      %3315 = vmatprep.subr.bf16.mxu0 0
      %3316 = vmatpush1.bf16.msra.mxu0 %v3293
      %3317 = vmatprep.subr.bf16.mxu0 0
      %3318 = vmatpush1.bf16.msra.mxu0 %v3294
      %3319 = vmatprep.subr.bf16.mxu0 0
      %3320 = vmatpush1.bf16.msra.mxu0 0
      %3321 = vmatprep.subr.bf16.mxu0 0
      %3322 = vmatpush1.bf16.msra.mxu0 0
      %3323 = vmatprep.subr.bf16.mxu0 0
      %3324 = vmatpush1.bf16.msra.mxu0 0
      %3325 = vmatprep.subr.bf16.mxu0 0
      %3326 = vmatpush1.bf16.msra.mxu0 0
      %3327 = vmatprep.subr.bf16.mxu0 0
      %3328 = vmatpush1.bf16.msra.mxu0 0
      %3329 = vmatprep.subr.bf16.mxu0 0
      %3330 = vmatpush1.bf16.msra.mxu0 0
      %3331 = vmatprep.subr.bf16.mxu0 0
      %3332 = vmatpush1.bf16.msra.mxu0 0
      %3333 = vmatprep.subr.bf16.mxu0 0
      %3334 = vmatpush1.bf16.msra.mxu0 0
      %3335 = vmatprep.mubr.bf16.mxu0 0
      %3336 = vmatmul.mubr.bf16.gmra.mrb[0].mxu0 %v3118
      %v3337 = vpop.f32.mrb[0].mxu0
      %v3338 = vadd.f32 %v3102, %v3337
      %v3339 = vpop.f32.mrb[0].mxu0
      %v3340 = vpop.f32.mrb[0].mxu0
      %v3341 = vadd.f32 %v3102, %v3340
      %v3342 = vpop.f32.mrb[0].mxu0
      %3343 = vmatprep.mubr.bf16.mxu0 0
      %3344 = vmatmul.mubr.bf16.gmra.mrb[0].mxu0 %v3126
      %v3345 = vpop.f32.mrb[0].mxu0
      %v3346 = vadd.f32 %v3102, %v3345
      %v3347 = vpop.f32.mrb[0].mxu0
      %v3348 = vpop.f32.mrb[0].mxu0
      %v3349 = vadd.f32 %v3102, %v3348
      %v3350 = vpop.f32.mrb[0].mxu0
      %3351 = vmatprep.mubr.bf16.mxu0 0
      %3352 = vmatmul.mubr.bf16.gmra.mrb[0].mxu0 %v3134
      %v3353 = vpop.f32.mrb[0].mxu0
      %v3354 = vadd.f32 %v3102, %v3353
      %v3355 = vpop.f32.mrb[0].mxu0
      %v3356 = vpop.f32.mrb[0].mxu0
      %v3357 = vadd.f32 %v3102, %v3356
      %v3358 = vpop.f32.mrb[0].mxu0
      %3359 = vmatprep.mubr.bf16.mxu0 0
      %3360 = vmatmul.mubr.bf16.gmra.mrb[0].mxu0 %v3142
      %v3361 = vpop.f32.mrb[0].mxu0
      %v3362 = vadd.f32 %v3102, %v3361
      %v3363 = vpop.f32.mrb[0].mxu0
      %v3364 = vpop.f32.mrb[0].mxu0
      %v3365 = vadd.f32 %v3102, %v3364
      %v3366 = vpop.f32.mrb[0].mxu0
      %3367 = vmatprep.mubr.bf16.mxu0 0
      %3368 = vmatmul.mubr.bf16.gmra.mrb[0].mxu0 %v3150
      %v3369 = vpop.f32.mrb[0].mxu0
      %v3370 = vadd.f32 %v3102, %v3369
      %v3371 = vpop.f32.mrb[0].mxu0
      %v3372 = vpop.f32.mrb[0].mxu0
      %v3373 = vadd.f32 %v3102, %v3372
      %v3374 = vpop.f32.mrb[0].mxu0
      %3375 = vmatprep.mubr.bf16.mxu0 0
      %3376 = vmatmul.mubr.bf16.gmra.mrb[0].mxu0 %v3158
      %v3377 = vpop.f32.mrb[0].mxu0
      %v3378 = vadd.f32 %v3102, %v3377
      %v3379 = vpop.f32.mrb[0].mxu0
      %v3380 = vpop.f32.mrb[0].mxu0
      %v3381 = vadd.f32 %v3102, %v3380
      %v3382 = vpop.f32.mrb[0].mxu0
      %3383 = vmatprep.mubr.bf16.mxu0 0
      %3384 = vmatmul.mubr.bf16.gmra.mrb[0].mxu0 %v3166
      %v3385 = vpop.f32.mrb[0].mxu0
      %v3386 = vadd.f32 %v3102, %v3385
      %v3387 = vpop.f32.mrb[0].mxu0
      %v3388 = vpop.f32.mrb[0].mxu0
      %v3389 = vadd.f32 %v3102, %v3388
      %v3390 = vpop.f32.mrb[0].mxu0
      %3391 = vmatprep.mubr.bf16.mxu0 0
      %3392 = vmatmul.mubr.bf16.gmra.mrb[0].mxu0 %v3174
      %v3393 = vpop.f32.mrb[0].mxu0
      %v3394 = vadd.f32 %v3102, %v3393
      %v3395 = vpop.f32.mrb[0].mxu0
      %v3396 = vpop.f32.mrb[0].mxu0
      %v3397 = vadd.f32 %v3102, %v3396
      %v3398 = vpop.f32.mrb[0].mxu0
      %3399 = vmatprep.mubr.bf16.mxu0 0
      %3400 = vmatmul.mubr.bf16.gmra.mrb[0].mxu0 %v3182
      %v3401 = vpop.f32.mrb[0].mxu0
      %v3402 = vadd.f32 %v3102, %v3401
      %v3403 = vpop.f32.mrb[0].mxu0
      %v3404 = vpop.f32.mrb[0].mxu0
      %v3405 = vadd.f32 %v3102, %v3404
      %v3406 = vpop.f32.mrb[0].mxu0
      %3407 = vmatprep.mubr.bf16.mxu0 0
      %3408 = vmatmul.mubr.bf16.gmra.mrb[0].mxu0 %v3190
      %v3409 = vpop.f32.mrb[0].mxu0
      %v3410 = vadd.f32 %v3102, %v3409
      %v3411 = vpop.f32.mrb[0].mxu0
      %v3412 = vpop.f32.mrb[0].mxu0
      %v3413 = vadd.f32 %v3102, %v3412
      %v3414 = vpop.f32.mrb[0].mxu0
      %3415 = vmatprep.mubr.bf16.mxu0 0
      %3416 = vmatmul.mubr.bf16.gmra.mrb[0].mxu0 %v3198
      %v3417 = vpop.f32.mrb[0].mxu0
      %v3418 = vadd.f32 %v3102, %v3417
      %v3419 = vpop.f32.mrb[0].mxu0
      %v3420 = vpop.f32.mrb[0].mxu0
      %v3421 = vadd.f32 %v3102, %v3420
      %v3422 = vpop.f32.mrb[0].mxu0
      %3423 = vmatprep.mubr.bf16.mxu0 0
      %3424 = vmatmul.mubr.bf16.gmra.mrb[0].mxu0 %v3206
      %v3425 = vpop.f32.mrb[0].mxu0
      %v3426 = vadd.f32 %v3102, %v3425
      %v3427 = vpop.f32.mrb[0].mxu0
      %v3428 = vpop.f32.mrb[0].mxu0
      %v3429 = vadd.f32 %v3102, %v3428
      %v3430 = vpop.f32.mrb[0].mxu0
      %3431 = vmatprep.mubr.bf16.mxu0 0
      %3432 = vmatmul.mubr.bf16.gmra.mrb[0].mxu0 %v3214
      %v3433 = vpop.f32.mrb[0].mxu0
      %v3434 = vadd.f32 %v3102, %v3433
      %v3435 = vpop.f32.mrb[0].mxu0
      %v3436 = vpop.f32.mrb[0].mxu0
      %v3437 = vadd.f32 %v3102, %v3436
      %v3438 = vpop.f32.mrb[0].mxu0
      %3439 = vmatprep.mubr.bf16.mxu0 0
      %3440 = vmatmul.mubr.bf16.gmra.mrb[0].mxu0 %v3222
      %v3441 = vpop.f32.mrb[0].mxu0
      %v3442 = vadd.f32 %v3102, %v3441
      %v3443 = vpop.f32.mrb[0].mxu0
      %v3444 = vpop.f32.mrb[0].mxu0
      %v3445 = vadd.f32 %v3102, %v3444
      %v3446 = vpop.f32.mrb[0].mxu0
      %3447 = vmatprep.mubr.bf16.mxu0 0
      %3448 = vmatmul.mubr.bf16.gmra.mrb[0].mxu0 %v3230
      %v3449 = vpop.f32.mrb[0].mxu0
      %v3450 = vadd.f32 %v3102, %v3449
      %v3451 = vpop.f32.mrb[0].mxu0
      %v3452 = vpop.f32.mrb[0].mxu0
      %v3453 = vadd.f32 %v3102, %v3452
      %v3454 = vpop.f32.mrb[0].mxu0
      %3455 = vmatprep.mubr.bf16.mxu0 0
      %3456 = vmatmul.mubr.bf16.gmra.mrb[0].mxu0 %v3238
      %v3457 = vpop.f32.mrb[0].mxu0
      %v3458 = vadd.f32 %v3102, %v3457
      %v3459 = vpop.f32.mrb[0].mxu0
      %v3460 = vpop.f32.mrb[0].mxu0
      %v3461 = vadd.f32 %v3102, %v3460
      %v3462 = vpop.f32.mrb[0].mxu0
      %3463 = vdwg.mxu0
      %v3464 = vmax.f32 %v3338, 0.0
      %v3465 = vmax.f32 %v3341, 0.0
      %v3466 = vmax.f32 %v3346, 0.0
      %v3467 = vmax.f32 %v3349, 0.0
      %v3468 = vmax.f32 %v3354, 0.0
      %v3469 = vmax.f32 %v3357, 0.0
      %v3470 = vmax.f32 %v3362, 0.0
      %v3471 = vmax.f32 %v3365, 0.0
      %v3472 = vmax.f32 %v3370, 0.0
      %v3473 = vmax.f32 %v3373, 0.0
      %v3474 = vmax.f32 %v3378, 0.0
      %v3475 = vmax.f32 %v3381, 0.0
      %v3476 = vmax.f32 %v3386, 0.0
      %v3477 = vmax.f32 %v3389, 0.0
      %v3478 = vmax.f32 %v3394, 0.0
      %v3479 = vmax.f32 %v3397, 0.0
      %v3480 = vmax.f32 %v3402, 0.0
      %v3481 = vmax.f32 %v3405, 0.0
      %v3482 = vmax.f32 %v3410, 0.0
      %v3483 = vmax.f32 %v3413, 0.0
      %v3484 = vmax.f32 %v3418, 0.0
      %v3485 = vmax.f32 %v3421, 0.0
      %v3486 = vmax.f32 %v3426, 0.0
      %v3487 = vmax.f32 %v3429, 0.0
      %v3488 = vmax.f32 %v3434, 0.0
      %v3489 = vmax.f32 %v3437, 0.0
      %v3490 = vmax.f32 %v3442, 0.0
      %v3491 = vmax.f32 %v3445, 0.0
      %v3492 = vmax.f32 %v3450, 0.0
      %v3493 = vmax.f32 %v3453, 0.0
      %v3494 = vmax.f32 %v3458, 0.0
      %v3495 = vmax.f32 %v3461, 0.0
      %v3496 = vpack.c.bf16 %v3465, %v3464
      %v3497 = vpack.c.bf16 %v3467, %v3466
      %v3498 = vpack.c.bf16 %v3469, %v3468
      %v3499 = vpack.c.bf16 %v3471, %v3470
      %v3500 = vpack.c.bf16 %v3473, %v3472
      %v3501 = vpack.c.bf16 %v3475, %v3474
      %v3502 = vpack.c.bf16 %v3477, %v3476
      %v3503 = vpack.c.bf16 %v3479, %v3478
      %v3504 = vpack.c.bf16 %v3481, %v3480
      %v3505 = vpack.c.bf16 %v3483, %v3482
      %v3506 = vpack.c.bf16 %v3485, %v3484
      %v3507 = vpack.c.bf16 %v3487, %v3486
      %v3508 = vpack.c.bf16 %v3489, %v3488
      %v3509 = vpack.c.bf16 %v3491, %v3490
      %v3510 = vpack.c.bf16 %v3493, %v3492
      %v3511 = vpack.c.bf16 %v3495, %v3494
      %v3512 = vld [vmem:[%s421] sm:$0xf]
      %v3513 = vld [vmem:[%s421 + $0x4] sm:$0xf]
      %v3514 = vld [vmem:[%s421 + $0x8] sm:$0xf]
      %v3515 = vld [vmem:[%s421 + $0xc] sm:$0xf]
      %v3516 = vld [vmem:[%s421 + $0x10] sm:$0xf]
      %v3517 = vld [vmem:[%s421 + $0x14] sm:$0xf]
      %v3518 = vld [vmem:[%s421 + $0x18] sm:$0xf]
      %v3519 = vld [vmem:[%s421 + $0x1c] sm:$0xf]
      %v3520 = vld [vmem:[%s421 + $0x20] sm:$0xf]
      %v3521 = vld [vmem:[%s421 + $0x24] sm:$0xf]
      %v3522 = vld [vmem:[%s421 + $0x28] sm:$0xf]
      %v3523 = vld [vmem:[%s421 + $0x2c] sm:$0xf]
      %v3524 = vld [vmem:[%s421 + $0x30] sm:$0xf]
      %v3525 = vld [vmem:[%s421 + $0x34] sm:$0xf]
      %v3526 = vld [vmem:[%s421 + $0x38] sm:$0xf]
      %v3527 = vld [vmem:[%s421 + $0x3c] sm:$0xf]
      %v3528 = vld [vmem:[%s421 + $0x40] sm:$0xf]
      %v3529 = vld [vmem:[%s421 + $0x44] sm:$0xf]
      %v3530 = vld [vmem:[%s421 + $0x48] sm:$0xf]
      %v3531 = vld [vmem:[%s421 + $0x4c] sm:$0xf]
      %v3532 = vld [vmem:[%s421 + $0x50] sm:$0xf]
      %v3533 = vld [vmem:[%s421 + $0x54] sm:$0xf]
      %v3534 = vld [vmem:[%s421 + $0x58] sm:$0xf]
      %v3535 = vld [vmem:[%s421 + $0x5c] sm:$0xf]
      %v3536 = vld [vmem:[%s421 + $0x60] sm:$0xf]
      %v3537 = vld [vmem:[%s421 + $0x64] sm:$0xf]
      %v3538 = vld [vmem:[%s421 + $0x68] sm:$0xf]
      %v3539 = vld [vmem:[%s421 + $0x6c] sm:$0xf]
      %v3540 = vld [vmem:[%s421 + $0x70] sm:$0xf]
      %v3541 = vld [vmem:[%s421 + $0x74] sm:$0xf]
      %v3542 = vld [vmem:[%s421 + $0x78] sm:$0xf]
      %v3543 = vld [vmem:[%s421 + $0x7c] sm:$0xf]
      %v3576 = vunpack.c.l.b16 %v3512
      %v3577 = vunpack.c.l.b16 %v3513
      %v3578 = vunpack.c.l.b16 %v3514
      %v3579 = vunpack.c.l.b16 %v3515
      %v3580 = vunpack.c.l.b16 %v3516
      %v3581 = vunpack.c.l.b16 %v3517
      %v3582 = vunpack.c.l.b16 %v3518
      %v3583 = vunpack.c.l.b16 %v3519
      %v3584 = vunpack.c.l.b16 %v3520
      %v3585 = vunpack.c.l.b16 %v3521
      %v3586 = vunpack.c.l.b16 %v3522
      %v3587 = vunpack.c.l.b16 %v3523
      %v3588 = vunpack.c.l.b16 %v3524
      %v3589 = vunpack.c.l.b16 %v3525
      %v3590 = vunpack.c.l.b16 %v3526
      %v3591 = vunpack.c.l.b16 %v3527
      %v3592 = vunpack.c.l.b16 %v3528
      %v3593 = vunpack.c.l.b16 %v3529
      %v3594 = vunpack.c.l.b16 %v3530
      %v3595 = vunpack.c.l.b16 %v3531
      %v3596 = vunpack.c.l.b16 %v3532
      %v3597 = vunpack.c.l.b16 %v3533
      %v3598 = vunpack.c.l.b16 %v3534
      %v3599 = vunpack.c.l.b16 %v3535
      %v3600 = vunpack.c.l.b16 %v3536
      %v3601 = vunpack.c.l.b16 %v3537
      %v3602 = vunpack.c.l.b16 %v3538
      %v3603 = vunpack.c.l.b16 %v3539
      %v3604 = vunpack.c.l.b16 %v3540
      %v3605 = vunpack.c.l.b16 %v3541
      %v3606 = vunpack.c.l.b16 %v3542
      %v3607 = vunpack.c.l.b16 %v3543
      %v3608 = vpack.c.b16 %v3577, %v3576
      %v3609 = vpack.c.b16 %v3579, %v3578
      %v3610 = vpack.c.b16 %v3581, %v3580
      %v3611 = vpack.c.b16 %v3583, %v3582
      %v3612 = vpack.c.b16 %v3585, %v3584
      %v3613 = vpack.c.b16 %v3587, %v3586
      %v3614 = vpack.c.b16 %v3589, %v3588
      %v3615 = vpack.c.b16 %v3591, %v3590
      %v3616 = vpack.c.b16 %v3593, %v3592
      %v3617 = vpack.c.b16 %v3595, %v3594
      %v3618 = vpack.c.b16 %v3597, %v3596
      %v3619 = vpack.c.b16 %v3599, %v3598
      %v3620 = vpack.c.b16 %v3601, %v3600
      %v3621 = vpack.c.b16 %v3603, %v3602
      %v3622 = vpack.c.b16 %v3605, %v3604
      %v3623 = vpack.c.b16 %v3607, %v3606
      %3640 = vrot.lane.b32.xlu0 %v3496, 8
      %v3641 = vpop.permute.xlu0 %3640
      %3642 = vrot.lane.b32.xlu0 %v3497, 8
      %v3643 = vpop.permute.xlu0 %3642
      %3644 = vrot.lane.b32.xlu0 %v3498, 8
      %v3645 = vpop.permute.xlu0 %3644
      %3646 = vrot.lane.b32.xlu0 %v3499, 8
      %v3647 = vpop.permute.xlu0 %3646
      %3648 = vrot.lane.b32.xlu0 %v3500, 8
      %v3649 = vpop.permute.xlu0 %3648
      %3650 = vrot.lane.b32.xlu0 %v3501, 8
      %v3651 = vpop.permute.xlu0 %3650
      %3652 = vrot.lane.b32.xlu0 %v3502, 8
      %v3653 = vpop.permute.xlu0 %3652
      %3654 = vrot.lane.b32.xlu0 %v3503, 8
      %v3655 = vpop.permute.xlu0 %3654
      %3656 = vrot.lane.b32.xlu0 %v3504, 8
      %v3657 = vpop.permute.xlu0 %3656
      %3658 = vrot.lane.b32.xlu0 %v3505, 8
      %v3659 = vpop.permute.xlu0 %3658
      %3660 = vrot.lane.b32.xlu0 %v3506, 8
      %v3661 = vpop.permute.xlu0 %3660
      %3662 = vrot.lane.b32.xlu0 %v3507, 8
      %v3663 = vpop.permute.xlu0 %3662
      %3664 = vrot.lane.b32.xlu0 %v3508, 8
      %v3665 = vpop.permute.xlu0 %3664
      %3666 = vrot.lane.b32.xlu0 %v3509, 8
      %v3667 = vpop.permute.xlu0 %3666
      %3668 = vrot.lane.b32.xlu0 %v3510, 8
      %v3669 = vpop.permute.xlu0 %3668
      %3670 = vrot.lane.b32.xlu0 %v3511, 8
      %v3671 = vpop.permute.xlu0 %3670
      %v3674 = vsel %vm1303, %v3608, %v3641
      %v3677 = vsel %vm1303, %v3609, %v3643
      %v3680 = vsel %vm1303, %v3610, %v3645
      %v3683 = vsel %vm1303, %v3611, %v3647
      %v3686 = vsel %vm1303, %v3612, %v3649
      %v3689 = vsel %vm1303, %v3613, %v3651
      %v3692 = vsel %vm1303, %v3614, %v3653
      %v3695 = vsel %vm1303, %v3615, %v3655
      %v3698 = vsel %vm1303, %v3616, %v3657
      %v3701 = vsel %vm1303, %v3617, %v3659
      %v3704 = vsel %vm1303, %v3618, %v3661
      %v3707 = vsel %vm1303, %v3619, %v3663
      %v3710 = vsel %vm1303, %v3620, %v3665
      %v3713 = vsel %vm1303, %v3621, %v3667
      %v3716 = vsel %vm1303, %v3622, %v3669
      %v3719 = vsel %vm1303, %v3623, %v3671
      %v3720 = vsel %vm2852, %v3674, 0
      %v3722 = vsel %vm2852, %v3677, 0
      %v3724 = vsel %vm2852, %v3680, 0
      %v3726 = vsel %vm2852, %v3683, 0
      %v3728 = vsel %vm2852, %v3686, 0
      %v3730 = vsel %vm2852, %v3689, 0
      %v3732 = vsel %vm2852, %v3692, 0
      %v3734 = vsel %vm2852, %v3695, 0
      %v3736 = vsel %vm2852, %v3698, 0
      %v3738 = vsel %vm2852, %v3701, 0
      %v3740 = vsel %vm2852, %v3704, 0
      %v3742 = vsel %vm2852, %v3707, 0
      %v3744 = vsel %vm2852, %v3710, 0
      %v3746 = vsel %vm2852, %v3713, 0
      %v3748 = vsel %vm2852, %v3716, 0
      %v3750 = vsel %vm2852, %v3719, 0
      %v3752 = vld [vmem:[%s5] sm:$0xf]
      %v3753 = vld [vmem:[%s5 + $0x4] sm:$0xf]
      %v3754 = vld [vmem:[%s5 + $0x8] sm:$0xf]
      %v3755 = vld [vmem:[%s5 + $0xc] sm:$0xf]
      %v3756 = vld [vmem:[%s5 + $0x10] sm:$0xf]
      %v3757 = vld [vmem:[%s5 + $0x14] sm:$0xf]
      %v3758 = vld [vmem:[%s5 + $0x18] sm:$0xf]
      %v3759 = vld [vmem:[%s5 + $0x1c] sm:$0xf]
      %v3760 = vld [vmem:[%s5 + $0x20] sm:$0xf]
      %v3761 = vld [vmem:[%s5 + $0x24] sm:$0xf]
      %v3762 = vld [vmem:[%s5 + $0x28] sm:$0xf]
      %v3763 = vld [vmem:[%s5 + $0x2c] sm:$0xf]
      %v3764 = vld [vmem:[%s5 + $0x30] sm:$0xf]
      %v3765 = vld [vmem:[%s5 + $0x34] sm:$0xf]
      %v3766 = vld [vmem:[%s5 + $0x38] sm:$0xf]
      %v3767 = vld [vmem:[%s5 + $0x3c] sm:$0xf]
      %v3768 = vld [vmem:[%s6] sm:$0x1]
      %v3770 = vlaneseq
      %v3771 = vshrl.u32 %v3770, 7
      %v3772 = vsub.s32 0, %v3771
      %v3773 = vrot.slane %v3768, %v3772
      %v3791 = vunpack.c.l.b16 %v3752
      %v3792 = vunpack.c.l.b16 %v3753
      %v3793 = vunpack.c.l.b16 %v3754
      %v3794 = vunpack.c.l.b16 %v3755
      %v3795 = vunpack.c.l.b16 %v3756
      %v3796 = vunpack.c.l.b16 %v3757
      %v3797 = vunpack.c.l.b16 %v3758
      %v3798 = vunpack.c.l.b16 %v3759
      %v3799 = vunpack.c.l.b16 %v3760
      %v3800 = vunpack.c.l.b16 %v3761
      %v3801 = vunpack.c.l.b16 %v3762
      %v3802 = vunpack.c.l.b16 %v3763
      %v3803 = vunpack.c.l.b16 %v3764
      %v3804 = vunpack.c.l.b16 %v3765
      %v3805 = vunpack.c.l.b16 %v3766
      %v3806 = vunpack.c.l.b16 %v3767
      %v3807 = vpack.c.b16 %v3792, %v3791
      %v3808 = vpack.c.b16 %v3794, %v3793
      %v3809 = vpack.c.b16 %v3796, %v3795
      %v3810 = vpack.c.b16 %v3798, %v3797
      %v3811 = vpack.c.b16 %v3800, %v3799
      %v3812 = vpack.c.b16 %v3802, %v3801
      %v3813 = vpack.c.b16 %v3804, %v3803
      %v3814 = vpack.c.b16 %v3806, %v3805
      %3823 = vmatprep.subr.bf16.mxu0 0
      %3824 = vmatpush1.bf16.msra.mxu0 %v3807
      %3825 = vmatprep.subr.bf16.mxu0 0
      %3826 = vmatpush1.bf16.msra.mxu0 %v3808
      %3827 = vmatprep.subr.bf16.mxu0 0
      %3828 = vmatpush1.bf16.msra.mxu0 %v3809
      %3829 = vmatprep.subr.bf16.mxu0 0
      %3830 = vmatpush1.bf16.msra.mxu0 %v3810
      %3831 = vmatprep.subr.bf16.mxu0 0
      %3832 = vmatpush1.bf16.msra.mxu0 %v3811
      %3833 = vmatprep.subr.bf16.mxu0 0
      %3834 = vmatpush1.bf16.msra.mxu0 %v3812
      %3835 = vmatprep.subr.bf16.mxu0 0
      %3836 = vmatpush1.bf16.msra.mxu0 %v3813
      %3837 = vmatprep.subr.bf16.mxu0 0
      %3838 = vmatpush1.bf16.msra.mxu0 %v3814
      %3839 = vmatprep.subr.bf16.mxu0 0
      %3840 = vmatpush1.bf16.msra.mxu0 0
      %3841 = vmatprep.subr.bf16.mxu0 0
      %3842 = vmatpush1.bf16.msra.mxu0 0
      %3843 = vmatprep.subr.bf16.mxu0 0
      %3844 = vmatpush1.bf16.msra.mxu0 0
      %3845 = vmatprep.subr.bf16.mxu0 0
      %3846 = vmatpush1.bf16.msra.mxu0 0
      %3847 = vmatprep.subr.bf16.mxu0 0
      %3848 = vmatpush1.bf16.msra.mxu0 0
      %3849 = vmatprep.subr.bf16.mxu0 0
      %3850 = vmatpush1.bf16.msra.mxu0 0
      %3851 = vmatprep.subr.bf16.mxu0 0
      %3852 = vmatpush1.bf16.msra.mxu0 0
      %3853 = vmatprep.subr.bf16.mxu0 0
      %3854 = vmatpush1.bf16.msra.mxu0 0
      %3855 = vmatprep.mubr.bf16.mxu0 0
      %3856 = vmatmul.mubr.bf16.gmra.mrb[0].mxu0 %v3720
      %v3857 = vpop.f32.mrb[0].mxu0
      %v3858 = vadd.f32 %v3773, %v3857
      %v3859 = vpop.f32.mrb[0].mxu0
      %v3860 = vpop.f32.mrb[0].mxu0
      %v3861 = vadd.f32 %v3773, %v3860
      %v3862 = vpop.f32.mrb[0].mxu0
      %3863 = vmatprep.mubr.bf16.mxu0 0
      %3864 = vmatmul.mubr.bf16.gmra.mrb[0].mxu0 %v3722
      %v3865 = vpop.f32.mrb[0].mxu0
      %v3866 = vadd.f32 %v3773, %v3865
      %v3867 = vpop.f32.mrb[0].mxu0
      %v3868 = vpop.f32.mrb[0].mxu0
      %v3869 = vadd.f32 %v3773, %v3868
      %v3870 = vpop.f32.mrb[0].mxu0
      %3871 = vmatprep.mubr.bf16.mxu0 0
      %3872 = vmatmul.mubr.bf16.gmra.mrb[0].mxu0 %v3724
      %v3873 = vpop.f32.mrb[0].mxu0
      %v3874 = vadd.f32 %v3773, %v3873
      %v3875 = vpop.f32.mrb[0].mxu0
      %v3876 = vpop.f32.mrb[0].mxu0
      %v3877 = vadd.f32 %v3773, %v3876
      %v3878 = vpop.f32.mrb[0].mxu0
      %3879 = vmatprep.mubr.bf16.mxu0 0
      %3880 = vmatmul.mubr.bf16.gmra.mrb[0].mxu0 %v3726
      %v3881 = vpop.f32.mrb[0].mxu0
      %v3882 = vadd.f32 %v3773, %v3881
      %v3883 = vpop.f32.mrb[0].mxu0
      %v3884 = vpop.f32.mrb[0].mxu0
      %v3885 = vadd.f32 %v3773, %v3884
      %v3886 = vpop.f32.mrb[0].mxu0
      %3887 = vmatprep.mubr.bf16.mxu0 0
      %3888 = vmatmul.mubr.bf16.gmra.mrb[0].mxu0 %v3728
      %v3889 = vpop.f32.mrb[0].mxu0
      %v3890 = vadd.f32 %v3773, %v3889
      %v3891 = vpop.f32.mrb[0].mxu0
      %v3892 = vpop.f32.mrb[0].mxu0
      %v3893 = vadd.f32 %v3773, %v3892
      %v3894 = vpop.f32.mrb[0].mxu0
      %3895 = vmatprep.mubr.bf16.mxu0 0
      %3896 = vmatmul.mubr.bf16.gmra.mrb[0].mxu0 %v3730
      %v3897 = vpop.f32.mrb[0].mxu0
      %v3898 = vadd.f32 %v3773, %v3897
      %v3899 = vpop.f32.mrb[0].mxu0
      %v3900 = vpop.f32.mrb[0].mxu0
      %v3901 = vadd.f32 %v3773, %v3900
      %v3902 = vpop.f32.mrb[0].mxu0
      %3903 = vmatprep.mubr.bf16.mxu0 0
      %3904 = vmatmul.mubr.bf16.gmra.mrb[0].mxu0 %v3732
      %v3905 = vpop.f32.mrb[0].mxu0
      %v3906 = vadd.f32 %v3773, %v3905
      %v3907 = vpop.f32.mrb[0].mxu0
      %v3908 = vpop.f32.mrb[0].mxu0
      %v3909 = vadd.f32 %v3773, %v3908
      %v3910 = vpop.f32.mrb[0].mxu0
      %3911 = vmatprep.mubr.bf16.mxu0 0
      %3912 = vmatmul.mubr.bf16.gmra.mrb[0].mxu0 %v3734
      %v3913 = vpop.f32.mrb[0].mxu0
      %v3914 = vadd.f32 %v3773, %v3913
      %v3915 = vpop.f32.mrb[0].mxu0
      %v3916 = vpop.f32.mrb[0].mxu0
      %v3917 = vadd.f32 %v3773, %v3916
      %v3918 = vpop.f32.mrb[0].mxu0
      %3919 = vmatprep.mubr.bf16.mxu0 0
      %3920 = vmatmul.mubr.bf16.gmra.mrb[0].mxu0 %v3736
      %v3921 = vpop.f32.mrb[0].mxu0
      %v3922 = vadd.f32 %v3773, %v3921
      %v3923 = vpop.f32.mrb[0].mxu0
      %v3924 = vpop.f32.mrb[0].mxu0
      %v3925 = vadd.f32 %v3773, %v3924
      %v3926 = vpop.f32.mrb[0].mxu0
      %3927 = vmatprep.mubr.bf16.mxu0 0
      %3928 = vmatmul.mubr.bf16.gmra.mrb[0].mxu0 %v3738
      %v3929 = vpop.f32.mrb[0].mxu0
      %v3930 = vadd.f32 %v3773, %v3929
      %v3931 = vpop.f32.mrb[0].mxu0
      %v3932 = vpop.f32.mrb[0].mxu0
      %v3933 = vadd.f32 %v3773, %v3932
      %v3934 = vpop.f32.mrb[0].mxu0
      %3935 = vmatprep.mubr.bf16.mxu0 0
      %3936 = vmatmul.mubr.bf16.gmra.mrb[0].mxu0 %v3740
      %v3937 = vpop.f32.mrb[0].mxu0
      %v3938 = vadd.f32 %v3773, %v3937
      %v3939 = vpop.f32.mrb[0].mxu0
      %v3940 = vpop.f32.mrb[0].mxu0
      %v3941 = vadd.f32 %v3773, %v3940
      %v3942 = vpop.f32.mrb[0].mxu0
      %3943 = vmatprep.mubr.bf16.mxu0 0
      %3944 = vmatmul.mubr.bf16.gmra.mrb[0].mxu0 %v3742
      %v3945 = vpop.f32.mrb[0].mxu0
      %v3946 = vadd.f32 %v3773, %v3945
      %v3947 = vpop.f32.mrb[0].mxu0
      %v3948 = vpop.f32.mrb[0].mxu0
      %v3949 = vadd.f32 %v3773, %v3948
      %v3950 = vpop.f32.mrb[0].mxu0
      %3951 = vmatprep.mubr.bf16.mxu0 0
      %3952 = vmatmul.mubr.bf16.gmra.mrb[0].mxu0 %v3744
      %v3953 = vpop.f32.mrb[0].mxu0
      %v3954 = vadd.f32 %v3773, %v3953
      %v3955 = vpop.f32.mrb[0].mxu0
      %v3956 = vpop.f32.mrb[0].mxu0
      %v3957 = vadd.f32 %v3773, %v3956
      %v3958 = vpop.f32.mrb[0].mxu0
      %3959 = vmatprep.mubr.bf16.mxu0 0
      %3960 = vmatmul.mubr.bf16.gmra.mrb[0].mxu0 %v3746
      %v3961 = vpop.f32.mrb[0].mxu0
      %v3962 = vadd.f32 %v3773, %v3961
      %v3963 = vpop.f32.mrb[0].mxu0
      %v3964 = vpop.f32.mrb[0].mxu0
      %v3965 = vadd.f32 %v3773, %v3964
      %v3966 = vpop.f32.mrb[0].mxu0
      %3967 = vmatprep.mubr.bf16.mxu0 0
      %3968 = vmatmul.mubr.bf16.gmra.mrb[0].mxu0 %v3748
      %v3969 = vpop.f32.mrb[0].mxu0
      %v3970 = vadd.f32 %v3773, %v3969
      %v3971 = vpop.f32.mrb[0].mxu0
      %v3972 = vpop.f32.mrb[0].mxu0
      %v3973 = vadd.f32 %v3773, %v3972
      %v3974 = vpop.f32.mrb[0].mxu0
      %3975 = vmatprep.mubr.bf16.mxu0 0
      %3976 = vmatmul.mubr.bf16.gmra.mrb[0].mxu0 %v3750
      %v3977 = vpop.f32.mrb[0].mxu0
      %v3978 = vadd.f32 %v3773, %v3977
      %v3979 = vpop.f32.mrb[0].mxu0
      %v3980 = vpop.f32.mrb[0].mxu0
      %v3981 = vadd.f32 %v3773, %v3980
      %v3982 = vpop.f32.mrb[0].mxu0
      %3983 = vdwg.mxu0
      %v3984 = vpack.c.bf16 %v3861, %v3858
      %v3985 = vpack.c.bf16 %v3869, %v3866
      %v3986 = vpack.c.bf16 %v3877, %v3874
      %v3987 = vpack.c.bf16 %v3885, %v3882
      %v3988 = vpack.c.bf16 %v3893, %v3890
      %v3989 = vpack.c.bf16 %v3901, %v3898
      %v3990 = vpack.c.bf16 %v3909, %v3906
      %v3991 = vpack.c.bf16 %v3917, %v3914
      %v3992 = vpack.c.bf16 %v3925, %v3922
      %v3993 = vpack.c.bf16 %v3933, %v3930
      %v3994 = vpack.c.bf16 %v3941, %v3938
      %v3995 = vpack.c.bf16 %v3949, %v3946
      %v3996 = vpack.c.bf16 %v3957, %v3954
      %v3997 = vpack.c.bf16 %v3965, %v3962
      %v3998 = vpack.c.bf16 %v3973, %v3970
      %v3999 = vpack.c.bf16 %v3981, %v3978
      %v4016 = vrot.slane %v3984, 4
      %v4017 = vrot.slane %v3985, 4
      %v4018 = vsel %vm1252, %v4016, %v4017
      %v4019 = vrot.slane %v3986, 4
      %v4020 = vsel %vm1252, %v4017, %v4019
      %v4021 = vrot.slane %v3987, 4
      %v4022 = vsel %vm1252, %v4019, %v4021
      %v4023 = vrot.slane %v3988, 4
      %v4024 = vsel %vm1252, %v4021, %v4023
      %v4025 = vrot.slane %v3989, 4
      %v4026 = vsel %vm1252, %v4023, %v4025
      %v4027 = vrot.slane %v3990, 4
      %v4028 = vsel %vm1252, %v4025, %v4027
      %v4029 = vrot.slane %v3991, 4
      %v4030 = vsel %vm1252, %v4027, %v4029
      %v4031 = vrot.slane %v3992, 4
      %v4032 = vsel %vm1252, %v4029, %v4031
      %v4033 = vrot.slane %v3993, 4
      %v4034 = vsel %vm1252, %v4031, %v4033
      %v4035 = vrot.slane %v3994, 4
      %v4036 = vsel %vm1252, %v4033, %v4035
      %v4037 = vrot.slane %v3995, 4
      %v4038 = vsel %vm1252, %v4035, %v4037
      %v4039 = vrot.slane %v3996, 4
      %v4040 = vsel %vm1252, %v4037, %v4039
      %v4041 = vrot.slane %v3997, 4
      %v4042 = vsel %vm1252, %v4039, %v4041
      %v4043 = vrot.slane %v3998, 4
      %v4044 = vsel %vm1252, %v4041, %v4043
      %v4045 = vrot.slane %v3999, 4
      %v4046 = vsel %vm1252, %v4043, %v4045
      %vm4064 = vcmask 130052
      %4065 = vst.msk [vmem:[#allocation2 + $0x8] sm:$0xf0] %vm4064, %v4016
      %4066 = vst.msk [vmem:[#allocation2 + $0x10] sm:$0xff] %vm430, %v4018
      %4067 = vst.msk [vmem:[#allocation2 + $0x18] sm:$0xff] %vm430, %v4020
      %4068 = vst.msk [vmem:[#allocation2 + $0x20] sm:$0xff] %vm430, %v4022
      %4069 = vst.msk [vmem:[#allocation2 + $0x28] sm:$0xff] %vm430, %v4024
      %4070 = vst.msk [vmem:[#allocation2 + $0x30] sm:$0xff] %vm430, %v4026
      %4071 = vst.msk [vmem:[#allocation2 + $0x38] sm:$0xff] %vm430, %v4028
      %4072 = vst.msk [vmem:[#allocation2 + $0x40] sm:$0xff] %vm430, %v4030
      %4073 = vst.msk [vmem:[#allocation2 + $0x48] sm:$0xff] %vm430, %v4032
      %4074 = vst.msk [vmem:[#allocation2 + $0x50] sm:$0xff] %vm430, %v4034
      %4075 = vst.msk [vmem:[#allocation2 + $0x58] sm:$0xff] %vm430, %v4036
      %4076 = vst.msk [vmem:[#allocation2 + $0x60] sm:$0xff] %vm430, %v4038
      %4077 = vst.msk [vmem:[#allocation2 + $0x68] sm:$0xff] %vm430, %v4040
      %4078 = vst.msk [vmem:[#allocation2 + $0x70] sm:$0xff] %vm430, %v4042
      %4079 = vst.msk [vmem:[#allocation2 + $0x78] sm:$0xff] %vm430, %v4044
      %4080 = vst.msk [vmem:[#allocation2 + $0x80] sm:$0xff] %vm430, %v4046
      %vm4081 = vcmask 125952
      %4082 = vst.msk [vmem:[#allocation2 + $0x88] sm:$0xf] %vm4081, %v4045
      %v4083 = vld [vmem:[#allocation2] sm:$0xf8]
      %v4084 = vld [vmem:[#allocation2 + $0x8] sm:$0xff]
      %v4085 = vld [vmem:[#allocation2 + $0x10] sm:$0xff]
      %v4086 = vld [vmem:[#allocation2 + $0x18] sm:$0xff]
      %v4087 = vld [vmem:[#allocation2 + $0x20] sm:$0xff]
      %v4088 = vld [vmem:[#allocation2 + $0x28] sm:$0xff]
      %v4089 = vld [vmem:[#allocation2 + $0x30] sm:$0xff]
      %v4090 = vld [vmem:[#allocation2 + $0x38] sm:$0xff]
      %v4091 = vld [vmem:[#allocation2 + $0x40] sm:$0xff]
      %v4092 = vld [vmem:[#allocation2 + $0x48] sm:$0xff]
      %v4093 = vld [vmem:[#allocation2 + $0x50] sm:$0xff]
      %v4094 = vld [vmem:[#allocation2 + $0x58] sm:$0xff]
      %v4095 = vld [vmem:[#allocation2 + $0x60] sm:$0xff]
      %v4096 = vld [vmem:[#allocation2 + $0x68] sm:$0xff]
      %v4097 = vld [vmem:[#allocation2 + $0x70] sm:$0xff]
      %v4098 = vld [vmem:[#allocation2 + $0x78] sm:$0xff]
      %v4099 = vld [vmem:[#allocation2 + $0x80] sm:$0xf]
      %v4100 = vsel %vm1658, %v4083, 0
      %v4101 = vsel %vm1659, %v4084, 0
      %v4102 = vsel %vm1660, %v4085, 0
      %v4103 = vsel %vm1661, %v4086, 0
      %v4104 = vsel %vm1662, %v4087, 0
      %v4105 = vsel %vm1663, %v4088, 0
      %v4106 = vsel %vm1664, %v4089, 0
      %v4107 = vsel %vm1665, %v4090, 0
      %v4108 = vsel %vm1666, %v4091, 0
      %v4109 = vsel %vm1667, %v4092, 0
      %v4110 = vsel %vm1668, %v4093, 0
      %v4111 = vsel %vm1669, %v4094, 0
      %v4112 = vsel %vm1670, %v4095, 0
      %v4113 = vsel %vm1671, %v4096, 0
      %v4114 = vsel %vm1672, %v4097, 0
      %v4115 = vsel %vm1673, %v4098, 0
      %v4116 = vsel %vm1674, %v4099, 0
      %v4117 = vld [vmem:[#allocation2] sm:$0xf0]
      %v4118 = vld [vmem:[#allocation2 + $0x80] sm:$0x1f]
      %v4119 = vsel %vm2014, %v4117, 0
      %v4120 = vsel %vm2015, %v4084, 0
      %v4121 = vsel %vm2016, %v4085, 0
      %v4122 = vsel %vm2017, %v4086, 0
      %v4123 = vsel %vm2018, %v4087, 0
      %v4124 = vsel %vm2019, %v4088, 0
      %v4125 = vsel %vm2020, %v4089, 0
      %v4126 = vsel %vm2021, %v4090, 0
      %v4127 = vsel %vm2022, %v4091, 0
      %v4128 = vsel %vm2023, %v4092, 0
      %v4129 = vsel %vm2024, %v4093, 0
      %v4130 = vsel %vm2025, %v4094, 0
      %v4131 = vsel %vm2026, %v4095, 0
      %v4132 = vsel %vm2027, %v4096, 0
      %v4133 = vsel %vm2028, %v4097, 0
      %v4134 = vsel %vm2029, %v4098, 0
      %v4135 = vsel %vm2030, %v4118, 0
      %v4136 = vld [vmem:[#allocation2 + $0x8] sm:$0xf8]
      %v4137 = vld [vmem:[#allocation2 + $0x80] sm:$0xff]
      %v4138 = vld [vmem:[#allocation2 + $0x88] sm:$0xf]
      %v4139 = vsel %vm1658, %v4136, 0
      %v4140 = vsel %vm1659, %v4085, 0
      %v4141 = vsel %vm1660, %v4086, 0
      %v4142 = vsel %vm1661, %v4087, 0
      %v4143 = vsel %vm1662, %v4088, 0
      %v4144 = vsel %vm1663, %v4089, 0
      %v4145 = vsel %vm1664, %v4090, 0
      %v4146 = vsel %vm1665, %v4091, 0
      %v4147 = vsel %vm1666, %v4092, 0
      %v4148 = vsel %vm1667, %v4093, 0
      %v4149 = vsel %vm1668, %v4094, 0
      %v4150 = vsel %vm1669, %v4095, 0
      %v4151 = vsel %vm1670, %v4096, 0
      %v4152 = vsel %vm1671, %v4097, 0
      %v4153 = vsel %vm1672, %v4098, 0
      %v4154 = vsel %vm1673, %v4137, 0
      %v4155 = vsel %vm1674, %v4138, 0
      %v4156 = vld [vmem:[#allocation2 + $0x8] sm:$0xf0]
      %v4157 = vld [vmem:[#allocation2 + $0x88] sm:$0x1f]
      %v4158 = vsel %vm2014, %v4156, 0
      %v4159 = vsel %vm2015, %v4085, 0
      %v4160 = vsel %vm2016, %v4086, 0
      %v4161 = vsel %vm2017, %v4087, 0
      %v4162 = vsel %vm2018, %v4088, 0
      %v4163 = vsel %vm2019, %v4089, 0
      %v4164 = vsel %vm2020, %v4090, 0
      %v4165 = vsel %vm2021, %v4091, 0
      %v4166 = vsel %vm2022, %v4092, 0
      %v4167 = vsel %vm2023, %v4093, 0
      %v4168 = vsel %vm2024, %v4094, 0
      %v4169 = vsel %vm2025, %v4095, 0
      %v4170 = vsel %vm2026, %v4096, 0
      %v4171 = vsel %vm2027, %v4097, 0
      %v4172 = vsel %vm2028, %v4098, 0
      %v4173 = vsel %vm2029, %v4137, 0
      %v4174 = vsel %vm2030, %v4157, 0
      %v4175 = vld [vmem:[#allocation2 + $0x10] sm:$0xf8]
      %v4176 = vld [vmem:[#allocation2 + $0x88] sm:$0xff]
      %v4177 = vld [vmem:[#allocation2 + $0x90] sm:$0xf]
      %v4178 = vsel %vm1658, %v4175, 0
      %v4179 = vsel %vm1659, %v4086, 0
      %v4180 = vsel %vm1660, %v4087, 0
      %v4181 = vsel %vm1661, %v4088, 0
      %v4182 = vsel %vm1662, %v4089, 0
      %v4183 = vsel %vm1663, %v4090, 0
      %v4184 = vsel %vm1664, %v4091, 0
      %v4185 = vsel %vm1665, %v4092, 0
      %v4186 = vsel %vm1666, %v4093, 0
      %v4187 = vsel %vm1667, %v4094, 0
      %v4188 = vsel %vm1668, %v4095, 0
      %v4189 = vsel %vm1669, %v4096, 0
      %v4190 = vsel %vm1670, %v4097, 0
      %v4191 = vsel %vm1671, %v4098, 0
      %v4192 = vsel %vm1672, %v4137, 0
      %v4193 = vsel %vm1673, %v4176, 0
      %v4194 = vsel %vm1674, %v4177, 0
      %v4195 = vld [vmem:[#allocation2 + $0x10] sm:$0xf0]
      %v4196 = vld [vmem:[#allocation2 + $0x90] sm:$0x1f]
      %v4197 = vsel %vm2014, %v4195, 0
      %v4198 = vsel %vm2015, %v4086, 0
      %v4199 = vsel %vm2016, %v4087, 0
      %v4200 = vsel %vm2017, %v4088, 0
      %v4201 = vsel %vm2018, %v4089, 0
      %v4202 = vsel %vm2019, %v4090, 0
      %v4203 = vsel %vm2020, %v4091, 0
      %v4204 = vsel %vm2021, %v4092, 0
      %v4205 = vsel %vm2022, %v4093, 0
      %v4206 = vsel %vm2023, %v4094, 0
      %v4207 = vsel %vm2024, %v4095, 0
      %v4208 = vsel %vm2025, %v4096, 0
      %v4209 = vsel %vm2026, %v4097, 0
      %v4210 = vsel %vm2027, %v4098, 0
      %v4211 = vsel %vm2028, %v4137, 0
      %v4212 = vsel %vm2029, %v4176, 0
      %v4213 = vsel %vm2030, %v4196, 0
      %v4215 = vshrl.u32 %v4117, 16
      %v4217 = vshll.u32 %v4117, 16
      %v4219 = vrot.slane %v4217, 1
      %v4220 = vor.u32 %v4215, %v4219
      %v4222 = vshll.u32 %v4084, 16
      %v4224 = vrot.slane %v4222, 1
      %v4225 = vsel %vm2126, %v4220, %v4224
      %v4226 = vshrl.u32 %v4084, 16
      %v4228 = vor.u32 %v4226, %v4224
      %v4230 = vshll.u32 %v4085, 16
      %v4232 = vrot.slane %v4230, 1
      %v4233 = vsel %vm2126, %v4228, %v4232
      %v4234 = vshrl.u32 %v4085, 16
      %v4236 = vor.u32 %v4234, %v4232
      %v4238 = vshll.u32 %v4086, 16
      %v4240 = vrot.slane %v4238, 1
      %v4241 = vsel %vm2126, %v4236, %v4240
      %v4242 = vshrl.u32 %v4086, 16
      %v4244 = vor.u32 %v4242, %v4240
      %v4246 = vshll.u32 %v4087, 16
      %v4248 = vrot.slane %v4246, 1
      %v4249 = vsel %vm2126, %v4244, %v4248
      %v4250 = vshrl.u32 %v4087, 16
      %v4252 = vor.u32 %v4250, %v4248
      %v4254 = vshll.u32 %v4088, 16
      %v4256 = vrot.slane %v4254, 1
      %v4257 = vsel %vm2126, %v4252, %v4256
      %v4258 = vshrl.u32 %v4088, 16
      %v4260 = vor.u32 %v4258, %v4256
      %v4262 = vshll.u32 %v4089, 16
      %v4264 = vrot.slane %v4262, 1
      %v4265 = vsel %vm2126, %v4260, %v4264
      %v4266 = vshrl.u32 %v4089, 16
      %v4268 = vor.u32 %v4266, %v4264
      %v4270 = vshll.u32 %v4090, 16
      %v4272 = vrot.slane %v4270, 1
      %v4273 = vsel %vm2126, %v4268, %v4272
      %v4274 = vshrl.u32 %v4090, 16
      %v4276 = vor.u32 %v4274, %v4272
      %v4278 = vshll.u32 %v4091, 16
      %v4280 = vrot.slane %v4278, 1
      %v4281 = vsel %vm2126, %v4276, %v4280
      %v4282 = vshrl.u32 %v4091, 16
      %v4284 = vor.u32 %v4282, %v4280
      %v4286 = vshll.u32 %v4092, 16
      %v4288 = vrot.slane %v4286, 1
      %v4289 = vsel %vm2126, %v4284, %v4288
      %v4290 = vshrl.u32 %v4092, 16
      %v4292 = vor.u32 %v4290, %v4288
      %v4294 = vshll.u32 %v4093, 16
      %v4296 = vrot.slane %v4294, 1
      %v4297 = vsel %vm2126, %v4292, %v4296
      %v4298 = vshrl.u32 %v4093, 16
      %v4300 = vor.u32 %v4298, %v4296
      %v4302 = vshll.u32 %v4094, 16
      %v4304 = vrot.slane %v4302, 1
      %v4305 = vsel %vm2126, %v4300, %v4304
      %v4306 = vshrl.u32 %v4094, 16
      %v4308 = vor.u32 %v4306, %v4304
      %v4310 = vshll.u32 %v4095, 16
      %v4312 = vrot.slane %v4310, 1
      %v4313 = vsel %vm2126, %v4308, %v4312
      %v4314 = vshrl.u32 %v4095, 16
      %v4316 = vor.u32 %v4314, %v4312
      %v4318 = vshll.u32 %v4096, 16
      %v4320 = vrot.slane %v4318, 1
      %v4321 = vsel %vm2126, %v4316, %v4320
      %v4322 = vshrl.u32 %v4096, 16
      %v4324 = vor.u32 %v4322, %v4320
      %v4326 = vshll.u32 %v4097, 16
      %v4328 = vrot.slane %v4326, 1
      %v4329 = vsel %vm2126, %v4324, %v4328
      %v4330 = vshrl.u32 %v4097, 16
      %v4332 = vor.u32 %v4330, %v4328
      %v4334 = vshll.u32 %v4098, 16
      %v4336 = vrot.slane %v4334, 1
      %v4337 = vsel %vm2126, %v4332, %v4336
      %v4338 = vshrl.u32 %v4098, 16
      %v4340 = vor.u32 %v4338, %v4336
      %v4342 = vshll.u32 %v4099, 16
      %v4344 = vrot.slane %v4342, 1
      %v4345 = vsel %vm2126, %v4340, %v4344
      %v4346 = vshrl.u32 %v4099, 16
      %v4348 = vor.u32 %v4346, %v4344
      %4349 = vrot.lane.b32.xlu0 %v4225, 16
      %v4350 = vpop.permute.xlu0 %4349
      %4351 = vrot.lane.b32.xlu0 %v4233, 16
      %v4352 = vpop.permute.xlu0 %4351
      %4353 = vrot.lane.b32.xlu0 %v4241, 16
      %v4354 = vpop.permute.xlu0 %4353
      %4355 = vrot.lane.b32.xlu0 %v4249, 16
      %v4356 = vpop.permute.xlu0 %4355
      %4357 = vrot.lane.b32.xlu0 %v4257, 16
      %v4358 = vpop.permute.xlu0 %4357
      %4359 = vrot.lane.b32.xlu0 %v4265, 16
      %v4360 = vpop.permute.xlu0 %4359
      %4361 = vrot.lane.b32.xlu0 %v4273, 16
      %v4362 = vpop.permute.xlu0 %4361
      %4363 = vrot.lane.b32.xlu0 %v4281, 16
      %v4364 = vpop.permute.xlu0 %4363
      %4365 = vrot.lane.b32.xlu0 %v4289, 16
      %v4366 = vpop.permute.xlu0 %4365
      %4367 = vrot.lane.b32.xlu0 %v4297, 16
      %v4368 = vpop.permute.xlu0 %4367
      %4369 = vrot.lane.b32.xlu0 %v4305, 16
      %v4370 = vpop.permute.xlu0 %4369
      %4371 = vrot.lane.b32.xlu0 %v4313, 16
      %v4372 = vpop.permute.xlu0 %4371
      %4373 = vrot.lane.b32.xlu0 %v4321, 16
      %v4374 = vpop.permute.xlu0 %4373
      %4375 = vrot.lane.b32.xlu0 %v4329, 16
      %v4376 = vpop.permute.xlu0 %4375
      %4377 = vrot.lane.b32.xlu0 %v4337, 16
      %v4378 = vpop.permute.xlu0 %4377
      %4379 = vrot.lane.b32.xlu0 %v4345, 16
      %v4380 = vpop.permute.xlu0 %4379
      %4381 = vrot.lane.b32.xlu0 %v4348, 16
      %v4382 = vpop.permute.xlu0 %4381
      %v4400 = vrot.slane %v4119, 1
      %v4401 = vrot.slane %v4120, 1
      %v4402 = vsel %vm2313, %v4400, %v4401
      %v4403 = vrot.slane %v4121, 1
      %v4404 = vsel %vm2313, %v4401, %v4403
      %v4405 = vrot.slane %v4122, 1
      %v4406 = vsel %vm2313, %v4403, %v4405
      %v4407 = vrot.slane %v4123, 1
      %v4408 = vsel %vm2313, %v4405, %v4407
      %v4409 = vrot.slane %v4124, 1
      %v4410 = vsel %vm2313, %v4407, %v4409
      %v4411 = vrot.slane %v4125, 1
      %v4412 = vsel %vm2313, %v4409, %v4411
      %v4413 = vrot.slane %v4126, 1
      %v4414 = vsel %vm2313, %v4411, %v4413
      %v4415 = vrot.slane %v4127, 1
      %v4416 = vsel %vm2313, %v4413, %v4415
      %v4417 = vrot.slane %v4128, 1
      %v4418 = vsel %vm2313, %v4415, %v4417
      %v4419 = vrot.slane %v4129, 1
      %v4420 = vsel %vm2313, %v4417, %v4419
      %v4421 = vrot.slane %v4130, 1
      %v4422 = vsel %vm2313, %v4419, %v4421
      %v4423 = vrot.slane %v4131, 1
      %v4424 = vsel %vm2313, %v4421, %v4423
      %v4425 = vrot.slane %v4132, 1
      %v4426 = vsel %vm2313, %v4423, %v4425
      %v4427 = vrot.slane %v4133, 1
      %v4428 = vsel %vm2313, %v4425, %v4427
      %v4429 = vrot.slane %v4134, 1
      %v4430 = vsel %vm2313, %v4427, %v4429
      %v4431 = vrot.slane %v4135, 1
      %v4432 = vsel %vm2313, %v4429, %v4431
      %4433 = vrot.lane.b32.xlu0 %v4402, 32
      %v4434 = vpop.permute.xlu0 %4433
      %4435 = vrot.lane.b32.xlu0 %v4404, 32
      %v4436 = vpop.permute.xlu0 %4435
      %4437 = vrot.lane.b32.xlu0 %v4406, 32
      %v4438 = vpop.permute.xlu0 %4437
      %4439 = vrot.lane.b32.xlu0 %v4408, 32
      %v4440 = vpop.permute.xlu0 %4439
      %4441 = vrot.lane.b32.xlu0 %v4410, 32
      %v4442 = vpop.permute.xlu0 %4441
      %4443 = vrot.lane.b32.xlu0 %v4412, 32
      %v4444 = vpop.permute.xlu0 %4443
      %4445 = vrot.lane.b32.xlu0 %v4414, 32
      %v4446 = vpop.permute.xlu0 %4445
      %4447 = vrot.lane.b32.xlu0 %v4416, 32
      %v4448 = vpop.permute.xlu0 %4447
      %4449 = vrot.lane.b32.xlu0 %v4418, 32
      %v4450 = vpop.permute.xlu0 %4449
      %4451 = vrot.lane.b32.xlu0 %v4420, 32
      %v4452 = vpop.permute.xlu0 %4451
      %4453 = vrot.lane.b32.xlu0 %v4422, 32
      %v4454 = vpop.permute.xlu0 %4453
      %4455 = vrot.lane.b32.xlu0 %v4424, 32
      %v4456 = vpop.permute.xlu0 %4455
      %4457 = vrot.lane.b32.xlu0 %v4426, 32
      %v4458 = vpop.permute.xlu0 %4457
      %4459 = vrot.lane.b32.xlu0 %v4428, 32
      %v4460 = vpop.permute.xlu0 %4459
      %4461 = vrot.lane.b32.xlu0 %v4430, 32
      %v4462 = vpop.permute.xlu0 %4461
      %4463 = vrot.lane.b32.xlu0 %v4432, 32
      %v4464 = vpop.permute.xlu0 %4463
      %4465 = vrot.lane.b32.xlu0 %v4431, 32
      %v4466 = vpop.permute.xlu0 %4465
      %4484 = vrot.lane.b32.xlu0 %v4139, 48
      %v4485 = vpop.permute.xlu0 %4484
      %4486 = vrot.lane.b32.xlu0 %v4140, 48
      %v4487 = vpop.permute.xlu0 %4486
      %4488 = vrot.lane.b32.xlu0 %v4141, 48
      %v4489 = vpop.permute.xlu0 %4488
      %4490 = vrot.lane.b32.xlu0 %v4142, 48
      %v4491 = vpop.permute.xlu0 %4490
      %4492 = vrot.lane.b32.xlu0 %v4143, 48
      %v4493 = vpop.permute.xlu0 %4492
      %4494 = vrot.lane.b32.xlu0 %v4144, 48
      %v4495 = vpop.permute.xlu0 %4494
      %4496 = vrot.lane.b32.xlu0 %v4145, 48
      %v4497 = vpop.permute.xlu0 %4496
      %4498 = vrot.lane.b32.xlu0 %v4146, 48
      %v4499 = vpop.permute.xlu0 %4498
      %4500 = vrot.lane.b32.xlu0 %v4147, 48
      %v4501 = vpop.permute.xlu0 %4500
      %4502 = vrot.lane.b32.xlu0 %v4148, 48
      %v4503 = vpop.permute.xlu0 %4502
      %4504 = vrot.lane.b32.xlu0 %v4149, 48
      %v4505 = vpop.permute.xlu0 %4504
      %4506 = vrot.lane.b32.xlu0 %v4150, 48
      %v4507 = vpop.permute.xlu0 %4506
      %4508 = vrot.lane.b32.xlu0 %v4151, 48
      %v4509 = vpop.permute.xlu0 %4508
      %4510 = vrot.lane.b32.xlu0 %v4152, 48
      %v4511 = vpop.permute.xlu0 %4510
      %4512 = vrot.lane.b32.xlu0 %v4153, 48
      %v4513 = vpop.permute.xlu0 %4512
      %4514 = vrot.lane.b32.xlu0 %v4154, 48
      %v4515 = vpop.permute.xlu0 %4514
      %4516 = vrot.lane.b32.xlu0 %v4155, 48
      %v4517 = vpop.permute.xlu0 %4516
      %v4519 = vshrl.u32 %v4156, 16
      %v4521 = vshll.u32 %v4156, 16
      %v4523 = vrot.slane %v4521, 1
      %v4524 = vor.u32 %v4519, %v4523
      %v4525 = vsel %vm2126, %v4524, %v4232
      %v4527 = vshll.u32 %v4137, 16
      %v4529 = vrot.slane %v4527, 1
      %v4530 = vsel %vm2126, %v4340, %v4529
      %v4531 = vshrl.u32 %v4137, 16
      %v4533 = vor.u32 %v4531, %v4529
      %v4535 = vshll.u32 %v4138, 16
      %v4537 = vrot.slane %v4535, 1
      %v4538 = vsel %vm2126, %v4533, %v4537
      %v4539 = vshrl.u32 %v4138, 16
      %v4541 = vor.u32 %v4539, %v4537
      %4542 = vrot.lane.b32.xlu0 %v4525, 64
      %v4543 = vpop.permute.xlu0 %4542
      %4544 = vrot.lane.b32.xlu0 %v4241, 64
      %v4545 = vpop.permute.xlu0 %4544
      %4546 = vrot.lane.b32.xlu0 %v4249, 64
      %v4547 = vpop.permute.xlu0 %4546
      %4548 = vrot.lane.b32.xlu0 %v4257, 64
      %v4549 = vpop.permute.xlu0 %4548
      %4550 = vrot.lane.b32.xlu0 %v4265, 64
      %v4551 = vpop.permute.xlu0 %4550
      %4552 = vrot.lane.b32.xlu0 %v4273, 64
      %v4553 = vpop.permute.xlu0 %4552
      %4554 = vrot.lane.b32.xlu0 %v4281, 64
      %v4555 = vpop.permute.xlu0 %4554
      %4556 = vrot.lane.b32.xlu0 %v4289, 64
      %v4557 = vpop.permute.xlu0 %4556
      %4558 = vrot.lane.b32.xlu0 %v4297, 64
      %v4559 = vpop.permute.xlu0 %4558
      %4560 = vrot.lane.b32.xlu0 %v4305, 64
      %v4561 = vpop.permute.xlu0 %4560
      %4562 = vrot.lane.b32.xlu0 %v4313, 64
      %v4563 = vpop.permute.xlu0 %4562
      %4564 = vrot.lane.b32.xlu0 %v4321, 64
      %v4565 = vpop.permute.xlu0 %4564
      %4566 = vrot.lane.b32.xlu0 %v4329, 64
      %v4567 = vpop.permute.xlu0 %4566
      %4568 = vrot.lane.b32.xlu0 %v4337, 64
      %v4569 = vpop.permute.xlu0 %4568
      %4570 = vrot.lane.b32.xlu0 %v4530, 64
      %v4571 = vpop.permute.xlu0 %4570
      %4572 = vrot.lane.b32.xlu0 %v4538, 64
      %v4573 = vpop.permute.xlu0 %4572
      %4574 = vrot.lane.b32.xlu0 %v4541, 64
      %v4575 = vpop.permute.xlu0 %4574
      %v4593 = vrot.slane %v4158, 1
      %v4594 = vrot.slane %v4159, 1
      %v4595 = vsel %vm2313, %v4593, %v4594
      %v4596 = vrot.slane %v4160, 1
      %v4597 = vsel %vm2313, %v4594, %v4596
      %v4598 = vrot.slane %v4161, 1
      %v4599 = vsel %vm2313, %v4596, %v4598
      %v4600 = vrot.slane %v4162, 1
      %v4601 = vsel %vm2313, %v4598, %v4600
      %v4602 = vrot.slane %v4163, 1
      %v4603 = vsel %vm2313, %v4600, %v4602
      %v4604 = vrot.slane %v4164, 1
      %v4605 = vsel %vm2313, %v4602, %v4604
      %v4606 = vrot.slane %v4165, 1
      %v4607 = vsel %vm2313, %v4604, %v4606
      %v4608 = vrot.slane %v4166, 1
      %v4609 = vsel %vm2313, %v4606, %v4608
      %v4610 = vrot.slane %v4167, 1
      %v4611 = vsel %vm2313, %v4608, %v4610
      %v4612 = vrot.slane %v4168, 1
      %v4613 = vsel %vm2313, %v4610, %v4612
      %v4614 = vrot.slane %v4169, 1
      %v4615 = vsel %vm2313, %v4612, %v4614
      %v4616 = vrot.slane %v4170, 1
      %v4617 = vsel %vm2313, %v4614, %v4616
      %v4618 = vrot.slane %v4171, 1
      %v4619 = vsel %vm2313, %v4616, %v4618
      %v4620 = vrot.slane %v4172, 1
      %v4621 = vsel %vm2313, %v4618, %v4620
      %v4622 = vrot.slane %v4173, 1
      %v4623 = vsel %vm2313, %v4620, %v4622
      %v4624 = vrot.slane %v4174, 1
      %v4625 = vsel %vm2313, %v4622, %v4624
      %4626 = vrot.lane.b32.xlu0 %v4595, 80
      %v4627 = vpop.permute.xlu0 %4626
      %4628 = vrot.lane.b32.xlu0 %v4597, 80
      %v4629 = vpop.permute.xlu0 %4628
      %4630 = vrot.lane.b32.xlu0 %v4599, 80
      %v4631 = vpop.permute.xlu0 %4630
      %4632 = vrot.lane.b32.xlu0 %v4601, 80
      %v4633 = vpop.permute.xlu0 %4632
      %4634 = vrot.lane.b32.xlu0 %v4603, 80
      %v4635 = vpop.permute.xlu0 %4634
      %4636 = vrot.lane.b32.xlu0 %v4605, 80
      %v4637 = vpop.permute.xlu0 %4636
      %4638 = vrot.lane.b32.xlu0 %v4607, 80
      %v4639 = vpop.permute.xlu0 %4638
      %4640 = vrot.lane.b32.xlu0 %v4609, 80
      %v4641 = vpop.permute.xlu0 %4640
      %4642 = vrot.lane.b32.xlu0 %v4611, 80
      %v4643 = vpop.permute.xlu0 %4642
      %4644 = vrot.lane.b32.xlu0 %v4613, 80
      %v4645 = vpop.permute.xlu0 %4644
      %4646 = vrot.lane.b32.xlu0 %v4615, 80
      %v4647 = vpop.permute.xlu0 %4646
      %4648 = vrot.lane.b32.xlu0 %v4617, 80
      %v4649 = vpop.permute.xlu0 %4648
      %4650 = vrot.lane.b32.xlu0 %v4619, 80
      %v4651 = vpop.permute.xlu0 %4650
      %4652 = vrot.lane.b32.xlu0 %v4621, 80
      %v4653 = vpop.permute.xlu0 %4652
      %4654 = vrot.lane.b32.xlu0 %v4623, 80
      %v4655 = vpop.permute.xlu0 %4654
      %4656 = vrot.lane.b32.xlu0 %v4625, 80
      %v4657 = vpop.permute.xlu0 %4656
      %4658 = vrot.lane.b32.xlu0 %v4624, 80
      %v4659 = vpop.permute.xlu0 %4658
      %4677 = vrot.lane.b32.xlu0 %v4178, 96
      %v4678 = vpop.permute.xlu0 %4677
      %4679 = vrot.lane.b32.xlu0 %v4179, 96
      %v4680 = vpop.permute.xlu0 %4679
      %4681 = vrot.lane.b32.xlu0 %v4180, 96
      %v4682 = vpop.permute.xlu0 %4681
      %4683 = vrot.lane.b32.xlu0 %v4181, 96
      %v4684 = vpop.permute.xlu0 %4683
      %4685 = vrot.lane.b32.xlu0 %v4182, 96
      %v4686 = vpop.permute.xlu0 %4685
      %4687 = vrot.lane.b32.xlu0 %v4183, 96
      %v4688 = vpop.permute.xlu0 %4687
      %4689 = vrot.lane.b32.xlu0 %v4184, 96
      %v4690 = vpop.permute.xlu0 %4689
      %4691 = vrot.lane.b32.xlu0 %v4185, 96
      %v4692 = vpop.permute.xlu0 %4691
      %4693 = vrot.lane.b32.xlu0 %v4186, 96
      %v4694 = vpop.permute.xlu0 %4693
      %4695 = vrot.lane.b32.xlu0 %v4187, 96
      %v4696 = vpop.permute.xlu0 %4695
      %4697 = vrot.lane.b32.xlu0 %v4188, 96
      %v4698 = vpop.permute.xlu0 %4697
      %4699 = vrot.lane.b32.xlu0 %v4189, 96
      %v4700 = vpop.permute.xlu0 %4699
      %4701 = vrot.lane.b32.xlu0 %v4190, 96
      %v4702 = vpop.permute.xlu0 %4701
      %4703 = vrot.lane.b32.xlu0 %v4191, 96
      %v4704 = vpop.permute.xlu0 %4703
      %4705 = vrot.lane.b32.xlu0 %v4192, 96
      %v4706 = vpop.permute.xlu0 %4705
      %4707 = vrot.lane.b32.xlu0 %v4193, 96
      %v4708 = vpop.permute.xlu0 %4707
      %4709 = vrot.lane.b32.xlu0 %v4194, 96
      %v4710 = vpop.permute.xlu0 %4709
      %v4712 = vshrl.u32 %v4195, 16
      %v4714 = vshll.u32 %v4195, 16
      %v4716 = vrot.slane %v4714, 1
      %v4717 = vor.u32 %v4712, %v4716
      %v4718 = vsel %vm2126, %v4717, %v4240
      %v4720 = vshll.u32 %v4176, 16
      %v4722 = vrot.slane %v4720, 1
      %v4723 = vsel %vm2126, %v4533, %v4722
      %v4724 = vshrl.u32 %v4176, 16
      %v4726 = vor.u32 %v4724, %v4722
      %v4728 = vshll.u32 %v4177, 16
      %v4730 = vrot.slane %v4728, 1
      %v4731 = vsel %vm2126, %v4726, %v4730
      %v4732 = vshrl.u32 %v4177, 16
      %v4734 = vor.u32 %v4732, %v4730
      %4735 = vrot.lane.b32.xlu0 %v4718, 112
      %v4736 = vpop.permute.xlu0 %4735
      %4737 = vrot.lane.b32.xlu0 %v4249, 112
      %v4738 = vpop.permute.xlu0 %4737
      %4739 = vrot.lane.b32.xlu0 %v4257, 112
      %v4740 = vpop.permute.xlu0 %4739
      %4741 = vrot.lane.b32.xlu0 %v4265, 112
      %v4742 = vpop.permute.xlu0 %4741
      %4743 = vrot.lane.b32.xlu0 %v4273, 112
      %v4744 = vpop.permute.xlu0 %4743
      %4745 = vrot.lane.b32.xlu0 %v4281, 112
      %v4746 = vpop.permute.xlu0 %4745
      %4747 = vrot.lane.b32.xlu0 %v4289, 112
      %v4748 = vpop.permute.xlu0 %4747
      %4749 = vrot.lane.b32.xlu0 %v4297, 112
      %v4750 = vpop.permute.xlu0 %4749
      %4751 = vrot.lane.b32.xlu0 %v4305, 112
      %v4752 = vpop.permute.xlu0 %4751
      %4753 = vrot.lane.b32.xlu0 %v4313, 112
      %v4754 = vpop.permute.xlu0 %4753
      %4755 = vrot.lane.b32.xlu0 %v4321, 112
      %v4756 = vpop.permute.xlu0 %4755
      %4757 = vrot.lane.b32.xlu0 %v4329, 112
      %v4758 = vpop.permute.xlu0 %4757
      %4759 = vrot.lane.b32.xlu0 %v4337, 112
      %v4760 = vpop.permute.xlu0 %4759
      %4761 = vrot.lane.b32.xlu0 %v4530, 112
      %v4762 = vpop.permute.xlu0 %4761
      %4763 = vrot.lane.b32.xlu0 %v4723, 112
      %v4764 = vpop.permute.xlu0 %4763
      %4765 = vrot.lane.b32.xlu0 %v4731, 112
      %v4766 = vpop.permute.xlu0 %4765
      %4767 = vrot.lane.b32.xlu0 %v4734, 112
      %v4768 = vpop.permute.xlu0 %4767
      %v4786 = vrot.slane %v4197, 1
      %v4787 = vrot.slane %v4198, 1
      %v4788 = vsel %vm2313, %v4786, %v4787
      %v4789 = vrot.slane %v4199, 1
      %v4790 = vsel %vm2313, %v4787, %v4789
      %v4791 = vrot.slane %v4200, 1
      %v4792 = vsel %vm2313, %v4789, %v4791
      %v4793 = vrot.slane %v4201, 1
      %v4794 = vsel %vm2313, %v4791, %v4793
      %v4795 = vrot.slane %v4202, 1
      %v4796 = vsel %vm2313, %v4793, %v4795
      %v4797 = vrot.slane %v4203, 1
      %v4798 = vsel %vm2313, %v4795, %v4797
      %v4799 = vrot.slane %v4204, 1
      %v4800 = vsel %vm2313, %v4797, %v4799
      %v4801 = vrot.slane %v4205, 1
      %v4802 = vsel %vm2313, %v4799, %v4801
      %v4803 = vrot.slane %v4206, 1
      %v4804 = vsel %vm2313, %v4801, %v4803
      %v4805 = vrot.slane %v4207, 1
      %v4806 = vsel %vm2313, %v4803, %v4805
      %v4807 = vrot.slane %v4208, 1
      %v4808 = vsel %vm2313, %v4805, %v4807
      %v4809 = vrot.slane %v4209, 1
      %v4810 = vsel %vm2313, %v4807, %v4809
      %v4811 = vrot.slane %v4210, 1
      %v4812 = vsel %vm2313, %v4809, %v4811
      %v4813 = vrot.slane %v4211, 1
      %v4814 = vsel %vm2313, %v4811, %v4813
      %v4815 = vrot.slane %v4212, 1
      %v4816 = vsel %vm2313, %v4813, %v4815
      %v4817 = vrot.slane %v4213, 1
      %v4818 = vsel %vm2313, %v4815, %v4817
      %v4821 = vsel %vm430, %v4100, %v4350
      %v4824 = vsel %vm430, %v4101, %v4352
      %v4827 = vsel %vm430, %v4102, %v4354
      %v4830 = vsel %vm430, %v4103, %v4356
      %v4833 = vsel %vm430, %v4104, %v4358
      %v4836 = vsel %vm430, %v4105, %v4360
      %v4839 = vsel %vm430, %v4106, %v4362
      %v4842 = vsel %vm430, %v4107, %v4364
      %v4845 = vsel %vm430, %v4108, %v4366
      %v4848 = vsel %vm430, %v4109, %v4368
      %v4851 = vsel %vm430, %v4110, %v4370
      %v4854 = vsel %vm430, %v4111, %v4372
      %v4857 = vsel %vm430, %v4112, %v4374
      %v4860 = vsel %vm430, %v4113, %v4376
      %v4863 = vsel %vm430, %v4114, %v4378
      %v4866 = vsel %vm430, %v4115, %v4380
      %v4869 = vsel %vm430, %v4116, %v4382
      %v4871 = vsel %vm2887, %v4821, %v4434
      %v4873 = vsel %vm2887, %v4824, %v4436
      %v4875 = vsel %vm2887, %v4827, %v4438
      %v4877 = vsel %vm2887, %v4830, %v4440
      %v4879 = vsel %vm2887, %v4833, %v4442
      %v4881 = vsel %vm2887, %v4836, %v4444
      %v4883 = vsel %vm2887, %v4839, %v4446
      %v4885 = vsel %vm2887, %v4842, %v4448
      %v4887 = vsel %vm2887, %v4845, %v4450
      %v4889 = vsel %vm2887, %v4848, %v4452
      %v4891 = vsel %vm2887, %v4851, %v4454
      %v4893 = vsel %vm2887, %v4854, %v4456
      %v4895 = vsel %vm2887, %v4857, %v4458
      %v4897 = vsel %vm2887, %v4860, %v4460
      %v4899 = vsel %vm2887, %v4863, %v4462
      %v4901 = vsel %vm2887, %v4866, %v4464
      %v4903 = vsel %vm2887, %v4869, %v4466
      %v4905 = vsel %vm2957, %v4871, %v4485
      %v4907 = vsel %vm2957, %v4873, %v4487
      %v4909 = vsel %vm2957, %v4875, %v4489
      %v4911 = vsel %vm2957, %v4877, %v4491
      %v4913 = vsel %vm2957, %v4879, %v4493
      %v4915 = vsel %vm2957, %v4881, %v4495
      %v4917 = vsel %vm2957, %v4883, %v4497
      %v4919 = vsel %vm2957, %v4885, %v4499
      %v4921 = vsel %vm2957, %v4887, %v4501
      %v4923 = vsel %vm2957, %v4889, %v4503
      %v4925 = vsel %vm2957, %v4891, %v4505
      %v4927 = vsel %vm2957, %v4893, %v4507
      %v4929 = vsel %vm2957, %v4895, %v4509
      %v4931 = vsel %vm2957, %v4897, %v4511
      %v4933 = vsel %vm2957, %v4899, %v4513
      %v4935 = vsel %vm2957, %v4901, %v4515
      %v4937 = vsel %vm2957, %v4903, %v4517
      %v4939 = vsel %vm3027, %v4905, %v4543
      %v4941 = vsel %vm3027, %v4907, %v4545
      %v4943 = vsel %vm3027, %v4909, %v4547
      %v4945 = vsel %vm3027, %v4911, %v4549
      %v4947 = vsel %vm3027, %v4913, %v4551
      %v4949 = vsel %vm3027, %v4915, %v4553
      %v4951 = vsel %vm3027, %v4917, %v4555
      %v4953 = vsel %vm3027, %v4919, %v4557
      %v4955 = vsel %vm3027, %v4921, %v4559
      %v4957 = vsel %vm3027, %v4923, %v4561
      %v4959 = vsel %vm3027, %v4925, %v4563
      %v4961 = vsel %vm3027, %v4927, %v4565
      %v4963 = vsel %vm3027, %v4929, %v4567
      %v4965 = vsel %vm3027, %v4931, %v4569
      %v4967 = vsel %vm3027, %v4933, %v4571
      %v4969 = vsel %vm3027, %v4935, %v4573
      %v4971 = vsel %vm3027, %v4937, %v4575
      %vm4972 = vcmask 654336
      %v4974 = vsel %vm4972, %v4939, %v4627
      %v4976 = vsel %vm4972, %v4941, %v4629
      %v4978 = vsel %vm4972, %v4943, %v4631
      %v4980 = vsel %vm4972, %v4945, %v4633
      %v4982 = vsel %vm4972, %v4947, %v4635
      %v4984 = vsel %vm4972, %v4949, %v4637
      %v4986 = vsel %vm4972, %v4951, %v4639
      %v4988 = vsel %vm4972, %v4953, %v4641
      %v4990 = vsel %vm4972, %v4955, %v4643
      %v4992 = vsel %vm4972, %v4957, %v4645
      %v4994 = vsel %vm4972, %v4959, %v4647
      %v4996 = vsel %vm4972, %v4961, %v4649
      %v4998 = vsel %vm4972, %v4963, %v4651
      %v5000 = vsel %vm4972, %v4965, %v4653
      %v5002 = vsel %vm4972, %v4967, %v4655
      %v5004 = vsel %vm4972, %v4969, %v4657
      %v5006 = vsel %vm4972, %v4971, %v4659
      %vm5007 = vcmask 785408
      %v5009 = vsel %vm5007, %v4974, %v4678
      %v5011 = vsel %vm5007, %v4976, %v4680
      %v5013 = vsel %vm5007, %v4978, %v4682
      %v5015 = vsel %vm5007, %v4980, %v4684
      %v5017 = vsel %vm5007, %v4982, %v4686
      %v5019 = vsel %vm5007, %v4984, %v4688
      %v5021 = vsel %vm5007, %v4986, %v4690
      %v5023 = vsel %vm5007, %v4988, %v4692
      %v5025 = vsel %vm5007, %v4990, %v4694
      %v5027 = vsel %vm5007, %v4992, %v4696
      %v5029 = vsel %vm5007, %v4994, %v4698
      %v5031 = vsel %vm5007, %v4996, %v4700
      %v5033 = vsel %vm5007, %v4998, %v4702
      %v5035 = vsel %vm5007, %v5000, %v4704
      %v5037 = vsel %vm5007, %v5002, %v4706
      %v5039 = vsel %vm5007, %v5004, %v4708
      %v5041 = vsel %vm5007, %v5006, %v4710
      %vm5042 = vcmask 916480
      %v5044 = vsel %vm5042, %v5009, %v4736
      %v5046 = vsel %vm5042, %v5011, %v4738
      %v5048 = vsel %vm5042, %v5013, %v4740
      %v5050 = vsel %vm5042, %v5015, %v4742
      %v5052 = vsel %vm5042, %v5017, %v4744
      %v5054 = vsel %vm5042, %v5019, %v4746
      %v5056 = vsel %vm5042, %v5021, %v4748
      %v5058 = vsel %vm5042, %v5023, %v4750
      %v5060 = vsel %vm5042, %v5025, %v4752
      %v5062 = vsel %vm5042, %v5027, %v4754
      %v5064 = vsel %vm5042, %v5029, %v4756
      %v5066 = vsel %vm5042, %v5031, %v4758
      %v5068 = vsel %vm5042, %v5033, %v4760
      %v5070 = vsel %vm5042, %v5035, %v4762
      %v5072 = vsel %vm5042, %v5037, %v4764
      %v5074 = vsel %vm5042, %v5039, %v4766
      %v5076 = vsel %vm5042, %v5041, %v4768
      %v5078 = vsel %vm430, %v4788, 0
      %v5080 = vsel %vm430, %v4790, 0
      %v5082 = vsel %vm430, %v4792, 0
      %v5084 = vsel %vm430, %v4794, 0
      %v5086 = vsel %vm430, %v4796, 0
      %v5088 = vsel %vm430, %v4798, 0
      %v5090 = vsel %vm430, %v4800, 0
      %v5092 = vsel %vm430, %v4802, 0
      %v5094 = vsel %vm430, %v4804, 0
      %v5096 = vsel %vm430, %v4806, 0
      %v5098 = vsel %vm430, %v4808, 0
      %v5100 = vsel %vm430, %v4810, 0
      %v5102 = vsel %vm430, %v4812, 0
      %v5104 = vsel %vm430, %v4814, 0
      %v5106 = vsel %vm430, %v4816, 0
      %v5108 = vsel %vm430, %v4818, 0
      %v5110 = vsel %vm430, %v4817, 0
      %v5111 = vld [vmem:[%s7] sm:$0xf]
      %v5112 = vld [vmem:[%s7 + $0x4] sm:$0xf]
      %v5113 = vld [vmem:[%s7 + $0x8] sm:$0xf]
      %v5114 = vld [vmem:[%s7 + $0xc] sm:$0xf]
      %v5115 = vld [vmem:[%s7 + $0x10] sm:$0xf]
      %v5116 = vld [vmem:[%s7 + $0x14] sm:$0xf]
      %v5117 = vld [vmem:[%s7 + $0x18] sm:$0xf]
      %v5118 = vld [vmem:[%s7 + $0x1c] sm:$0xf]
      %v5119 = vld [vmem:[%s7 + $0x20] sm:$0xf]
      %v5120 = vld [vmem:[%s7 + $0x24] sm:$0xf]
      %v5121 = vld [vmem:[%s7 + $0x28] sm:$0xf]
      %v5122 = vld [vmem:[%s7 + $0x2c] sm:$0xf]
      %v5123 = vld [vmem:[%s7 + $0x30] sm:$0xf]
      %v5124 = vld [vmem:[%s7 + $0x34] sm:$0xf]
      %v5125 = vld [vmem:[%s7 + $0x38] sm:$0xf]
      %v5126 = vld [vmem:[%s7 + $0x3c] sm:$0xf]
      %v5127 = vld [vmem:[%s7 + $0x40] sm:$0xf]
      %v5128 = vld [vmem:[%s7 + $0x44] sm:$0xf]
      %v5129 = vld [vmem:[%s7 + $0x48] sm:$0xf]
      %v5130 = vld [vmem:[%s7 + $0x4c] sm:$0xf]
      %v5131 = vld [vmem:[%s7 + $0x50] sm:$0xf]
      %v5132 = vld [vmem:[%s7 + $0x54] sm:$0xf]
      %v5133 = vld [vmem:[%s7 + $0x58] sm:$0xf]
      %v5134 = vld [vmem:[%s7 + $0x5c] sm:$0xf]
      %v5135 = vld [vmem:[%s7 + $0x60] sm:$0xf]
      %v5136 = vld [vmem:[%s7 + $0x64] sm:$0xf]
      %v5137 = vld [vmem:[%s7 + $0x68] sm:$0xf]
      %v5138 = vld [vmem:[%s7 + $0x6c] sm:$0xf]
      %v5139 = vld [vmem:[%s7 + $0x70] sm:$0xf]
      %v5140 = vld [vmem:[%s7 + $0x74] sm:$0xf]
      %v5141 = vld [vmem:[%s7 + $0x78] sm:$0xf]
      %v5142 = vld [vmem:[%s7 + $0x7c] sm:$0xf]
      %v5143 = vld [vmem:[%s8] sm:$0x1]
      %v5145 = vlaneseq
      %v5146 = vshrl.u32 %v5145, 7
      %v5147 = vsub.s32 0, %v5146
      %v5148 = vrot.slane %v5143, %v5147
      %v5150 = vshrl.u32 %v5044, 16
      %v5152 = vrot.slane %v5150, 3
      %v5153 = vshll.u32 %v5044, 16
      %v5155 = vrot.slane %v5153, 4
      %v5156 = vor.u32 %v5152, %v5155
      %v5157 = vshrl.u32 %v5046, 16
      %v5159 = vrot.slane %v5157, 3
      %v5160 = vshll.u32 %v5046, 16
      %v5162 = vrot.slane %v5160, 4
      %v5163 = vor.u32 %v5159, %v5162
      %v5164 = vsel %vm1870, %v5156, %v5163
      %v5165 = vshrl.u32 %v5078, 16
      %v5167 = vrot.slane %v5165, 3
      %v5168 = vshll.u32 %v5078, 16
      %v5170 = vrot.slane %v5168, 4
      %v5171 = vor.u32 %v5167, %v5170
      %v5172 = vshrl.u32 %v5080, 16
      %v5174 = vrot.slane %v5172, 3
      %v5175 = vshll.u32 %v5080, 16
      %v5177 = vrot.slane %v5175, 4
      %v5178 = vor.u32 %v5174, %v5177
      %v5179 = vsel %vm1870, %v5171, %v5178
      %v5180 = vshrl.u32 %v5048, 16
      %v5182 = vrot.slane %v5180, 3
      %v5183 = vshll.u32 %v5048, 16
      %v5185 = vrot.slane %v5183, 4
      %v5186 = vor.u32 %v5182, %v5185
      %v5187 = vsel %vm1870, %v5163, %v5186
      %v5188 = vshrl.u32 %v5082, 16
      %v5190 = vrot.slane %v5188, 3
      %v5191 = vshll.u32 %v5082, 16
      %v5193 = vrot.slane %v5191, 4
      %v5194 = vor.u32 %v5190, %v5193
      %v5195 = vsel %vm1870, %v5178, %v5194
      %v5196 = vshrl.u32 %v5050, 16
      %v5198 = vrot.slane %v5196, 3
      %v5199 = vshll.u32 %v5050, 16
      %v5201 = vrot.slane %v5199, 4
      %v5202 = vor.u32 %v5198, %v5201
      %v5203 = vsel %vm1870, %v5186, %v5202
      %v5204 = vshrl.u32 %v5084, 16
      %v5206 = vrot.slane %v5204, 3
      %v5207 = vshll.u32 %v5084, 16
      %v5209 = vrot.slane %v5207, 4
      %v5210 = vor.u32 %v5206, %v5209
      %v5211 = vsel %vm1870, %v5194, %v5210
      %v5212 = vshrl.u32 %v5052, 16
      %v5214 = vrot.slane %v5212, 3
      %v5215 = vshll.u32 %v5052, 16
      %v5217 = vrot.slane %v5215, 4
      %v5218 = vor.u32 %v5214, %v5217
      %v5219 = vsel %vm1870, %v5202, %v5218
      %v5220 = vshrl.u32 %v5086, 16
      %v5222 = vrot.slane %v5220, 3
      %v5223 = vshll.u32 %v5086, 16
      %v5225 = vrot.slane %v5223, 4
      %v5226 = vor.u32 %v5222, %v5225
      %v5227 = vsel %vm1870, %v5210, %v5226
      %v5228 = vshrl.u32 %v5054, 16
      %v5230 = vrot.slane %v5228, 3
      %v5231 = vshll.u32 %v5054, 16
      %v5233 = vrot.slane %v5231, 4
      %v5234 = vor.u32 %v5230, %v5233
      %v5235 = vsel %vm1870, %v5218, %v5234
      %v5236 = vshrl.u32 %v5088, 16
      %v5238 = vrot.slane %v5236, 3
      %v5239 = vshll.u32 %v5088, 16
      %v5241 = vrot.slane %v5239, 4
      %v5242 = vor.u32 %v5238, %v5241
      %v5243 = vsel %vm1870, %v5226, %v5242
      %v5244 = vshrl.u32 %v5056, 16
      %v5246 = vrot.slane %v5244, 3
      %v5247 = vshll.u32 %v5056, 16
      %v5249 = vrot.slane %v5247, 4
      %v5250 = vor.u32 %v5246, %v5249
      %v5251 = vsel %vm1870, %v5234, %v5250
      %v5252 = vshrl.u32 %v5090, 16
      %v5254 = vrot.slane %v5252, 3
      %v5255 = vshll.u32 %v5090, 16
      %v5257 = vrot.slane %v5255, 4
      %v5258 = vor.u32 %v5254, %v5257
      %v5259 = vsel %vm1870, %v5242, %v5258
      %v5260 = vshrl.u32 %v5058, 16
      %v5262 = vrot.slane %v5260, 3
      %v5263 = vshll.u32 %v5058, 16
      %v5265 = vrot.slane %v5263, 4
      %v5266 = vor.u32 %v5262, %v5265
      %v5267 = vsel %vm1870, %v5250, %v5266
      %v5268 = vshrl.u32 %v5092, 16
      %v5270 = vrot.slane %v5268, 3
      %v5271 = vshll.u32 %v5092, 16
      %v5273 = vrot.slane %v5271, 4
      %v5274 = vor.u32 %v5270, %v5273
      %v5275 = vsel %vm1870, %v5258, %v5274
      %v5276 = vshrl.u32 %v5060, 16
      %v5278 = vrot.slane %v5276, 3
      %v5279 = vshll.u32 %v5060, 16
      %v5281 = vrot.slane %v5279, 4
      %v5282 = vor.u32 %v5278, %v5281
      %v5283 = vsel %vm1870, %v5266, %v5282
      %v5284 = vshrl.u32 %v5094, 16
      %v5286 = vrot.slane %v5284, 3
      %v5287 = vshll.u32 %v5094, 16
      %v5289 = vrot.slane %v5287, 4
      %v5290 = vor.u32 %v5286, %v5289
      %v5291 = vsel %vm1870, %v5274, %v5290
      %v5292 = vshrl.u32 %v5062, 16
      %v5294 = vrot.slane %v5292, 3
      %v5295 = vshll.u32 %v5062, 16
      %v5297 = vrot.slane %v5295, 4
      %v5298 = vor.u32 %v5294, %v5297
      %v5299 = vsel %vm1870, %v5282, %v5298
      %v5300 = vshrl.u32 %v5096, 16
      %v5302 = vrot.slane %v5300, 3
      %v5303 = vshll.u32 %v5096, 16
      %v5305 = vrot.slane %v5303, 4
      %v5306 = vor.u32 %v5302, %v5305
      %v5307 = vsel %vm1870, %v5290, %v5306
      %v5308 = vshrl.u32 %v5064, 16
      %v5310 = vrot.slane %v5308, 3
      %v5311 = vshll.u32 %v5064, 16
      %v5313 = vrot.slane %v5311, 4
      %v5314 = vor.u32 %v5310, %v5313
      %v5315 = vsel %vm1870, %v5298, %v5314
      %v5316 = vshrl.u32 %v5098, 16
      %v5318 = vrot.slane %v5316, 3
      %v5319 = vshll.u32 %v5098, 16
      %v5321 = vrot.slane %v5319, 4
      %v5322 = vor.u32 %v5318, %v5321
      %v5323 = vsel %vm1870, %v5306, %v5322
      %v5324 = vshrl.u32 %v5066, 16
      %v5326 = vrot.slane %v5324, 3
      %v5327 = vshll.u32 %v5066, 16
      %v5329 = vrot.slane %v5327, 4
      %v5330 = vor.u32 %v5326, %v5329
      %v5331 = vsel %vm1870, %v5314, %v5330
      %v5332 = vshrl.u32 %v5100, 16
      %v5334 = vrot.slane %v5332, 3
      %v5335 = vshll.u32 %v5100, 16
      %v5337 = vrot.slane %v5335, 4
      %v5338 = vor.u32 %v5334, %v5337
      %v5339 = vsel %vm1870, %v5322, %v5338
      %v5340 = vshrl.u32 %v5068, 16
      %v5342 = vrot.slane %v5340, 3
      %v5343 = vshll.u32 %v5068, 16
      %v5345 = vrot.slane %v5343, 4
      %v5346 = vor.u32 %v5342, %v5345
      %v5347 = vsel %vm1870, %v5330, %v5346
      %v5348 = vshrl.u32 %v5102, 16
      %v5350 = vrot.slane %v5348, 3
      %v5351 = vshll.u32 %v5102, 16
      %v5353 = vrot.slane %v5351, 4
      %v5354 = vor.u32 %v5350, %v5353
      %v5355 = vsel %vm1870, %v5338, %v5354
      %v5356 = vshrl.u32 %v5070, 16
      %v5358 = vrot.slane %v5356, 3
      %v5359 = vshll.u32 %v5070, 16
      %v5361 = vrot.slane %v5359, 4
      %v5362 = vor.u32 %v5358, %v5361
      %v5363 = vsel %vm1870, %v5346, %v5362
      %v5364 = vshrl.u32 %v5104, 16
      %v5366 = vrot.slane %v5364, 3
      %v5367 = vshll.u32 %v5104, 16
      %v5369 = vrot.slane %v5367, 4
      %v5370 = vor.u32 %v5366, %v5369
      %v5371 = vsel %vm1870, %v5354, %v5370
      %v5372 = vshrl.u32 %v5072, 16
      %v5374 = vrot.slane %v5372, 3
      %v5375 = vshll.u32 %v5072, 16
      %v5377 = vrot.slane %v5375, 4
      %v5378 = vor.u32 %v5374, %v5377
      %v5379 = vsel %vm1870, %v5362, %v5378
      %v5380 = vshrl.u32 %v5106, 16
      %v5382 = vrot.slane %v5380, 3
      %v5383 = vshll.u32 %v5106, 16
      %v5385 = vrot.slane %v5383, 4
      %v5386 = vor.u32 %v5382, %v5385
      %v5387 = vsel %vm1870, %v5370, %v5386
      %v5388 = vshrl.u32 %v5074, 16
      %v5390 = vrot.slane %v5388, 3
      %v5391 = vshll.u32 %v5074, 16
      %v5393 = vrot.slane %v5391, 4
      %v5394 = vor.u32 %v5390, %v5393
      %v5395 = vsel %vm1870, %v5378, %v5394
      %v5396 = vshrl.u32 %v5108, 16
      %v5398 = vrot.slane %v5396, 3
      %v5399 = vshll.u32 %v5108, 16
      %v5401 = vrot.slane %v5399, 4
      %v5402 = vor.u32 %v5398, %v5401
      %v5403 = vsel %vm1870, %v5386, %v5402
      %v5404 = vshrl.u32 %v5076, 16
      %v5406 = vrot.slane %v5404, 3
      %v5407 = vshll.u32 %v5076, 16
      %v5409 = vrot.slane %v5407, 4
      %v5410 = vor.u32 %v5406, %v5409
      %v5411 = vsel %vm1870, %v5394, %v5410
      %v5412 = vshrl.u32 %v5110, 16
      %v5414 = vrot.slane %v5412, 3
      %v5415 = vshll.u32 %v5110, 16
      %v5417 = vrot.slane %v5415, 4
      %v5418 = vor.u32 %v5414, %v5417
      %v5419 = vsel %vm1870, %v5402, %v5418
      %v5484 = vunpack.c.l.b16 %v5111
      %v5485 = vunpack.c.l.b16 %v5112
      %v5486 = vunpack.c.l.b16 %v5113
      %v5487 = vunpack.c.l.b16 %v5114
      %v5488 = vunpack.c.l.b16 %v5115
      %v5489 = vunpack.c.l.b16 %v5116
      %v5490 = vunpack.c.l.b16 %v5117
      %v5491 = vunpack.c.l.b16 %v5118
      %v5492 = vunpack.c.l.b16 %v5119
      %v5493 = vunpack.c.l.b16 %v5120
      %v5494 = vunpack.c.l.b16 %v5121
      %v5495 = vunpack.c.l.b16 %v5122
      %v5496 = vunpack.c.l.b16 %v5123
      %v5497 = vunpack.c.l.b16 %v5124
      %v5498 = vunpack.c.l.b16 %v5125
      %v5499 = vunpack.c.l.b16 %v5126
      %v5500 = vunpack.c.l.b16 %v5127
      %v5501 = vunpack.c.l.b16 %v5128
      %v5502 = vunpack.c.l.b16 %v5129
      %v5503 = vunpack.c.l.b16 %v5130
      %v5504 = vunpack.c.l.b16 %v5131
      %v5505 = vunpack.c.l.b16 %v5132
      %v5506 = vunpack.c.l.b16 %v5133
      %v5507 = vunpack.c.l.b16 %v5134
      %v5508 = vunpack.c.l.b16 %v5135
      %v5509 = vunpack.c.l.b16 %v5136
      %v5510 = vunpack.c.l.b16 %v5137
      %v5511 = vunpack.c.l.b16 %v5138
      %v5512 = vunpack.c.l.b16 %v5139
      %v5513 = vunpack.c.l.b16 %v5140
      %v5514 = vunpack.c.l.b16 %v5141
      %v5515 = vunpack.c.l.b16 %v5142
      %v5516 = vpack.c.b16 %v5485, %v5484
      %v5517 = vpack.c.b16 %v5487, %v5486
      %v5518 = vpack.c.b16 %v5489, %v5488
      %v5519 = vpack.c.b16 %v5491, %v5490
      %v5520 = vpack.c.b16 %v5493, %v5492
      %v5521 = vpack.c.b16 %v5495, %v5494
      %v5522 = vpack.c.b16 %v5497, %v5496
      %v5523 = vpack.c.b16 %v5499, %v5498
      %v5524 = vpack.c.b16 %v5501, %v5500
      %v5525 = vpack.c.b16 %v5503, %v5502
      %v5526 = vpack.c.b16 %v5505, %v5504
      %v5527 = vpack.c.b16 %v5507, %v5506
      %v5528 = vpack.c.b16 %v5509, %v5508
      %v5529 = vpack.c.b16 %v5511, %v5510
      %v5530 = vpack.c.b16 %v5513, %v5512
      %v5531 = vpack.c.b16 %v5515, %v5514
      %5548 = vmatprep.subr.bf16.mxu0 0
      %5549 = vmatpush1.bf16.msra.mxu0 %v5516
      %5550 = vmatprep.subr.bf16.mxu0 0
      %5551 = vmatpush1.bf16.msra.mxu0 %v5517
      %5552 = vmatprep.subr.bf16.mxu0 0
      %5553 = vmatpush1.bf16.msra.mxu0 %v5518
      %5554 = vmatprep.subr.bf16.mxu0 0
      %5555 = vmatpush1.bf16.msra.mxu0 %v5519
      %5556 = vmatprep.subr.bf16.mxu0 0
      %5557 = vmatpush1.bf16.msra.mxu0 %v5520
      %5558 = vmatprep.subr.bf16.mxu0 0
      %5559 = vmatpush1.bf16.msra.mxu0 %v5521
      %5560 = vmatprep.subr.bf16.mxu0 0
      %5561 = vmatpush1.bf16.msra.mxu0 %v5522
      %5562 = vmatprep.subr.bf16.mxu0 0
      %5563 = vmatpush1.bf16.msra.mxu0 %v5523
      %5564 = vmatprep.subr.bf16.mxu0 0
      %5565 = vmatpush1.bf16.msra.mxu0 %v5524
      %5566 = vmatprep.subr.bf16.mxu0 0
      %5567 = vmatpush1.bf16.msra.mxu0 %v5525
      %5568 = vmatprep.subr.bf16.mxu0 0
      %5569 = vmatpush1.bf16.msra.mxu0 %v5526
      %5570 = vmatprep.subr.bf16.mxu0 0
      %5571 = vmatpush1.bf16.msra.mxu0 %v5527
      %5572 = vmatprep.subr.bf16.mxu0 0
      %5573 = vmatpush1.bf16.msra.mxu0 %v5528
      %5574 = vmatprep.subr.bf16.mxu0 0
      %5575 = vmatpush1.bf16.msra.mxu0 %v5529
      %5576 = vmatprep.subr.bf16.mxu0 0
      %5577 = vmatpush1.bf16.msra.mxu0 %v5530
      %5578 = vmatprep.subr.bf16.mxu0 0
      %5579 = vmatpush1.bf16.msra.mxu0 %v5531
      %5580 = vmatprep.mubr.bf16.mxu0 %v5179
      %5581 = vmatmul.mubr.bf16.gmra.mrb[0].mxu0 %v5164
      %v5582 = vpop.f32.mrb[0].mxu0
      %v5583 = vadd.f32 %v5148, %v5582
      %v5584 = vpop.f32.mrb[0].mxu0
      %v5585 = vpop.f32.mrb[0].mxu0
      %v5586 = vadd.f32 %v5148, %v5585
      %v5587 = vpop.f32.mrb[0].mxu0
      %5588 = vmatprep.mubr.bf16.mxu0 %v5195
      %5589 = vmatmul.mubr.bf16.gmra.mrb[0].mxu0 %v5187
      %v5590 = vpop.f32.mrb[0].mxu0
      %v5591 = vadd.f32 %v5148, %v5590
      %v5592 = vpop.f32.mrb[0].mxu0
      %v5593 = vpop.f32.mrb[0].mxu0
      %v5594 = vadd.f32 %v5148, %v5593
      %v5595 = vpop.f32.mrb[0].mxu0
      %5596 = vmatprep.mubr.bf16.mxu0 %v5211
      %5597 = vmatmul.mubr.bf16.gmra.mrb[0].mxu0 %v5203
      %v5598 = vpop.f32.mrb[0].mxu0
      %v5599 = vadd.f32 %v5148, %v5598
      %v5600 = vpop.f32.mrb[0].mxu0
      %v5601 = vpop.f32.mrb[0].mxu0
      %v5602 = vadd.f32 %v5148, %v5601
      %v5603 = vpop.f32.mrb[0].mxu0
      %5604 = vmatprep.mubr.bf16.mxu0 %v5227
      %5605 = vmatmul.mubr.bf16.gmra.mrb[0].mxu0 %v5219
      %v5606 = vpop.f32.mrb[0].mxu0
      %v5607 = vadd.f32 %v5148, %v5606
      %v5608 = vpop.f32.mrb[0].mxu0
      %v5609 = vpop.f32.mrb[0].mxu0
      %v5610 = vadd.f32 %v5148, %v5609
      %v5611 = vpop.f32.mrb[0].mxu0
      %5612 = vmatprep.mubr.bf16.mxu0 %v5243
      %5613 = vmatmul.mubr.bf16.gmra.mrb[0].mxu0 %v5235
      %v5614 = vpop.f32.mrb[0].mxu0
      %v5615 = vadd.f32 %v5148, %v5614
      %v5616 = vpop.f32.mrb[0].mxu0
      %v5617 = vpop.f32.mrb[0].mxu0
      %v5618 = vadd.f32 %v5148, %v5617
      %v5619 = vpop.f32.mrb[0].mxu0
      %5620 = vmatprep.mubr.bf16.mxu0 %v5259
      %5621 = vmatmul.mubr.bf16.gmra.mrb[0].mxu0 %v5251
      %v5622 = vpop.f32.mrb[0].mxu0
      %v5623 = vadd.f32 %v5148, %v5622
      %v5624 = vpop.f32.mrb[0].mxu0
      %v5625 = vpop.f32.mrb[0].mxu0
      %v5626 = vadd.f32 %v5148, %v5625
      %v5627 = vpop.f32.mrb[0].mxu0
      %5628 = vmatprep.mubr.bf16.mxu0 %v5275
      %5629 = vmatmul.mubr.bf16.gmra.mrb[0].mxu0 %v5267
      %v5630 = vpop.f32.mrb[0].mxu0
      %v5631 = vadd.f32 %v5148, %v5630
      %v5632 = vpop.f32.mrb[0].mxu0
      %v5633 = vpop.f32.mrb[0].mxu0
      %v5634 = vadd.f32 %v5148, %v5633
      %v5635 = vpop.f32.mrb[0].mxu0
      %5636 = vmatprep.mubr.bf16.mxu0 %v5291
      %5637 = vmatmul.mubr.bf16.gmra.mrb[0].mxu0 %v5283
      %v5638 = vpop.f32.mrb[0].mxu0
      %v5639 = vadd.f32 %v5148, %v5638
      %v5640 = vpop.f32.mrb[0].mxu0
      %v5641 = vpop.f32.mrb[0].mxu0
      %v5642 = vadd.f32 %v5148, %v5641
      %v5643 = vpop.f32.mrb[0].mxu0
      %5644 = vmatprep.mubr.bf16.mxu0 %v5307
      %5645 = vmatmul.mubr.bf16.gmra.mrb[0].mxu0 %v5299
      %v5646 = vpop.f32.mrb[0].mxu0
      %v5647 = vadd.f32 %v5148, %v5646
      %v5648 = vpop.f32.mrb[0].mxu0
      %v5649 = vpop.f32.mrb[0].mxu0
      %v5650 = vadd.f32 %v5148, %v5649
      %v5651 = vpop.f32.mrb[0].mxu0
      %5652 = vmatprep.mubr.bf16.mxu0 %v5323
      %5653 = vmatmul.mubr.bf16.gmra.mrb[0].mxu0 %v5315
      %v5654 = vpop.f32.mrb[0].mxu0
      %v5655 = vadd.f32 %v5148, %v5654
      %v5656 = vpop.f32.mrb[0].mxu0
      %v5657 = vpop.f32.mrb[0].mxu0
      %v5658 = vadd.f32 %v5148, %v5657
      %v5659 = vpop.f32.mrb[0].mxu0
      %5660 = vmatprep.mubr.bf16.mxu0 %v5339
      %5661 = vmatmul.mubr.bf16.gmra.mrb[0].mxu0 %v5331
      %v5662 = vpop.f32.mrb[0].mxu0
      %v5663 = vadd.f32 %v5148, %v5662
      %v5664 = vpop.f32.mrb[0].mxu0
      %v5665 = vpop.f32.mrb[0].mxu0
      %v5666 = vadd.f32 %v5148, %v5665
      %v5667 = vpop.f32.mrb[0].mxu0
      %5668 = vmatprep.mubr.bf16.mxu0 %v5355
      %5669 = vmatmul.mubr.bf16.gmra.mrb[0].mxu0 %v5347
      %v5670 = vpop.f32.mrb[0].mxu0
      %v5671 = vadd.f32 %v5148, %v5670
      %v5672 = vpop.f32.mrb[0].mxu0
      %v5673 = vpop.f32.mrb[0].mxu0
      %v5674 = vadd.f32 %v5148, %v5673
      %v5675 = vpop.f32.mrb[0].mxu0
      %5676 = vmatprep.mubr.bf16.mxu0 %v5371
      %5677 = vmatmul.mubr.bf16.gmra.mrb[0].mxu0 %v5363
      %v5678 = vpop.f32.mrb[0].mxu0
      %v5679 = vadd.f32 %v5148, %v5678
      %v5680 = vpop.f32.mrb[0].mxu0
      %v5681 = vpop.f32.mrb[0].mxu0
      %v5682 = vadd.f32 %v5148, %v5681
      %v5683 = vpop.f32.mrb[0].mxu0
      %5684 = vmatprep.mubr.bf16.mxu0 %v5387
      %5685 = vmatmul.mubr.bf16.gmra.mrb[0].mxu0 %v5379
      %v5686 = vpop.f32.mrb[0].mxu0
      %v5687 = vadd.f32 %v5148, %v5686
      %v5688 = vpop.f32.mrb[0].mxu0
      %v5689 = vpop.f32.mrb[0].mxu0
      %v5690 = vadd.f32 %v5148, %v5689
      %v5691 = vpop.f32.mrb[0].mxu0
      %5692 = vmatprep.mubr.bf16.mxu0 %v5403
      %5693 = vmatmul.mubr.bf16.gmra.mrb[0].mxu0 %v5395
      %v5694 = vpop.f32.mrb[0].mxu0
      %v5695 = vadd.f32 %v5148, %v5694
      %v5696 = vpop.f32.mrb[0].mxu0
      %v5697 = vpop.f32.mrb[0].mxu0
      %v5698 = vadd.f32 %v5148, %v5697
      %v5699 = vpop.f32.mrb[0].mxu0
      %5700 = vmatprep.mubr.bf16.mxu0 %v5419
      %5701 = vmatmul.mubr.bf16.gmra.mrb[0].mxu0 %v5411
      %v5702 = vpop.f32.mrb[0].mxu0
      %v5703 = vadd.f32 %v5148, %v5702
      %v5704 = vpop.f32.mrb[0].mxu0
      %v5705 = vpop.f32.mrb[0].mxu0
      %v5706 = vadd.f32 %v5148, %v5705
      %v5707 = vpop.f32.mrb[0].mxu0
      %5708 = vdwg.mxu0
      %v5709 = vmax.f32 %v5583, 0.0
      %v5710 = vmax.f32 %v5586, 0.0
      %v5711 = vmax.f32 %v5591, 0.0
      %v5712 = vmax.f32 %v5594, 0.0
      %v5713 = vmax.f32 %v5599, 0.0
      %v5714 = vmax.f32 %v5602, 0.0
      %v5715 = vmax.f32 %v5607, 0.0
      %v5716 = vmax.f32 %v5610, 0.0
      %v5717 = vmax.f32 %v5615, 0.0
      %v5718 = vmax.f32 %v5618, 0.0
      %v5719 = vmax.f32 %v5623, 0.0
      %v5720 = vmax.f32 %v5626, 0.0
      %v5721 = vmax.f32 %v5631, 0.0
      %v5722 = vmax.f32 %v5634, 0.0
      %v5723 = vmax.f32 %v5639, 0.0
      %v5724 = vmax.f32 %v5642, 0.0
      %v5725 = vmax.f32 %v5647, 0.0
      %v5726 = vmax.f32 %v5650, 0.0
      %v5727 = vmax.f32 %v5655, 0.0
      %v5728 = vmax.f32 %v5658, 0.0
      %v5729 = vmax.f32 %v5663, 0.0
      %v5730 = vmax.f32 %v5666, 0.0
      %v5731 = vmax.f32 %v5671, 0.0
      %v5732 = vmax.f32 %v5674, 0.0
      %v5733 = vmax.f32 %v5679, 0.0
      %v5734 = vmax.f32 %v5682, 0.0
      %v5735 = vmax.f32 %v5687, 0.0
      %v5736 = vmax.f32 %v5690, 0.0
      %v5737 = vmax.f32 %v5695, 0.0
      %v5738 = vmax.f32 %v5698, 0.0
      %v5739 = vmax.f32 %v5703, 0.0
      %v5740 = vmax.f32 %v5706, 0.0
      %v5741 = vpack.c.bf16 %v5710, %v5709
      %v5742 = vpack.c.bf16 %v5712, %v5711
      %v5743 = vpack.c.bf16 %v5714, %v5713
      %v5744 = vpack.c.bf16 %v5716, %v5715
      %v5745 = vpack.c.bf16 %v5718, %v5717
      %v5746 = vpack.c.bf16 %v5720, %v5719
      %v5747 = vpack.c.bf16 %v5722, %v5721
      %v5748 = vpack.c.bf16 %v5724, %v5723
      %v5749 = vpack.c.bf16 %v5726, %v5725
      %v5750 = vpack.c.bf16 %v5728, %v5727
      %v5751 = vpack.c.bf16 %v5730, %v5729
      %v5752 = vpack.c.bf16 %v5732, %v5731
      %v5753 = vpack.c.bf16 %v5734, %v5733
      %v5754 = vpack.c.bf16 %v5736, %v5735
      %v5755 = vpack.c.bf16 %v5738, %v5737
      %v5756 = vpack.c.bf16 %v5740, %v5739
      %v5773 = vrot.slane %v5741, 4
      %v5774 = vrot.slane %v5742, 4
      %v5775 = vsel %vm1252, %v5773, %v5774
      %v5776 = vrot.slane %v5743, 4
      %v5777 = vsel %vm1252, %v5774, %v5776
      %v5778 = vrot.slane %v5744, 4
      %v5779 = vsel %vm1252, %v5776, %v5778
      %v5780 = vrot.slane %v5745, 4
      %v5781 = vsel %vm1252, %v5778, %v5780
      %v5782 = vrot.slane %v5746, 4
      %v5783 = vsel %vm1252, %v5780, %v5782
      %v5784 = vrot.slane %v5747, 4
      %v5785 = vsel %vm1252, %v5782, %v5784
      %v5786 = vrot.slane %v5748, 4
      %v5787 = vsel %vm1252, %v5784, %v5786
      %v5788 = vrot.slane %v5749, 4
      %v5789 = vsel %vm1252, %v5786, %v5788
      %v5790 = vrot.slane %v5750, 4
      %v5791 = vsel %vm1252, %v5788, %v5790
      %v5792 = vrot.slane %v5751, 4
      %v5793 = vsel %vm1252, %v5790, %v5792
      %v5794 = vrot.slane %v5752, 4
      %v5795 = vsel %vm1252, %v5792, %v5794
      %v5796 = vrot.slane %v5753, 4
      %v5797 = vsel %vm1252, %v5794, %v5796
      %v5798 = vrot.slane %v5754, 4
      %v5799 = vsel %vm1252, %v5796, %v5798
      %v5800 = vrot.slane %v5755, 4
      %v5801 = vsel %vm1252, %v5798, %v5800
      %v5802 = vrot.slane %v5756, 4
      %v5803 = vsel %vm1252, %v5800, %v5802
      %5821 = vst.msk [vmem:[#allocation2 + $0x8] sm:$0xf0] %vm4064, %v5773
      %5822 = vst.msk [vmem:[#allocation2 + $0x10] sm:$0xff] %vm430, %v5775
      %5823 = vst.msk [vmem:[#allocation2 + $0x18] sm:$0xff] %vm430, %v5777
      %5824 = vst.msk [vmem:[#allocation2 + $0x20] sm:$0xff] %vm430, %v5779
      %5825 = vst.msk [vmem:[#allocation2 + $0x28] sm:$0xff] %vm430, %v5781
      %5826 = vst.msk [vmem:[#allocation2 + $0x30] sm:$0xff] %vm430, %v5783
      %5827 = vst.msk [vmem:[#allocation2 + $0x38] sm:$0xff] %vm430, %v5785
      %5828 = vst.msk [vmem:[#allocation2 + $0x40] sm:$0xff] %vm430, %v5787
      %5829 = vst.msk [vmem:[#allocation2 + $0x48] sm:$0xff] %vm430, %v5789
      %5830 = vst.msk [vmem:[#allocation2 + $0x50] sm:$0xff] %vm430, %v5791
      %5831 = vst.msk [vmem:[#allocation2 + $0x58] sm:$0xff] %vm430, %v5793
      %5832 = vst.msk [vmem:[#allocation2 + $0x60] sm:$0xff] %vm430, %v5795
      %5833 = vst.msk [vmem:[#allocation2 + $0x68] sm:$0xff] %vm430, %v5797
      %5834 = vst.msk [vmem:[#allocation2 + $0x70] sm:$0xff] %vm430, %v5799
      %5835 = vst.msk [vmem:[#allocation2 + $0x78] sm:$0xff] %vm430, %v5801
      %5836 = vst.msk [vmem:[#allocation2 + $0x80] sm:$0xff] %vm430, %v5803
      %5837 = vst.msk [vmem:[#allocation2 + $0x88] sm:$0xf] %vm4081, %v5802
      %v5838 = vld [vmem:[#allocation2] sm:$0xf8]
      %v5839 = vld [vmem:[#allocation2 + $0x8] sm:$0xff]
      %v5840 = vld [vmem:[#allocation2 + $0x10] sm:$0xff]
      %v5841 = vld [vmem:[#allocation2 + $0x18] sm:$0xff]
      %v5842 = vld [vmem:[#allocation2 + $0x20] sm:$0xff]
      %v5843 = vld [vmem:[#allocation2 + $0x28] sm:$0xff]
      %v5844 = vld [vmem:[#allocation2 + $0x30] sm:$0xff]
      %v5845 = vld [vmem:[#allocation2 + $0x38] sm:$0xff]
      %v5846 = vld [vmem:[#allocation2 + $0x40] sm:$0xff]
      %v5847 = vld [vmem:[#allocation2 + $0x48] sm:$0xff]
      %v5848 = vld [vmem:[#allocation2 + $0x50] sm:$0xff]
      %v5849 = vld [vmem:[#allocation2 + $0x58] sm:$0xff]
      %v5850 = vld [vmem:[#allocation2 + $0x60] sm:$0xff]
      %v5851 = vld [vmem:[#allocation2 + $0x68] sm:$0xff]
      %v5852 = vld [vmem:[#allocation2 + $0x70] sm:$0xff]
      %v5853 = vld [vmem:[#allocation2 + $0x78] sm:$0xff]
      %v5854 = vld [vmem:[#allocation2 + $0x80] sm:$0xf]
      %v5855 = vsel %vm1658, %v5838, 0
      %v5856 = vsel %vm1659, %v5839, 0
      %v5857 = vsel %vm1660, %v5840, 0
      %v5858 = vsel %vm1661, %v5841, 0
      %v5859 = vsel %vm1662, %v5842, 0
      %v5860 = vsel %vm1663, %v5843, 0
      %v5861 = vsel %vm1664, %v5844, 0
      %v5862 = vsel %vm1665, %v5845, 0
      %v5863 = vsel %vm1666, %v5846, 0
      %v5864 = vsel %vm1667, %v5847, 0
      %v5865 = vsel %vm1668, %v5848, 0
      %v5866 = vsel %vm1669, %v5849, 0
      %v5867 = vsel %vm1670, %v5850, 0
      %v5868 = vsel %vm1671, %v5851, 0
      %v5869 = vsel %vm1672, %v5852, 0
      %v5870 = vsel %vm1673, %v5853, 0
      %v5871 = vsel %vm1674, %v5854, 0
      %v5872 = vld [vmem:[#allocation2] sm:$0xf0]
      %v5873 = vld [vmem:[#allocation2 + $0x80] sm:$0x1f]
      %v5874 = vsel %vm2014, %v5872, 0
      %v5875 = vsel %vm2015, %v5839, 0
      %v5876 = vsel %vm2016, %v5840, 0
      %v5877 = vsel %vm2017, %v5841, 0
      %v5878 = vsel %vm2018, %v5842, 0
      %v5879 = vsel %vm2019, %v5843, 0
      %v5880 = vsel %vm2020, %v5844, 0
      %v5881 = vsel %vm2021, %v5845, 0
      %v5882 = vsel %vm2022, %v5846, 0
      %v5883 = vsel %vm2023, %v5847, 0
      %v5884 = vsel %vm2024, %v5848, 0
      %v5885 = vsel %vm2025, %v5849, 0
      %v5886 = vsel %vm2026, %v5850, 0
      %v5887 = vsel %vm2027, %v5851, 0
      %v5888 = vsel %vm2028, %v5852, 0
      %v5889 = vsel %vm2029, %v5853, 0
      %v5890 = vsel %vm2030, %v5873, 0
      %v5891 = vld [vmem:[#allocation2 + $0x8] sm:$0xf8]
      %v5892 = vld [vmem:[#allocation2 + $0x80] sm:$0xff]
      %v5893 = vld [vmem:[#allocation2 + $0x88] sm:$0xf]
      %v5894 = vsel %vm1658, %v5891, 0
      %v5895 = vsel %vm1659, %v5840, 0
      %v5896 = vsel %vm1660, %v5841, 0
      %v5897 = vsel %vm1661, %v5842, 0
      %v5898 = vsel %vm1662, %v5843, 0
      %v5899 = vsel %vm1663, %v5844, 0
      %v5900 = vsel %vm1664, %v5845, 0
      %v5901 = vsel %vm1665, %v5846, 0
      %v5902 = vsel %vm1666, %v5847, 0
      %v5903 = vsel %vm1667, %v5848, 0
      %v5904 = vsel %vm1668, %v5849, 0
      %v5905 = vsel %vm1669, %v5850, 0
      %v5906 = vsel %vm1670, %v5851, 0
      %v5907 = vsel %vm1671, %v5852, 0
      %v5908 = vsel %vm1672, %v5853, 0
      %v5909 = vsel %vm1673, %v5892, 0
      %v5910 = vsel %vm1674, %v5893, 0
      %v5911 = vld [vmem:[#allocation2 + $0x8] sm:$0xf0]
      %v5912 = vld [vmem:[#allocation2 + $0x88] sm:$0x1f]
      %v5913 = vsel %vm2014, %v5911, 0
      %v5914 = vsel %vm2015, %v5840, 0
      %v5915 = vsel %vm2016, %v5841, 0
      %v5916 = vsel %vm2017, %v5842, 0
      %v5917 = vsel %vm2018, %v5843, 0
      %v5918 = vsel %vm2019, %v5844, 0
      %v5919 = vsel %vm2020, %v5845, 0
      %v5920 = vsel %vm2021, %v5846, 0
      %v5921 = vsel %vm2022, %v5847, 0
      %v5922 = vsel %vm2023, %v5848, 0
      %v5923 = vsel %vm2024, %v5849, 0
      %v5924 = vsel %vm2025, %v5850, 0
      %v5925 = vsel %vm2026, %v5851, 0
      %v5926 = vsel %vm2027, %v5852, 0
      %v5927 = vsel %vm2028, %v5853, 0
      %v5928 = vsel %vm2029, %v5892, 0
      %v5929 = vsel %vm2030, %v5912, 0
      %v5930 = vld [vmem:[#allocation2 + $0x10] sm:$0xf8]
      %v5931 = vld [vmem:[#allocation2 + $0x88] sm:$0xff]
      %v5932 = vld [vmem:[#allocation2 + $0x90] sm:$0xf]
      %v5933 = vsel %vm1658, %v5930, 0
      %v5934 = vsel %vm1659, %v5841, 0
      %v5935 = vsel %vm1660, %v5842, 0
      %v5936 = vsel %vm1661, %v5843, 0
      %v5937 = vsel %vm1662, %v5844, 0
      %v5938 = vsel %vm1663, %v5845, 0
      %v5939 = vsel %vm1664, %v5846, 0
      %v5940 = vsel %vm1665, %v5847, 0
      %v5941 = vsel %vm1666, %v5848, 0
      %v5942 = vsel %vm1667, %v5849, 0
      %v5943 = vsel %vm1668, %v5850, 0
      %v5944 = vsel %vm1669, %v5851, 0
      %v5945 = vsel %vm1670, %v5852, 0
      %v5946 = vsel %vm1671, %v5853, 0
      %v5947 = vsel %vm1672, %v5892, 0
      %v5948 = vsel %vm1673, %v5931, 0
      %v5949 = vsel %vm1674, %v5932, 0
      %v5950 = vld [vmem:[#allocation2 + $0x10] sm:$0xf0]
      %v5951 = vld [vmem:[#allocation2 + $0x90] sm:$0x1f]
      %v5952 = vsel %vm2014, %v5950, 0
      %v5953 = vsel %vm2015, %v5841, 0
      %v5954 = vsel %vm2016, %v5842, 0
      %v5955 = vsel %vm2017, %v5843, 0
      %v5956 = vsel %vm2018, %v5844, 0
      %v5957 = vsel %vm2019, %v5845, 0
      %v5958 = vsel %vm2020, %v5846, 0
      %v5959 = vsel %vm2021, %v5847, 0
      %v5960 = vsel %vm2022, %v5848, 0
      %v5961 = vsel %vm2023, %v5849, 0
      %v5962 = vsel %vm2024, %v5850, 0
      %v5963 = vsel %vm2025, %v5851, 0
      %v5964 = vsel %vm2026, %v5852, 0
      %v5965 = vsel %vm2027, %v5853, 0
      %v5966 = vsel %vm2028, %v5892, 0
      %v5967 = vsel %vm2029, %v5931, 0
      %v5968 = vsel %vm2030, %v5951, 0
      %v5970 = vshrl.u32 %v5872, 16
      %v5972 = vshll.u32 %v5872, 16
      %v5974 = vrot.slane %v5972, 1
      %v5975 = vor.u32 %v5970, %v5974
      %v5977 = vshll.u32 %v5839, 16
      %v5979 = vrot.slane %v5977, 1
      %v5980 = vsel %vm2126, %v5975, %v5979
      %v5981 = vshrl.u32 %v5839, 16
      %v5983 = vor.u32 %v5981, %v5979
      %v5985 = vshll.u32 %v5840, 16
      %v5987 = vrot.slane %v5985, 1
      %v5988 = vsel %vm2126, %v5983, %v5987
      %v5989 = vshrl.u32 %v5840, 16
      %v5991 = vor.u32 %v5989, %v5987
      %v5993 = vshll.u32 %v5841, 16
      %v5995 = vrot.slane %v5993, 1
      %v5996 = vsel %vm2126, %v5991, %v5995
      %v5997 = vshrl.u32 %v5841, 16
      %v5999 = vor.u32 %v5997, %v5995
      %v6001 = vshll.u32 %v5842, 16
      %v6003 = vrot.slane %v6001, 1
      %v6004 = vsel %vm2126, %v5999, %v6003
      %v6005 = vshrl.u32 %v5842, 16
      %v6007 = vor.u32 %v6005, %v6003
      %v6009 = vshll.u32 %v5843, 16
      %v6011 = vrot.slane %v6009, 1
      %v6012 = vsel %vm2126, %v6007, %v6011
      %v6013 = vshrl.u32 %v5843, 16
      %v6015 = vor.u32 %v6013, %v6011
      %v6017 = vshll.u32 %v5844, 16
      %v6019 = vrot.slane %v6017, 1
      %v6020 = vsel %vm2126, %v6015, %v6019
      %v6021 = vshrl.u32 %v5844, 16
      %v6023 = vor.u32 %v6021, %v6019
      %v6025 = vshll.u32 %v5845, 16
      %v6027 = vrot.slane %v6025, 1
      %v6028 = vsel %vm2126, %v6023, %v6027
      %v6029 = vshrl.u32 %v5845, 16
      %v6031 = vor.u32 %v6029, %v6027
      %v6033 = vshll.u32 %v5846, 16
      %v6035 = vrot.slane %v6033, 1
      %v6036 = vsel %vm2126, %v6031, %v6035
      %v6037 = vshrl.u32 %v5846, 16
      %v6039 = vor.u32 %v6037, %v6035
      %v6041 = vshll.u32 %v5847, 16
      %v6043 = vrot.slane %v6041, 1
      %v6044 = vsel %vm2126, %v6039, %v6043
      %v6045 = vshrl.u32 %v5847, 16
      %v6047 = vor.u32 %v6045, %v6043
      %v6049 = vshll.u32 %v5848, 16
      %v6051 = vrot.slane %v6049, 1
      %v6052 = vsel %vm2126, %v6047, %v6051
      %v6053 = vshrl.u32 %v5848, 16
      %v6055 = vor.u32 %v6053, %v6051
      %v6057 = vshll.u32 %v5849, 16
      %v6059 = vrot.slane %v6057, 1
      %v6060 = vsel %vm2126, %v6055, %v6059
      %v6061 = vshrl.u32 %v5849, 16
      %v6063 = vor.u32 %v6061, %v6059
      %v6065 = vshll.u32 %v5850, 16
      %v6067 = vrot.slane %v6065, 1
      %v6068 = vsel %vm2126, %v6063, %v6067
      %v6069 = vshrl.u32 %v5850, 16
      %v6071 = vor.u32 %v6069, %v6067
      %v6073 = vshll.u32 %v5851, 16
      %v6075 = vrot.slane %v6073, 1
      %v6076 = vsel %vm2126, %v6071, %v6075
      %v6077 = vshrl.u32 %v5851, 16
      %v6079 = vor.u32 %v6077, %v6075
      %v6081 = vshll.u32 %v5852, 16
      %v6083 = vrot.slane %v6081, 1
      %v6084 = vsel %vm2126, %v6079, %v6083
      %v6085 = vshrl.u32 %v5852, 16
      %v6087 = vor.u32 %v6085, %v6083
      %v6089 = vshll.u32 %v5853, 16
      %v6091 = vrot.slane %v6089, 1
      %v6092 = vsel %vm2126, %v6087, %v6091
      %v6093 = vshrl.u32 %v5853, 16
      %v6095 = vor.u32 %v6093, %v6091
      %v6097 = vshll.u32 %v5854, 16
      %v6099 = vrot.slane %v6097, 1
      %v6100 = vsel %vm2126, %v6095, %v6099
      %v6101 = vshrl.u32 %v5854, 16
      %v6103 = vor.u32 %v6101, %v6099
      %6104 = vrot.lane.b32.xlu0 %v5980, 16
      %v6105 = vpop.permute.xlu0 %6104
      %6106 = vrot.lane.b32.xlu0 %v5988, 16
      %v6107 = vpop.permute.xlu0 %6106
      %6108 = vrot.lane.b32.xlu0 %v5996, 16
      %v6109 = vpop.permute.xlu0 %6108
      %6110 = vrot.lane.b32.xlu0 %v6004, 16
      %v6111 = vpop.permute.xlu0 %6110
      %6112 = vrot.lane.b32.xlu0 %v6012, 16
      %v6113 = vpop.permute.xlu0 %6112
      %6114 = vrot.lane.b32.xlu0 %v6020, 16
      %v6115 = vpop.permute.xlu0 %6114
      %6116 = vrot.lane.b32.xlu0 %v6028, 16
      %v6117 = vpop.permute.xlu0 %6116
      %6118 = vrot.lane.b32.xlu0 %v6036, 16
      %v6119 = vpop.permute.xlu0 %6118
      %6120 = vrot.lane.b32.xlu0 %v6044, 16
      %v6121 = vpop.permute.xlu0 %6120
      %6122 = vrot.lane.b32.xlu0 %v6052, 16
      %v6123 = vpop.permute.xlu0 %6122
      %6124 = vrot.lane.b32.xlu0 %v6060, 16
      %v6125 = vpop.permute.xlu0 %6124
      %6126 = vrot.lane.b32.xlu0 %v6068, 16
      %v6127 = vpop.permute.xlu0 %6126
      %6128 = vrot.lane.b32.xlu0 %v6076, 16
      %v6129 = vpop.permute.xlu0 %6128
      %6130 = vrot.lane.b32.xlu0 %v6084, 16
      %v6131 = vpop.permute.xlu0 %6130
      %6132 = vrot.lane.b32.xlu0 %v6092, 16
      %v6133 = vpop.permute.xlu0 %6132
      %6134 = vrot.lane.b32.xlu0 %v6100, 16
      %v6135 = vpop.permute.xlu0 %6134
      %6136 = vrot.lane.b32.xlu0 %v6103, 16
      %v6137 = vpop.permute.xlu0 %6136
      %v6155 = vrot.slane %v5874, 1
      %v6156 = vrot.slane %v5875, 1
      %v6157 = vsel %vm2313, %v6155, %v6156
      %v6158 = vrot.slane %v5876, 1
      %v6159 = vsel %vm2313, %v6156, %v6158
      %v6160 = vrot.slane %v5877, 1
      %v6161 = vsel %vm2313, %v6158, %v6160
      %v6162 = vrot.slane %v5878, 1
      %v6163 = vsel %vm2313, %v6160, %v6162
      %v6164 = vrot.slane %v5879, 1
      %v6165 = vsel %vm2313, %v6162, %v6164
      %v6166 = vrot.slane %v5880, 1
      %v6167 = vsel %vm2313, %v6164, %v6166
      %v6168 = vrot.slane %v5881, 1
      %v6169 = vsel %vm2313, %v6166, %v6168
      %v6170 = vrot.slane %v5882, 1
      %v6171 = vsel %vm2313, %v6168, %v6170
      %v6172 = vrot.slane %v5883, 1
      %v6173 = vsel %vm2313, %v6170, %v6172
      %v6174 = vrot.slane %v5884, 1
      %v6175 = vsel %vm2313, %v6172, %v6174
      %v6176 = vrot.slane %v5885, 1
      %v6177 = vsel %vm2313, %v6174, %v6176
      %v6178 = vrot.slane %v5886, 1
      %v6179 = vsel %vm2313, %v6176, %v6178
      %v6180 = vrot.slane %v5887, 1
      %v6181 = vsel %vm2313, %v6178, %v6180
      %v6182 = vrot.slane %v5888, 1
      %v6183 = vsel %vm2313, %v6180, %v6182
      %v6184 = vrot.slane %v5889, 1
      %v6185 = vsel %vm2313, %v6182, %v6184
      %v6186 = vrot.slane %v5890, 1
      %v6187 = vsel %vm2313, %v6184, %v6186
      %6188 = vrot.lane.b32.xlu0 %v6157, 32
      %v6189 = vpop.permute.xlu0 %6188
      %6190 = vrot.lane.b32.xlu0 %v6159, 32
      %v6191 = vpop.permute.xlu0 %6190
      %6192 = vrot.lane.b32.xlu0 %v6161, 32
      %v6193 = vpop.permute.xlu0 %6192
      %6194 = vrot.lane.b32.xlu0 %v6163, 32
      %v6195 = vpop.permute.xlu0 %6194
      %6196 = vrot.lane.b32.xlu0 %v6165, 32
      %v6197 = vpop.permute.xlu0 %6196
      %6198 = vrot.lane.b32.xlu0 %v6167, 32
      %v6199 = vpop.permute.xlu0 %6198
      %6200 = vrot.lane.b32.xlu0 %v6169, 32
      %v6201 = vpop.permute.xlu0 %6200
      %6202 = vrot.lane.b32.xlu0 %v6171, 32
      %v6203 = vpop.permute.xlu0 %6202
      %6204 = vrot.lane.b32.xlu0 %v6173, 32
      %v6205 = vpop.permute.xlu0 %6204
      %6206 = vrot.lane.b32.xlu0 %v6175, 32
      %v6207 = vpop.permute.xlu0 %6206
      %6208 = vrot.lane.b32.xlu0 %v6177, 32
      %v6209 = vpop.permute.xlu0 %6208
      %6210 = vrot.lane.b32.xlu0 %v6179, 32
      %v6211 = vpop.permute.xlu0 %6210
      %6212 = vrot.lane.b32.xlu0 %v6181, 32
      %v6213 = vpop.permute.xlu0 %6212
      %6214 = vrot.lane.b32.xlu0 %v6183, 32
      %v6215 = vpop.permute.xlu0 %6214
      %6216 = vrot.lane.b32.xlu0 %v6185, 32
      %v6217 = vpop.permute.xlu0 %6216
      %6218 = vrot.lane.b32.xlu0 %v6187, 32
      %v6219 = vpop.permute.xlu0 %6218
      %6220 = vrot.lane.b32.xlu0 %v6186, 32
      %v6221 = vpop.permute.xlu0 %6220
      %6239 = vrot.lane.b32.xlu0 %v5894, 48
      %v6240 = vpop.permute.xlu0 %6239
      %6241 = vrot.lane.b32.xlu0 %v5895, 48
      %v6242 = vpop.permute.xlu0 %6241
      %6243 = vrot.lane.b32.xlu0 %v5896, 48
      %v6244 = vpop.permute.xlu0 %6243
      %6245 = vrot.lane.b32.xlu0 %v5897, 48
      %v6246 = vpop.permute.xlu0 %6245
      %6247 = vrot.lane.b32.xlu0 %v5898, 48
      %v6248 = vpop.permute.xlu0 %6247
      %6249 = vrot.lane.b32.xlu0 %v5899, 48
      %v6250 = vpop.permute.xlu0 %6249
      %6251 = vrot.lane.b32.xlu0 %v5900, 48
      %v6252 = vpop.permute.xlu0 %6251
      %6253 = vrot.lane.b32.xlu0 %v5901, 48
      %v6254 = vpop.permute.xlu0 %6253
      %6255 = vrot.lane.b32.xlu0 %v5902, 48
      %v6256 = vpop.permute.xlu0 %6255
      %6257 = vrot.lane.b32.xlu0 %v5903, 48
      %v6258 = vpop.permute.xlu0 %6257
      %6259 = vrot.lane.b32.xlu0 %v5904, 48
      %v6260 = vpop.permute.xlu0 %6259
      %6261 = vrot.lane.b32.xlu0 %v5905, 48
      %v6262 = vpop.permute.xlu0 %6261
      %6263 = vrot.lane.b32.xlu0 %v5906, 48
      %v6264 = vpop.permute.xlu0 %6263
      %6265 = vrot.lane.b32.xlu0 %v5907, 48
      %v6266 = vpop.permute.xlu0 %6265
      %6267 = vrot.lane.b32.xlu0 %v5908, 48
      %v6268 = vpop.permute.xlu0 %6267
      %6269 = vrot.lane.b32.xlu0 %v5909, 48
      %v6270 = vpop.permute.xlu0 %6269
      %6271 = vrot.lane.b32.xlu0 %v5910, 48
      %v6272 = vpop.permute.xlu0 %6271
      %v6274 = vshrl.u32 %v5911, 16
      %v6276 = vshll.u32 %v5911, 16
      %v6278 = vrot.slane %v6276, 1
      %v6279 = vor.u32 %v6274, %v6278
      %v6280 = vsel %vm2126, %v6279, %v5987
      %v6282 = vshll.u32 %v5892, 16
      %v6284 = vrot.slane %v6282, 1
      %v6285 = vsel %vm2126, %v6095, %v6284
      %v6286 = vshrl.u32 %v5892, 16
      %v6288 = vor.u32 %v6286, %v6284
      %v6290 = vshll.u32 %v5893, 16
      %v6292 = vrot.slane %v6290, 1
      %v6293 = vsel %vm2126, %v6288, %v6292
      %v6294 = vshrl.u32 %v5893, 16
      %v6296 = vor.u32 %v6294, %v6292
      %6297 = vrot.lane.b32.xlu0 %v6280, 64
      %v6298 = vpop.permute.xlu0 %6297
      %6299 = vrot.lane.b32.xlu0 %v5996, 64
      %v6300 = vpop.permute.xlu0 %6299
      %6301 = vrot.lane.b32.xlu0 %v6004, 64
      %v6302 = vpop.permute.xlu0 %6301
      %6303 = vrot.lane.b32.xlu0 %v6012, 64
      %v6304 = vpop.permute.xlu0 %6303
      %6305 = vrot.lane.b32.xlu0 %v6020, 64
      %v6306 = vpop.permute.xlu0 %6305
      %6307 = vrot.lane.b32.xlu0 %v6028, 64
      %v6308 = vpop.permute.xlu0 %6307
      %6309 = vrot.lane.b32.xlu0 %v6036, 64
      %v6310 = vpop.permute.xlu0 %6309
      %6311 = vrot.lane.b32.xlu0 %v6044, 64
      %v6312 = vpop.permute.xlu0 %6311
      %6313 = vrot.lane.b32.xlu0 %v6052, 64
      %v6314 = vpop.permute.xlu0 %6313
      %6315 = vrot.lane.b32.xlu0 %v6060, 64
      %v6316 = vpop.permute.xlu0 %6315
      %6317 = vrot.lane.b32.xlu0 %v6068, 64
      %v6318 = vpop.permute.xlu0 %6317
      %6319 = vrot.lane.b32.xlu0 %v6076, 64
      %v6320 = vpop.permute.xlu0 %6319
      %6321 = vrot.lane.b32.xlu0 %v6084, 64
      %v6322 = vpop.permute.xlu0 %6321
      %6323 = vrot.lane.b32.xlu0 %v6092, 64
      %v6324 = vpop.permute.xlu0 %6323
      %6325 = vrot.lane.b32.xlu0 %v6285, 64
      %v6326 = vpop.permute.xlu0 %6325
      %6327 = vrot.lane.b32.xlu0 %v6293, 64
      %v6328 = vpop.permute.xlu0 %6327
      %6329 = vrot.lane.b32.xlu0 %v6296, 64
      %v6330 = vpop.permute.xlu0 %6329
      %v6348 = vrot.slane %v5913, 1
      %v6349 = vrot.slane %v5914, 1
      %v6350 = vsel %vm2313, %v6348, %v6349
      %v6351 = vrot.slane %v5915, 1
      %v6352 = vsel %vm2313, %v6349, %v6351
      %v6353 = vrot.slane %v5916, 1
      %v6354 = vsel %vm2313, %v6351, %v6353
      %v6355 = vrot.slane %v5917, 1
      %v6356 = vsel %vm2313, %v6353, %v6355
      %v6357 = vrot.slane %v5918, 1
      %v6358 = vsel %vm2313, %v6355, %v6357
      %v6359 = vrot.slane %v5919, 1
      %v6360 = vsel %vm2313, %v6357, %v6359
      %v6361 = vrot.slane %v5920, 1
      %v6362 = vsel %vm2313, %v6359, %v6361
      %v6363 = vrot.slane %v5921, 1
      %v6364 = vsel %vm2313, %v6361, %v6363
      %v6365 = vrot.slane %v5922, 1
      %v6366 = vsel %vm2313, %v6363, %v6365
      %v6367 = vrot.slane %v5923, 1
      %v6368 = vsel %vm2313, %v6365, %v6367
      %v6369 = vrot.slane %v5924, 1
      %v6370 = vsel %vm2313, %v6367, %v6369
      %v6371 = vrot.slane %v5925, 1
      %v6372 = vsel %vm2313, %v6369, %v6371
      %v6373 = vrot.slane %v5926, 1
      %v6374 = vsel %vm2313, %v6371, %v6373
      %v6375 = vrot.slane %v5927, 1
      %v6376 = vsel %vm2313, %v6373, %v6375
      %v6377 = vrot.slane %v5928, 1
      %v6378 = vsel %vm2313, %v6375, %v6377
      %v6379 = vrot.slane %v5929, 1
      %v6380 = vsel %vm2313, %v6377, %v6379
      %6381 = vrot.lane.b32.xlu0 %v6350, 80
      %v6382 = vpop.permute.xlu0 %6381
      %6383 = vrot.lane.b32.xlu0 %v6352, 80
      %v6384 = vpop.permute.xlu0 %6383
      %6385 = vrot.lane.b32.xlu0 %v6354, 80
      %v6386 = vpop.permute.xlu0 %6385
      %6387 = vrot.lane.b32.xlu0 %v6356, 80
      %v6388 = vpop.permute.xlu0 %6387
      %6389 = vrot.lane.b32.xlu0 %v6358, 80
      %v6390 = vpop.permute.xlu0 %6389
      %6391 = vrot.lane.b32.xlu0 %v6360, 80
      %v6392 = vpop.permute.xlu0 %6391
      %6393 = vrot.lane.b32.xlu0 %v6362, 80
      %v6394 = vpop.permute.xlu0 %6393
      %6395 = vrot.lane.b32.xlu0 %v6364, 80
      %v6396 = vpop.permute.xlu0 %6395
      %6397 = vrot.lane.b32.xlu0 %v6366, 80
      %v6398 = vpop.permute.xlu0 %6397
      %6399 = vrot.lane.b32.xlu0 %v6368, 80
      %v6400 = vpop.permute.xlu0 %6399
      %6401 = vrot.lane.b32.xlu0 %v6370, 80
      %v6402 = vpop.permute.xlu0 %6401
      %6403 = vrot.lane.b32.xlu0 %v6372, 80
      %v6404 = vpop.permute.xlu0 %6403
      %6405 = vrot.lane.b32.xlu0 %v6374, 80
      %v6406 = vpop.permute.xlu0 %6405
      %6407 = vrot.lane.b32.xlu0 %v6376, 80
      %v6408 = vpop.permute.xlu0 %6407
      %6409 = vrot.lane.b32.xlu0 %v6378, 80
      %v6410 = vpop.permute.xlu0 %6409
      %6411 = vrot.lane.b32.xlu0 %v6380, 80
      %v6412 = vpop.permute.xlu0 %6411
      %6413 = vrot.lane.b32.xlu0 %v6379, 80
      %v6414 = vpop.permute.xlu0 %6413
      %6432 = vrot.lane.b32.xlu0 %v5933, 96
      %v6433 = vpop.permute.xlu0 %6432
      %6434 = vrot.lane.b32.xlu0 %v5934, 96
      %v6435 = vpop.permute.xlu0 %6434
      %6436 = vrot.lane.b32.xlu0 %v5935, 96
      %v6437 = vpop.permute.xlu0 %6436
      %6438 = vrot.lane.b32.xlu0 %v5936, 96
      %v6439 = vpop.permute.xlu0 %6438
      %6440 = vrot.lane.b32.xlu0 %v5937, 96
      %v6441 = vpop.permute.xlu0 %6440
      %6442 = vrot.lane.b32.xlu0 %v5938, 96
      %v6443 = vpop.permute.xlu0 %6442
      %6444 = vrot.lane.b32.xlu0 %v5939, 96
      %v6445 = vpop.permute.xlu0 %6444
      %6446 = vrot.lane.b32.xlu0 %v5940, 96
      %v6447 = vpop.permute.xlu0 %6446
      %6448 = vrot.lane.b32.xlu0 %v5941, 96
      %v6449 = vpop.permute.xlu0 %6448
      %6450 = vrot.lane.b32.xlu0 %v5942, 96
      %v6451 = vpop.permute.xlu0 %6450
      %6452 = vrot.lane.b32.xlu0 %v5943, 96
      %v6453 = vpop.permute.xlu0 %6452
      %6454 = vrot.lane.b32.xlu0 %v5944, 96
      %v6455 = vpop.permute.xlu0 %6454
      %6456 = vrot.lane.b32.xlu0 %v5945, 96
      %v6457 = vpop.permute.xlu0 %6456
      %6458 = vrot.lane.b32.xlu0 %v5946, 96
      %v6459 = vpop.permute.xlu0 %6458
      %6460 = vrot.lane.b32.xlu0 %v5947, 96
      %v6461 = vpop.permute.xlu0 %6460
      %6462 = vrot.lane.b32.xlu0 %v5948, 96
      %v6463 = vpop.permute.xlu0 %6462
      %6464 = vrot.lane.b32.xlu0 %v5949, 96
      %v6465 = vpop.permute.xlu0 %6464
      %v6467 = vshrl.u32 %v5950, 16
      %v6469 = vshll.u32 %v5950, 16
      %v6471 = vrot.slane %v6469, 1
      %v6472 = vor.u32 %v6467, %v6471
      %v6473 = vsel %vm2126, %v6472, %v5995
      %v6475 = vshll.u32 %v5931, 16
      %v6477 = vrot.slane %v6475, 1
      %v6478 = vsel %vm2126, %v6288, %v6477
      %v6479 = vshrl.u32 %v5931, 16
      %v6481 = vor.u32 %v6479, %v6477
      %v6483 = vshll.u32 %v5932, 16
      %v6485 = vrot.slane %v6483, 1
      %v6486 = vsel %vm2126, %v6481, %v6485
      %v6487 = vshrl.u32 %v5932, 16
      %v6489 = vor.u32 %v6487, %v6485
      %6490 = vrot.lane.b32.xlu0 %v6473, 112
      %v6491 = vpop.permute.xlu0 %6490
      %6492 = vrot.lane.b32.xlu0 %v6004, 112
      %v6493 = vpop.permute.xlu0 %6492
      %6494 = vrot.lane.b32.xlu0 %v6012, 112
      %v6495 = vpop.permute.xlu0 %6494
      %6496 = vrot.lane.b32.xlu0 %v6020, 112
      %v6497 = vpop.permute.xlu0 %6496
      %6498 = vrot.lane.b32.xlu0 %v6028, 112
      %v6499 = vpop.permute.xlu0 %6498
      %6500 = vrot.lane.b32.xlu0 %v6036, 112
      %v6501 = vpop.permute.xlu0 %6500
      %6502 = vrot.lane.b32.xlu0 %v6044, 112
      %v6503 = vpop.permute.xlu0 %6502
      %6504 = vrot.lane.b32.xlu0 %v6052, 112
      %v6505 = vpop.permute.xlu0 %6504
      %6506 = vrot.lane.b32.xlu0 %v6060, 112
      %v6507 = vpop.permute.xlu0 %6506
      %6508 = vrot.lane.b32.xlu0 %v6068, 112
      %v6509 = vpop.permute.xlu0 %6508
      %6510 = vrot.lane.b32.xlu0 %v6076, 112
      %v6511 = vpop.permute.xlu0 %6510
      %6512 = vrot.lane.b32.xlu0 %v6084, 112
      %v6513 = vpop.permute.xlu0 %6512
      %6514 = vrot.lane.b32.xlu0 %v6092, 112
      %v6515 = vpop.permute.xlu0 %6514
      %6516 = vrot.lane.b32.xlu0 %v6285, 112
      %v6517 = vpop.permute.xlu0 %6516
      %6518 = vrot.lane.b32.xlu0 %v6478, 112
      %v6519 = vpop.permute.xlu0 %6518
      %6520 = vrot.lane.b32.xlu0 %v6486, 112
      %v6521 = vpop.permute.xlu0 %6520
      %6522 = vrot.lane.b32.xlu0 %v6489, 112
      %v6523 = vpop.permute.xlu0 %6522
      %v6541 = vrot.slane %v5952, 1
      %v6542 = vrot.slane %v5953, 1
      %v6543 = vsel %vm2313, %v6541, %v6542
      %v6544 = vrot.slane %v5954, 1
      %v6545 = vsel %vm2313, %v6542, %v6544
      %v6546 = vrot.slane %v5955, 1
      %v6547 = vsel %vm2313, %v6544, %v6546
      %v6548 = vrot.slane %v5956, 1
      %v6549 = vsel %vm2313, %v6546, %v6548
      %v6550 = vrot.slane %v5957, 1
      %v6551 = vsel %vm2313, %v6548, %v6550
      %v6552 = vrot.slane %v5958, 1
      %v6553 = vsel %vm2313, %v6550, %v6552
      %v6554 = vrot.slane %v5959, 1
      %v6555 = vsel %vm2313, %v6552, %v6554
      %v6556 = vrot.slane %v5960, 1
      %v6557 = vsel %vm2313, %v6554, %v6556
      %v6558 = vrot.slane %v5961, 1
      %v6559 = vsel %vm2313, %v6556, %v6558
      %v6560 = vrot.slane %v5962, 1
      %v6561 = vsel %vm2313, %v6558, %v6560
      %v6562 = vrot.slane %v5963, 1
      %v6563 = vsel %vm2313, %v6560, %v6562
      %v6564 = vrot.slane %v5964, 1
      %v6565 = vsel %vm2313, %v6562, %v6564
      %v6566 = vrot.slane %v5965, 1
      %v6567 = vsel %vm2313, %v6564, %v6566
      %v6568 = vrot.slane %v5966, 1
      %v6569 = vsel %vm2313, %v6566, %v6568
      %v6570 = vrot.slane %v5967, 1
      %v6571 = vsel %vm2313, %v6568, %v6570
      %v6572 = vrot.slane %v5968, 1
      %v6573 = vsel %vm2313, %v6570, %v6572
      %v6576 = vsel %vm430, %v5855, %v6105
      %v6579 = vsel %vm430, %v5856, %v6107
      %v6582 = vsel %vm430, %v5857, %v6109
      %v6585 = vsel %vm430, %v5858, %v6111
      %v6588 = vsel %vm430, %v5859, %v6113
      %v6591 = vsel %vm430, %v5860, %v6115
      %v6594 = vsel %vm430, %v5861, %v6117
      %v6597 = vsel %vm430, %v5862, %v6119
      %v6600 = vsel %vm430, %v5863, %v6121
      %v6603 = vsel %vm430, %v5864, %v6123
      %v6606 = vsel %vm430, %v5865, %v6125
      %v6609 = vsel %vm430, %v5866, %v6127
      %v6612 = vsel %vm430, %v5867, %v6129
      %v6615 = vsel %vm430, %v5868, %v6131
      %v6618 = vsel %vm430, %v5869, %v6133
      %v6621 = vsel %vm430, %v5870, %v6135
      %v6624 = vsel %vm430, %v5871, %v6137
      %v6626 = vsel %vm2887, %v6576, %v6189
      %v6628 = vsel %vm2887, %v6579, %v6191
      %v6630 = vsel %vm2887, %v6582, %v6193
      %v6632 = vsel %vm2887, %v6585, %v6195
      %v6634 = vsel %vm2887, %v6588, %v6197
      %v6636 = vsel %vm2887, %v6591, %v6199
      %v6638 = vsel %vm2887, %v6594, %v6201
      %v6640 = vsel %vm2887, %v6597, %v6203
      %v6642 = vsel %vm2887, %v6600, %v6205
      %v6644 = vsel %vm2887, %v6603, %v6207
      %v6646 = vsel %vm2887, %v6606, %v6209
      %v6648 = vsel %vm2887, %v6609, %v6211
      %v6650 = vsel %vm2887, %v6612, %v6213
      %v6652 = vsel %vm2887, %v6615, %v6215
      %v6654 = vsel %vm2887, %v6618, %v6217
      %v6656 = vsel %vm2887, %v6621, %v6219
      %v6658 = vsel %vm2887, %v6624, %v6221
      %v6660 = vsel %vm2957, %v6626, %v6240
      %v6662 = vsel %vm2957, %v6628, %v6242
      %v6664 = vsel %vm2957, %v6630, %v6244
      %v6666 = vsel %vm2957, %v6632, %v6246
      %v6668 = vsel %vm2957, %v6634, %v6248
      %v6670 = vsel %vm2957, %v6636, %v6250
      %v6672 = vsel %vm2957, %v6638, %v6252
      %v6674 = vsel %vm2957, %v6640, %v6254
      %v6676 = vsel %vm2957, %v6642, %v6256
      %v6678 = vsel %vm2957, %v6644, %v6258
      %v6680 = vsel %vm2957, %v6646, %v6260
      %v6682 = vsel %vm2957, %v6648, %v6262
      %v6684 = vsel %vm2957, %v6650, %v6264
      %v6686 = vsel %vm2957, %v6652, %v6266
      %v6688 = vsel %vm2957, %v6654, %v6268
      %v6690 = vsel %vm2957, %v6656, %v6270
      %v6692 = vsel %vm2957, %v6658, %v6272
      %v6694 = vsel %vm3027, %v6660, %v6298
      %v6696 = vsel %vm3027, %v6662, %v6300
      %v6698 = vsel %vm3027, %v6664, %v6302
      %v6700 = vsel %vm3027, %v6666, %v6304
      %v6702 = vsel %vm3027, %v6668, %v6306
      %v6704 = vsel %vm3027, %v6670, %v6308
      %v6706 = vsel %vm3027, %v6672, %v6310
      %v6708 = vsel %vm3027, %v6674, %v6312
      %v6710 = vsel %vm3027, %v6676, %v6314
      %v6712 = vsel %vm3027, %v6678, %v6316
      %v6714 = vsel %vm3027, %v6680, %v6318
      %v6716 = vsel %vm3027, %v6682, %v6320
      %v6718 = vsel %vm3027, %v6684, %v6322
      %v6720 = vsel %vm3027, %v6686, %v6324
      %v6722 = vsel %vm3027, %v6688, %v6326
      %v6724 = vsel %vm3027, %v6690, %v6328
      %v6726 = vsel %vm3027, %v6692, %v6330
      %v6728 = vsel %vm4972, %v6694, %v6382
      %v6730 = vsel %vm4972, %v6696, %v6384
      %v6732 = vsel %vm4972, %v6698, %v6386
      %v6734 = vsel %vm4972, %v6700, %v6388
      %v6736 = vsel %vm4972, %v6702, %v6390
      %v6738 = vsel %vm4972, %v6704, %v6392
      %v6740 = vsel %vm4972, %v6706, %v6394
      %v6742 = vsel %vm4972, %v6708, %v6396
      %v6744 = vsel %vm4972, %v6710, %v6398
      %v6746 = vsel %vm4972, %v6712, %v6400
      %v6748 = vsel %vm4972, %v6714, %v6402
      %v6750 = vsel %vm4972, %v6716, %v6404
      %v6752 = vsel %vm4972, %v6718, %v6406
      %v6754 = vsel %vm4972, %v6720, %v6408
      %v6756 = vsel %vm4972, %v6722, %v6410
      %v6758 = vsel %vm4972, %v6724, %v6412
      %v6760 = vsel %vm4972, %v6726, %v6414
      %v6762 = vsel %vm5007, %v6728, %v6433
      %v6764 = vsel %vm5007, %v6730, %v6435
      %v6766 = vsel %vm5007, %v6732, %v6437
      %v6768 = vsel %vm5007, %v6734, %v6439
      %v6770 = vsel %vm5007, %v6736, %v6441
      %v6772 = vsel %vm5007, %v6738, %v6443
      %v6774 = vsel %vm5007, %v6740, %v6445
      %v6776 = vsel %vm5007, %v6742, %v6447
      %v6778 = vsel %vm5007, %v6744, %v6449
      %v6780 = vsel %vm5007, %v6746, %v6451
      %v6782 = vsel %vm5007, %v6748, %v6453
      %v6784 = vsel %vm5007, %v6750, %v6455
      %v6786 = vsel %vm5007, %v6752, %v6457
      %v6788 = vsel %vm5007, %v6754, %v6459
      %v6790 = vsel %vm5007, %v6756, %v6461
      %v6792 = vsel %vm5007, %v6758, %v6463
      %v6794 = vsel %vm5007, %v6760, %v6465
      %v6796 = vsel %vm5042, %v6762, %v6491
      %v6798 = vsel %vm5042, %v6764, %v6493
      %v6800 = vsel %vm5042, %v6766, %v6495
      %v6802 = vsel %vm5042, %v6768, %v6497
      %v6804 = vsel %vm5042, %v6770, %v6499
      %v6806 = vsel %vm5042, %v6772, %v6501
      %v6808 = vsel %vm5042, %v6774, %v6503
      %v6810 = vsel %vm5042, %v6776, %v6505
      %v6812 = vsel %vm5042, %v6778, %v6507
      %v6814 = vsel %vm5042, %v6780, %v6509
      %v6816 = vsel %vm5042, %v6782, %v6511
      %v6818 = vsel %vm5042, %v6784, %v6513
      %v6820 = vsel %vm5042, %v6786, %v6515
      %v6822 = vsel %vm5042, %v6788, %v6517
      %v6824 = vsel %vm5042, %v6790, %v6519
      %v6826 = vsel %vm5042, %v6792, %v6521
      %v6828 = vsel %vm5042, %v6794, %v6523
      %v6830 = vsel %vm430, %v6543, 0
      %v6832 = vsel %vm430, %v6545, 0
      %v6834 = vsel %vm430, %v6547, 0
      %v6836 = vsel %vm430, %v6549, 0
      %v6838 = vsel %vm430, %v6551, 0
      %v6840 = vsel %vm430, %v6553, 0
      %v6842 = vsel %vm430, %v6555, 0
      %v6844 = vsel %vm430, %v6557, 0
      %v6846 = vsel %vm430, %v6559, 0
      %v6848 = vsel %vm430, %v6561, 0
      %v6850 = vsel %vm430, %v6563, 0
      %v6852 = vsel %vm430, %v6565, 0
      %v6854 = vsel %vm430, %v6567, 0
      %v6856 = vsel %vm430, %v6569, 0
      %v6858 = vsel %vm430, %v6571, 0
      %v6860 = vsel %vm430, %v6573, 0
      %v6862 = vsel %vm430, %v6572, 0
      %v6863 = vld [vmem:[%s9] sm:$0xf]
      %v6864 = vld [vmem:[%s9 + $0x4] sm:$0xf]
      %v6865 = vld [vmem:[%s9 + $0x8] sm:$0xf]
      %v6866 = vld [vmem:[%s9 + $0xc] sm:$0xf]
      %v6867 = vld [vmem:[%s9 + $0x10] sm:$0xf]
      %v6868 = vld [vmem:[%s9 + $0x14] sm:$0xf]
      %v6869 = vld [vmem:[%s9 + $0x18] sm:$0xf]
      %v6870 = vld [vmem:[%s9 + $0x1c] sm:$0xf]
      %v6871 = vld [vmem:[%s9 + $0x20] sm:$0xf]
      %v6872 = vld [vmem:[%s9 + $0x24] sm:$0xf]
      %v6873 = vld [vmem:[%s9 + $0x28] sm:$0xf]
      %v6874 = vld [vmem:[%s9 + $0x2c] sm:$0xf]
      %v6875 = vld [vmem:[%s9 + $0x30] sm:$0xf]
      %v6876 = vld [vmem:[%s9 + $0x34] sm:$0xf]
      %v6877 = vld [vmem:[%s9 + $0x38] sm:$0xf]
      %v6878 = vld [vmem:[%s9 + $0x3c] sm:$0xf]
      %v6879 = vld [vmem:[%s9 + $0x40] sm:$0xf]
      %v6880 = vld [vmem:[%s9 + $0x44] sm:$0xf]
      %v6881 = vld [vmem:[%s9 + $0x48] sm:$0xf]
      %v6882 = vld [vmem:[%s9 + $0x4c] sm:$0xf]
      %v6883 = vld [vmem:[%s9 + $0x50] sm:$0xf]
      %v6884 = vld [vmem:[%s9 + $0x54] sm:$0xf]
      %v6885 = vld [vmem:[%s9 + $0x58] sm:$0xf]
      %v6886 = vld [vmem:[%s9 + $0x5c] sm:$0xf]
      %v6887 = vld [vmem:[%s9 + $0x60] sm:$0xf]
      %v6888 = vld [vmem:[%s9 + $0x64] sm:$0xf]
      %v6889 = vld [vmem:[%s9 + $0x68] sm:$0xf]
      %v6890 = vld [vmem:[%s9 + $0x6c] sm:$0xf]
      %v6891 = vld [vmem:[%s9 + $0x70] sm:$0xf]
      %v6892 = vld [vmem:[%s9 + $0x74] sm:$0xf]
      %v6893 = vld [vmem:[%s9 + $0x78] sm:$0xf]
      %v6894 = vld [vmem:[%s9 + $0x7c] sm:$0xf]
      %v6895 = vld [vmem:[%s10] sm:$0x1]
      %v6897 = vlaneseq
      %v6898 = vshrl.u32 %v6897, 7
      %v6899 = vsub.s32 0, %v6898
      %v6900 = vrot.slane %v6895, %v6899
      %v6902 = vshrl.u32 %v6796, 16
      %v6904 = vrot.slane %v6902, 3
      %v6905 = vshll.u32 %v6796, 16
      %v6907 = vrot.slane %v6905, 4
      %v6908 = vor.u32 %v6904, %v6907
      %v6909 = vshrl.u32 %v6798, 16
      %v6911 = vrot.slane %v6909, 3
      %v6912 = vshll.u32 %v6798, 16
      %v6914 = vrot.slane %v6912, 4
      %v6915 = vor.u32 %v6911, %v6914
      %v6916 = vsel %vm1870, %v6908, %v6915
      %v6917 = vshrl.u32 %v6830, 16
      %v6919 = vrot.slane %v6917, 3
      %v6920 = vshll.u32 %v6830, 16
      %v6922 = vrot.slane %v6920, 4
      %v6923 = vor.u32 %v6919, %v6922
      %v6924 = vshrl.u32 %v6832, 16
      %v6926 = vrot.slane %v6924, 3
      %v6927 = vshll.u32 %v6832, 16
      %v6929 = vrot.slane %v6927, 4
      %v6930 = vor.u32 %v6926, %v6929
      %v6931 = vsel %vm1870, %v6923, %v6930
      %v6932 = vshrl.u32 %v6800, 16
      %v6934 = vrot.slane %v6932, 3
      %v6935 = vshll.u32 %v6800, 16
      %v6937 = vrot.slane %v6935, 4
      %v6938 = vor.u32 %v6934, %v6937
      %v6939 = vsel %vm1870, %v6915, %v6938
      %v6940 = vshrl.u32 %v6834, 16
      %v6942 = vrot.slane %v6940, 3
      %v6943 = vshll.u32 %v6834, 16
      %v6945 = vrot.slane %v6943, 4
      %v6946 = vor.u32 %v6942, %v6945
      %v6947 = vsel %vm1870, %v6930, %v6946
      %v6948 = vshrl.u32 %v6802, 16
      %v6950 = vrot.slane %v6948, 3
      %v6951 = vshll.u32 %v6802, 16
      %v6953 = vrot.slane %v6951, 4
      %v6954 = vor.u32 %v6950, %v6953
      %v6955 = vsel %vm1870, %v6938, %v6954
      %v6956 = vshrl.u32 %v6836, 16
      %v6958 = vrot.slane %v6956, 3
      %v6959 = vshll.u32 %v6836, 16
      %v6961 = vrot.slane %v6959, 4
      %v6962 = vor.u32 %v6958, %v6961
      %v6963 = vsel %vm1870, %v6946, %v6962
      %v6964 = vshrl.u32 %v6804, 16
      %v6966 = vrot.slane %v6964, 3
      %v6967 = vshll.u32 %v6804, 16
      %v6969 = vrot.slane %v6967, 4
      %v6970 = vor.u32 %v6966, %v6969
      %v6971 = vsel %vm1870, %v6954, %v6970
      %v6972 = vshrl.u32 %v6838, 16
      %v6974 = vrot.slane %v6972, 3
      %v6975 = vshll.u32 %v6838, 16
      %v6977 = vrot.slane %v6975, 4
      %v6978 = vor.u32 %v6974, %v6977
      %v6979 = vsel %vm1870, %v6962, %v6978
      %v6980 = vshrl.u32 %v6806, 16
      %v6982 = vrot.slane %v6980, 3
      %v6983 = vshll.u32 %v6806, 16
      %v6985 = vrot.slane %v6983, 4
      %v6986 = vor.u32 %v6982, %v6985
      %v6987 = vsel %vm1870, %v6970, %v6986
      %v6988 = vshrl.u32 %v6840, 16
      %v6990 = vrot.slane %v6988, 3
      %v6991 = vshll.u32 %v6840, 16
      %v6993 = vrot.slane %v6991, 4
      %v6994 = vor.u32 %v6990, %v6993
      %v6995 = vsel %vm1870, %v6978, %v6994
      %v6996 = vshrl.u32 %v6808, 16
      %v6998 = vrot.slane %v6996, 3
      %v6999 = vshll.u32 %v6808, 16
      %v7001 = vrot.slane %v6999, 4
      %v7002 = vor.u32 %v6998, %v7001
      %v7003 = vsel %vm1870, %v6986, %v7002
      %v7004 = vshrl.u32 %v6842, 16
      %v7006 = vrot.slane %v7004, 3
      %v7007 = vshll.u32 %v6842, 16
      %v7009 = vrot.slane %v7007, 4
      %v7010 = vor.u32 %v7006, %v7009
      %v7011 = vsel %vm1870, %v6994, %v7010
      %v7012 = vshrl.u32 %v6810, 16
      %v7014 = vrot.slane %v7012, 3
      %v7015 = vshll.u32 %v6810, 16
      %v7017 = vrot.slane %v7015, 4
      %v7018 = vor.u32 %v7014, %v7017
      %v7019 = vsel %vm1870, %v7002, %v7018
      %v7020 = vshrl.u32 %v6844, 16
      %v7022 = vrot.slane %v7020, 3
      %v7023 = vshll.u32 %v6844, 16
      %v7025 = vrot.slane %v7023, 4
      %v7026 = vor.u32 %v7022, %v7025
      %v7027 = vsel %vm1870, %v7010, %v7026
      %v7028 = vshrl.u32 %v6812, 16
      %v7030 = vrot.slane %v7028, 3
      %v7031 = vshll.u32 %v6812, 16
      %v7033 = vrot.slane %v7031, 4
      %v7034 = vor.u32 %v7030, %v7033
      %v7035 = vsel %vm1870, %v7018, %v7034
      %v7036 = vshrl.u32 %v6846, 16
      %v7038 = vrot.slane %v7036, 3
      %v7039 = vshll.u32 %v6846, 16
      %v7041 = vrot.slane %v7039, 4
      %v7042 = vor.u32 %v7038, %v7041
      %v7043 = vsel %vm1870, %v7026, %v7042
      %v7044 = vshrl.u32 %v6814, 16
      %v7046 = vrot.slane %v7044, 3
      %v7047 = vshll.u32 %v6814, 16
      %v7049 = vrot.slane %v7047, 4
      %v7050 = vor.u32 %v7046, %v7049
      %v7051 = vsel %vm1870, %v7034, %v7050
      %v7052 = vshrl.u32 %v6848, 16
      %v7054 = vrot.slane %v7052, 3
      %v7055 = vshll.u32 %v6848, 16
      %v7057 = vrot.slane %v7055, 4
      %v7058 = vor.u32 %v7054, %v7057
      %v7059 = vsel %vm1870, %v7042, %v7058
      %v7060 = vshrl.u32 %v6816, 16
      %v7062 = vrot.slane %v7060, 3
      %v7063 = vshll.u32 %v6816, 16
      %v7065 = vrot.slane %v7063, 4
      %v7066 = vor.u32 %v7062, %v7065
      %v7067 = vsel %vm1870, %v7050, %v7066
      %v7068 = vshrl.u32 %v6850, 16
      %v7070 = vrot.slane %v7068, 3
      %v7071 = vshll.u32 %v6850, 16
      %v7073 = vrot.slane %v7071, 4
      %v7074 = vor.u32 %v7070, %v7073
      %v7075 = vsel %vm1870, %v7058, %v7074
      %v7076 = vshrl.u32 %v6818, 16
      %v7078 = vrot.slane %v7076, 3
      %v7079 = vshll.u32 %v6818, 16
      %v7081 = vrot.slane %v7079, 4
      %v7082 = vor.u32 %v7078, %v7081
      %v7083 = vsel %vm1870, %v7066, %v7082
      %v7084 = vshrl.u32 %v6852, 16
      %v7086 = vrot.slane %v7084, 3
      %v7087 = vshll.u32 %v6852, 16
      %v7089 = vrot.slane %v7087, 4
      %v7090 = vor.u32 %v7086, %v7089
      %v7091 = vsel %vm1870, %v7074, %v7090
      %v7092 = vshrl.u32 %v6820, 16
      %v7094 = vrot.slane %v7092, 3
      %v7095 = vshll.u32 %v6820, 16
      %v7097 = vrot.slane %v7095, 4
      %v7098 = vor.u32 %v7094, %v7097
      %v7099 = vsel %vm1870, %v7082, %v7098
      %v7100 = vshrl.u32 %v6854, 16
      %v7102 = vrot.slane %v7100, 3
      %v7103 = vshll.u32 %v6854, 16
      %v7105 = vrot.slane %v7103, 4
      %v7106 = vor.u32 %v7102, %v7105
      %v7107 = vsel %vm1870, %v7090, %v7106
      %v7108 = vshrl.u32 %v6822, 16
      %v7110 = vrot.slane %v7108, 3
      %v7111 = vshll.u32 %v6822, 16
      %v7113 = vrot.slane %v7111, 4
      %v7114 = vor.u32 %v7110, %v7113
      %v7115 = vsel %vm1870, %v7098, %v7114
      %v7116 = vshrl.u32 %v6856, 16
      %v7118 = vrot.slane %v7116, 3
      %v7119 = vshll.u32 %v6856, 16
      %v7121 = vrot.slane %v7119, 4
      %v7122 = vor.u32 %v7118, %v7121
      %v7123 = vsel %vm1870, %v7106, %v7122
      %v7124 = vshrl.u32 %v6824, 16
      %v7126 = vrot.slane %v7124, 3
      %v7127 = vshll.u32 %v6824, 16
      %v7129 = vrot.slane %v7127, 4
      %v7130 = vor.u32 %v7126, %v7129
      %v7131 = vsel %vm1870, %v7114, %v7130
      %v7132 = vshrl.u32 %v6858, 16
      %v7134 = vrot.slane %v7132, 3
      %v7135 = vshll.u32 %v6858, 16
      %v7137 = vrot.slane %v7135, 4
      %v7138 = vor.u32 %v7134, %v7137
      %v7139 = vsel %vm1870, %v7122, %v7138
      %v7140 = vshrl.u32 %v6826, 16
      %v7142 = vrot.slane %v7140, 3
      %v7143 = vshll.u32 %v6826, 16
      %v7145 = vrot.slane %v7143, 4
      %v7146 = vor.u32 %v7142, %v7145
      %v7147 = vsel %vm1870, %v7130, %v7146
      %v7148 = vshrl.u32 %v6860, 16
      %v7150 = vrot.slane %v7148, 3
      %v7151 = vshll.u32 %v6860, 16
      %v7153 = vrot.slane %v7151, 4
      %v7154 = vor.u32 %v7150, %v7153
      %v7155 = vsel %vm1870, %v7138, %v7154
      %v7156 = vshrl.u32 %v6828, 16
      %v7158 = vrot.slane %v7156, 3
      %v7159 = vshll.u32 %v6828, 16
      %v7161 = vrot.slane %v7159, 4
      %v7162 = vor.u32 %v7158, %v7161
      %v7163 = vsel %vm1870, %v7146, %v7162
      %v7164 = vshrl.u32 %v6862, 16
      %v7166 = vrot.slane %v7164, 3
      %v7167 = vshll.u32 %v6862, 16
      %v7169 = vrot.slane %v7167, 4
      %v7170 = vor.u32 %v7166, %v7169
      %v7171 = vsel %vm1870, %v7154, %v7170
      %v7236 = vunpack.c.l.b16 %v6863
      %v7237 = vunpack.c.l.b16 %v6864
      %v7238 = vunpack.c.l.b16 %v6865
      %v7239 = vunpack.c.l.b16 %v6866
      %v7240 = vunpack.c.l.b16 %v6867
      %v7241 = vunpack.c.l.b16 %v6868
      %v7242 = vunpack.c.l.b16 %v6869
      %v7243 = vunpack.c.l.b16 %v6870
      %v7244 = vunpack.c.l.b16 %v6871
      %v7245 = vunpack.c.l.b16 %v6872
      %v7246 = vunpack.c.l.b16 %v6873
      %v7247 = vunpack.c.l.b16 %v6874
      %v7248 = vunpack.c.l.b16 %v6875
      %v7249 = vunpack.c.l.b16 %v6876
      %v7250 = vunpack.c.l.b16 %v6877
      %v7251 = vunpack.c.l.b16 %v6878
      %v7252 = vunpack.c.l.b16 %v6879
      %v7253 = vunpack.c.l.b16 %v6880
      %v7254 = vunpack.c.l.b16 %v6881
      %v7255 = vunpack.c.l.b16 %v6882
      %v7256 = vunpack.c.l.b16 %v6883
      %v7257 = vunpack.c.l.b16 %v6884
      %v7258 = vunpack.c.l.b16 %v6885
      %v7259 = vunpack.c.l.b16 %v6886
      %v7260 = vunpack.c.l.b16 %v6887
      %v7261 = vunpack.c.l.b16 %v6888
      %v7262 = vunpack.c.l.b16 %v6889
      %v7263 = vunpack.c.l.b16 %v6890
      %v7264 = vunpack.c.l.b16 %v6891
      %v7265 = vunpack.c.l.b16 %v6892
      %v7266 = vunpack.c.l.b16 %v6893
      %v7267 = vunpack.c.l.b16 %v6894
      %v7268 = vpack.c.b16 %v7237, %v7236
      %v7269 = vpack.c.b16 %v7239, %v7238
      %v7270 = vpack.c.b16 %v7241, %v7240
      %v7271 = vpack.c.b16 %v7243, %v7242
      %v7272 = vpack.c.b16 %v7245, %v7244
      %v7273 = vpack.c.b16 %v7247, %v7246
      %v7274 = vpack.c.b16 %v7249, %v7248
      %v7275 = vpack.c.b16 %v7251, %v7250
      %v7276 = vpack.c.b16 %v7253, %v7252
      %v7277 = vpack.c.b16 %v7255, %v7254
      %v7278 = vpack.c.b16 %v7257, %v7256
      %v7279 = vpack.c.b16 %v7259, %v7258
      %v7280 = vpack.c.b16 %v7261, %v7260
      %v7281 = vpack.c.b16 %v7263, %v7262
      %v7282 = vpack.c.b16 %v7265, %v7264
      %v7283 = vpack.c.b16 %v7267, %v7266
      %7300 = vmatprep.subr.bf16.mxu0 0
      %7301 = vmatpush1.bf16.msra.mxu0 %v7268
      %7302 = vmatprep.subr.bf16.mxu0 0
      %7303 = vmatpush1.bf16.msra.mxu0 %v7269
      %7304 = vmatprep.subr.bf16.mxu0 0
      %7305 = vmatpush1.bf16.msra.mxu0 %v7270
      %7306 = vmatprep.subr.bf16.mxu0 0
      %7307 = vmatpush1.bf16.msra.mxu0 %v7271
      %7308 = vmatprep.subr.bf16.mxu0 0
      %7309 = vmatpush1.bf16.msra.mxu0 %v7272
      %7310 = vmatprep.subr.bf16.mxu0 0
      %7311 = vmatpush1.bf16.msra.mxu0 %v7273
      %7312 = vmatprep.subr.bf16.mxu0 0
      %7313 = vmatpush1.bf16.msra.mxu0 %v7274
      %7314 = vmatprep.subr.bf16.mxu0 0
      %7315 = vmatpush1.bf16.msra.mxu0 %v7275
      %7316 = vmatprep.subr.bf16.mxu0 0
      %7317 = vmatpush1.bf16.msra.mxu0 %v7276
      %7318 = vmatprep.subr.bf16.mxu0 0
      %7319 = vmatpush1.bf16.msra.mxu0 %v7277
      %7320 = vmatprep.subr.bf16.mxu0 0
      %7321 = vmatpush1.bf16.msra.mxu0 %v7278
      %7322 = vmatprep.subr.bf16.mxu0 0
      %7323 = vmatpush1.bf16.msra.mxu0 %v7279
      %7324 = vmatprep.subr.bf16.mxu0 0
      %7325 = vmatpush1.bf16.msra.mxu0 %v7280
      %7326 = vmatprep.subr.bf16.mxu0 0
      %7327 = vmatpush1.bf16.msra.mxu0 %v7281
      %7328 = vmatprep.subr.bf16.mxu0 0
      %7329 = vmatpush1.bf16.msra.mxu0 %v7282
      %7330 = vmatprep.subr.bf16.mxu0 0
      %7331 = vmatpush1.bf16.msra.mxu0 %v7283
      %7332 = vmatprep.mubr.bf16.mxu0 %v6931
      %7333 = vmatmul.mubr.bf16.gmra.mrb[0].mxu0 %v6916
      %v7334 = vpop.f32.mrb[0].mxu0
      %v7335 = vadd.f32 %v6900, %v7334
      %v7336 = vpop.f32.mrb[0].mxu0
      %v7337 = vpop.f32.mrb[0].mxu0
      %v7338 = vadd.f32 %v6900, %v7337
      %v7339 = vpop.f32.mrb[0].mxu0
      %7340 = vmatprep.mubr.bf16.mxu0 %v6947
      %7341 = vmatmul.mubr.bf16.gmra.mrb[0].mxu0 %v6939
      %v7342 = vpop.f32.mrb[0].mxu0
      %v7343 = vadd.f32 %v6900, %v7342
      %v7344 = vpop.f32.mrb[0].mxu0
      %v7345 = vpop.f32.mrb[0].mxu0
      %v7346 = vadd.f32 %v6900, %v7345
      %v7347 = vpop.f32.mrb[0].mxu0
      %7348 = vmatprep.mubr.bf16.mxu0 %v6963
      %7349 = vmatmul.mubr.bf16.gmra.mrb[0].mxu0 %v6955
      %v7350 = vpop.f32.mrb[0].mxu0
      %v7351 = vadd.f32 %v6900, %v7350
      %v7352 = vpop.f32.mrb[0].mxu0
      %v7353 = vpop.f32.mrb[0].mxu0
      %v7354 = vadd.f32 %v6900, %v7353
      %v7355 = vpop.f32.mrb[0].mxu0
      %7356 = vmatprep.mubr.bf16.mxu0 %v6979
      %7357 = vmatmul.mubr.bf16.gmra.mrb[0].mxu0 %v6971
      %v7358 = vpop.f32.mrb[0].mxu0
      %v7359 = vadd.f32 %v6900, %v7358
      %v7360 = vpop.f32.mrb[0].mxu0
      %v7361 = vpop.f32.mrb[0].mxu0
      %v7362 = vadd.f32 %v6900, %v7361
      %v7363 = vpop.f32.mrb[0].mxu0
      %7364 = vmatprep.mubr.bf16.mxu0 %v6995
      %7365 = vmatmul.mubr.bf16.gmra.mrb[0].mxu0 %v6987
      %v7366 = vpop.f32.mrb[0].mxu0
      %v7367 = vadd.f32 %v6900, %v7366
      %v7368 = vpop.f32.mrb[0].mxu0
      %v7369 = vpop.f32.mrb[0].mxu0
      %v7370 = vadd.f32 %v6900, %v7369
      %v7371 = vpop.f32.mrb[0].mxu0
      %7372 = vmatprep.mubr.bf16.mxu0 %v7011
      %7373 = vmatmul.mubr.bf16.gmra.mrb[0].mxu0 %v7003
      %v7374 = vpop.f32.mrb[0].mxu0
      %v7375 = vadd.f32 %v6900, %v7374
      %v7376 = vpop.f32.mrb[0].mxu0
      %v7377 = vpop.f32.mrb[0].mxu0
      %v7378 = vadd.f32 %v6900, %v7377
      %v7379 = vpop.f32.mrb[0].mxu0
      %7380 = vmatprep.mubr.bf16.mxu0 %v7027
      %7381 = vmatmul.mubr.bf16.gmra.mrb[0].mxu0 %v7019
      %v7382 = vpop.f32.mrb[0].mxu0
      %v7383 = vadd.f32 %v6900, %v7382
      %v7384 = vpop.f32.mrb[0].mxu0
      %v7385 = vpop.f32.mrb[0].mxu0
      %v7386 = vadd.f32 %v6900, %v7385
      %v7387 = vpop.f32.mrb[0].mxu0
      %7388 = vmatprep.mubr.bf16.mxu0 %v7043
      %7389 = vmatmul.mubr.bf16.gmra.mrb[0].mxu0 %v7035
      %v7390 = vpop.f32.mrb[0].mxu0
      %v7391 = vadd.f32 %v6900, %v7390
      %v7392 = vpop.f32.mrb[0].mxu0
      %v7393 = vpop.f32.mrb[0].mxu0
      %v7394 = vadd.f32 %v6900, %v7393
      %v7395 = vpop.f32.mrb[0].mxu0
      %7396 = vmatprep.mubr.bf16.mxu0 %v7059
      %7397 = vmatmul.mubr.bf16.gmra.mrb[0].mxu0 %v7051
      %v7398 = vpop.f32.mrb[0].mxu0
      %v7399 = vadd.f32 %v6900, %v7398
      %v7400 = vpop.f32.mrb[0].mxu0
      %v7401 = vpop.f32.mrb[0].mxu0
      %v7402 = vadd.f32 %v6900, %v7401
      %v7403 = vpop.f32.mrb[0].mxu0
      %7404 = vmatprep.mubr.bf16.mxu0 %v7075
      %7405 = vmatmul.mubr.bf16.gmra.mrb[0].mxu0 %v7067
      %v7406 = vpop.f32.mrb[0].mxu0
      %v7407 = vadd.f32 %v6900, %v7406
      %v7408 = vpop.f32.mrb[0].mxu0
      %v7409 = vpop.f32.mrb[0].mxu0
      %v7410 = vadd.f32 %v6900, %v7409
      %v7411 = vpop.f32.mrb[0].mxu0
      %7412 = vmatprep.mubr.bf16.mxu0 %v7091
      %7413 = vmatmul.mubr.bf16.gmra.mrb[0].mxu0 %v7083
      %v7414 = vpop.f32.mrb[0].mxu0
      %v7415 = vadd.f32 %v6900, %v7414
      %v7416 = vpop.f32.mrb[0].mxu0
      %v7417 = vpop.f32.mrb[0].mxu0
      %v7418 = vadd.f32 %v6900, %v7417
      %v7419 = vpop.f32.mrb[0].mxu0
      %7420 = vmatprep.mubr.bf16.mxu0 %v7107
      %7421 = vmatmul.mubr.bf16.gmra.mrb[0].mxu0 %v7099
      %v7422 = vpop.f32.mrb[0].mxu0
      %v7423 = vadd.f32 %v6900, %v7422
      %v7424 = vpop.f32.mrb[0].mxu0
      %v7425 = vpop.f32.mrb[0].mxu0
      %v7426 = vadd.f32 %v6900, %v7425
      %v7427 = vpop.f32.mrb[0].mxu0
      %7428 = vmatprep.mubr.bf16.mxu0 %v7123
      %7429 = vmatmul.mubr.bf16.gmra.mrb[0].mxu0 %v7115
      %v7430 = vpop.f32.mrb[0].mxu0
      %v7431 = vadd.f32 %v6900, %v7430
      %v7432 = vpop.f32.mrb[0].mxu0
      %v7433 = vpop.f32.mrb[0].mxu0
      %v7434 = vadd.f32 %v6900, %v7433
      %v7435 = vpop.f32.mrb[0].mxu0
      %7436 = vmatprep.mubr.bf16.mxu0 %v7139
      %7437 = vmatmul.mubr.bf16.gmra.mrb[0].mxu0 %v7131
      %v7438 = vpop.f32.mrb[0].mxu0
      %v7439 = vadd.f32 %v6900, %v7438
      %v7440 = vpop.f32.mrb[0].mxu0
      %v7441 = vpop.f32.mrb[0].mxu0
      %v7442 = vadd.f32 %v6900, %v7441
      %v7443 = vpop.f32.mrb[0].mxu0
      %7444 = vmatprep.mubr.bf16.mxu0 %v7155
      %7445 = vmatmul.mubr.bf16.gmra.mrb[0].mxu0 %v7147
      %v7446 = vpop.f32.mrb[0].mxu0
      %v7447 = vadd.f32 %v6900, %v7446
      %v7448 = vpop.f32.mrb[0].mxu0
      %v7449 = vpop.f32.mrb[0].mxu0
      %v7450 = vadd.f32 %v6900, %v7449
      %v7451 = vpop.f32.mrb[0].mxu0
      %7452 = vmatprep.mubr.bf16.mxu0 %v7171
      %7453 = vmatmul.mubr.bf16.gmra.mrb[0].mxu0 %v7163
      %v7454 = vpop.f32.mrb[0].mxu0
      %v7455 = vadd.f32 %v6900, %v7454
      %v7456 = vpop.f32.mrb[0].mxu0
      %v7457 = vpop.f32.mrb[0].mxu0
      %v7458 = vadd.f32 %v6900, %v7457
      %v7459 = vpop.f32.mrb[0].mxu0
      %7460 = vdwg.mxu0
      %v7461 = vmax.f32 %v7335, -60.0
      %v7462 = vmax.f32 %v7338, -60.0
      %v7463 = vmax.f32 %v7343, -60.0
      %v7464 = vmax.f32 %v7346, -60.0
      %v7465 = vmax.f32 %v7351, -60.0
      %v7466 = vmax.f32 %v7354, -60.0
      %v7467 = vmax.f32 %v7359, -60.0
      %v7468 = vmax.f32 %v7362, -60.0
      %v7469 = vmax.f32 %v7367, -60.0
      %v7470 = vmax.f32 %v7370, -60.0
      %v7471 = vmax.f32 %v7375, -60.0
      %v7472 = vmax.f32 %v7378, -60.0
      %v7473 = vmax.f32 %v7383, -60.0
      %v7474 = vmax.f32 %v7386, -60.0
      %v7475 = vmax.f32 %v7391, -60.0
      %v7476 = vmax.f32 %v7394, -60.0
      %v7477 = vmax.f32 %v7399, -60.0
      %v7478 = vmax.f32 %v7402, -60.0
      %v7479 = vmax.f32 %v7407, -60.0
      %v7480 = vmax.f32 %v7410, -60.0
      %v7481 = vmax.f32 %v7415, -60.0
      %v7482 = vmax.f32 %v7418, -60.0
      %v7483 = vmax.f32 %v7423, -60.0
      %v7484 = vmax.f32 %v7426, -60.0
      %v7485 = vmax.f32 %v7431, -60.0
      %v7486 = vmax.f32 %v7434, -60.0
      %v7487 = vmax.f32 %v7439, -60.0
      %v7488 = vmax.f32 %v7442, -60.0
      %v7489 = vmax.f32 %v7447, -60.0
      %v7490 = vmax.f32 %v7450, -60.0
      %v7491 = vmax.f32 %v7455, -60.0
      %v7492 = vmax.f32 %v7458, -60.0
      %v7493 = vmin.f32 %v7461, 60.0
      %v7494 = vmin.f32 %v7462, 60.0
      %v7495 = vmin.f32 %v7463, 60.0
      %v7496 = vmin.f32 %v7464, 60.0
      %v7497 = vmin.f32 %v7465, 60.0
      %v7498 = vmin.f32 %v7466, 60.0
      %v7499 = vmin.f32 %v7467, 60.0
      %v7500 = vmin.f32 %v7468, 60.0
      %v7501 = vmin.f32 %v7469, 60.0
      %v7502 = vmin.f32 %v7470, 60.0
      %v7503 = vmin.f32 %v7471, 60.0
      %v7504 = vmin.f32 %v7472, 60.0
      %v7505 = vmin.f32 %v7473, 60.0
      %v7506 = vmin.f32 %v7474, 60.0
      %v7507 = vmin.f32 %v7475, 60.0
      %v7508 = vmin.f32 %v7476, 60.0
      %v7509 = vmin.f32 %v7477, 60.0
      %v7510 = vmin.f32 %v7478, 60.0
      %v7511 = vmin.f32 %v7479, 60.0
      %v7512 = vmin.f32 %v7480, 60.0
      %v7513 = vmin.f32 %v7481, 60.0
      %v7514 = vmin.f32 %v7482, 60.0
      %v7515 = vmin.f32 %v7483, 60.0
      %v7516 = vmin.f32 %v7484, 60.0
      %v7517 = vmin.f32 %v7485, 60.0
      %v7518 = vmin.f32 %v7486, 60.0
      %v7519 = vmin.f32 %v7487, 60.0
      %v7520 = vmin.f32 %v7488, 60.0
      %v7521 = vmin.f32 %v7489, 60.0
      %v7522 = vmin.f32 %v7490, 60.0
      %v7523 = vmin.f32 %v7491, 60.0
      %v7524 = vmin.f32 %v7492, 60.0
      %v7525 = vsub.f32 0.0, %v7493
      %v7526 = vsub.f32 0.0, %v7494
      %v7527 = vsub.f32 0.0, %v7495
      %v7528 = vsub.f32 0.0, %v7496
      %v7529 = vsub.f32 0.0, %v7497
      %v7530 = vsub.f32 0.0, %v7498
      %v7531 = vsub.f32 0.0, %v7499
      %v7532 = vsub.f32 0.0, %v7500
      %v7533 = vsub.f32 0.0, %v7501
      %v7534 = vsub.f32 0.0, %v7502
      %v7535 = vsub.f32 0.0, %v7503
      %v7536 = vsub.f32 0.0, %v7504
      %v7537 = vsub.f32 0.0, %v7505
      %v7538 = vsub.f32 0.0, %v7506
      %v7539 = vsub.f32 0.0, %v7507
      %v7540 = vsub.f32 0.0, %v7508
      %v7541 = vsub.f32 0.0, %v7509
      %v7542 = vsub.f32 0.0, %v7510
      %v7543 = vsub.f32 0.0, %v7511
      %v7544 = vsub.f32 0.0, %v7512
      %v7545 = vsub.f32 0.0, %v7513
      %v7546 = vsub.f32 0.0, %v7514
      %v7547 = vsub.f32 0.0, %v7515
      %v7548 = vsub.f32 0.0, %v7516
      %v7549 = vsub.f32 0.0, %v7517
      %v7550 = vsub.f32 0.0, %v7518
      %v7551 = vsub.f32 0.0, %v7519
      %v7552 = vsub.f32 0.0, %v7520
      %v7553 = vsub.f32 0.0, %v7521
      %v7554 = vsub.f32 0.0, %v7522
      %v7555 = vsub.f32 0.0, %v7523
      %v7556 = vsub.f32 0.0, %v7524
      %v7557 = vmul.f32 %v7525, 1.442695
      %v7558 = vpow.pop %v7557
      %v7559 = vmul.f32 %v7526, 1.442695
      %v7560 = vpow.pop %v7559
      %v7561 = vmul.f32 %v7527, 1.442695
      %v7562 = vpow.pop %v7561
      %v7563 = vmul.f32 %v7528, 1.442695
      %v7564 = vpow.pop %v7563
      %v7565 = vmul.f32 %v7529, 1.442695
      %v7566 = vpow.pop %v7565
      %v7567 = vmul.f32 %v7530, 1.442695
      %v7568 = vpow.pop %v7567
      %v7569 = vmul.f32 %v7531, 1.442695
      %v7570 = vpow.pop %v7569
      %v7571 = vmul.f32 %v7532, 1.442695
      %v7572 = vpow.pop %v7571
      %v7573 = vmul.f32 %v7533, 1.442695
      %v7574 = vpow.pop %v7573
      %v7575 = vmul.f32 %v7534, 1.442695
      %v7576 = vpow.pop %v7575
      %v7577 = vmul.f32 %v7535, 1.442695
      %v7578 = vpow.pop %v7577
      %v7579 = vmul.f32 %v7536, 1.442695
      %v7580 = vpow.pop %v7579
      %v7581 = vmul.f32 %v7537, 1.442695
      %v7582 = vpow.pop %v7581
      %v7583 = vmul.f32 %v7538, 1.442695
      %v7584 = vpow.pop %v7583
      %v7585 = vmul.f32 %v7539, 1.442695
      %v7586 = vpow.pop %v7585
      %v7587 = vmul.f32 %v7540, 1.442695
      %v7588 = vpow.pop %v7587
      %v7589 = vmul.f32 %v7541, 1.442695
      %v7590 = vpow.pop %v7589
      %v7591 = vmul.f32 %v7542, 1.442695
      %v7592 = vpow.pop %v7591
      %v7593 = vmul.f32 %v7543, 1.442695
      %v7594 = vpow.pop %v7593
      %v7595 = vmul.f32 %v7544, 1.442695
      %v7596 = vpow.pop %v7595
      %v7597 = vmul.f32 %v7545, 1.442695
      %v7598 = vpow.pop %v7597
      %v7599 = vmul.f32 %v7546, 1.442695
      %v7600 = vpow.pop %v7599
      %v7601 = vmul.f32 %v7547, 1.442695
      %v7602 = vpow.pop %v7601
      %v7603 = vmul.f32 %v7548, 1.442695
      %v7604 = vpow.pop %v7603
      %v7605 = vmul.f32 %v7549, 1.442695
      %v7606 = vpow.pop %v7605
      %v7607 = vmul.f32 %v7550, 1.442695
      %v7608 = vpow.pop %v7607
      %v7609 = vmul.f32 %v7551, 1.442695
      %v7610 = vpow.pop %v7609
      %v7611 = vmul.f32 %v7552, 1.442695
      %v7612 = vpow.pop %v7611
      %v7613 = vmul.f32 %v7553, 1.442695
      %v7614 = vpow.pop %v7613
      %v7615 = vmul.f32 %v7554, 1.442695
      %v7616 = vpow.pop %v7615
      %v7617 = vmul.f32 %v7555, 1.442695
      %v7618 = vpow.pop %v7617
      %v7619 = vmul.f32 %v7556, 1.442695
      %v7620 = vpow.pop %v7619
      %v7621 = vadd.f32 %v7558, 1.0
      %v7622 = vadd.f32 %v7560, 1.0
      %v7623 = vadd.f32 %v7562, 1.0
      %v7624 = vadd.f32 %v7564, 1.0
      %v7625 = vadd.f32 %v7566, 1.0
      %v7626 = vadd.f32 %v7568, 1.0
      %v7627 = vadd.f32 %v7570, 1.0
      %v7628 = vadd.f32 %v7572, 1.0
      %v7629 = vadd.f32 %v7574, 1.0
      %v7630 = vadd.f32 %v7576, 1.0
      %v7631 = vadd.f32 %v7578, 1.0
      %v7632 = vadd.f32 %v7580, 1.0
      %v7633 = vadd.f32 %v7582, 1.0
      %v7634 = vadd.f32 %v7584, 1.0
      %v7635 = vadd.f32 %v7586, 1.0
      %v7636 = vadd.f32 %v7588, 1.0
      %v7637 = vadd.f32 %v7590, 1.0
      %v7638 = vadd.f32 %v7592, 1.0
      %v7639 = vadd.f32 %v7594, 1.0
      %v7640 = vadd.f32 %v7596, 1.0
      %v7641 = vadd.f32 %v7598, 1.0
      %v7642 = vadd.f32 %v7600, 1.0
      %v7643 = vadd.f32 %v7602, 1.0
      %v7644 = vadd.f32 %v7604, 1.0
      %v7645 = vadd.f32 %v7606, 1.0
      %v7646 = vadd.f32 %v7608, 1.0
      %v7647 = vadd.f32 %v7610, 1.0
      %v7648 = vadd.f32 %v7612, 1.0
      %v7649 = vadd.f32 %v7614, 1.0
      %v7650 = vadd.f32 %v7616, 1.0
      %v7651 = vadd.f32 %v7618, 1.0
      %v7652 = vadd.f32 %v7620, 1.0
      %v7653 = vrcp.pop %v7621
      %v7654 = vrcp.pop %v7622
      %v7655 = vrcp.pop %v7623
      %v7656 = vrcp.pop %v7624
      %v7657 = vrcp.pop %v7625
      %v7658 = vrcp.pop %v7626
      %v7659 = vrcp.pop %v7627
      %v7660 = vrcp.pop %v7628
      %v7661 = vrcp.pop %v7629
      %v7662 = vrcp.pop %v7630
      %v7663 = vrcp.pop %v7631
      %v7664 = vrcp.pop %v7632
      %v7665 = vrcp.pop %v7633
      %v7666 = vrcp.pop %v7634
      %v7667 = vrcp.pop %v7635
      %v7668 = vrcp.pop %v7636
      %v7669 = vrcp.pop %v7637
      %v7670 = vrcp.pop %v7638
      %v7671 = vrcp.pop %v7639
      %v7672 = vrcp.pop %v7640
      %v7673 = vrcp.pop %v7641
      %v7674 = vrcp.pop %v7642
      %v7675 = vrcp.pop %v7643
      %v7676 = vrcp.pop %v7644
      %v7677 = vrcp.pop %v7645
      %v7678 = vrcp.pop %v7646
      %v7679 = vrcp.pop %v7647
      %v7680 = vrcp.pop %v7648
      %v7681 = vrcp.pop %v7649
      %v7682 = vrcp.pop %v7650
      %v7683 = vrcp.pop %v7651
      %v7684 = vrcp.pop %v7652
      %v7685 = vpack.c.bf16 %v7654, %v7653
      %v7686 = vpack.c.bf16 %v7656, %v7655
      %v7687 = vpack.c.bf16 %v7658, %v7657
      %v7688 = vpack.c.bf16 %v7660, %v7659
      %v7689 = vpack.c.bf16 %v7662, %v7661
      %v7690 = vpack.c.bf16 %v7664, %v7663
      %v7691 = vpack.c.bf16 %v7666, %v7665
      %v7692 = vpack.c.bf16 %v7668, %v7667
      %v7693 = vpack.c.bf16 %v7670, %v7669
      %v7694 = vpack.c.bf16 %v7672, %v7671
      %v7695 = vpack.c.bf16 %v7674, %v7673
      %v7696 = vpack.c.bf16 %v7676, %v7675
      %v7697 = vpack.c.bf16 %v7678, %v7677
      %v7698 = vpack.c.bf16 %v7680, %v7679
      %v7699 = vpack.c.bf16 %v7682, %v7681
      %v7700 = vpack.c.bf16 %v7684, %v7683
      %v7717 = vunpack.c.l.b16 %v7685
      %v7718 = vunpack.c.h.b16 %v7685
      %v7719 = vunpack.c.l.b16 %v7686
      %v7720 = vunpack.c.h.b16 %v7686
      %v7721 = vunpack.c.l.b16 %v7687
      %v7722 = vunpack.c.h.b16 %v7687
      %v7723 = vunpack.c.l.b16 %v7688
      %v7724 = vunpack.c.h.b16 %v7688
      %v7725 = vunpack.c.l.b16 %v7689
      %v7726 = vunpack.c.h.b16 %v7689
      %v7727 = vunpack.c.l.b16 %v7690
      %v7728 = vunpack.c.h.b16 %v7690
      %v7729 = vunpack.c.l.b16 %v7691
      %v7730 = vunpack.c.h.b16 %v7691
      %v7731 = vunpack.c.l.b16 %v7692
      %v7732 = vunpack.c.h.b16 %v7692
      %v7733 = vunpack.c.l.b16 %v7693
      %v7734 = vunpack.c.h.b16 %v7693
      %v7735 = vunpack.c.l.b16 %v7694
      %v7736 = vunpack.c.h.b16 %v7694
      %v7737 = vunpack.c.l.b16 %v7695
      %v7738 = vunpack.c.h.b16 %v7695
      %v7739 = vunpack.c.l.b16 %v7696
      %v7740 = vunpack.c.h.b16 %v7696
      %v7741 = vunpack.c.l.b16 %v7697
      %v7742 = vunpack.c.h.b16 %v7697
      %v7743 = vunpack.c.l.b16 %v7698
      %v7744 = vunpack.c.h.b16 %v7698
      %v7745 = vunpack.c.l.b16 %v7699
      %v7746 = vunpack.c.h.b16 %v7699
      %v7747 = vunpack.c.l.b16 %v7700
      %v7748 = vunpack.c.h.b16 %v7700
      %v7749 = vpack.c.b16 %v7717, %v7717
      %v7750 = vpack.c.b16 %v7718, %v7718
      %v7751 = vpack.c.b16 %v7719, %v7719
      %v7752 = vpack.c.b16 %v7720, %v7720
      %v7753 = vpack.c.b16 %v7721, %v7721
      %v7754 = vpack.c.b16 %v7722, %v7722
      %v7755 = vpack.c.b16 %v7723, %v7723
      %v7756 = vpack.c.b16 %v7724, %v7724
      %v7757 = vpack.c.b16 %v7725, %v7725
      %v7758 = vpack.c.b16 %v7726, %v7726
      %v7759 = vpack.c.b16 %v7727, %v7727
      %v7760 = vpack.c.b16 %v7728, %v7728
      %v7761 = vpack.c.b16 %v7729, %v7729
      %v7762 = vpack.c.b16 %v7730, %v7730
      %v7763 = vpack.c.b16 %v7731, %v7731
      %v7764 = vpack.c.b16 %v7732, %v7732
      %v7765 = vpack.c.b16 %v7733, %v7733
      %v7766 = vpack.c.b16 %v7734, %v7734
      %v7767 = vpack.c.b16 %v7735, %v7735
      %v7768 = vpack.c.b16 %v7736, %v7736
      %v7769 = vpack.c.b16 %v7737, %v7737
      %v7770 = vpack.c.b16 %v7738, %v7738
      %v7771 = vpack.c.b16 %v7739, %v7739
      %v7772 = vpack.c.b16 %v7740, %v7740
      %v7773 = vpack.c.b16 %v7741, %v7741
      %v7774 = vpack.c.b16 %v7742, %v7742
      %v7775 = vpack.c.b16 %v7743, %v7743
      %v7776 = vpack.c.b16 %v7744, %v7744
      %v7777 = vpack.c.b16 %v7745, %v7745
      %v7778 = vpack.c.b16 %v7746, %v7746
      %v7779 = vpack.c.b16 %v7747, %v7747
      %v7780 = vpack.c.b16 %v7748, %v7748
      %7813 = vst [vmem:[%s426] sm:$0xf] %v7749
      %7814 = vst [vmem:[%s426 + $0x4] sm:$0xf] %v7750
      %7815 = vst [vmem:[%s426 + $0x8] sm:$0xf] %v7751
      %7816 = vst [vmem:[%s426 + $0xc] sm:$0xf] %v7752
      %7817 = vst [vmem:[%s426 + $0x10] sm:$0xf] %v7753
      %7818 = vst [vmem:[%s426 + $0x14] sm:$0xf] %v7754
      %7819 = vst [vmem:[%s426 + $0x18] sm:$0xf] %v7755
      %7820 = vst [vmem:[%s426 + $0x1c] sm:$0xf] %v7756
      %7821 = vst [vmem:[%s426 + $0x20] sm:$0xf] %v7757
      %7822 = vst [vmem:[%s426 + $0x24] sm:$0xf] %v7758
      %7823 = vst [vmem:[%s426 + $0x28] sm:$0xf] %v7759
      %7824 = vst [vmem:[%s426 + $0x2c] sm:$0xf] %v7760
      %7825 = vst [vmem:[%s426 + $0x30] sm:$0xf] %v7761
      %7826 = vst [vmem:[%s426 + $0x34] sm:$0xf] %v7762
      %7827 = vst [vmem:[%s426 + $0x38] sm:$0xf] %v7763
      %7828 = vst [vmem:[%s426 + $0x3c] sm:$0xf] %v7764
      %7829 = vst [vmem:[%s426 + $0x40] sm:$0xf] %v7765
      %7830 = vst [vmem:[%s426 + $0x44] sm:$0xf] %v7766
      %7831 = vst [vmem:[%s426 + $0x48] sm:$0xf] %v7767
      %7832 = vst [vmem:[%s426 + $0x4c] sm:$0xf] %v7768
      %7833 = vst [vmem:[%s426 + $0x50] sm:$0xf] %v7769
      %7834 = vst [vmem:[%s426 + $0x54] sm:$0xf] %v7770
      %7835 = vst [vmem:[%s426 + $0x58] sm:$0xf] %v7771
      %7836 = vst [vmem:[%s426 + $0x5c] sm:$0xf] %v7772
      %7837 = vst [vmem:[%s426 + $0x60] sm:$0xf] %v7773
      %7838 = vst [vmem:[%s426 + $0x64] sm:$0xf] %v7774
      %7839 = vst [vmem:[%s426 + $0x68] sm:$0xf] %v7775
      %7840 = vst [vmem:[%s426 + $0x6c] sm:$0xf] %v7776
      %7841 = vst [vmem:[%s426 + $0x70] sm:$0xf] %v7777
      %7842 = vst [vmem:[%s426 + $0x74] sm:$0xf] %v7778
      %7843 = vst [vmem:[%s426 + $0x78] sm:$0xf] %v7779
      %7844 = vst [vmem:[%s426 + $0x7c] sm:$0xf] %v7780
      %p7845 = scmp.lt.s32.totalorder %s22, 1
      %s7846 = scalar_select %p7845, %s22, 1
      %s7847 = smul.addr %s7846, 32
      %s7848 = smul.addr %s7847, 4
      %s7849 = scalar_lea.vmem %s11, %s7848
      // Predicated region
      $region65: #{decoder_forward.1} parent=63 // pred_check
        %p7850 = pneg %p286
      $region66: #{decoder_forward.1} parent=63 // pred_check_branch
        %7852 = sbr.rel (%p7850) target = $region68
      $region67: #{decoder_forward.1} parent=63 // pred_region
        _
      $region68: #{decoder_forward.1} parent=63 // pred_fallthru
        _
    $region64: #{decoder_forward.1} parent=5 // pred_fallthru
      _
    %p7853 = scmp.le.s32.totalorder 2, %s17
    // Predicated region
    $region69: #{decoder_forward.1} parent=5 // pred_check
      %p7854 = pneg %p7853
    $region70: #{decoder_forward.1} parent=5 // pred_check_branch
      %7856 = sbr.rel (%p7854) target = $region72
    $region71: #{decoder_forward.1} parent=5 // pred_region
      %s7857 = ssub.s32 %s17, 2
      // Predicated region
      $region73: #{decoder_forward.1} parent=71 // pred_check
        %p7858 = pneg %p292
      $region74: #{decoder_forward.1} parent=71 // pred_check_branch
        %7860 = sbr.rel (%p7858) target = $region76
      $region75: #{decoder_forward.1} parent=71 // pred_region
        %p7861 = scmp.lt.s32.totalorder %s23, 1
        %s7862 = scalar_select %p7861, %s23, 1
        %s7863 = smul.addr %s7862, 32
        %s7864 = smul.addr %s7863, 4
        %s7865 = scalar_lea.vmem %s11, %s7864
      $region76: #{decoder_forward.1} parent=71 // pred_fallthru
        _
    $region72: #{decoder_forward.1} parent=5 // pred_fallthru
      _
  $region6: #{decoder_forward.1} parent=0 // loop_footer
    %s21 = sadd.s32 1, %s17
  $region7: #{decoder_forward.1} parent=0 // loop_footer_branch
    %16 = sbr.rel target = $region3
  $region8: #{decoder_forward.1} parent=0 // loop_exit
    _

</llo_original>
